<compile_context>
chip_gen: v7x
topology: tpu7x:2x2x1
jax: 0.10.0
libtpu: 0.0.40
codegen_flags: <defaults>
</compile_context>

<pallas_src>
import functools

import jax
import jax.numpy as jnp
from jax.experimental import pallas as pl
from jax.experimental.pallas import tpu as pltpu


def _neg_sampling_kernel(idx_ref, h_ref, w_hbm, out_ref, rows_ref, sems,
                         *, tile_b, num_samples, out_pad):
    """One batch tile: DMA-gather rows of W by index, dot with h, sigmoid.

    idx_ref : SMEM (B*S,) int32      -- scalar-prefetched flattened indices
    h_ref   : VMEM (tile_b, D)
    w_hbm   : HBM  (V, D)            -- raw ref, rows DMA'd on demand
    out_ref : VMEM (tile_b, out_pad) -- lane-dense f32, sliced in wrapper
    rows_ref: VMEM (num_samples * tile_b, D) scratch, row r = s*tile_b + b
    sems    : DMA semaphores, one per gathered row
    """
    bt = pl.program_id(0)
    base = bt * tile_b * num_samples

    # Issue every row-gather DMA up front, wait once, then compute.
    copies = []
    for b in range(tile_b):
        for s in range(num_samples):
            r = s * tile_b + b                         # sample-major scratch layout
            row = idx_ref[base + b * num_samples + s]  # SMEM scalar read
            cp = pltpu.make_async_copy(
                w_hbm.at[pl.ds(row, 1), :],
                rows_ref.at[pl.ds(r, 1), :],
                sems.at[r])
            cp.start()
            copies.append(cp)
    for cp in copies:
        cp.wait()

    h = h_ref[...].astype(jnp.float32)                 # (tile_b, D)

    # Per-sample dot over d_model: VPU multiply + lane reduce, statically
    # unrolled over the (small, fixed) sample count.
    cols = []
    for s in range(num_samples):
        w_s = rows_ref[s * tile_b:(s + 1) * tile_b, :].astype(jnp.float32)
        cols.append(jnp.sum(h * w_s, axis=-1, keepdims=True))    # (tile_b, 1)
    scores = jax.nn.sigmoid(jnp.concatenate(cols, axis=-1))      # (tile_b, S)

    # Lane-dense store: pad the sample dim up to a multiple of 128 lanes.
    pad = jnp.zeros((tile_b, out_pad - num_samples), jnp.float32)
    out_ref[...] = jnp.concatenate([scores, pad], axis=-1).astype(out_ref.dtype)


def embedding_dot_sigmoid(h, indices, emb_weight, *, tile_b=8):
    """sigmoid(h[b] . W[indices[b, s]]) for all (b, s); returns (B, S) f32."""
    B, D = h.shape
    S = indices.shape[1]
    out_pad = ((S + 127) // 128) * 128                 # lane-dense output width

    # Pad batch to a multiple of the batch tile (results sliced off below).
    pad_b = (-B) % tile_b
    if pad_b:
        h = jnp.concatenate([h, jnp.zeros((pad_b, D), h.dtype)], axis=0)
        indices = jnp.concatenate(
            [indices, jnp.zeros((pad_b, S), indices.dtype)], axis=0)
    bp = B + pad_b

    flat_idx = indices.reshape(bp * S).astype(jnp.int32)

    kernel = functools.partial(
        _neg_sampling_kernel, tile_b=tile_b, num_samples=S, out_pad=out_pad)

    grid_spec = pltpu.PrefetchScalarGridSpec(
        num_scalar_prefetch=1,                         # flat_idx -> SMEM
        grid=(bp // tile_b,),
        in_specs=[
            pl.BlockSpec((tile_b, D), lambda i, idx: (i, 0)),    # h batch tile
            pl.BlockSpec(memory_space=pl.ANY),                   # W stays in HBM
        ],
        out_specs=pl.BlockSpec((tile_b, out_pad), lambda i, idx: (i, 0)),
        scratch_shapes=[
            pltpu.VMEM((S * tile_b, D), emb_weight.dtype),       # gathered rows
            pltpu.SemaphoreType.DMA((S * tile_b,)),
        ],
    )

    out = pl.pallas_call(
        kernel,
        out_shape=jax.ShapeDtypeStruct((bp, out_pad), jnp.float32),
        grid_spec=grid_spec,
        compiler_params=pltpu.CompilerParams(
            dimension_semantics=("parallel",)),        # batch tiles independent
    )(flat_idx, h, emb_weight)
    return out[:B, :S]


def negative_sampling_forward(h, target_index, negative_sample, emb_weight,
                              *, tile_b=8):
    """Mirror of NegativeSampling.forward (negatives pre-sampled in JAX glue).

    Args:
      h:               (B, D) float
      target_index:    (B,)   int32
      negative_sample: (B, neg_size) int32 (sampler output)
      emb_weight:      (V, D) float (f32 or bf16)
    Returns:
      (pos_out (B,1), pos_label (B,1), neg_out (B,neg), neg_label (B,neg))
    """
    B = target_index.shape[0]
    neg_size = negative_sample.shape[1]
    # One kernel call covers the positive column and all negative columns.
    all_idx = jnp.concatenate(
        [target_index.reshape(B, 1), negative_sample], axis=1)    # (B, 1+neg)
    scores = embedding_dot_sigmoid(h, all_idx, emb_weight, tile_b=tile_b)
    pos_out = scores[:, :1]
    neg_out = scores[:, 1:]
    pos_label = jnp.ones((B, 1), dtype=jnp.float32)
    neg_label = jnp.zeros((B, neg_size), dtype=jnp.float32)
    return pos_out, pos_label, neg_out, neg_label


if __name__ == "__main__":
    # Small, module-consistent shapes: 2 batch tiles of 8 -> grid=(2,).
    B, D, V, NEG = 16, 32, 64, 5        # batch, d_model, num_item, neg samples

    key = jax.random.PRNGKey(0)
    k_w, k_h, k_tgt, k_neg = jax.random.split(key, 4)

    # EmbeddingLayer weight: normal(mean=0, std=init_embedding_std=1).
    emb_weight = jax.random.normal(k_w, (V, D), dtype=jnp.float32)
    h = jax.random.normal(k_h, (B, D), dtype=jnp.float32)
    target_index = jax.random.randint(k_tgt, (B,), 0, V, dtype=jnp.int32)

    # UnigramSampler: deterministic synthetic counts, p = max(1,c)^0.75 / sum.
    counts = (jnp.arange(V, dtype=jnp.float32) % 10.0) + 1.0
    word_p = jnp.power(jnp.maximum(counts, 1.0), 0.75)
    word_p = word_p / jnp.sum(word_p)
    negative_sample = jax.random.choice(
        k_neg, V, shape=(B, NEG), replace=True, p=word_p).astype(jnp.int32)

    pos_out, pos_label, neg_out, neg_label = negative_sampling_forward(
        h, target_index, negative_sample, emb_weight)
    jax.block_until_ready((pos_out, pos_label, neg_out, neg_label))

    # Pure-JAX reference check of the kernel math.
    def ref_scores(idx):
        w = emb_weight[idx]                                 # (B, S, D)
        return jax.nn.sigmoid(jnp.einsum("bd,bsd->bs", h, w))

    ref_pos = ref_scores(target_index.reshape(B, 1))
    ref_neg = ref_scores(negative_sample)
    assert pos_out.shape == (B, 1) and neg_out.shape == (B, NEG)
    assert pos_label.shape == (B, 1) and neg_label.shape == (B, NEG)
    assert jnp.allclose(pos_out, ref_pos, atol=1e-5, rtol=1e-5)
    assert jnp.allclose(neg_out, ref_neg, atol=1e-5, rtol=1e-5)

    print("KERNEL_OK")
</pallas_src>

<mosaic_0001>
module attributes {stable_mosaic.version = 11 : i64} {
  func.func @_neg_sampling_kernel(%arg0: i32, %arg1: memref<96xi32, #tpu.memory_space<smem>>, %arg2: memref<8x32xf32, #tpu.memory_space<vmem>>, %arg3: memref<64x32xf32, #tpu.memory_space<any>>, %arg4: memref<8x128xf32, #tpu.memory_space<vmem>>, %arg5: memref<48x32xf32, #tpu.memory_space<vmem>>, %arg6: memref<48x!tpu.dma_semaphore, #tpu.memory_space<semaphore_mem>>) attributes {dimension_semantics = [#tpu.dimension_semantics<parallel>], iteration_bounds = array<i64: 2>, scalar_prefetch = 1 : i64, scratch_operands = 2 : i64, tpu.core_type = #tpu.core_type<tc>, window_params = [{transform_indices = @transform_0, window_bounds = array<i64: 8, 32>}, {}, {transform_indices = @transform_2, window_bounds = array<i64: 8, 128>}]} {
    %c8_i32 = arith.constant 8 : i32
    %0 = arith.muli %arg0, %c8_i32 : i32
    %c6_i32 = arith.constant 6 : i32
    %1 = arith.muli %0, %c6_i32 : i32
    %c0_i32 = arith.constant 0 : i32
    %2 = arith.addi %1, %c0_i32 : i32
    %c0_i32_0 = arith.constant 0 : i32
    %3 = arith.addi %2, %c0_i32_0 : i32
    %4 = arith.index_cast %3 : i32 to index
    %5 = memref.load %arg1[%4] : memref<96xi32, #tpu.memory_space<smem>>
    %c0_i32_1 = arith.constant 0 : i32
    %c0_i32_2 = arith.constant 0 : i32
    %6 = tpu.memref_slice %arg3[%5, %c0_i32_2] : memref<64x32xf32, #tpu.memory_space<any>> -> memref<1x32xf32, #tpu.memory_space<any>>
    %c0_i32_3 = arith.constant 0 : i32
    %c0_i32_4 = arith.constant 0 : i32
    %7 = tpu.memref_slice %arg5[%c0_i32_3, %c0_i32_4] : memref<48x32xf32, #tpu.memory_space<vmem>> -> memref<1x32xf32, #tpu.memory_space<vmem>>
    %8 = tpu.memref_slice %arg6[%c0_i32_1] : memref<48x!tpu.dma_semaphore, #tpu.memory_space<semaphore_mem>> -> memref<1x!tpu.dma_semaphore, #tpu.memory_space<semaphore_mem>>
    %9 = tpu.memref_squeeze %8 : memref<1x!tpu.dma_semaphore, #tpu.memory_space<semaphore_mem>> -> memref<!tpu.dma_semaphore, #tpu.memory_space<semaphore_mem>>
    tpu.enqueue_dma source(%6 : memref<1x32xf32, #tpu.memory_space<any>>) target(%7 : memref<1x32xf32, #tpu.memory_space<vmem>>) target_semaphore(%9 : memref<!tpu.dma_semaphore, #tpu.memory_space<semaphore_mem>>)
    %c0_i32_5 = arith.constant 0 : i32
    %10 = arith.addi %1, %c0_i32_5 : i32
    %c1_i32 = arith.constant 1 : i32
    %11 = arith.addi %10, %c1_i32 : i32
    %12 = arith.index_cast %11 : i32 to index
    %13 = memref.load %arg1[%12] : memref<96xi32, #tpu.memory_space<smem>>
    %c8_i32_6 = arith.constant 8 : i32
    %c0_i32_7 = arith.constant 0 : i32
    %14 = tpu.memref_slice %arg3[%13, %c0_i32_7] : memref<64x32xf32, #tpu.memory_space<any>> -> memref<1x32xf32, #tpu.memory_space<any>>
    %c8_i32_8 = arith.constant 8 : i32
    %c0_i32_9 = arith.constant 0 : i32
    %15 = tpu.memref_slice %arg5[%c8_i32_8, %c0_i32_9] : memref<48x32xf32, #tpu.memory_space<vmem>> -> memref<1x32xf32, #tpu.memory_space<vmem>>
    %16 = tpu.memref_slice %arg6[%c8_i32_6] : memref<48x!tpu.dma_semaphore, #tpu.memory_space<semaphore_mem>> -> memref<1x!tpu.dma_semaphore, #tpu.memory_space<semaphore_mem>>
    %17 = tpu.memref_squeeze %16 : memref<1x!tpu.dma_semaphore, #tpu.memory_space<semaphore_mem>> -> memref<!tpu.dma_semaphore, #tpu.memory_space<semaphore_mem>>
    tpu.enqueue_dma source(%14 : memref<1x32xf32, #tpu.memory_space<any>>) target(%15 : memref<1x32xf32, #tpu.memory_space<vmem>>) target_semaphore(%17 : memref<!tpu.dma_semaphore, #tpu.memory_space<semaphore_mem>>)
    %c0_i32_10 = arith.constant 0 : i32
    %18 = arith.addi %1, %c0_i32_10 : i32
    %c2_i32 = arith.constant 2 : i32
    %19 = arith.addi %18, %c2_i32 : i32
    %20 = arith.index_cast %19 : i32 to index
    %21 = memref.load %arg1[%20] : memref<96xi32, #tpu.memory_space<smem>>
    %c16_i32 = arith.constant 16 : i32
    %c0_i32_11 = arith.constant 0 : i32
    %22 = tpu.memref_slice %arg3[%21, %c0_i32_11] : memref<64x32xf32, #tpu.memory_space<any>> -> memref<1x32xf32, #tpu.memory_space<any>>
    %c16_i32_12 = arith.constant 16 : i32
    %c0_i32_13 = arith.constant 0 : i32
    %23 = tpu.memref_slice %arg5[%c16_i32_12, %c0_i32_13] : memref<48x32xf32, #tpu.memory_space<vmem>> -> memref<1x32xf32, #tpu.memory_space<vmem>>
    %24 = tpu.memref_slice %arg6[%c16_i32] : memref<48x!tpu.dma_semaphore, #tpu.memory_space<semaphore_mem>> -> memref<1x!tpu.dma_semaphore, #tpu.memory_space<semaphore_mem>>
    %25 = tpu.memref_squeeze %24 : memref<1x!tpu.dma_semaphore, #tpu.memory_space<semaphore_mem>> -> memref<!tpu.dma_semaphore, #tpu.memory_space<semaphore_mem>>
    tpu.enqueue_dma source(%22 : memref<1x32xf32, #tpu.memory_space<any>>) target(%23 : memref<1x32xf32, #tpu.memory_space<vmem>>) target_semaphore(%25 : memref<!tpu.dma_semaphore, #tpu.memory_space<semaphore_mem>>)
    %c0_i32_14 = arith.constant 0 : i32
    %26 = arith.addi %1, %c0_i32_14 : i32
    %c3_i32 = arith.constant 3 : i32
    %27 = arith.addi %26, %c3_i32 : i32
    %28 = arith.index_cast %27 : i32 to index
    %29 = memref.load %arg1[%28] : memref<96xi32, #tpu.memory_space<smem>>
    %c24_i32 = arith.constant 24 : i32
    %c0_i32_15 = arith.constant 0 : i32
    %30 = tpu.memref_slice %arg3[%29, %c0_i32_15] : memref<64x32xf32, #tpu.memory_space<any>> -> memref<1x32xf32, #tpu.memory_space<any>>
    %c24_i32_16 = arith.constant 24 : i32
    %c0_i32_17 = arith.constant 0 : i32
    %31 = tpu.memref_slice %arg5[%c24_i32_16, %c0_i32_17] : memref<48x32xf32, #tpu.memory_space<vmem>> -> memref<1x32xf32, #tpu.memory_space<vmem>>
    %32 = tpu.memref_slice %arg6[%c24_i32] : memref<48x!tpu.dma_semaphore, #tpu.memory_space<semaphore_mem>> -> memref<1x!tpu.dma_semaphore, #tpu.memory_space<semaphore_mem>>
    %33 = tpu.memref_squeeze %32 : memref<1x!tpu.dma_semaphore, #tpu.memory_space<semaphore_mem>> -> memref<!tpu.dma_semaphore, #tpu.memory_space<semaphore_mem>>
    tpu.enqueue_dma source(%30 : memref<1x32xf32, #tpu.memory_space<any>>) target(%31 : memref<1x32xf32, #tpu.memory_space<vmem>>) target_semaphore(%33 : memref<!tpu.dma_semaphore, #tpu.memory_space<semaphore_mem>>)
    %c0_i32_18 = arith.constant 0 : i32
    %34 = arith.addi %1, %c0_i32_18 : i32
    %c4_i32 = arith.constant 4 : i32
    %35 = arith.addi %34, %c4_i32 : i32
    %36 = arith.index_cast %35 : i32 to index
    %37 = memref.load %arg1[%36] : memref<96xi32, #tpu.memory_space<smem>>
    %c32_i32 = arith.constant 32 : i32
    %c0_i32_19 = arith.constant 0 : i32
    %38 = tpu.memref_slice %arg3[%37, %c0_i32_19] : memref<64x32xf32, #tpu.memory_space<any>> -> memref<1x32xf32, #tpu.memory_space<any>>
    %c32_i32_20 = arith.constant 32 : i32
    %c0_i32_21 = arith.constant 0 : i32
    %39 = tpu.memref_slice %arg5[%c32_i32_20, %c0_i32_21] : memref<48x32xf32, #tpu.memory_space<vmem>> -> memref<1x32xf32, #tpu.memory_space<vmem>>
    %40 = tpu.memref_slice %arg6[%c32_i32] : memref<48x!tpu.dma_semaphore, #tpu.memory_space<semaphore_mem>> -> memref<1x!tpu.dma_semaphore, #tpu.memory_space<semaphore_mem>>
    %41 = tpu.memref_squeeze %40 : memref<1x!tpu.dma_semaphore, #tpu.memory_space<semaphore_mem>> -> memref<!tpu.dma_semaphore, #tpu.memory_space<semaphore_mem>>
    tpu.enqueue_dma source(%38 : memref<1x32xf32, #tpu.memory_space<any>>) target(%39 : memref<1x32xf32, #tpu.memory_space<vmem>>) target_semaphore(%41 : memref<!tpu.dma_semaphore, #tpu.memory_space<semaphore_mem>>)
    %c0_i32_22 = arith.constant 0 : i32
    %42 = arith.addi %1, %c0_i32_22 : i32
    %c5_i32 = arith.constant 5 : i32
    %43 = arith.addi %42, %c5_i32 : i32
    %44 = arith.index_cast %43 : i32 to index
    %45 = memref.load %arg1[%44] : memref<96xi32, #tpu.memory_space<smem>>
    %c40_i32 = arith.constant 40 : i32
    %c0_i32_23 = arith.constant 0 : i32
    %46 = tpu.memref_slice %arg3[%45, %c0_i32_23] : memref<64x32xf32, #tpu.memory_space<any>> -> memref<1x32xf32, #tpu.memory_space<any>>
    %c40_i32_24 = arith.constant 40 : i32
    %c0_i32_25 = arith.constant 0 : i32
    %47 = tpu.memref_slice %arg5[%c40_i32_24, %c0_i32_25] : memref<48x32xf32, #tpu.memory_space<vmem>> -> memref<1x32xf32, #tpu.memory_space<vmem>>
    %48 = tpu.memref_slice %arg6[%c40_i32] : memref<48x!tpu.dma_semaphore, #tpu.memory_space<semaphore_mem>> -> memref<1x!tpu.dma_semaphore, #tpu.memory_space<semaphore_mem>>
    %49 = tpu.memref_squeeze %48 : memref<1x!tpu.dma_semaphore, #tpu.memory_space<semaphore_mem>> -> memref<!tpu.dma_semaphore, #tpu.memory_space<semaphore_mem>>
    tpu.enqueue_dma source(%46 : memref<1x32xf32, #tpu.memory_space<any>>) target(%47 : memref<1x32xf32, #tpu.memory_space<vmem>>) target_semaphore(%49 : memref<!tpu.dma_semaphore, #tpu.memory_space<semaphore_mem>>)
    %c6_i32_26 = arith.constant 6 : i32
    %50 = arith.addi %1, %c6_i32_26 : i32
    %c0_i32_27 = arith.constant 0 : i32
    %51 = arith.addi %50, %c0_i32_27 : i32
    %52 = arith.index_cast %51 : i32 to index
    %53 = memref.load %arg1[%52] : memref<96xi32, #tpu.memory_space<smem>>
    %c1_i32_28 = arith.constant 1 : i32
    %c0_i32_29 = arith.constant 0 : i32
    %54 = tpu.memref_slice %arg3[%53, %c0_i32_29] : memref<64x32xf32, #tpu.memory_space<any>> -> memref<1x32xf32, #tpu.memory_space<any>>
    %c1_i32_30 = arith.constant 1 : i32
    %c0_i32_31 = arith.constant 0 : i32
    %55 = tpu.memref_slice %arg5[%c1_i32_30, %c0_i32_31] : memref<48x32xf32, #tpu.memory_space<vmem>> -> memref<1x32xf32, #tpu.memory_space<vmem>>
    %56 = tpu.memref_slice %arg6[%c1_i32_28] : memref<48x!tpu.dma_semaphore, #tpu.memory_space<semaphore_mem>> -> memref<1x!tpu.dma_semaphore, #tpu.memory_space<semaphore_mem>>
    %57 = tpu.memref_squeeze %56 : memref<1x!tpu.dma_semaphore, #tpu.memory_space<semaphore_mem>> -> memref<!tpu.dma_semaphore, #tpu.memory_space<semaphore_mem>>
    tpu.enqueue_dma source(%54 : memref<1x32xf32, #tpu.memory_space<any>>) target(%55 : memref<1x32xf32, #tpu.memory_space<vmem>>) target_semaphore(%57 : memref<!tpu.dma_semaphore, #tpu.memory_space<semaphore_mem>>)
    %c6_i32_32 = arith.constant 6 : i32
    %58 = arith.addi %1, %c6_i32_32 : i32
    %c1_i32_33 = arith.constant 1 : i32
    %59 = arith.addi %58, %c1_i32_33 : i32
    %60 = arith.index_cast %59 : i32 to index
    %61 = memref.load %arg1[%60] : memref<96xi32, #tpu.memory_space<smem>>
    %c9_i32 = arith.constant 9 : i32
    %c0_i32_34 = arith.constant 0 : i32
    %62 = tpu.memref_slice %arg3[%61, %c0_i32_34] : memref<64x32xf32, #tpu.memory_space<any>> -> memref<1x32xf32, #tpu.memory_space<any>>
    %c9_i32_35 = arith.constant 9 : i32
    %c0_i32_36 = arith.constant 0 : i32
    %63 = tpu.memref_slice %arg5[%c9_i32_35, %c0_i32_36] : memref<48x32xf32, #tpu.memory_space<vmem>> -> memref<1x32xf32, #tpu.memory_space<vmem>>
    %64 = tpu.memref_slice %arg6[%c9_i32] : memref<48x!tpu.dma_semaphore, #tpu.memory_space<semaphore_mem>> -> memref<1x!tpu.dma_semaphore, #tpu.memory_space<semaphore_mem>>
    %65 = tpu.memref_squeeze %64 : memref<1x!tpu.dma_semaphore, #tpu.memory_space<semaphore_mem>> -> memref<!tpu.dma_semaphore, #tpu.memory_space<semaphore_mem>>
    tpu.enqueue_dma source(%62 : memref<1x32xf32, #tpu.memory_space<any>>) target(%63 : memref<1x32xf32, #tpu.memory_space<vmem>>) target_semaphore(%65 : memref<!tpu.dma_semaphore, #tpu.memory_space<semaphore_mem>>)
    %c6_i32_37 = arith.constant 6 : i32
    %66 = arith.addi %1, %c6_i32_37 : i32
    %c2_i32_38 = arith.constant 2 : i32
    %67 = arith.addi %66, %c2_i32_38 : i32
    %68 = arith.index_cast %67 : i32 to index
    %69 = memref.load %arg1[%68] : memref<96xi32, #tpu.memory_space<smem>>
    %c17_i32 = arith.constant 17 : i32
    %c0_i32_39 = arith.constant 0 : i32
    %70 = tpu.memref_slice %arg3[%69, %c0_i32_39] : memref<64x32xf32, #tpu.memory_space<any>> -> memref<1x32xf32, #tpu.memory_space<any>>
    %c17_i32_40 = arith.constant 17 : i32
    %c0_i32_41 = arith.constant 0 : i32
    %71 = tpu.memref_slice %arg5[%c17_i32_40, %c0_i32_41] : memref<48x32xf32, #tpu.memory_space<vmem>> -> memref<1x32xf32, #tpu.memory_space<vmem>>
    %72 = tpu.memref_slice %arg6[%c17_i32] : memref<48x!tpu.dma_semaphore, #tpu.memory_space<semaphore_mem>> -> memref<1x!tpu.dma_semaphore, #tpu.memory_space<semaphore_mem>>
    %73 = tpu.memref_squeeze %72 : memref<1x!tpu.dma_semaphore, #tpu.memory_space<semaphore_mem>> -> memref<!tpu.dma_semaphore, #tpu.memory_space<semaphore_mem>>
    tpu.enqueue_dma source(%70 : memref<1x32xf32, #tpu.memory_space<any>>) target(%71 : memref<1x32xf32, #tpu.memory_space<vmem>>) target_semaphore(%73 : memref<!tpu.dma_semaphore, #tpu.memory_space<semaphore_mem>>)
    %c6_i32_42 = arith.constant 6 : i32
    %74 = arith.addi %1, %c6_i32_42 : i32
    %c3_i32_43 = arith.constant 3 : i32
    %75 = arith.addi %74, %c3_i32_43 : i32
    %76 = arith.index_cast %75 : i32 to index
    %77 = memref.load %arg1[%76] : memref<96xi32, #tpu.memory_space<smem>>
    %c25_i32 = arith.constant 25 : i32
    %c0_i32_44 = arith.constant 0 : i32
    %78 = tpu.memref_slice %arg3[%77, %c0_i32_44] : memref<64x32xf32, #tpu.memory_space<any>> -> memref<1x32xf32, #tpu.memory_space<any>>
    %c25_i32_45 = arith.constant 25 : i32
    %c0_i32_46 = arith.constant 0 : i32
    %79 = tpu.memref_slice %arg5[%c25_i32_45, %c0_i32_46] : memref<48x32xf32, #tpu.memory_space<vmem>> -> memref<1x32xf32, #tpu.memory_space<vmem>>
    %80 = tpu.memref_slice %arg6[%c25_i32] : memref<48x!tpu.dma_semaphore, #tpu.memory_space<semaphore_mem>> -> memref<1x!tpu.dma_semaphore, #tpu.memory_space<semaphore_mem>>
    %81 = tpu.memref_squeeze %80 : memref<1x!tpu.dma_semaphore, #tpu.memory_space<semaphore_mem>> -> memref<!tpu.dma_semaphore, #tpu.memory_space<semaphore_mem>>
    tpu.enqueue_dma source(%78 : memref<1x32xf32, #tpu.memory_space<any>>) target(%79 : memref<1x32xf32, #tpu.memory_space<vmem>>) target_semaphore(%81 : memref<!tpu.dma_semaphore, #tpu.memory_space<semaphore_mem>>)
    %c6_i32_47 = arith.constant 6 : i32
    %82 = arith.addi %1, %c6_i32_47 : i32
    %c4_i32_48 = arith.constant 4 : i32
    %83 = arith.addi %82, %c4_i32_48 : i32
    %84 = arith.index_cast %83 : i32 to index
    %85 = memref.load %arg1[%84] : memref<96xi32, #tpu.memory_space<smem>>
    %c33_i32 = arith.constant 33 : i32
    %c0_i32_49 = arith.constant 0 : i32
    %86 = tpu.memref_slice %arg3[%85, %c0_i32_49] : memref<64x32xf32, #tpu.memory_space<any>> -> memref<1x32xf32, #tpu.memory_space<any>>
    %c33_i32_50 = arith.constant 33 : i32
    %c0_i32_51 = arith.constant 0 : i32
    %87 = tpu.memref_slice %arg5[%c33_i32_50, %c0_i32_51] : memref<48x32xf32, #tpu.memory_space<vmem>> -> memref<1x32xf32, #tpu.memory_space<vmem>>
    %88 = tpu.memref_slice %arg6[%c33_i32] : memref<48x!tpu.dma_semaphore, #tpu.memory_space<semaphore_mem>> -> memref<1x!tpu.dma_semaphore, #tpu.memory_space<semaphore_mem>>
    %89 = tpu.memref_squeeze %88 : memref<1x!tpu.dma_semaphore, #tpu.memory_space<semaphore_mem>> -> memref<!tpu.dma_semaphore, #tpu.memory_space<semaphore_mem>>
    tpu.enqueue_dma source(%86 : memref<1x32xf32, #tpu.memory_space<any>>) target(%87 : memref<1x32xf32, #tpu.memory_space<vmem>>) target_semaphore(%89 : memref<!tpu.dma_semaphore, #tpu.memory_space<semaphore_mem>>)
    %c6_i32_52 = arith.constant 6 : i32
    %90 = arith.addi %1, %c6_i32_52 : i32
    %c5_i32_53 = arith.constant 5 : i32
    %91 = arith.addi %90, %c5_i32_53 : i32
    %92 = arith.index_cast %91 : i32 to index
    %93 = memref.load %arg1[%92] : memref<96xi32, #tpu.memory_space<smem>>
    %c41_i32 = arith.constant 41 : i32
    %c0_i32_54 = arith.constant 0 : i32
    %94 = tpu.memref_slice %arg3[%93, %c0_i32_54] : memref<64x32xf32, #tpu.memory_space<any>> -> memref<1x32xf32, #tpu.memory_space<any>>
    %c41_i32_55 = arith.constant 41 : i32
    %c0_i32_56 = arith.constant 0 : i32
    %95 = tpu.memref_slice %arg5[%c41_i32_55, %c0_i32_56] : memref<48x32xf32, #tpu.memory_space<vmem>> -> memref<1x32xf32, #tpu.memory_space<vmem>>
    %96 = tpu.memref_slice %arg6[%c41_i32] : memref<48x!tpu.dma_semaphore, #tpu.memory_space<semaphore_mem>> -> memref<1x!tpu.dma_semaphore, #tpu.memory_space<semaphore_mem>>
    %97 = tpu.memref_squeeze %96 : memref<1x!tpu.dma_semaphore, #tpu.memory_space<semaphore_mem>> -> memref<!tpu.dma_semaphore, #tpu.memory_space<semaphore_mem>>
    tpu.enqueue_dma source(%94 : memref<1x32xf32, #tpu.memory_space<any>>) target(%95 : memref<1x32xf32, #tpu.memory_space<vmem>>) target_semaphore(%97 : memref<!tpu.dma_semaphore, #tpu.memory_space<semaphore_mem>>)
    %c12_i32 = arith.constant 12 : i32
    %98 = arith.addi %1, %c12_i32 : i32
    %c0_i32_57 = arith.constant 0 : i32
    %99 = arith.addi %98, %c0_i32_57 : i32
    %100 = arith.index_cast %99 : i32 to index
    %101 = memref.load %arg1[%100] : memref<96xi32, #tpu.memory_space<smem>>
    %c2_i32_58 = arith.constant 2 : i32
    %c0_i32_59 = arith.constant 0 : i32
    %102 = tpu.memref_slice %arg3[%101, %c0_i32_59] : memref<64x32xf32, #tpu.memory_space<any>> -> memref<1x32xf32, #tpu.memory_space<any>>
    %c2_i32_60 = arith.constant 2 : i32
    %c0_i32_61 = arith.constant 0 : i32
    %103 = tpu.memref_slice %arg5[%c2_i32_60, %c0_i32_61] : memref<48x32xf32, #tpu.memory_space<vmem>> -> memref<1x32xf32, #tpu.memory_space<vmem>>
    %104 = tpu.memref_slice %arg6[%c2_i32_58] : memref<48x!tpu.dma_semaphore, #tpu.memory_space<semaphore_mem>> -> memref<1x!tpu.dma_semaphore, #tpu.memory_space<semaphore_mem>>
    %105 = tpu.memref_squeeze %104 : memref<1x!tpu.dma_semaphore, #tpu.memory_space<semaphore_mem>> -> memref<!tpu.dma_semaphore, #tpu.memory_space<semaphore_mem>>
    tpu.enqueue_dma source(%102 : memref<1x32xf32, #tpu.memory_space<any>>) target(%103 : memref<1x32xf32, #tpu.memory_space<vmem>>) target_semaphore(%105 : memref<!tpu.dma_semaphore, #tpu.memory_space<semaphore_mem>>)
    %c12_i32_62 = arith.constant 12 : i32
    %106 = arith.addi %1, %c12_i32_62 : i32
    %c1_i32_63 = arith.constant 1 : i32
    %107 = arith.addi %106, %c1_i32_63 : i32
    %108 = arith.index_cast %107 : i32 to index
    %109 = memref.load %arg1[%108] : memref<96xi32, #tpu.memory_space<smem>>
    %c10_i32 = arith.constant 10 : i32
    %c0_i32_64 = arith.constant 0 : i32
    %110 = tpu.memref_slice %arg3[%109, %c0_i32_64] : memref<64x32xf32, #tpu.memory_space<any>> -> memref<1x32xf32, #tpu.memory_space<any>>
    %c10_i32_65 = arith.constant 10 : i32
    %c0_i32_66 = arith.constant 0 : i32
    %111 = tpu.memref_slice %arg5[%c10_i32_65, %c0_i32_66] : memref<48x32xf32, #tpu.memory_space<vmem>> -> memref<1x32xf32, #tpu.memory_space<vmem>>
    %112 = tpu.memref_slice %arg6[%c10_i32] : memref<48x!tpu.dma_semaphore, #tpu.memory_space<semaphore_mem>> -> memref<1x!tpu.dma_semaphore, #tpu.memory_space<semaphore_mem>>
    %113 = tpu.memref_squeeze %112 : memref<1x!tpu.dma_semaphore, #tpu.memory_space<semaphore_mem>> -> memref<!tpu.dma_semaphore, #tpu.memory_space<semaphore_mem>>
    tpu.enqueue_dma source(%110 : memref<1x32xf32, #tpu.memory_space<any>>) target(%111 : memref<1x32xf32, #tpu.memory_space<vmem>>) target_semaphore(%113 : memref<!tpu.dma_semaphore, #tpu.memory_space<semaphore_mem>>)
    %c12_i32_67 = arith.constant 12 : i32
    %114 = arith.addi %1, %c12_i32_67 : i32
    %c2_i32_68 = arith.constant 2 : i32
    %115 = arith.addi %114, %c2_i32_68 : i32
    %116 = arith.index_cast %115 : i32 to index
    %117 = memref.load %arg1[%116] : memref<96xi32, #tpu.memory_space<smem>>
    %c18_i32 = arith.constant 18 : i32
    %c0_i32_69 = arith.constant 0 : i32
    %118 = tpu.memref_slice %arg3[%117, %c0_i32_69] : memref<64x32xf32, #tpu.memory_space<any>> -> memref<1x32xf32, #tpu.memory_space<any>>
    %c18_i32_70 = arith.constant 18 : i32
    %c0_i32_71 = arith.constant 0 : i32
    %119 = tpu.memref_slice %arg5[%c18_i32_70, %c0_i32_71] : memref<48x32xf32, #tpu.memory_space<vmem>> -> memref<1x32xf32, #tpu.memory_space<vmem>>
    %120 = tpu.memref_slice %arg6[%c18_i32] : memref<48x!tpu.dma_semaphore, #tpu.memory_space<semaphore_mem>> -> memref<1x!tpu.dma_semaphore, #tpu.memory_space<semaphore_mem>>
    %121 = tpu.memref_squeeze %120 : memref<1x!tpu.dma_semaphore, #tpu.memory_space<semaphore_mem>> -> memref<!tpu.dma_semaphore, #tpu.memory_space<semaphore_mem>>
    tpu.enqueue_dma source(%118 : memref<1x32xf32, #tpu.memory_space<any>>) target(%119 : memref<1x32xf32, #tpu.memory_space<vmem>>) target_semaphore(%121 : memref<!tpu.dma_semaphore, #tpu.memory_space<semaphore_mem>>)
    %c12_i32_72 = arith.constant 12 : i32
    %122 = arith.addi %1, %c12_i32_72 : i32
    %c3_i32_73 = arith.constant 3 : i32
    %123 = arith.addi %122, %c3_i32_73 : i32
    %124 = arith.index_cast %123 : i32 to index
    %125 = memref.load %arg1[%124] : memref<96xi32, #tpu.memory_space<smem>>
    %c26_i32 = arith.constant 26 : i32
    %c0_i32_74 = arith.constant 0 : i32
    %126 = tpu.memref_slice %arg3[%125, %c0_i32_74] : memref<64x32xf32, #tpu.memory_space<any>> -> memref<1x32xf32, #tpu.memory_space<any>>
    %c26_i32_75 = arith.constant 26 : i32
    %c0_i32_76 = arith.constant 0 : i32
    %127 = tpu.memref_slice %arg5[%c26_i32_75, %c0_i32_76] : memref<48x32xf32, #tpu.memory_space<vmem>> -> memref<1x32xf32, #tpu.memory_space<vmem>>
    %128 = tpu.memref_slice %arg6[%c26_i32] : memref<48x!tpu.dma_semaphore, #tpu.memory_space<semaphore_mem>> -> memref<1x!tpu.dma_semaphore, #tpu.memory_space<semaphore_mem>>
    %129 = tpu.memref_squeeze %128 : memref<1x!tpu.dma_semaphore, #tpu.memory_space<semaphore_mem>> -> memref<!tpu.dma_semaphore, #tpu.memory_space<semaphore_mem>>
    tpu.enqueue_dma source(%126 : memref<1x32xf32, #tpu.memory_space<any>>) target(%127 : memref<1x32xf32, #tpu.memory_space<vmem>>) target_semaphore(%129 : memref<!tpu.dma_semaphore, #tpu.memory_space<semaphore_mem>>)
    %c12_i32_77 = arith.constant 12 : i32
    %130 = arith.addi %1, %c12_i32_77 : i32
    %c4_i32_78 = arith.constant 4 : i32
    %131 = arith.addi %130, %c4_i32_78 : i32
    %132 = arith.index_cast %131 : i32 to index
    %133 = memref.load %arg1[%132] : memref<96xi32, #tpu.memory_space<smem>>
    %c34_i32 = arith.constant 34 : i32
    %c0_i32_79 = arith.constant 0 : i32
    %134 = tpu.memref_slice %arg3[%133, %c0_i32_79] : memref<64x32xf32, #tpu.memory_space<any>> -> memref<1x32xf32, #tpu.memory_space<any>>
    %c34_i32_80 = arith.constant 34 : i32
    %c0_i32_81 = arith.constant 0 : i32
    %135 = tpu.memref_slice %arg5[%c34_i32_80, %c0_i32_81] : memref<48x32xf32, #tpu.memory_space<vmem>> -> memref<1x32xf32, #tpu.memory_space<vmem>>
    %136 = tpu.memref_slice %arg6[%c34_i32] : memref<48x!tpu.dma_semaphore, #tpu.memory_space<semaphore_mem>> -> memref<1x!tpu.dma_semaphore, #tpu.memory_space<semaphore_mem>>
    %137 = tpu.memref_squeeze %136 : memref<1x!tpu.dma_semaphore, #tpu.memory_space<semaphore_mem>> -> memref<!tpu.dma_semaphore, #tpu.memory_space<semaphore_mem>>
    tpu.enqueue_dma source(%134 : memref<1x32xf32, #tpu.memory_space<any>>) target(%135 : memref<1x32xf32, #tpu.memory_space<vmem>>) target_semaphore(%137 : memref<!tpu.dma_semaphore, #tpu.memory_space<semaphore_mem>>)
    %c12_i32_82 = arith.constant 12 : i32
    %138 = arith.addi %1, %c12_i32_82 : i32
    %c5_i32_83 = arith.constant 5 : i32
    %139 = arith.addi %138, %c5_i32_83 : i32
    %140 = arith.index_cast %139 : i32 to index
    %141 = memref.load %arg1[%140] : memref<96xi32, #tpu.memory_space<smem>>
    %c42_i32 = arith.constant 42 : i32
    %c0_i32_84 = arith.constant 0 : i32
    %142 = tpu.memref_slice %arg3[%141, %c0_i32_84] : memref<64x32xf32, #tpu.memory_space<any>> -> memref<1x32xf32, #tpu.memory_space<any>>
    %c42_i32_85 = arith.constant 42 : i32
    %c0_i32_86 = arith.constant 0 : i32
    %143 = tpu.memref_slice %arg5[%c42_i32_85, %c0_i32_86] : memref<48x32xf32, #tpu.memory_space<vmem>> -> memref<1x32xf32, #tpu.memory_space<vmem>>
    %144 = tpu.memref_slice %arg6[%c42_i32] : memref<48x!tpu.dma_semaphore, #tpu.memory_space<semaphore_mem>> -> memref<1x!tpu.dma_semaphore, #tpu.memory_space<semaphore_mem>>
    %145 = tpu.memref_squeeze %144 : memref<1x!tpu.dma_semaphore, #tpu.memory_space<semaphore_mem>> -> memref<!tpu.dma_semaphore, #tpu.memory_space<semaphore_mem>>
    tpu.enqueue_dma source(%142 : memref<1x32xf32, #tpu.memory_space<any>>) target(%143 : memref<1x32xf32, #tpu.memory_space<vmem>>) target_semaphore(%145 : memref<!tpu.dma_semaphore, #tpu.memory_space<semaphore_mem>>)
    %c18_i32_87 = arith.constant 18 : i32
    %146 = arith.addi %1, %c18_i32_87 : i32
    %c0_i32_88 = arith.constant 0 : i32
    %147 = arith.addi %146, %c0_i32_88 : i32
    %148 = arith.index_cast %147 : i32 to index
    %149 = memref.load %arg1[%148] : memref<96xi32, #tpu.memory_space<smem>>
    %c3_i32_89 = arith.constant 3 : i32
    %c0_i32_90 = arith.constant 0 : i32
    %150 = tpu.memref_slice %arg3[%149, %c0_i32_90] : memref<64x32xf32, #tpu.memory_space<any>> -> memref<1x32xf32, #tpu.memory_space<any>>
    %c3_i32_91 = arith.constant 3 : i32
    %c0_i32_92 = arith.constant 0 : i32
    %151 = tpu.memref_slice %arg5[%c3_i32_91, %c0_i32_92] : memref<48x32xf32, #tpu.memory_space<vmem>> -> memref<1x32xf32, #tpu.memory_space<vmem>>
    %152 = tpu.memref_slice %arg6[%c3_i32_89] : memref<48x!tpu.dma_semaphore, #tpu.memory_space<semaphore_mem>> -> memref<1x!tpu.dma_semaphore, #tpu.memory_space<semaphore_mem>>
    %153 = tpu.memref_squeeze %152 : memref<1x!tpu.dma_semaphore, #tpu.memory_space<semaphore_mem>> -> memref<!tpu.dma_semaphore, #tpu.memory_space<semaphore_mem>>
    tpu.enqueue_dma source(%150 : memref<1x32xf32, #tpu.memory_space<any>>) target(%151 : memref<1x32xf32, #tpu.memory_space<vmem>>) target_semaphore(%153 : memref<!tpu.dma_semaphore, #tpu.memory_space<semaphore_mem>>)
    %c18_i32_93 = arith.constant 18 : i32
    %154 = arith.addi %1, %c18_i32_93 : i32
    %c1_i32_94 = arith.constant 1 : i32
    %155 = arith.addi %154, %c1_i32_94 : i32
    %156 = arith.index_cast %155 : i32 to index
    %157 = memref.load %arg1[%156] : memref<96xi32, #tpu.memory_space<smem>>
    %c11_i32 = arith.constant 11 : i32
    %c0_i32_95 = arith.constant 0 : i32
    %158 = tpu.memref_slice %arg3[%157, %c0_i32_95] : memref<64x32xf32, #tpu.memory_space<any>> -> memref<1x32xf32, #tpu.memory_space<any>>
    %c11_i32_96 = arith.constant 11 : i32
    %c0_i32_97 = arith.constant 0 : i32
    %159 = tpu.memref_slice %arg5[%c11_i32_96, %c0_i32_97] : memref<48x32xf32, #tpu.memory_space<vmem>> -> memref<1x32xf32, #tpu.memory_space<vmem>>
    %160 = tpu.memref_slice %arg6[%c11_i32] : memref<48x!tpu.dma_semaphore, #tpu.memory_space<semaphore_mem>> -> memref<1x!tpu.dma_semaphore, #tpu.memory_space<semaphore_mem>>
    %161 = tpu.memref_squeeze %160 : memref<1x!tpu.dma_semaphore, #tpu.memory_space<semaphore_mem>> -> memref<!tpu.dma_semaphore, #tpu.memory_space<semaphore_mem>>
    tpu.enqueue_dma source(%158 : memref<1x32xf32, #tpu.memory_space<any>>) target(%159 : memref<1x32xf32, #tpu.memory_space<vmem>>) target_semaphore(%161 : memref<!tpu.dma_semaphore, #tpu.memory_space<semaphore_mem>>)
    %c18_i32_98 = arith.constant 18 : i32
    %162 = arith.addi %1, %c18_i32_98 : i32
    %c2_i32_99 = arith.constant 2 : i32
    %163 = arith.addi %162, %c2_i32_99 : i32
    %164 = arith.index_cast %163 : i32 to index
    %165 = memref.load %arg1[%164] : memref<96xi32, #tpu.memory_space<smem>>
    %c19_i32 = arith.constant 19 : i32
    %c0_i32_100 = arith.constant 0 : i32
    %166 = tpu.memref_slice %arg3[%165, %c0_i32_100] : memref<64x32xf32, #tpu.memory_space<any>> -> memref<1x32xf32, #tpu.memory_space<any>>
    %c19_i32_101 = arith.constant 19 : i32
    %c0_i32_102 = arith.constant 0 : i32
    %167 = tpu.memref_slice %arg5[%c19_i32_101, %c0_i32_102] : memref<48x32xf32, #tpu.memory_space<vmem>> -> memref<1x32xf32, #tpu.memory_space<vmem>>
    %168 = tpu.memref_slice %arg6[%c19_i32] : memref<48x!tpu.dma_semaphore, #tpu.memory_space<semaphore_mem>> -> memref<1x!tpu.dma_semaphore, #tpu.memory_space<semaphore_mem>>
    %169 = tpu.memref_squeeze %168 : memref<1x!tpu.dma_semaphore, #tpu.memory_space<semaphore_mem>> -> memref<!tpu.dma_semaphore, #tpu.memory_space<semaphore_mem>>
    tpu.enqueue_dma source(%166 : memref<1x32xf32, #tpu.memory_space<any>>) target(%167 : memref<1x32xf32, #tpu.memory_space<vmem>>) target_semaphore(%169 : memref<!tpu.dma_semaphore, #tpu.memory_space<semaphore_mem>>)
    %c18_i32_103 = arith.constant 18 : i32
    %170 = arith.addi %1, %c18_i32_103 : i32
    %c3_i32_104 = arith.constant 3 : i32
    %171 = arith.addi %170, %c3_i32_104 : i32
    %172 = arith.index_cast %171 : i32 to index
    %173 = memref.load %arg1[%172] : memref<96xi32, #tpu.memory_space<smem>>
    %c27_i32 = arith.constant 27 : i32
    %c0_i32_105 = arith.constant 0 : i32
    %174 = tpu.memref_slice %arg3[%173, %c0_i32_105] : memref<64x32xf32, #tpu.memory_space<any>> -> memref<1x32xf32, #tpu.memory_space<any>>
    %c27_i32_106 = arith.constant 27 : i32
    %c0_i32_107 = arith.constant 0 : i32
    %175 = tpu.memref_slice %arg5[%c27_i32_106, %c0_i32_107] : memref<48x32xf32, #tpu.memory_space<vmem>> -> memref<1x32xf32, #tpu.memory_space<vmem>>
    %176 = tpu.memref_slice %arg6[%c27_i32] : memref<48x!tpu.dma_semaphore, #tpu.memory_space<semaphore_mem>> -> memref<1x!tpu.dma_semaphore, #tpu.memory_space<semaphore_mem>>
    %177 = tpu.memref_squeeze %176 : memref<1x!tpu.dma_semaphore, #tpu.memory_space<semaphore_mem>> -> memref<!tpu.dma_semaphore, #tpu.memory_space<semaphore_mem>>
    tpu.enqueue_dma source(%174 : memref<1x32xf32, #tpu.memory_space<any>>) target(%175 : memref<1x32xf32, #tpu.memory_space<vmem>>) target_semaphore(%177 : memref<!tpu.dma_semaphore, #tpu.memory_space<semaphore_mem>>)
    %c18_i32_108 = arith.constant 18 : i32
    %178 = arith.addi %1, %c18_i32_108 : i32
    %c4_i32_109 = arith.constant 4 : i32
    %179 = arith.addi %178, %c4_i32_109 : i32
    %180 = arith.index_cast %179 : i32 to index
    %181 = memref.load %arg1[%180] : memref<96xi32, #tpu.memory_space<smem>>
    %c35_i32 = arith.constant 35 : i32
    %c0_i32_110 = arith.constant 0 : i32
    %182 = tpu.memref_slice %arg3[%181, %c0_i32_110] : memref<64x32xf32, #tpu.memory_space<any>> -> memref<1x32xf32, #tpu.memory_space<any>>
    %c35_i32_111 = arith.constant 35 : i32
    %c0_i32_112 = arith.constant 0 : i32
    %183 = tpu.memref_slice %arg5[%c35_i32_111, %c0_i32_112] : memref<48x32xf32, #tpu.memory_space<vmem>> -> memref<1x32xf32, #tpu.memory_space<vmem>>
    %184 = tpu.memref_slice %arg6[%c35_i32] : memref<48x!tpu.dma_semaphore, #tpu.memory_space<semaphore_mem>> -> memref<1x!tpu.dma_semaphore, #tpu.memory_space<semaphore_mem>>
    %185 = tpu.memref_squeeze %184 : memref<1x!tpu.dma_semaphore, #tpu.memory_space<semaphore_mem>> -> memref<!tpu.dma_semaphore, #tpu.memory_space<semaphore_mem>>
    tpu.enqueue_dma source(%182 : memref<1x32xf32, #tpu.memory_space<any>>) target(%183 : memref<1x32xf32, #tpu.memory_space<vmem>>) target_semaphore(%185 : memref<!tpu.dma_semaphore, #tpu.memory_space<semaphore_mem>>)
    %c18_i32_113 = arith.constant 18 : i32
    %186 = arith.addi %1, %c18_i32_113 : i32
    %c5_i32_114 = arith.constant 5 : i32
    %187 = arith.addi %186, %c5_i32_114 : i32
    %188 = arith.index_cast %187 : i32 to index
    %189 = memref.load %arg1[%188] : memref<96xi32, #tpu.memory_space<smem>>
    %c43_i32 = arith.constant 43 : i32
    %c0_i32_115 = arith.constant 0 : i32
    %190 = tpu.memref_slice %arg3[%189, %c0_i32_115] : memref<64x32xf32, #tpu.memory_space<any>> -> memref<1x32xf32, #tpu.memory_space<any>>
    %c43_i32_116 = arith.constant 43 : i32
    %c0_i32_117 = arith.constant 0 : i32
    %191 = tpu.memref_slice %arg5[%c43_i32_116, %c0_i32_117] : memref<48x32xf32, #tpu.memory_space<vmem>> -> memref<1x32xf32, #tpu.memory_space<vmem>>
    %192 = tpu.memref_slice %arg6[%c43_i32] : memref<48x!tpu.dma_semaphore, #tpu.memory_space<semaphore_mem>> -> memref<1x!tpu.dma_semaphore, #tpu.memory_space<semaphore_mem>>
    %193 = tpu.memref_squeeze %192 : memref<1x!tpu.dma_semaphore, #tpu.memory_space<semaphore_mem>> -> memref<!tpu.dma_semaphore, #tpu.memory_space<semaphore_mem>>
    tpu.enqueue_dma source(%190 : memref<1x32xf32, #tpu.memory_space<any>>) target(%191 : memref<1x32xf32, #tpu.memory_space<vmem>>) target_semaphore(%193 : memref<!tpu.dma_semaphore, #tpu.memory_space<semaphore_mem>>)
    %c24_i32_118 = arith.constant 24 : i32
    %194 = arith.addi %1, %c24_i32_118 : i32
    %c0_i32_119 = arith.constant 0 : i32
    %195 = arith.addi %194, %c0_i32_119 : i32
    %196 = arith.index_cast %195 : i32 to index
    %197 = memref.load %arg1[%196] : memref<96xi32, #tpu.memory_space<smem>>
    %c4_i32_120 = arith.constant 4 : i32
    %c0_i32_121 = arith.constant 0 : i32
    %198 = tpu.memref_slice %arg3[%197, %c0_i32_121] : memref<64x32xf32, #tpu.memory_space<any>> -> memref<1x32xf32, #tpu.memory_space<any>>
    %c4_i32_122 = arith.constant 4 : i32
    %c0_i32_123 = arith.constant 0 : i32
    %199 = tpu.memref_slice %arg5[%c4_i32_122, %c0_i32_123] : memref<48x32xf32, #tpu.memory_space<vmem>> -> memref<1x32xf32, #tpu.memory_space<vmem>>
    %200 = tpu.memref_slice %arg6[%c4_i32_120] : memref<48x!tpu.dma_semaphore, #tpu.memory_space<semaphore_mem>> -> memref<1x!tpu.dma_semaphore, #tpu.memory_space<semaphore_mem>>
    %201 = tpu.memref_squeeze %200 : memref<1x!tpu.dma_semaphore, #tpu.memory_space<semaphore_mem>> -> memref<!tpu.dma_semaphore, #tpu.memory_space<semaphore_mem>>
    tpu.enqueue_dma source(%198 : memref<1x32xf32, #tpu.memory_space<any>>) target(%199 : memref<1x32xf32, #tpu.memory_space<vmem>>) target_semaphore(%201 : memref<!tpu.dma_semaphore, #tpu.memory_space<semaphore_mem>>)
    %c24_i32_124 = arith.constant 24 : i32
    %202 = arith.addi %1, %c24_i32_124 : i32
    %c1_i32_125 = arith.constant 1 : i32
    %203 = arith.addi %202, %c1_i32_125 : i32
    %204 = arith.index_cast %203 : i32 to index
    %205 = memref.load %arg1[%204] : memref<96xi32, #tpu.memory_space<smem>>
    %c12_i32_126 = arith.constant 12 : i32
    %c0_i32_127 = arith.constant 0 : i32
    %206 = tpu.memref_slice %arg3[%205, %c0_i32_127] : memref<64x32xf32, #tpu.memory_space<any>> -> memref<1x32xf32, #tpu.memory_space<any>>
    %c12_i32_128 = arith.constant 12 : i32
    %c0_i32_129 = arith.constant 0 : i32
    %207 = tpu.memref_slice %arg5[%c12_i32_128, %c0_i32_129] : memref<48x32xf32, #tpu.memory_space<vmem>> -> memref<1x32xf32, #tpu.memory_space<vmem>>
    %208 = tpu.memref_slice %arg6[%c12_i32_126] : memref<48x!tpu.dma_semaphore, #tpu.memory_space<semaphore_mem>> -> memref<1x!tpu.dma_semaphore, #tpu.memory_space<semaphore_mem>>
    %209 = tpu.memref_squeeze %208 : memref<1x!tpu.dma_semaphore, #tpu.memory_space<semaphore_mem>> -> memref<!tpu.dma_semaphore, #tpu.memory_space<semaphore_mem>>
    tpu.enqueue_dma source(%206 : memref<1x32xf32, #tpu.memory_space<any>>) target(%207 : memref<1x32xf32, #tpu.memory_space<vmem>>) target_semaphore(%209 : memref<!tpu.dma_semaphore, #tpu.memory_space<semaphore_mem>>)
    %c24_i32_130 = arith.constant 24 : i32
    %210 = arith.addi %1, %c24_i32_130 : i32
    %c2_i32_131 = arith.constant 2 : i32
    %211 = arith.addi %210, %c2_i32_131 : i32
    %212 = arith.index_cast %211 : i32 to index
    %213 = memref.load %arg1[%212] : memref<96xi32, #tpu.memory_space<smem>>
    %c20_i32 = arith.constant 20 : i32
    %c0_i32_132 = arith.constant 0 : i32
    %214 = tpu.memref_slice %arg3[%213, %c0_i32_132] : memref<64x32xf32, #tpu.memory_space<any>> -> memref<1x32xf32, #tpu.memory_space<any>>
    %c20_i32_133 = arith.constant 20 : i32
    %c0_i32_134 = arith.constant 0 : i32
    %215 = tpu.memref_slice %arg5[%c20_i32_133, %c0_i32_134] : memref<48x32xf32, #tpu.memory_space<vmem>> -> memref<1x32xf32, #tpu.memory_space<vmem>>
    %216 = tpu.memref_slice %arg6[%c20_i32] : memref<48x!tpu.dma_semaphore, #tpu.memory_space<semaphore_mem>> -> memref<1x!tpu.dma_semaphore, #tpu.memory_space<semaphore_mem>>
    %217 = tpu.memref_squeeze %216 : memref<1x!tpu.dma_semaphore, #tpu.memory_space<semaphore_mem>> -> memref<!tpu.dma_semaphore, #tpu.memory_space<semaphore_mem>>
    tpu.enqueue_dma source(%214 : memref<1x32xf32, #tpu.memory_space<any>>) target(%215 : memref<1x32xf32, #tpu.memory_space<vmem>>) target_semaphore(%217 : memref<!tpu.dma_semaphore, #tpu.memory_space<semaphore_mem>>)
    %c24_i32_135 = arith.constant 24 : i32
    %218 = arith.addi %1, %c24_i32_135 : i32
    %c3_i32_136 = arith.constant 3 : i32
    %219 = arith.addi %218, %c3_i32_136 : i32
    %220 = arith.index_cast %219 : i32 to index
    %221 = memref.load %arg1[%220] : memref<96xi32, #tpu.memory_space<smem>>
    %c28_i32 = arith.constant 28 : i32
    %c0_i32_137 = arith.constant 0 : i32
    %222 = tpu.memref_slice %arg3[%221, %c0_i32_137] : memref<64x32xf32, #tpu.memory_space<any>> -> memref<1x32xf32, #tpu.memory_space<any>>
    %c28_i32_138 = arith.constant 28 : i32
    %c0_i32_139 = arith.constant 0 : i32
    %223 = tpu.memref_slice %arg5[%c28_i32_138, %c0_i32_139] : memref<48x32xf32, #tpu.memory_space<vmem>> -> memref<1x32xf32, #tpu.memory_space<vmem>>
    %224 = tpu.memref_slice %arg6[%c28_i32] : memref<48x!tpu.dma_semaphore, #tpu.memory_space<semaphore_mem>> -> memref<1x!tpu.dma_semaphore, #tpu.memory_space<semaphore_mem>>
    %225 = tpu.memref_squeeze %224 : memref<1x!tpu.dma_semaphore, #tpu.memory_space<semaphore_mem>> -> memref<!tpu.dma_semaphore, #tpu.memory_space<semaphore_mem>>
    tpu.enqueue_dma source(%222 : memref<1x32xf32, #tpu.memory_space<any>>) target(%223 : memref<1x32xf32, #tpu.memory_space<vmem>>) target_semaphore(%225 : memref<!tpu.dma_semaphore, #tpu.memory_space<semaphore_mem>>)
    %c24_i32_140 = arith.constant 24 : i32
    %226 = arith.addi %1, %c24_i32_140 : i32
    %c4_i32_141 = arith.constant 4 : i32
    %227 = arith.addi %226, %c4_i32_141 : i32
    %228 = arith.index_cast %227 : i32 to index
    %229 = memref.load %arg1[%228] : memref<96xi32, #tpu.memory_space<smem>>
    %c36_i32 = arith.constant 36 : i32
    %c0_i32_142 = arith.constant 0 : i32
    %230 = tpu.memref_slice %arg3[%229, %c0_i32_142] : memref<64x32xf32, #tpu.memory_space<any>> -> memref<1x32xf32, #tpu.memory_space<any>>
    %c36_i32_143 = arith.constant 36 : i32
    %c0_i32_144 = arith.constant 0 : i32
    %231 = tpu.memref_slice %arg5[%c36_i32_143, %c0_i32_144] : memref<48x32xf32, #tpu.memory_space<vmem>> -> memref<1x32xf32, #tpu.memory_space<vmem>>
    %232 = tpu.memref_slice %arg6[%c36_i32] : memref<48x!tpu.dma_semaphore, #tpu.memory_space<semaphore_mem>> -> memref<1x!tpu.dma_semaphore, #tpu.memory_space<semaphore_mem>>
    %233 = tpu.memref_squeeze %232 : memref<1x!tpu.dma_semaphore, #tpu.memory_space<semaphore_mem>> -> memref<!tpu.dma_semaphore, #tpu.memory_space<semaphore_mem>>
    tpu.enqueue_dma source(%230 : memref<1x32xf32, #tpu.memory_space<any>>) target(%231 : memref<1x32xf32, #tpu.memory_space<vmem>>) target_semaphore(%233 : memref<!tpu.dma_semaphore, #tpu.memory_space<semaphore_mem>>)
    %c24_i32_145 = arith.constant 24 : i32
    %234 = arith.addi %1, %c24_i32_145 : i32
    %c5_i32_146 = arith.constant 5 : i32
    %235 = arith.addi %234, %c5_i32_146 : i32
    %236 = arith.index_cast %235 : i32 to index
    %237 = memref.load %arg1[%236] : memref<96xi32, #tpu.memory_space<smem>>
    %c44_i32 = arith.constant 44 : i32
    %c0_i32_147 = arith.constant 0 : i32
    %238 = tpu.memref_slice %arg3[%237, %c0_i32_147] : memref<64x32xf32, #tpu.memory_space<any>> -> memref<1x32xf32, #tpu.memory_space<any>>
    %c44_i32_148 = arith.constant 44 : i32
    %c0_i32_149 = arith.constant 0 : i32
    %239 = tpu.memref_slice %arg5[%c44_i32_148, %c0_i32_149] : memref<48x32xf32, #tpu.memory_space<vmem>> -> memref<1x32xf32, #tpu.memory_space<vmem>>
    %240 = tpu.memref_slice %arg6[%c44_i32] : memref<48x!tpu.dma_semaphore, #tpu.memory_space<semaphore_mem>> -> memref<1x!tpu.dma_semaphore, #tpu.memory_space<semaphore_mem>>
    %241 = tpu.memref_squeeze %240 : memref<1x!tpu.dma_semaphore, #tpu.memory_space<semaphore_mem>> -> memref<!tpu.dma_semaphore, #tpu.memory_space<semaphore_mem>>
    tpu.enqueue_dma source(%238 : memref<1x32xf32, #tpu.memory_space<any>>) target(%239 : memref<1x32xf32, #tpu.memory_space<vmem>>) target_semaphore(%241 : memref<!tpu.dma_semaphore, #tpu.memory_space<semaphore_mem>>)
    %c30_i32 = arith.constant 30 : i32
    %242 = arith.addi %1, %c30_i32 : i32
    %c0_i32_150 = arith.constant 0 : i32
    %243 = arith.addi %242, %c0_i32_150 : i32
    %244 = arith.index_cast %243 : i32 to index
    %245 = memref.load %arg1[%244] : memref<96xi32, #tpu.memory_space<smem>>
    %c5_i32_151 = arith.constant 5 : i32
    %c0_i32_152 = arith.constant 0 : i32
    %246 = tpu.memref_slice %arg3[%245, %c0_i32_152] : memref<64x32xf32, #tpu.memory_space<any>> -> memref<1x32xf32, #tpu.memory_space<any>>
    %c5_i32_153 = arith.constant 5 : i32
    %c0_i32_154 = arith.constant 0 : i32
    %247 = tpu.memref_slice %arg5[%c5_i32_153, %c0_i32_154] : memref<48x32xf32, #tpu.memory_space<vmem>> -> memref<1x32xf32, #tpu.memory_space<vmem>>
    %248 = tpu.memref_slice %arg6[%c5_i32_151] : memref<48x!tpu.dma_semaphore, #tpu.memory_space<semaphore_mem>> -> memref<1x!tpu.dma_semaphore, #tpu.memory_space<semaphore_mem>>
    %249 = tpu.memref_squeeze %248 : memref<1x!tpu.dma_semaphore, #tpu.memory_space<semaphore_mem>> -> memref<!tpu.dma_semaphore, #tpu.memory_space<semaphore_mem>>
    tpu.enqueue_dma source(%246 : memref<1x32xf32, #tpu.memory_space<any>>) target(%247 : memref<1x32xf32, #tpu.memory_space<vmem>>) target_semaphore(%249 : memref<!tpu.dma_semaphore, #tpu.memory_space<semaphore_mem>>)
    %c30_i32_155 = arith.constant 30 : i32
    %250 = arith.addi %1, %c30_i32_155 : i32
    %c1_i32_156 = arith.constant 1 : i32
    %251 = arith.addi %250, %c1_i32_156 : i32
    %252 = arith.index_cast %251 : i32 to index
    %253 = memref.load %arg1[%252] : memref<96xi32, #tpu.memory_space<smem>>
    %c13_i32 = arith.constant 13 : i32
    %c0_i32_157 = arith.constant 0 : i32
    %254 = tpu.memref_slice %arg3[%253, %c0_i32_157] : memref<64x32xf32, #tpu.memory_space<any>> -> memref<1x32xf32, #tpu.memory_space<any>>
    %c13_i32_158 = arith.constant 13 : i32
    %c0_i32_159 = arith.constant 0 : i32
    %255 = tpu.memref_slice %arg5[%c13_i32_158, %c0_i32_159] : memref<48x32xf32, #tpu.memory_space<vmem>> -> memref<1x32xf32, #tpu.memory_space<vmem>>
    %256 = tpu.memref_slice %arg6[%c13_i32] : memref<48x!tpu.dma_semaphore, #tpu.memory_space<semaphore_mem>> -> memref<1x!tpu.dma_semaphore, #tpu.memory_space<semaphore_mem>>
    %257 = tpu.memref_squeeze %256 : memref<1x!tpu.dma_semaphore, #tpu.memory_space<semaphore_mem>> -> memref<!tpu.dma_semaphore, #tpu.memory_space<semaphore_mem>>
    tpu.enqueue_dma source(%254 : memref<1x32xf32, #tpu.memory_space<any>>) target(%255 : memref<1x32xf32, #tpu.memory_space<vmem>>) target_semaphore(%257 : memref<!tpu.dma_semaphore, #tpu.memory_space<semaphore_mem>>)
    %c30_i32_160 = arith.constant 30 : i32
    %258 = arith.addi %1, %c30_i32_160 : i32
    %c2_i32_161 = arith.constant 2 : i32
    %259 = arith.addi %258, %c2_i32_161 : i32
    %260 = arith.index_cast %259 : i32 to index
    %261 = memref.load %arg1[%260] : memref<96xi32, #tpu.memory_space<smem>>
    %c21_i32 = arith.constant 21 : i32
    %c0_i32_162 = arith.constant 0 : i32
    %262 = tpu.memref_slice %arg3[%261, %c0_i32_162] : memref<64x32xf32, #tpu.memory_space<any>> -> memref<1x32xf32, #tpu.memory_space<any>>
    %c21_i32_163 = arith.constant 21 : i32
    %c0_i32_164 = arith.constant 0 : i32
    %263 = tpu.memref_slice %arg5[%c21_i32_163, %c0_i32_164] : memref<48x32xf32, #tpu.memory_space<vmem>> -> memref<1x32xf32, #tpu.memory_space<vmem>>
    %264 = tpu.memref_slice %arg6[%c21_i32] : memref<48x!tpu.dma_semaphore, #tpu.memory_space<semaphore_mem>> -> memref<1x!tpu.dma_semaphore, #tpu.memory_space<semaphore_mem>>
    %265 = tpu.memref_squeeze %264 : memref<1x!tpu.dma_semaphore, #tpu.memory_space<semaphore_mem>> -> memref<!tpu.dma_semaphore, #tpu.memory_space<semaphore_mem>>
    tpu.enqueue_dma source(%262 : memref<1x32xf32, #tpu.memory_space<any>>) target(%263 : memref<1x32xf32, #tpu.memory_space<vmem>>) target_semaphore(%265 : memref<!tpu.dma_semaphore, #tpu.memory_space<semaphore_mem>>)
    %c30_i32_165 = arith.constant 30 : i32
    %266 = arith.addi %1, %c30_i32_165 : i32
    %c3_i32_166 = arith.constant 3 : i32
    %267 = arith.addi %266, %c3_i32_166 : i32
    %268 = arith.index_cast %267 : i32 to index
    %269 = memref.load %arg1[%268] : memref<96xi32, #tpu.memory_space<smem>>
    %c29_i32 = arith.constant 29 : i32
    %c0_i32_167 = arith.constant 0 : i32
    %270 = tpu.memref_slice %arg3[%269, %c0_i32_167] : memref<64x32xf32, #tpu.memory_space<any>> -> memref<1x32xf32, #tpu.memory_space<any>>
    %c29_i32_168 = arith.constant 29 : i32
    %c0_i32_169 = arith.constant 0 : i32
    %271 = tpu.memref_slice %arg5[%c29_i32_168, %c0_i32_169] : memref<48x32xf32, #tpu.memory_space<vmem>> -> memref<1x32xf32, #tpu.memory_space<vmem>>
    %272 = tpu.memref_slice %arg6[%c29_i32] : memref<48x!tpu.dma_semaphore, #tpu.memory_space<semaphore_mem>> -> memref<1x!tpu.dma_semaphore, #tpu.memory_space<semaphore_mem>>
    %273 = tpu.memref_squeeze %272 : memref<1x!tpu.dma_semaphore, #tpu.memory_space<semaphore_mem>> -> memref<!tpu.dma_semaphore, #tpu.memory_space<semaphore_mem>>
    tpu.enqueue_dma source(%270 : memref<1x32xf32, #tpu.memory_space<any>>) target(%271 : memref<1x32xf32, #tpu.memory_space<vmem>>) target_semaphore(%273 : memref<!tpu.dma_semaphore, #tpu.memory_space<semaphore_mem>>)
    %c30_i32_170 = arith.constant 30 : i32
    %274 = arith.addi %1, %c30_i32_170 : i32
    %c4_i32_171 = arith.constant 4 : i32
    %275 = arith.addi %274, %c4_i32_171 : i32
    %276 = arith.index_cast %275 : i32 to index
    %277 = memref.load %arg1[%276] : memref<96xi32, #tpu.memory_space<smem>>
    %c37_i32 = arith.constant 37 : i32
    %c0_i32_172 = arith.constant 0 : i32
    %278 = tpu.memref_slice %arg3[%277, %c0_i32_172] : memref<64x32xf32, #tpu.memory_space<any>> -> memref<1x32xf32, #tpu.memory_space<any>>
    %c37_i32_173 = arith.constant 37 : i32
    %c0_i32_174 = arith.constant 0 : i32
    %279 = tpu.memref_slice %arg5[%c37_i32_173, %c0_i32_174] : memref<48x32xf32, #tpu.memory_space<vmem>> -> memref<1x32xf32, #tpu.memory_space<vmem>>
    %280 = tpu.memref_slice %arg6[%c37_i32] : memref<48x!tpu.dma_semaphore, #tpu.memory_space<semaphore_mem>> -> memref<1x!tpu.dma_semaphore, #tpu.memory_space<semaphore_mem>>
    %281 = tpu.memref_squeeze %280 : memref<1x!tpu.dma_semaphore, #tpu.memory_space<semaphore_mem>> -> memref<!tpu.dma_semaphore, #tpu.memory_space<semaphore_mem>>
    tpu.enqueue_dma source(%278 : memref<1x32xf32, #tpu.memory_space<any>>) target(%279 : memref<1x32xf32, #tpu.memory_space<vmem>>) target_semaphore(%281 : memref<!tpu.dma_semaphore, #tpu.memory_space<semaphore_mem>>)
    %c30_i32_175 = arith.constant 30 : i32
    %282 = arith.addi %1, %c30_i32_175 : i32
    %c5_i32_176 = arith.constant 5 : i32
    %283 = arith.addi %282, %c5_i32_176 : i32
    %284 = arith.index_cast %283 : i32 to index
    %285 = memref.load %arg1[%284] : memref<96xi32, #tpu.memory_space<smem>>
    %c45_i32 = arith.constant 45 : i32
    %c0_i32_177 = arith.constant 0 : i32
    %286 = tpu.memref_slice %arg3[%285, %c0_i32_177] : memref<64x32xf32, #tpu.memory_space<any>> -> memref<1x32xf32, #tpu.memory_space<any>>
    %c45_i32_178 = arith.constant 45 : i32
    %c0_i32_179 = arith.constant 0 : i32
    %287 = tpu.memref_slice %arg5[%c45_i32_178, %c0_i32_179] : memref<48x32xf32, #tpu.memory_space<vmem>> -> memref<1x32xf32, #tpu.memory_space<vmem>>
    %288 = tpu.memref_slice %arg6[%c45_i32] : memref<48x!tpu.dma_semaphore, #tpu.memory_space<semaphore_mem>> -> memref<1x!tpu.dma_semaphore, #tpu.memory_space<semaphore_mem>>
    %289 = tpu.memref_squeeze %288 : memref<1x!tpu.dma_semaphore, #tpu.memory_space<semaphore_mem>> -> memref<!tpu.dma_semaphore, #tpu.memory_space<semaphore_mem>>
    tpu.enqueue_dma source(%286 : memref<1x32xf32, #tpu.memory_space<any>>) target(%287 : memref<1x32xf32, #tpu.memory_space<vmem>>) target_semaphore(%289 : memref<!tpu.dma_semaphore, #tpu.memory_space<semaphore_mem>>)
    %c36_i32_180 = arith.constant 36 : i32
    %290 = arith.addi %1, %c36_i32_180 : i32
    %c0_i32_181 = arith.constant 0 : i32
    %291 = arith.addi %290, %c0_i32_181 : i32
    %292 = arith.index_cast %291 : i32 to index
    %293 = memref.load %arg1[%292] : memref<96xi32, #tpu.memory_space<smem>>
    %c6_i32_182 = arith.constant 6 : i32
    %c0_i32_183 = arith.constant 0 : i32
    %294 = tpu.memref_slice %arg3[%293, %c0_i32_183] : memref<64x32xf32, #tpu.memory_space<any>> -> memref<1x32xf32, #tpu.memory_space<any>>
    %c6_i32_184 = arith.constant 6 : i32
    %c0_i32_185 = arith.constant 0 : i32
    %295 = tpu.memref_slice %arg5[%c6_i32_184, %c0_i32_185] : memref<48x32xf32, #tpu.memory_space<vmem>> -> memref<1x32xf32, #tpu.memory_space<vmem>>
    %296 = tpu.memref_slice %arg6[%c6_i32_182] : memref<48x!tpu.dma_semaphore, #tpu.memory_space<semaphore_mem>> -> memref<1x!tpu.dma_semaphore, #tpu.memory_space<semaphore_mem>>
    %297 = tpu.memref_squeeze %296 : memref<1x!tpu.dma_semaphore, #tpu.memory_space<semaphore_mem>> -> memref<!tpu.dma_semaphore, #tpu.memory_space<semaphore_mem>>
    tpu.enqueue_dma source(%294 : memref<1x32xf32, #tpu.memory_space<any>>) target(%295 : memref<1x32xf32, #tpu.memory_space<vmem>>) target_semaphore(%297 : memref<!tpu.dma_semaphore, #tpu.memory_space<semaphore_mem>>)
    %c36_i32_186 = arith.constant 36 : i32
    %298 = arith.addi %1, %c36_i32_186 : i32
    %c1_i32_187 = arith.constant 1 : i32
    %299 = arith.addi %298, %c1_i32_187 : i32
    %300 = arith.index_cast %299 : i32 to index
    %301 = memref.load %arg1[%300] : memref<96xi32, #tpu.memory_space<smem>>
    %c14_i32 = arith.constant 14 : i32
    %c0_i32_188 = arith.constant 0 : i32
    %302 = tpu.memref_slice %arg3[%301, %c0_i32_188] : memref<64x32xf32, #tpu.memory_space<any>> -> memref<1x32xf32, #tpu.memory_space<any>>
    %c14_i32_189 = arith.constant 14 : i32
    %c0_i32_190 = arith.constant 0 : i32
    %303 = tpu.memref_slice %arg5[%c14_i32_189, %c0_i32_190] : memref<48x32xf32, #tpu.memory_space<vmem>> -> memref<1x32xf32, #tpu.memory_space<vmem>>
    %304 = tpu.memref_slice %arg6[%c14_i32] : memref<48x!tpu.dma_semaphore, #tpu.memory_space<semaphore_mem>> -> memref<1x!tpu.dma_semaphore, #tpu.memory_space<semaphore_mem>>
    %305 = tpu.memref_squeeze %304 : memref<1x!tpu.dma_semaphore, #tpu.memory_space<semaphore_mem>> -> memref<!tpu.dma_semaphore, #tpu.memory_space<semaphore_mem>>
    tpu.enqueue_dma source(%302 : memref<1x32xf32, #tpu.memory_space<any>>) target(%303 : memref<1x32xf32, #tpu.memory_space<vmem>>) target_semaphore(%305 : memref<!tpu.dma_semaphore, #tpu.memory_space<semaphore_mem>>)
    %c36_i32_191 = arith.constant 36 : i32
    %306 = arith.addi %1, %c36_i32_191 : i32
    %c2_i32_192 = arith.constant 2 : i32
    %307 = arith.addi %306, %c2_i32_192 : i32
    %308 = arith.index_cast %307 : i32 to index
    %309 = memref.load %arg1[%308] : memref<96xi32, #tpu.memory_space<smem>>
    %c22_i32 = arith.constant 22 : i32
    %c0_i32_193 = arith.constant 0 : i32
    %310 = tpu.memref_slice %arg3[%309, %c0_i32_193] : memref<64x32xf32, #tpu.memory_space<any>> -> memref<1x32xf32, #tpu.memory_space<any>>
    %c22_i32_194 = arith.constant 22 : i32
    %c0_i32_195 = arith.constant 0 : i32
    %311 = tpu.memref_slice %arg5[%c22_i32_194, %c0_i32_195] : memref<48x32xf32, #tpu.memory_space<vmem>> -> memref<1x32xf32, #tpu.memory_space<vmem>>
    %312 = tpu.memref_slice %arg6[%c22_i32] : memref<48x!tpu.dma_semaphore, #tpu.memory_space<semaphore_mem>> -> memref<1x!tpu.dma_semaphore, #tpu.memory_space<semaphore_mem>>
    %313 = tpu.memref_squeeze %312 : memref<1x!tpu.dma_semaphore, #tpu.memory_space<semaphore_mem>> -> memref<!tpu.dma_semaphore, #tpu.memory_space<semaphore_mem>>
    tpu.enqueue_dma source(%310 : memref<1x32xf32, #tpu.memory_space<any>>) target(%311 : memref<1x32xf32, #tpu.memory_space<vmem>>) target_semaphore(%313 : memref<!tpu.dma_semaphore, #tpu.memory_space<semaphore_mem>>)
    %c36_i32_196 = arith.constant 36 : i32
    %314 = arith.addi %1, %c36_i32_196 : i32
    %c3_i32_197 = arith.constant 3 : i32
    %315 = arith.addi %314, %c3_i32_197 : i32
    %316 = arith.index_cast %315 : i32 to index
    %317 = memref.load %arg1[%316] : memref<96xi32, #tpu.memory_space<smem>>
    %c30_i32_198 = arith.constant 30 : i32
    %c0_i32_199 = arith.constant 0 : i32
    %318 = tpu.memref_slice %arg3[%317, %c0_i32_199] : memref<64x32xf32, #tpu.memory_space<any>> -> memref<1x32xf32, #tpu.memory_space<any>>
    %c30_i32_200 = arith.constant 30 : i32
    %c0_i32_201 = arith.constant 0 : i32
    %319 = tpu.memref_slice %arg5[%c30_i32_200, %c0_i32_201] : memref<48x32xf32, #tpu.memory_space<vmem>> -> memref<1x32xf32, #tpu.memory_space<vmem>>
    %320 = tpu.memref_slice %arg6[%c30_i32_198] : memref<48x!tpu.dma_semaphore, #tpu.memory_space<semaphore_mem>> -> memref<1x!tpu.dma_semaphore, #tpu.memory_space<semaphore_mem>>
    %321 = tpu.memref_squeeze %320 : memref<1x!tpu.dma_semaphore, #tpu.memory_space<semaphore_mem>> -> memref<!tpu.dma_semaphore, #tpu.memory_space<semaphore_mem>>
    tpu.enqueue_dma source(%318 : memref<1x32xf32, #tpu.memory_space<any>>) target(%319 : memref<1x32xf32, #tpu.memory_space<vmem>>) target_semaphore(%321 : memref<!tpu.dma_semaphore, #tpu.memory_space<semaphore_mem>>)
    %c36_i32_202 = arith.constant 36 : i32
    %322 = arith.addi %1, %c36_i32_202 : i32
    %c4_i32_203 = arith.constant 4 : i32
    %323 = arith.addi %322, %c4_i32_203 : i32
    %324 = arith.index_cast %323 : i32 to index
    %325 = memref.load %arg1[%324] : memref<96xi32, #tpu.memory_space<smem>>
    %c38_i32 = arith.constant 38 : i32
    %c0_i32_204 = arith.constant 0 : i32
    %326 = tpu.memref_slice %arg3[%325, %c0_i32_204] : memref<64x32xf32, #tpu.memory_space<any>> -> memref<1x32xf32, #tpu.memory_space<any>>
    %c38_i32_205 = arith.constant 38 : i32
    %c0_i32_206 = arith.constant 0 : i32
    %327 = tpu.memref_slice %arg5[%c38_i32_205, %c0_i32_206] : memref<48x32xf32, #tpu.memory_space<vmem>> -> memref<1x32xf32, #tpu.memory_space<vmem>>
    %328 = tpu.memref_slice %arg6[%c38_i32] : memref<48x!tpu.dma_semaphore, #tpu.memory_space<semaphore_mem>> -> memref<1x!tpu.dma_semaphore, #tpu.memory_space<semaphore_mem>>
    %329 = tpu.memref_squeeze %328 : memref<1x!tpu.dma_semaphore, #tpu.memory_space<semaphore_mem>> -> memref<!tpu.dma_semaphore, #tpu.memory_space<semaphore_mem>>
    tpu.enqueue_dma source(%326 : memref<1x32xf32, #tpu.memory_space<any>>) target(%327 : memref<1x32xf32, #tpu.memory_space<vmem>>) target_semaphore(%329 : memref<!tpu.dma_semaphore, #tpu.memory_space<semaphore_mem>>)
    %c36_i32_207 = arith.constant 36 : i32
    %330 = arith.addi %1, %c36_i32_207 : i32
    %c5_i32_208 = arith.constant 5 : i32
    %331 = arith.addi %330, %c5_i32_208 : i32
    %332 = arith.index_cast %331 : i32 to index
    %333 = memref.load %arg1[%332] : memref<96xi32, #tpu.memory_space<smem>>
    %c46_i32 = arith.constant 46 : i32
    %c0_i32_209 = arith.constant 0 : i32
    %334 = tpu.memref_slice %arg3[%333, %c0_i32_209] : memref<64x32xf32, #tpu.memory_space<any>> -> memref<1x32xf32, #tpu.memory_space<any>>
    %c46_i32_210 = arith.constant 46 : i32
    %c0_i32_211 = arith.constant 0 : i32
    %335 = tpu.memref_slice %arg5[%c46_i32_210, %c0_i32_211] : memref<48x32xf32, #tpu.memory_space<vmem>> -> memref<1x32xf32, #tpu.memory_space<vmem>>
    %336 = tpu.memref_slice %arg6[%c46_i32] : memref<48x!tpu.dma_semaphore, #tpu.memory_space<semaphore_mem>> -> memref<1x!tpu.dma_semaphore, #tpu.memory_space<semaphore_mem>>
    %337 = tpu.memref_squeeze %336 : memref<1x!tpu.dma_semaphore, #tpu.memory_space<semaphore_mem>> -> memref<!tpu.dma_semaphore, #tpu.memory_space<semaphore_mem>>
    tpu.enqueue_dma source(%334 : memref<1x32xf32, #tpu.memory_space<any>>) target(%335 : memref<1x32xf32, #tpu.memory_space<vmem>>) target_semaphore(%337 : memref<!tpu.dma_semaphore, #tpu.memory_space<semaphore_mem>>)
    %c42_i32_212 = arith.constant 42 : i32
    %338 = arith.addi %1, %c42_i32_212 : i32
    %c0_i32_213 = arith.constant 0 : i32
    %339 = arith.addi %338, %c0_i32_213 : i32
    %340 = arith.index_cast %339 : i32 to index
    %341 = memref.load %arg1[%340] : memref<96xi32, #tpu.memory_space<smem>>
    %c7_i32 = arith.constant 7 : i32
    %c0_i32_214 = arith.constant 0 : i32
    %342 = tpu.memref_slice %arg3[%341, %c0_i32_214] : memref<64x32xf32, #tpu.memory_space<any>> -> memref<1x32xf32, #tpu.memory_space<any>>
    %c7_i32_215 = arith.constant 7 : i32
    %c0_i32_216 = arith.constant 0 : i32
    %343 = tpu.memref_slice %arg5[%c7_i32_215, %c0_i32_216] : memref<48x32xf32, #tpu.memory_space<vmem>> -> memref<1x32xf32, #tpu.memory_space<vmem>>
    %344 = tpu.memref_slice %arg6[%c7_i32] : memref<48x!tpu.dma_semaphore, #tpu.memory_space<semaphore_mem>> -> memref<1x!tpu.dma_semaphore, #tpu.memory_space<semaphore_mem>>
    %345 = tpu.memref_squeeze %344 : memref<1x!tpu.dma_semaphore, #tpu.memory_space<semaphore_mem>> -> memref<!tpu.dma_semaphore, #tpu.memory_space<semaphore_mem>>
    tpu.enqueue_dma source(%342 : memref<1x32xf32, #tpu.memory_space<any>>) target(%343 : memref<1x32xf32, #tpu.memory_space<vmem>>) target_semaphore(%345 : memref<!tpu.dma_semaphore, #tpu.memory_space<semaphore_mem>>)
    %c42_i32_217 = arith.constant 42 : i32
    %346 = arith.addi %1, %c42_i32_217 : i32
    %c1_i32_218 = arith.constant 1 : i32
    %347 = arith.addi %346, %c1_i32_218 : i32
    %348 = arith.index_cast %347 : i32 to index
    %349 = memref.load %arg1[%348] : memref<96xi32, #tpu.memory_space<smem>>
    %c15_i32 = arith.constant 15 : i32
    %c0_i32_219 = arith.constant 0 : i32
    %350 = tpu.memref_slice %arg3[%349, %c0_i32_219] : memref<64x32xf32, #tpu.memory_space<any>> -> memref<1x32xf32, #tpu.memory_space<any>>
    %c15_i32_220 = arith.constant 15 : i32
    %c0_i32_221 = arith.constant 0 : i32
    %351 = tpu.memref_slice %arg5[%c15_i32_220, %c0_i32_221] : memref<48x32xf32, #tpu.memory_space<vmem>> -> memref<1x32xf32, #tpu.memory_space<vmem>>
    %352 = tpu.memref_slice %arg6[%c15_i32] : memref<48x!tpu.dma_semaphore, #tpu.memory_space<semaphore_mem>> -> memref<1x!tpu.dma_semaphore, #tpu.memory_space<semaphore_mem>>
    %353 = tpu.memref_squeeze %352 : memref<1x!tpu.dma_semaphore, #tpu.memory_space<semaphore_mem>> -> memref<!tpu.dma_semaphore, #tpu.memory_space<semaphore_mem>>
    tpu.enqueue_dma source(%350 : memref<1x32xf32, #tpu.memory_space<any>>) target(%351 : memref<1x32xf32, #tpu.memory_space<vmem>>) target_semaphore(%353 : memref<!tpu.dma_semaphore, #tpu.memory_space<semaphore_mem>>)
    %c42_i32_222 = arith.constant 42 : i32
    %354 = arith.addi %1, %c42_i32_222 : i32
    %c2_i32_223 = arith.constant 2 : i32
    %355 = arith.addi %354, %c2_i32_223 : i32
    %356 = arith.index_cast %355 : i32 to index
    %357 = memref.load %arg1[%356] : memref<96xi32, #tpu.memory_space<smem>>
    %c23_i32 = arith.constant 23 : i32
    %c0_i32_224 = arith.constant 0 : i32
    %358 = tpu.memref_slice %arg3[%357, %c0_i32_224] : memref<64x32xf32, #tpu.memory_space<any>> -> memref<1x32xf32, #tpu.memory_space<any>>
    %c23_i32_225 = arith.constant 23 : i32
    %c0_i32_226 = arith.constant 0 : i32
    %359 = tpu.memref_slice %arg5[%c23_i32_225, %c0_i32_226] : memref<48x32xf32, #tpu.memory_space<vmem>> -> memref<1x32xf32, #tpu.memory_space<vmem>>
    %360 = tpu.memref_slice %arg6[%c23_i32] : memref<48x!tpu.dma_semaphore, #tpu.memory_space<semaphore_mem>> -> memref<1x!tpu.dma_semaphore, #tpu.memory_space<semaphore_mem>>
    %361 = tpu.memref_squeeze %360 : memref<1x!tpu.dma_semaphore, #tpu.memory_space<semaphore_mem>> -> memref<!tpu.dma_semaphore, #tpu.memory_space<semaphore_mem>>
    tpu.enqueue_dma source(%358 : memref<1x32xf32, #tpu.memory_space<any>>) target(%359 : memref<1x32xf32, #tpu.memory_space<vmem>>) target_semaphore(%361 : memref<!tpu.dma_semaphore, #tpu.memory_space<semaphore_mem>>)
    %c42_i32_227 = arith.constant 42 : i32
    %362 = arith.addi %1, %c42_i32_227 : i32
    %c3_i32_228 = arith.constant 3 : i32
    %363 = arith.addi %362, %c3_i32_228 : i32
    %364 = arith.index_cast %363 : i32 to index
    %365 = memref.load %arg1[%364] : memref<96xi32, #tpu.memory_space<smem>>
    %c31_i32 = arith.constant 31 : i32
    %c0_i32_229 = arith.constant 0 : i32
    %366 = tpu.memref_slice %arg3[%365, %c0_i32_229] : memref<64x32xf32, #tpu.memory_space<any>> -> memref<1x32xf32, #tpu.memory_space<any>>
    %c31_i32_230 = arith.constant 31 : i32
    %c0_i32_231 = arith.constant 0 : i32
    %367 = tpu.memref_slice %arg5[%c31_i32_230, %c0_i32_231] : memref<48x32xf32, #tpu.memory_space<vmem>> -> memref<1x32xf32, #tpu.memory_space<vmem>>
    %368 = tpu.memref_slice %arg6[%c31_i32] : memref<48x!tpu.dma_semaphore, #tpu.memory_space<semaphore_mem>> -> memref<1x!tpu.dma_semaphore, #tpu.memory_space<semaphore_mem>>
    %369 = tpu.memref_squeeze %368 : memref<1x!tpu.dma_semaphore, #tpu.memory_space<semaphore_mem>> -> memref<!tpu.dma_semaphore, #tpu.memory_space<semaphore_mem>>
    tpu.enqueue_dma source(%366 : memref<1x32xf32, #tpu.memory_space<any>>) target(%367 : memref<1x32xf32, #tpu.memory_space<vmem>>) target_semaphore(%369 : memref<!tpu.dma_semaphore, #tpu.memory_space<semaphore_mem>>)
    %c42_i32_232 = arith.constant 42 : i32
    %370 = arith.addi %1, %c42_i32_232 : i32
    %c4_i32_233 = arith.constant 4 : i32
    %371 = arith.addi %370, %c4_i32_233 : i32
    %372 = arith.index_cast %371 : i32 to index
    %373 = memref.load %arg1[%372] : memref<96xi32, #tpu.memory_space<smem>>
    %c39_i32 = arith.constant 39 : i32
    %c0_i32_234 = arith.constant 0 : i32
    %374 = tpu.memref_slice %arg3[%373, %c0_i32_234] : memref<64x32xf32, #tpu.memory_space<any>> -> memref<1x32xf32, #tpu.memory_space<any>>
    %c39_i32_235 = arith.constant 39 : i32
    %c0_i32_236 = arith.constant 0 : i32
    %375 = tpu.memref_slice %arg5[%c39_i32_235, %c0_i32_236] : memref<48x32xf32, #tpu.memory_space<vmem>> -> memref<1x32xf32, #tpu.memory_space<vmem>>
    %376 = tpu.memref_slice %arg6[%c39_i32] : memref<48x!tpu.dma_semaphore, #tpu.memory_space<semaphore_mem>> -> memref<1x!tpu.dma_semaphore, #tpu.memory_space<semaphore_mem>>
    %377 = tpu.memref_squeeze %376 : memref<1x!tpu.dma_semaphore, #tpu.memory_space<semaphore_mem>> -> memref<!tpu.dma_semaphore, #tpu.memory_space<semaphore_mem>>
    tpu.enqueue_dma source(%374 : memref<1x32xf32, #tpu.memory_space<any>>) target(%375 : memref<1x32xf32, #tpu.memory_space<vmem>>) target_semaphore(%377 : memref<!tpu.dma_semaphore, #tpu.memory_space<semaphore_mem>>)
    %c42_i32_237 = arith.constant 42 : i32
    %378 = arith.addi %1, %c42_i32_237 : i32
    %c5_i32_238 = arith.constant 5 : i32
    %379 = arith.addi %378, %c5_i32_238 : i32
    %380 = arith.index_cast %379 : i32 to index
    %381 = memref.load %arg1[%380] : memref<96xi32, #tpu.memory_space<smem>>
    %c47_i32 = arith.constant 47 : i32
    %c0_i32_239 = arith.constant 0 : i32
    %382 = tpu.memref_slice %arg3[%381, %c0_i32_239] : memref<64x32xf32, #tpu.memory_space<any>> -> memref<1x32xf32, #tpu.memory_space<any>>
    %c47_i32_240 = arith.constant 47 : i32
    %c0_i32_241 = arith.constant 0 : i32
    %383 = tpu.memref_slice %arg5[%c47_i32_240, %c0_i32_241] : memref<48x32xf32, #tpu.memory_space<vmem>> -> memref<1x32xf32, #tpu.memory_space<vmem>>
    %384 = tpu.memref_slice %arg6[%c47_i32] : memref<48x!tpu.dma_semaphore, #tpu.memory_space<semaphore_mem>> -> memref<1x!tpu.dma_semaphore, #tpu.memory_space<semaphore_mem>>
    %385 = tpu.memref_squeeze %384 : memref<1x!tpu.dma_semaphore, #tpu.memory_space<semaphore_mem>> -> memref<!tpu.dma_semaphore, #tpu.memory_space<semaphore_mem>>
    tpu.enqueue_dma source(%382 : memref<1x32xf32, #tpu.memory_space<any>>) target(%383 : memref<1x32xf32, #tpu.memory_space<vmem>>) target_semaphore(%385 : memref<!tpu.dma_semaphore, #tpu.memory_space<semaphore_mem>>)
    %c0_i32_242 = arith.constant 0 : i32
    %c0_i32_243 = arith.constant 0 : i32
    %386 = tpu.memref_slice %arg3[%5, %c0_i32_243] : memref<64x32xf32, #tpu.memory_space<any>> -> memref<1x32xf32, #tpu.memory_space<any>>
    %c0_i32_244 = arith.constant 0 : i32
    %c0_i32_245 = arith.constant 0 : i32
    %387 = tpu.memref_slice %arg5[%c0_i32_244, %c0_i32_245] : memref<48x32xf32, #tpu.memory_space<vmem>> -> memref<1x32xf32, #tpu.memory_space<vmem>>
    %388 = tpu.memref_slice %arg6[%c0_i32_242] : memref<48x!tpu.dma_semaphore, #tpu.memory_space<semaphore_mem>> -> memref<1x!tpu.dma_semaphore, #tpu.memory_space<semaphore_mem>>
    %389 = tpu.memref_squeeze %388 : memref<1x!tpu.dma_semaphore, #tpu.memory_space<semaphore_mem>> -> memref<!tpu.dma_semaphore, #tpu.memory_space<semaphore_mem>>
    tpu.wait_dma2 semaphore(%389 : memref<!tpu.dma_semaphore, #tpu.memory_space<semaphore_mem>>) src(%386 : memref<1x32xf32, #tpu.memory_space<any>>) dst(%387 : memref<1x32xf32, #tpu.memory_space<vmem>>)
    %c8_i32_246 = arith.constant 8 : i32
    %c0_i32_247 = arith.constant 0 : i32
    %390 = tpu.memref_slice %arg3[%13, %c0_i32_247] : memref<64x32xf32, #tpu.memory_space<any>> -> memref<1x32xf32, #tpu.memory_space<any>>
    %c8_i32_248 = arith.constant 8 : i32
    %c0_i32_249 = arith.constant 0 : i32
    %391 = tpu.memref_slice %arg5[%c8_i32_248, %c0_i32_249] : memref<48x32xf32, #tpu.memory_space<vmem>> -> memref<1x32xf32, #tpu.memory_space<vmem>>
    %392 = tpu.memref_slice %arg6[%c8_i32_246] : memref<48x!tpu.dma_semaphore, #tpu.memory_space<semaphore_mem>> -> memref<1x!tpu.dma_semaphore, #tpu.memory_space<semaphore_mem>>
    %393 = tpu.memref_squeeze %392 : memref<1x!tpu.dma_semaphore, #tpu.memory_space<semaphore_mem>> -> memref<!tpu.dma_semaphore, #tpu.memory_space<semaphore_mem>>
    tpu.wait_dma2 semaphore(%393 : memref<!tpu.dma_semaphore, #tpu.memory_space<semaphore_mem>>) src(%390 : memref<1x32xf32, #tpu.memory_space<any>>) dst(%391 : memref<1x32xf32, #tpu.memory_space<vmem>>)
    %c16_i32_250 = arith.constant 16 : i32
    %c0_i32_251 = arith.constant 0 : i32
    %394 = tpu.memref_slice %arg3[%21, %c0_i32_251] : memref<64x32xf32, #tpu.memory_space<any>> -> memref<1x32xf32, #tpu.memory_space<any>>
    %c16_i32_252 = arith.constant 16 : i32
    %c0_i32_253 = arith.constant 0 : i32
    %395 = tpu.memref_slice %arg5[%c16_i32_252, %c0_i32_253] : memref<48x32xf32, #tpu.memory_space<vmem>> -> memref<1x32xf32, #tpu.memory_space<vmem>>
    %396 = tpu.memref_slice %arg6[%c16_i32_250] : memref<48x!tpu.dma_semaphore, #tpu.memory_space<semaphore_mem>> -> memref<1x!tpu.dma_semaphore, #tpu.memory_space<semaphore_mem>>
    %397 = tpu.memref_squeeze %396 : memref<1x!tpu.dma_semaphore, #tpu.memory_space<semaphore_mem>> -> memref<!tpu.dma_semaphore, #tpu.memory_space<semaphore_mem>>
    tpu.wait_dma2 semaphore(%397 : memref<!tpu.dma_semaphore, #tpu.memory_space<semaphore_mem>>) src(%394 : memref<1x32xf32, #tpu.memory_space<any>>) dst(%395 : memref<1x32xf32, #tpu.memory_space<vmem>>)
    %c24_i32_254 = arith.constant 24 : i32
    %c0_i32_255 = arith.constant 0 : i32
    %398 = tpu.memref_slice %arg3[%29, %c0_i32_255] : memref<64x32xf32, #tpu.memory_space<any>> -> memref<1x32xf32, #tpu.memory_space<any>>
    %c24_i32_256 = arith.constant 24 : i32
    %c0_i32_257 = arith.constant 0 : i32
    %399 = tpu.memref_slice %arg5[%c24_i32_256, %c0_i32_257] : memref<48x32xf32, #tpu.memory_space<vmem>> -> memref<1x32xf32, #tpu.memory_space<vmem>>
    %400 = tpu.memref_slice %arg6[%c24_i32_254] : memref<48x!tpu.dma_semaphore, #tpu.memory_space<semaphore_mem>> -> memref<1x!tpu.dma_semaphore, #tpu.memory_space<semaphore_mem>>
    %401 = tpu.memref_squeeze %400 : memref<1x!tpu.dma_semaphore, #tpu.memory_space<semaphore_mem>> -> memref<!tpu.dma_semaphore, #tpu.memory_space<semaphore_mem>>
    tpu.wait_dma2 semaphore(%401 : memref<!tpu.dma_semaphore, #tpu.memory_space<semaphore_mem>>) src(%398 : memref<1x32xf32, #tpu.memory_space<any>>) dst(%399 : memref<1x32xf32, #tpu.memory_space<vmem>>)
    %c32_i32_258 = arith.constant 32 : i32
    %c0_i32_259 = arith.constant 0 : i32
    %402 = tpu.memref_slice %arg3[%37, %c0_i32_259] : memref<64x32xf32, #tpu.memory_space<any>> -> memref<1x32xf32, #tpu.memory_space<any>>
    %c32_i32_260 = arith.constant 32 : i32
    %c0_i32_261 = arith.constant 0 : i32
    %403 = tpu.memref_slice %arg5[%c32_i32_260, %c0_i32_261] : memref<48x32xf32, #tpu.memory_space<vmem>> -> memref<1x32xf32, #tpu.memory_space<vmem>>
    %404 = tpu.memref_slice %arg6[%c32_i32_258] : memref<48x!tpu.dma_semaphore, #tpu.memory_space<semaphore_mem>> -> memref<1x!tpu.dma_semaphore, #tpu.memory_space<semaphore_mem>>
    %405 = tpu.memref_squeeze %404 : memref<1x!tpu.dma_semaphore, #tpu.memory_space<semaphore_mem>> -> memref<!tpu.dma_semaphore, #tpu.memory_space<semaphore_mem>>
    tpu.wait_dma2 semaphore(%405 : memref<!tpu.dma_semaphore, #tpu.memory_space<semaphore_mem>>) src(%402 : memref<1x32xf32, #tpu.memory_space<any>>) dst(%403 : memref<1x32xf32, #tpu.memory_space<vmem>>)
    %c40_i32_262 = arith.constant 40 : i32
    %c0_i32_263 = arith.constant 0 : i32
    %406 = tpu.memref_slice %arg3[%45, %c0_i32_263] : memref<64x32xf32, #tpu.memory_space<any>> -> memref<1x32xf32, #tpu.memory_space<any>>
    %c40_i32_264 = arith.constant 40 : i32
    %c0_i32_265 = arith.constant 0 : i32
    %407 = tpu.memref_slice %arg5[%c40_i32_264, %c0_i32_265] : memref<48x32xf32, #tpu.memory_space<vmem>> -> memref<1x32xf32, #tpu.memory_space<vmem>>
    %408 = tpu.memref_slice %arg6[%c40_i32_262] : memref<48x!tpu.dma_semaphore, #tpu.memory_space<semaphore_mem>> -> memref<1x!tpu.dma_semaphore, #tpu.memory_space<semaphore_mem>>
    %409 = tpu.memref_squeeze %408 : memref<1x!tpu.dma_semaphore, #tpu.memory_space<semaphore_mem>> -> memref<!tpu.dma_semaphore, #tpu.memory_space<semaphore_mem>>
    tpu.wait_dma2 semaphore(%409 : memref<!tpu.dma_semaphore, #tpu.memory_space<semaphore_mem>>) src(%406 : memref<1x32xf32, #tpu.memory_space<any>>) dst(%407 : memref<1x32xf32, #tpu.memory_space<vmem>>)
    %c1_i32_266 = arith.constant 1 : i32
    %c0_i32_267 = arith.constant 0 : i32
    %410 = tpu.memref_slice %arg3[%53, %c0_i32_267] : memref<64x32xf32, #tpu.memory_space<any>> -> memref<1x32xf32, #tpu.memory_space<any>>
    %c1_i32_268 = arith.constant 1 : i32
    %c0_i32_269 = arith.constant 0 : i32
    %411 = tpu.memref_slice %arg5[%c1_i32_268, %c0_i32_269] : memref<48x32xf32, #tpu.memory_space<vmem>> -> memref<1x32xf32, #tpu.memory_space<vmem>>
    %412 = tpu.memref_slice %arg6[%c1_i32_266] : memref<48x!tpu.dma_semaphore, #tpu.memory_space<semaphore_mem>> -> memref<1x!tpu.dma_semaphore, #tpu.memory_space<semaphore_mem>>
    %413 = tpu.memref_squeeze %412 : memref<1x!tpu.dma_semaphore, #tpu.memory_space<semaphore_mem>> -> memref<!tpu.dma_semaphore, #tpu.memory_space<semaphore_mem>>
    tpu.wait_dma2 semaphore(%413 : memref<!tpu.dma_semaphore, #tpu.memory_space<semaphore_mem>>) src(%410 : memref<1x32xf32, #tpu.memory_space<any>>) dst(%411 : memref<1x32xf32, #tpu.memory_space<vmem>>)
    %c9_i32_270 = arith.constant 9 : i32
    %c0_i32_271 = arith.constant 0 : i32
    %414 = tpu.memref_slice %arg3[%61, %c0_i32_271] : memref<64x32xf32, #tpu.memory_space<any>> -> memref<1x32xf32, #tpu.memory_space<any>>
    %c9_i32_272 = arith.constant 9 : i32
    %c0_i32_273 = arith.constant 0 : i32
    %415 = tpu.memref_slice %arg5[%c9_i32_272, %c0_i32_273] : memref<48x32xf32, #tpu.memory_space<vmem>> -> memref<1x32xf32, #tpu.memory_space<vmem>>
    %416 = tpu.memref_slice %arg6[%c9_i32_270] : memref<48x!tpu.dma_semaphore, #tpu.memory_space<semaphore_mem>> -> memref<1x!tpu.dma_semaphore, #tpu.memory_space<semaphore_mem>>
    %417 = tpu.memref_squeeze %416 : memref<1x!tpu.dma_semaphore, #tpu.memory_space<semaphore_mem>> -> memref<!tpu.dma_semaphore, #tpu.memory_space<semaphore_mem>>
    tpu.wait_dma2 semaphore(%417 : memref<!tpu.dma_semaphore, #tpu.memory_space<semaphore_mem>>) src(%414 : memref<1x32xf32, #tpu.memory_space<any>>) dst(%415 : memref<1x32xf32, #tpu.memory_space<vmem>>)
    %c17_i32_274 = arith.constant 17 : i32
    %c0_i32_275 = arith.constant 0 : i32
    %418 = tpu.memref_slice %arg3[%69, %c0_i32_275] : memref<64x32xf32, #tpu.memory_space<any>> -> memref<1x32xf32, #tpu.memory_space<any>>
    %c17_i32_276 = arith.constant 17 : i32
    %c0_i32_277 = arith.constant 0 : i32
    %419 = tpu.memref_slice %arg5[%c17_i32_276, %c0_i32_277] : memref<48x32xf32, #tpu.memory_space<vmem>> -> memref<1x32xf32, #tpu.memory_space<vmem>>
    %420 = tpu.memref_slice %arg6[%c17_i32_274] : memref<48x!tpu.dma_semaphore, #tpu.memory_space<semaphore_mem>> -> memref<1x!tpu.dma_semaphore, #tpu.memory_space<semaphore_mem>>
    %421 = tpu.memref_squeeze %420 : memref<1x!tpu.dma_semaphore, #tpu.memory_space<semaphore_mem>> -> memref<!tpu.dma_semaphore, #tpu.memory_space<semaphore_mem>>
    tpu.wait_dma2 semaphore(%421 : memref<!tpu.dma_semaphore, #tpu.memory_space<semaphore_mem>>) src(%418 : memref<1x32xf32, #tpu.memory_space<any>>) dst(%419 : memref<1x32xf32, #tpu.memory_space<vmem>>)
    %c25_i32_278 = arith.constant 25 : i32
    %c0_i32_279 = arith.constant 0 : i32
    %422 = tpu.memref_slice %arg3[%77, %c0_i32_279] : memref<64x32xf32, #tpu.memory_space<any>> -> memref<1x32xf32, #tpu.memory_space<any>>
    %c25_i32_280 = arith.constant 25 : i32
    %c0_i32_281 = arith.constant 0 : i32
    %423 = tpu.memref_slice %arg5[%c25_i32_280, %c0_i32_281] : memref<48x32xf32, #tpu.memory_space<vmem>> -> memref<1x32xf32, #tpu.memory_space<vmem>>
    %424 = tpu.memref_slice %arg6[%c25_i32_278] : memref<48x!tpu.dma_semaphore, #tpu.memory_space<semaphore_mem>> -> memref<1x!tpu.dma_semaphore, #tpu.memory_space<semaphore_mem>>
    %425 = tpu.memref_squeeze %424 : memref<1x!tpu.dma_semaphore, #tpu.memory_space<semaphore_mem>> -> memref<!tpu.dma_semaphore, #tpu.memory_space<semaphore_mem>>
    tpu.wait_dma2 semaphore(%425 : memref<!tpu.dma_semaphore, #tpu.memory_space<semaphore_mem>>) src(%422 : memref<1x32xf32, #tpu.memory_space<any>>) dst(%423 : memref<1x32xf32, #tpu.memory_space<vmem>>)
    %c33_i32_282 = arith.constant 33 : i32
    %c0_i32_283 = arith.constant 0 : i32
    %426 = tpu.memref_slice %arg3[%85, %c0_i32_283] : memref<64x32xf32, #tpu.memory_space<any>> -> memref<1x32xf32, #tpu.memory_space<any>>
    %c33_i32_284 = arith.constant 33 : i32
    %c0_i32_285 = arith.constant 0 : i32
    %427 = tpu.memref_slice %arg5[%c33_i32_284, %c0_i32_285] : memref<48x32xf32, #tpu.memory_space<vmem>> -> memref<1x32xf32, #tpu.memory_space<vmem>>
    %428 = tpu.memref_slice %arg6[%c33_i32_282] : memref<48x!tpu.dma_semaphore, #tpu.memory_space<semaphore_mem>> -> memref<1x!tpu.dma_semaphore, #tpu.memory_space<semaphore_mem>>
    %429 = tpu.memref_squeeze %428 : memref<1x!tpu.dma_semaphore, #tpu.memory_space<semaphore_mem>> -> memref<!tpu.dma_semaphore, #tpu.memory_space<semaphore_mem>>
    tpu.wait_dma2 semaphore(%429 : memref<!tpu.dma_semaphore, #tpu.memory_space<semaphore_mem>>) src(%426 : memref<1x32xf32, #tpu.memory_space<any>>) dst(%427 : memref<1x32xf32, #tpu.memory_space<vmem>>)
    %c41_i32_286 = arith.constant 41 : i32
    %c0_i32_287 = arith.constant 0 : i32
    %430 = tpu.memref_slice %arg3[%93, %c0_i32_287] : memref<64x32xf32, #tpu.memory_space<any>> -> memref<1x32xf32, #tpu.memory_space<any>>
    %c41_i32_288 = arith.constant 41 : i32
    %c0_i32_289 = arith.constant 0 : i32
    %431 = tpu.memref_slice %arg5[%c41_i32_288, %c0_i32_289] : memref<48x32xf32, #tpu.memory_space<vmem>> -> memref<1x32xf32, #tpu.memory_space<vmem>>
    %432 = tpu.memref_slice %arg6[%c41_i32_286] : memref<48x!tpu.dma_semaphore, #tpu.memory_space<semaphore_mem>> -> memref<1x!tpu.dma_semaphore, #tpu.memory_space<semaphore_mem>>
    %433 = tpu.memref_squeeze %432 : memref<1x!tpu.dma_semaphore, #tpu.memory_space<semaphore_mem>> -> memref<!tpu.dma_semaphore, #tpu.memory_space<semaphore_mem>>
    tpu.wait_dma2 semaphore(%433 : memref<!tpu.dma_semaphore, #tpu.memory_space<semaphore_mem>>) src(%430 : memref<1x32xf32, #tpu.memory_space<any>>) dst(%431 : memref<1x32xf32, #tpu.memory_space<vmem>>)
    %c2_i32_290 = arith.constant 2 : i32
    %c0_i32_291 = arith.constant 0 : i32
    %434 = tpu.memref_slice %arg3[%101, %c0_i32_291] : memref<64x32xf32, #tpu.memory_space<any>> -> memref<1x32xf32, #tpu.memory_space<any>>
    %c2_i32_292 = arith.constant 2 : i32
    %c0_i32_293 = arith.constant 0 : i32
    %435 = tpu.memref_slice %arg5[%c2_i32_292, %c0_i32_293] : memref<48x32xf32, #tpu.memory_space<vmem>> -> memref<1x32xf32, #tpu.memory_space<vmem>>
    %436 = tpu.memref_slice %arg6[%c2_i32_290] : memref<48x!tpu.dma_semaphore, #tpu.memory_space<semaphore_mem>> -> memref<1x!tpu.dma_semaphore, #tpu.memory_space<semaphore_mem>>
    %437 = tpu.memref_squeeze %436 : memref<1x!tpu.dma_semaphore, #tpu.memory_space<semaphore_mem>> -> memref<!tpu.dma_semaphore, #tpu.memory_space<semaphore_mem>>
    tpu.wait_dma2 semaphore(%437 : memref<!tpu.dma_semaphore, #tpu.memory_space<semaphore_mem>>) src(%434 : memref<1x32xf32, #tpu.memory_space<any>>) dst(%435 : memref<1x32xf32, #tpu.memory_space<vmem>>)
    %c10_i32_294 = arith.constant 10 : i32
    %c0_i32_295 = arith.constant 0 : i32
    %438 = tpu.memref_slice %arg3[%109, %c0_i32_295] : memref<64x32xf32, #tpu.memory_space<any>> -> memref<1x32xf32, #tpu.memory_space<any>>
    %c10_i32_296 = arith.constant 10 : i32
    %c0_i32_297 = arith.constant 0 : i32
    %439 = tpu.memref_slice %arg5[%c10_i32_296, %c0_i32_297] : memref<48x32xf32, #tpu.memory_space<vmem>> -> memref<1x32xf32, #tpu.memory_space<vmem>>
    %440 = tpu.memref_slice %arg6[%c10_i32_294] : memref<48x!tpu.dma_semaphore, #tpu.memory_space<semaphore_mem>> -> memref<1x!tpu.dma_semaphore, #tpu.memory_space<semaphore_mem>>
    %441 = tpu.memref_squeeze %440 : memref<1x!tpu.dma_semaphore, #tpu.memory_space<semaphore_mem>> -> memref<!tpu.dma_semaphore, #tpu.memory_space<semaphore_mem>>
    tpu.wait_dma2 semaphore(%441 : memref<!tpu.dma_semaphore, #tpu.memory_space<semaphore_mem>>) src(%438 : memref<1x32xf32, #tpu.memory_space<any>>) dst(%439 : memref<1x32xf32, #tpu.memory_space<vmem>>)
    %c18_i32_298 = arith.constant 18 : i32
    %c0_i32_299 = arith.constant 0 : i32
    %442 = tpu.memref_slice %arg3[%117, %c0_i32_299] : memref<64x32xf32, #tpu.memory_space<any>> -> memref<1x32xf32, #tpu.memory_space<any>>
    %c18_i32_300 = arith.constant 18 : i32
    %c0_i32_301 = arith.constant 0 : i32
    %443 = tpu.memref_slice %arg5[%c18_i32_300, %c0_i32_301] : memref<48x32xf32, #tpu.memory_space<vmem>> -> memref<1x32xf32, #tpu.memory_space<vmem>>
    %444 = tpu.memref_slice %arg6[%c18_i32_298] : memref<48x!tpu.dma_semaphore, #tpu.memory_space<semaphore_mem>> -> memref<1x!tpu.dma_semaphore, #tpu.memory_space<semaphore_mem>>
    %445 = tpu.memref_squeeze %444 : memref<1x!tpu.dma_semaphore, #tpu.memory_space<semaphore_mem>> -> memref<!tpu.dma_semaphore, #tpu.memory_space<semaphore_mem>>
    tpu.wait_dma2 semaphore(%445 : memref<!tpu.dma_semaphore, #tpu.memory_space<semaphore_mem>>) src(%442 : memref<1x32xf32, #tpu.memory_space<any>>) dst(%443 : memref<1x32xf32, #tpu.memory_space<vmem>>)
    %c26_i32_302 = arith.constant 26 : i32
    %c0_i32_303 = arith.constant 0 : i32
    %446 = tpu.memref_slice %arg3[%125, %c0_i32_303] : memref<64x32xf32, #tpu.memory_space<any>> -> memref<1x32xf32, #tpu.memory_space<any>>
    %c26_i32_304 = arith.constant 26 : i32
    %c0_i32_305 = arith.constant 0 : i32
    %447 = tpu.memref_slice %arg5[%c26_i32_304, %c0_i32_305] : memref<48x32xf32, #tpu.memory_space<vmem>> -> memref<1x32xf32, #tpu.memory_space<vmem>>
    %448 = tpu.memref_slice %arg6[%c26_i32_302] : memref<48x!tpu.dma_semaphore, #tpu.memory_space<semaphore_mem>> -> memref<1x!tpu.dma_semaphore, #tpu.memory_space<semaphore_mem>>
    %449 = tpu.memref_squeeze %448 : memref<1x!tpu.dma_semaphore, #tpu.memory_space<semaphore_mem>> -> memref<!tpu.dma_semaphore, #tpu.memory_space<semaphore_mem>>
    tpu.wait_dma2 semaphore(%449 : memref<!tpu.dma_semaphore, #tpu.memory_space<semaphore_mem>>) src(%446 : memref<1x32xf32, #tpu.memory_space<any>>) dst(%447 : memref<1x32xf32, #tpu.memory_space<vmem>>)
    %c34_i32_306 = arith.constant 34 : i32
    %c0_i32_307 = arith.constant 0 : i32
    %450 = tpu.memref_slice %arg3[%133, %c0_i32_307] : memref<64x32xf32, #tpu.memory_space<any>> -> memref<1x32xf32, #tpu.memory_space<any>>
    %c34_i32_308 = arith.constant 34 : i32
    %c0_i32_309 = arith.constant 0 : i32
    %451 = tpu.memref_slice %arg5[%c34_i32_308, %c0_i32_309] : memref<48x32xf32, #tpu.memory_space<vmem>> -> memref<1x32xf32, #tpu.memory_space<vmem>>
    %452 = tpu.memref_slice %arg6[%c34_i32_306] : memref<48x!tpu.dma_semaphore, #tpu.memory_space<semaphore_mem>> -> memref<1x!tpu.dma_semaphore, #tpu.memory_space<semaphore_mem>>
    %453 = tpu.memref_squeeze %452 : memref<1x!tpu.dma_semaphore, #tpu.memory_space<semaphore_mem>> -> memref<!tpu.dma_semaphore, #tpu.memory_space<semaphore_mem>>
    tpu.wait_dma2 semaphore(%453 : memref<!tpu.dma_semaphore, #tpu.memory_space<semaphore_mem>>) src(%450 : memref<1x32xf32, #tpu.memory_space<any>>) dst(%451 : memref<1x32xf32, #tpu.memory_space<vmem>>)
    %c42_i32_310 = arith.constant 42 : i32
    %c0_i32_311 = arith.constant 0 : i32
    %454 = tpu.memref_slice %arg3[%141, %c0_i32_311] : memref<64x32xf32, #tpu.memory_space<any>> -> memref<1x32xf32, #tpu.memory_space<any>>
    %c42_i32_312 = arith.constant 42 : i32
    %c0_i32_313 = arith.constant 0 : i32
    %455 = tpu.memref_slice %arg5[%c42_i32_312, %c0_i32_313] : memref<48x32xf32, #tpu.memory_space<vmem>> -> memref<1x32xf32, #tpu.memory_space<vmem>>
    %456 = tpu.memref_slice %arg6[%c42_i32_310] : memref<48x!tpu.dma_semaphore, #tpu.memory_space<semaphore_mem>> -> memref<1x!tpu.dma_semaphore, #tpu.memory_space<semaphore_mem>>
    %457 = tpu.memref_squeeze %456 : memref<1x!tpu.dma_semaphore, #tpu.memory_space<semaphore_mem>> -> memref<!tpu.dma_semaphore, #tpu.memory_space<semaphore_mem>>
    tpu.wait_dma2 semaphore(%457 : memref<!tpu.dma_semaphore, #tpu.memory_space<semaphore_mem>>) src(%454 : memref<1x32xf32, #tpu.memory_space<any>>) dst(%455 : memref<1x32xf32, #tpu.memory_space<vmem>>)
    %c3_i32_314 = arith.constant 3 : i32
    %c0_i32_315 = arith.constant 0 : i32
    %458 = tpu.memref_slice %arg3[%149, %c0_i32_315] : memref<64x32xf32, #tpu.memory_space<any>> -> memref<1x32xf32, #tpu.memory_space<any>>
    %c3_i32_316 = arith.constant 3 : i32
    %c0_i32_317 = arith.constant 0 : i32
    %459 = tpu.memref_slice %arg5[%c3_i32_316, %c0_i32_317] : memref<48x32xf32, #tpu.memory_space<vmem>> -> memref<1x32xf32, #tpu.memory_space<vmem>>
    %460 = tpu.memref_slice %arg6[%c3_i32_314] : memref<48x!tpu.dma_semaphore, #tpu.memory_space<semaphore_mem>> -> memref<1x!tpu.dma_semaphore, #tpu.memory_space<semaphore_mem>>
    %461 = tpu.memref_squeeze %460 : memref<1x!tpu.dma_semaphore, #tpu.memory_space<semaphore_mem>> -> memref<!tpu.dma_semaphore, #tpu.memory_space<semaphore_mem>>
    tpu.wait_dma2 semaphore(%461 : memref<!tpu.dma_semaphore, #tpu.memory_space<semaphore_mem>>) src(%458 : memref<1x32xf32, #tpu.memory_space<any>>) dst(%459 : memref<1x32xf32, #tpu.memory_space<vmem>>)
    %c11_i32_318 = arith.constant 11 : i32
    %c0_i32_319 = arith.constant 0 : i32
    %462 = tpu.memref_slice %arg3[%157, %c0_i32_319] : memref<64x32xf32, #tpu.memory_space<any>> -> memref<1x32xf32, #tpu.memory_space<any>>
    %c11_i32_320 = arith.constant 11 : i32
    %c0_i32_321 = arith.constant 0 : i32
    %463 = tpu.memref_slice %arg5[%c11_i32_320, %c0_i32_321] : memref<48x32xf32, #tpu.memory_space<vmem>> -> memref<1x32xf32, #tpu.memory_space<vmem>>
    %464 = tpu.memref_slice %arg6[%c11_i32_318] : memref<48x!tpu.dma_semaphore, #tpu.memory_space<semaphore_mem>> -> memref<1x!tpu.dma_semaphore, #tpu.memory_space<semaphore_mem>>
    %465 = tpu.memref_squeeze %464 : memref<1x!tpu.dma_semaphore, #tpu.memory_space<semaphore_mem>> -> memref<!tpu.dma_semaphore, #tpu.memory_space<semaphore_mem>>
    tpu.wait_dma2 semaphore(%465 : memref<!tpu.dma_semaphore, #tpu.memory_space<semaphore_mem>>) src(%462 : memref<1x32xf32, #tpu.memory_space<any>>) dst(%463 : memref<1x32xf32, #tpu.memory_space<vmem>>)
    %c19_i32_322 = arith.constant 19 : i32
    %c0_i32_323 = arith.constant 0 : i32
    %466 = tpu.memref_slice %arg3[%165, %c0_i32_323] : memref<64x32xf32, #tpu.memory_space<any>> -> memref<1x32xf32, #tpu.memory_space<any>>
    %c19_i32_324 = arith.constant 19 : i32
    %c0_i32_325 = arith.constant 0 : i32
    %467 = tpu.memref_slice %arg5[%c19_i32_324, %c0_i32_325] : memref<48x32xf32, #tpu.memory_space<vmem>> -> memref<1x32xf32, #tpu.memory_space<vmem>>
    %468 = tpu.memref_slice %arg6[%c19_i32_322] : memref<48x!tpu.dma_semaphore, #tpu.memory_space<semaphore_mem>> -> memref<1x!tpu.dma_semaphore, #tpu.memory_space<semaphore_mem>>
    %469 = tpu.memref_squeeze %468 : memref<1x!tpu.dma_semaphore, #tpu.memory_space<semaphore_mem>> -> memref<!tpu.dma_semaphore, #tpu.memory_space<semaphore_mem>>
    tpu.wait_dma2 semaphore(%469 : memref<!tpu.dma_semaphore, #tpu.memory_space<semaphore_mem>>) src(%466 : memref<1x32xf32, #tpu.memory_space<any>>) dst(%467 : memref<1x32xf32, #tpu.memory_space<vmem>>)
    %c27_i32_326 = arith.constant 27 : i32
    %c0_i32_327 = arith.constant 0 : i32
    %470 = tpu.memref_slice %arg3[%173, %c0_i32_327] : memref<64x32xf32, #tpu.memory_space<any>> -> memref<1x32xf32, #tpu.memory_space<any>>
    %c27_i32_328 = arith.constant 27 : i32
    %c0_i32_329 = arith.constant 0 : i32
    %471 = tpu.memref_slice %arg5[%c27_i32_328, %c0_i32_329] : memref<48x32xf32, #tpu.memory_space<vmem>> -> memref<1x32xf32, #tpu.memory_space<vmem>>
    %472 = tpu.memref_slice %arg6[%c27_i32_326] : memref<48x!tpu.dma_semaphore, #tpu.memory_space<semaphore_mem>> -> memref<1x!tpu.dma_semaphore, #tpu.memory_space<semaphore_mem>>
    %473 = tpu.memref_squeeze %472 : memref<1x!tpu.dma_semaphore, #tpu.memory_space<semaphore_mem>> -> memref<!tpu.dma_semaphore, #tpu.memory_space<semaphore_mem>>
    tpu.wait_dma2 semaphore(%473 : memref<!tpu.dma_semaphore, #tpu.memory_space<semaphore_mem>>) src(%470 : memref<1x32xf32, #tpu.memory_space<any>>) dst(%471 : memref<1x32xf32, #tpu.memory_space<vmem>>)
    %c35_i32_330 = arith.constant 35 : i32
    %c0_i32_331 = arith.constant 0 : i32
    %474 = tpu.memref_slice %arg3[%181, %c0_i32_331] : memref<64x32xf32, #tpu.memory_space<any>> -> memref<1x32xf32, #tpu.memory_space<any>>
    %c35_i32_332 = arith.constant 35 : i32
    %c0_i32_333 = arith.constant 0 : i32
    %475 = tpu.memref_slice %arg5[%c35_i32_332, %c0_i32_333] : memref<48x32xf32, #tpu.memory_space<vmem>> -> memref<1x32xf32, #tpu.memory_space<vmem>>
    %476 = tpu.memref_slice %arg6[%c35_i32_330] : memref<48x!tpu.dma_semaphore, #tpu.memory_space<semaphore_mem>> -> memref<1x!tpu.dma_semaphore, #tpu.memory_space<semaphore_mem>>
    %477 = tpu.memref_squeeze %476 : memref<1x!tpu.dma_semaphore, #tpu.memory_space<semaphore_mem>> -> memref<!tpu.dma_semaphore, #tpu.memory_space<semaphore_mem>>
    tpu.wait_dma2 semaphore(%477 : memref<!tpu.dma_semaphore, #tpu.memory_space<semaphore_mem>>) src(%474 : memref<1x32xf32, #tpu.memory_space<any>>) dst(%475 : memref<1x32xf32, #tpu.memory_space<vmem>>)
    %c43_i32_334 = arith.constant 43 : i32
    %c0_i32_335 = arith.constant 0 : i32
    %478 = tpu.memref_slice %arg3[%189, %c0_i32_335] : memref<64x32xf32, #tpu.memory_space<any>> -> memref<1x32xf32, #tpu.memory_space<any>>
    %c43_i32_336 = arith.constant 43 : i32
    %c0_i32_337 = arith.constant 0 : i32
    %479 = tpu.memref_slice %arg5[%c43_i32_336, %c0_i32_337] : memref<48x32xf32, #tpu.memory_space<vmem>> -> memref<1x32xf32, #tpu.memory_space<vmem>>
    %480 = tpu.memref_slice %arg6[%c43_i32_334] : memref<48x!tpu.dma_semaphore, #tpu.memory_space<semaphore_mem>> -> memref<1x!tpu.dma_semaphore, #tpu.memory_space<semaphore_mem>>
    %481 = tpu.memref_squeeze %480 : memref<1x!tpu.dma_semaphore, #tpu.memory_space<semaphore_mem>> -> memref<!tpu.dma_semaphore, #tpu.memory_space<semaphore_mem>>
    tpu.wait_dma2 semaphore(%481 : memref<!tpu.dma_semaphore, #tpu.memory_space<semaphore_mem>>) src(%478 : memref<1x32xf32, #tpu.memory_space<any>>) dst(%479 : memref<1x32xf32, #tpu.memory_space<vmem>>)
    %c4_i32_338 = arith.constant 4 : i32
    %c0_i32_339 = arith.constant 0 : i32
    %482 = tpu.memref_slice %arg3[%197, %c0_i32_339] : memref<64x32xf32, #tpu.memory_space<any>> -> memref<1x32xf32, #tpu.memory_space<any>>
    %c4_i32_340 = arith.constant 4 : i32
    %c0_i32_341 = arith.constant 0 : i32
    %483 = tpu.memref_slice %arg5[%c4_i32_340, %c0_i32_341] : memref<48x32xf32, #tpu.memory_space<vmem>> -> memref<1x32xf32, #tpu.memory_space<vmem>>
    %484 = tpu.memref_slice %arg6[%c4_i32_338] : memref<48x!tpu.dma_semaphore, #tpu.memory_space<semaphore_mem>> -> memref<1x!tpu.dma_semaphore, #tpu.memory_space<semaphore_mem>>
    %485 = tpu.memref_squeeze %484 : memref<1x!tpu.dma_semaphore, #tpu.memory_space<semaphore_mem>> -> memref<!tpu.dma_semaphore, #tpu.memory_space<semaphore_mem>>
    tpu.wait_dma2 semaphore(%485 : memref<!tpu.dma_semaphore, #tpu.memory_space<semaphore_mem>>) src(%482 : memref<1x32xf32, #tpu.memory_space<any>>) dst(%483 : memref<1x32xf32, #tpu.memory_space<vmem>>)
    %c12_i32_342 = arith.constant 12 : i32
    %c0_i32_343 = arith.constant 0 : i32
    %486 = tpu.memref_slice %arg3[%205, %c0_i32_343] : memref<64x32xf32, #tpu.memory_space<any>> -> memref<1x32xf32, #tpu.memory_space<any>>
    %c12_i32_344 = arith.constant 12 : i32
    %c0_i32_345 = arith.constant 0 : i32
    %487 = tpu.memref_slice %arg5[%c12_i32_344, %c0_i32_345] : memref<48x32xf32, #tpu.memory_space<vmem>> -> memref<1x32xf32, #tpu.memory_space<vmem>>
    %488 = tpu.memref_slice %arg6[%c12_i32_342] : memref<48x!tpu.dma_semaphore, #tpu.memory_space<semaphore_mem>> -> memref<1x!tpu.dma_semaphore, #tpu.memory_space<semaphore_mem>>
    %489 = tpu.memref_squeeze %488 : memref<1x!tpu.dma_semaphore, #tpu.memory_space<semaphore_mem>> -> memref<!tpu.dma_semaphore, #tpu.memory_space<semaphore_mem>>
    tpu.wait_dma2 semaphore(%489 : memref<!tpu.dma_semaphore, #tpu.memory_space<semaphore_mem>>) src(%486 : memref<1x32xf32, #tpu.memory_space<any>>) dst(%487 : memref<1x32xf32, #tpu.memory_space<vmem>>)
    %c20_i32_346 = arith.constant 20 : i32
    %c0_i32_347 = arith.constant 0 : i32
    %490 = tpu.memref_slice %arg3[%213, %c0_i32_347] : memref<64x32xf32, #tpu.memory_space<any>> -> memref<1x32xf32, #tpu.memory_space<any>>
    %c20_i32_348 = arith.constant 20 : i32
    %c0_i32_349 = arith.constant 0 : i32
    %491 = tpu.memref_slice %arg5[%c20_i32_348, %c0_i32_349] : memref<48x32xf32, #tpu.memory_space<vmem>> -> memref<1x32xf32, #tpu.memory_space<vmem>>
    %492 = tpu.memref_slice %arg6[%c20_i32_346] : memref<48x!tpu.dma_semaphore, #tpu.memory_space<semaphore_mem>> -> memref<1x!tpu.dma_semaphore, #tpu.memory_space<semaphore_mem>>
    %493 = tpu.memref_squeeze %492 : memref<1x!tpu.dma_semaphore, #tpu.memory_space<semaphore_mem>> -> memref<!tpu.dma_semaphore, #tpu.memory_space<semaphore_mem>>
    tpu.wait_dma2 semaphore(%493 : memref<!tpu.dma_semaphore, #tpu.memory_space<semaphore_mem>>) src(%490 : memref<1x32xf32, #tpu.memory_space<any>>) dst(%491 : memref<1x32xf32, #tpu.memory_space<vmem>>)
    %c28_i32_350 = arith.constant 28 : i32
    %c0_i32_351 = arith.constant 0 : i32
    %494 = tpu.memref_slice %arg3[%221, %c0_i32_351] : memref<64x32xf32, #tpu.memory_space<any>> -> memref<1x32xf32, #tpu.memory_space<any>>
    %c28_i32_352 = arith.constant 28 : i32
    %c0_i32_353 = arith.constant 0 : i32
    %495 = tpu.memref_slice %arg5[%c28_i32_352, %c0_i32_353] : memref<48x32xf32, #tpu.memory_space<vmem>> -> memref<1x32xf32, #tpu.memory_space<vmem>>
    %496 = tpu.memref_slice %arg6[%c28_i32_350] : memref<48x!tpu.dma_semaphore, #tpu.memory_space<semaphore_mem>> -> memref<1x!tpu.dma_semaphore, #tpu.memory_space<semaphore_mem>>
    %497 = tpu.memref_squeeze %496 : memref<1x!tpu.dma_semaphore, #tpu.memory_space<semaphore_mem>> -> memref<!tpu.dma_semaphore, #tpu.memory_space<semaphore_mem>>
    tpu.wait_dma2 semaphore(%497 : memref<!tpu.dma_semaphore, #tpu.memory_space<semaphore_mem>>) src(%494 : memref<1x32xf32, #tpu.memory_space<any>>) dst(%495 : memref<1x32xf32, #tpu.memory_space<vmem>>)
    %c36_i32_354 = arith.constant 36 : i32
    %c0_i32_355 = arith.constant 0 : i32
    %498 = tpu.memref_slice %arg3[%229, %c0_i32_355] : memref<64x32xf32, #tpu.memory_space<any>> -> memref<1x32xf32, #tpu.memory_space<any>>
    %c36_i32_356 = arith.constant 36 : i32
    %c0_i32_357 = arith.constant 0 : i32
    %499 = tpu.memref_slice %arg5[%c36_i32_356, %c0_i32_357] : memref<48x32xf32, #tpu.memory_space<vmem>> -> memref<1x32xf32, #tpu.memory_space<vmem>>
    %500 = tpu.memref_slice %arg6[%c36_i32_354] : memref<48x!tpu.dma_semaphore, #tpu.memory_space<semaphore_mem>> -> memref<1x!tpu.dma_semaphore, #tpu.memory_space<semaphore_mem>>
    %501 = tpu.memref_squeeze %500 : memref<1x!tpu.dma_semaphore, #tpu.memory_space<semaphore_mem>> -> memref<!tpu.dma_semaphore, #tpu.memory_space<semaphore_mem>>
    tpu.wait_dma2 semaphore(%501 : memref<!tpu.dma_semaphore, #tpu.memory_space<semaphore_mem>>) src(%498 : memref<1x32xf32, #tpu.memory_space<any>>) dst(%499 : memref<1x32xf32, #tpu.memory_space<vmem>>)
    %c44_i32_358 = arith.constant 44 : i32
    %c0_i32_359 = arith.constant 0 : i32
    %502 = tpu.memref_slice %arg3[%237, %c0_i32_359] : memref<64x32xf32, #tpu.memory_space<any>> -> memref<1x32xf32, #tpu.memory_space<any>>
    %c44_i32_360 = arith.constant 44 : i32
    %c0_i32_361 = arith.constant 0 : i32
    %503 = tpu.memref_slice %arg5[%c44_i32_360, %c0_i32_361] : memref<48x32xf32, #tpu.memory_space<vmem>> -> memref<1x32xf32, #tpu.memory_space<vmem>>
    %504 = tpu.memref_slice %arg6[%c44_i32_358] : memref<48x!tpu.dma_semaphore, #tpu.memory_space<semaphore_mem>> -> memref<1x!tpu.dma_semaphore, #tpu.memory_space<semaphore_mem>>
    %505 = tpu.memref_squeeze %504 : memref<1x!tpu.dma_semaphore, #tpu.memory_space<semaphore_mem>> -> memref<!tpu.dma_semaphore, #tpu.memory_space<semaphore_mem>>
    tpu.wait_dma2 semaphore(%505 : memref<!tpu.dma_semaphore, #tpu.memory_space<semaphore_mem>>) src(%502 : memref<1x32xf32, #tpu.memory_space<any>>) dst(%503 : memref<1x32xf32, #tpu.memory_space<vmem>>)
    %c5_i32_362 = arith.constant 5 : i32
    %c0_i32_363 = arith.constant 0 : i32
    %506 = tpu.memref_slice %arg3[%245, %c0_i32_363] : memref<64x32xf32, #tpu.memory_space<any>> -> memref<1x32xf32, #tpu.memory_space<any>>
    %c5_i32_364 = arith.constant 5 : i32
    %c0_i32_365 = arith.constant 0 : i32
    %507 = tpu.memref_slice %arg5[%c5_i32_364, %c0_i32_365] : memref<48x32xf32, #tpu.memory_space<vmem>> -> memref<1x32xf32, #tpu.memory_space<vmem>>
    %508 = tpu.memref_slice %arg6[%c5_i32_362] : memref<48x!tpu.dma_semaphore, #tpu.memory_space<semaphore_mem>> -> memref<1x!tpu.dma_semaphore, #tpu.memory_space<semaphore_mem>>
    %509 = tpu.memref_squeeze %508 : memref<1x!tpu.dma_semaphore, #tpu.memory_space<semaphore_mem>> -> memref<!tpu.dma_semaphore, #tpu.memory_space<semaphore_mem>>
    tpu.wait_dma2 semaphore(%509 : memref<!tpu.dma_semaphore, #tpu.memory_space<semaphore_mem>>) src(%506 : memref<1x32xf32, #tpu.memory_space<any>>) dst(%507 : memref<1x32xf32, #tpu.memory_space<vmem>>)
    %c13_i32_366 = arith.constant 13 : i32
    %c0_i32_367 = arith.constant 0 : i32
    %510 = tpu.memref_slice %arg3[%253, %c0_i32_367] : memref<64x32xf32, #tpu.memory_space<any>> -> memref<1x32xf32, #tpu.memory_space<any>>
    %c13_i32_368 = arith.constant 13 : i32
    %c0_i32_369 = arith.constant 0 : i32
    %511 = tpu.memref_slice %arg5[%c13_i32_368, %c0_i32_369] : memref<48x32xf32, #tpu.memory_space<vmem>> -> memref<1x32xf32, #tpu.memory_space<vmem>>
    %512 = tpu.memref_slice %arg6[%c13_i32_366] : memref<48x!tpu.dma_semaphore, #tpu.memory_space<semaphore_mem>> -> memref<1x!tpu.dma_semaphore, #tpu.memory_space<semaphore_mem>>
    %513 = tpu.memref_squeeze %512 : memref<1x!tpu.dma_semaphore, #tpu.memory_space<semaphore_mem>> -> memref<!tpu.dma_semaphore, #tpu.memory_space<semaphore_mem>>
    tpu.wait_dma2 semaphore(%513 : memref<!tpu.dma_semaphore, #tpu.memory_space<semaphore_mem>>) src(%510 : memref<1x32xf32, #tpu.memory_space<any>>) dst(%511 : memref<1x32xf32, #tpu.memory_space<vmem>>)
    %c21_i32_370 = arith.constant 21 : i32
    %c0_i32_371 = arith.constant 0 : i32
    %514 = tpu.memref_slice %arg3[%261, %c0_i32_371] : memref<64x32xf32, #tpu.memory_space<any>> -> memref<1x32xf32, #tpu.memory_space<any>>
    %c21_i32_372 = arith.constant 21 : i32
    %c0_i32_373 = arith.constant 0 : i32
    %515 = tpu.memref_slice %arg5[%c21_i32_372, %c0_i32_373] : memref<48x32xf32, #tpu.memory_space<vmem>> -> memref<1x32xf32, #tpu.memory_space<vmem>>
    %516 = tpu.memref_slice %arg6[%c21_i32_370] : memref<48x!tpu.dma_semaphore, #tpu.memory_space<semaphore_mem>> -> memref<1x!tpu.dma_semaphore, #tpu.memory_space<semaphore_mem>>
    %517 = tpu.memref_squeeze %516 : memref<1x!tpu.dma_semaphore, #tpu.memory_space<semaphore_mem>> -> memref<!tpu.dma_semaphore, #tpu.memory_space<semaphore_mem>>
    tpu.wait_dma2 semaphore(%517 : memref<!tpu.dma_semaphore, #tpu.memory_space<semaphore_mem>>) src(%514 : memref<1x32xf32, #tpu.memory_space<any>>) dst(%515 : memref<1x32xf32, #tpu.memory_space<vmem>>)
    %c29_i32_374 = arith.constant 29 : i32
    %c0_i32_375 = arith.constant 0 : i32
    %518 = tpu.memref_slice %arg3[%269, %c0_i32_375] : memref<64x32xf32, #tpu.memory_space<any>> -> memref<1x32xf32, #tpu.memory_space<any>>
    %c29_i32_376 = arith.constant 29 : i32
    %c0_i32_377 = arith.constant 0 : i32
    %519 = tpu.memref_slice %arg5[%c29_i32_376, %c0_i32_377] : memref<48x32xf32, #tpu.memory_space<vmem>> -> memref<1x32xf32, #tpu.memory_space<vmem>>
    %520 = tpu.memref_slice %arg6[%c29_i32_374] : memref<48x!tpu.dma_semaphore, #tpu.memory_space<semaphore_mem>> -> memref<1x!tpu.dma_semaphore, #tpu.memory_space<semaphore_mem>>
    %521 = tpu.memref_squeeze %520 : memref<1x!tpu.dma_semaphore, #tpu.memory_space<semaphore_mem>> -> memref<!tpu.dma_semaphore, #tpu.memory_space<semaphore_mem>>
    tpu.wait_dma2 semaphore(%521 : memref<!tpu.dma_semaphore, #tpu.memory_space<semaphore_mem>>) src(%518 : memref<1x32xf32, #tpu.memory_space<any>>) dst(%519 : memref<1x32xf32, #tpu.memory_space<vmem>>)
    %c37_i32_378 = arith.constant 37 : i32
    %c0_i32_379 = arith.constant 0 : i32
    %522 = tpu.memref_slice %arg3[%277, %c0_i32_379] : memref<64x32xf32, #tpu.memory_space<any>> -> memref<1x32xf32, #tpu.memory_space<any>>
    %c37_i32_380 = arith.constant 37 : i32
    %c0_i32_381 = arith.constant 0 : i32
    %523 = tpu.memref_slice %arg5[%c37_i32_380, %c0_i32_381] : memref<48x32xf32, #tpu.memory_space<vmem>> -> memref<1x32xf32, #tpu.memory_space<vmem>>
    %524 = tpu.memref_slice %arg6[%c37_i32_378] : memref<48x!tpu.dma_semaphore, #tpu.memory_space<semaphore_mem>> -> memref<1x!tpu.dma_semaphore, #tpu.memory_space<semaphore_mem>>
    %525 = tpu.memref_squeeze %524 : memref<1x!tpu.dma_semaphore, #tpu.memory_space<semaphore_mem>> -> memref<!tpu.dma_semaphore, #tpu.memory_space<semaphore_mem>>
    tpu.wait_dma2 semaphore(%525 : memref<!tpu.dma_semaphore, #tpu.memory_space<semaphore_mem>>) src(%522 : memref<1x32xf32, #tpu.memory_space<any>>) dst(%523 : memref<1x32xf32, #tpu.memory_space<vmem>>)
    %c45_i32_382 = arith.constant 45 : i32
    %c0_i32_383 = arith.constant 0 : i32
    %526 = tpu.memref_slice %arg3[%285, %c0_i32_383] : memref<64x32xf32, #tpu.memory_space<any>> -> memref<1x32xf32, #tpu.memory_space<any>>
    %c45_i32_384 = arith.constant 45 : i32
    %c0_i32_385 = arith.constant 0 : i32
    %527 = tpu.memref_slice %arg5[%c45_i32_384, %c0_i32_385] : memref<48x32xf32, #tpu.memory_space<vmem>> -> memref<1x32xf32, #tpu.memory_space<vmem>>
    %528 = tpu.memref_slice %arg6[%c45_i32_382] : memref<48x!tpu.dma_semaphore, #tpu.memory_space<semaphore_mem>> -> memref<1x!tpu.dma_semaphore, #tpu.memory_space<semaphore_mem>>
    %529 = tpu.memref_squeeze %528 : memref<1x!tpu.dma_semaphore, #tpu.memory_space<semaphore_mem>> -> memref<!tpu.dma_semaphore, #tpu.memory_space<semaphore_mem>>
    tpu.wait_dma2 semaphore(%529 : memref<!tpu.dma_semaphore, #tpu.memory_space<semaphore_mem>>) src(%526 : memref<1x32xf32, #tpu.memory_space<any>>) dst(%527 : memref<1x32xf32, #tpu.memory_space<vmem>>)
    %c6_i32_386 = arith.constant 6 : i32
    %c0_i32_387 = arith.constant 0 : i32
    %530 = tpu.memref_slice %arg3[%293, %c0_i32_387] : memref<64x32xf32, #tpu.memory_space<any>> -> memref<1x32xf32, #tpu.memory_space<any>>
    %c6_i32_388 = arith.constant 6 : i32
    %c0_i32_389 = arith.constant 0 : i32
    %531 = tpu.memref_slice %arg5[%c6_i32_388, %c0_i32_389] : memref<48x32xf32, #tpu.memory_space<vmem>> -> memref<1x32xf32, #tpu.memory_space<vmem>>
    %532 = tpu.memref_slice %arg6[%c6_i32_386] : memref<48x!tpu.dma_semaphore, #tpu.memory_space<semaphore_mem>> -> memref<1x!tpu.dma_semaphore, #tpu.memory_space<semaphore_mem>>
    %533 = tpu.memref_squeeze %532 : memref<1x!tpu.dma_semaphore, #tpu.memory_space<semaphore_mem>> -> memref<!tpu.dma_semaphore, #tpu.memory_space<semaphore_mem>>
    tpu.wait_dma2 semaphore(%533 : memref<!tpu.dma_semaphore, #tpu.memory_space<semaphore_mem>>) src(%530 : memref<1x32xf32, #tpu.memory_space<any>>) dst(%531 : memref<1x32xf32, #tpu.memory_space<vmem>>)
    %c14_i32_390 = arith.constant 14 : i32
    %c0_i32_391 = arith.constant 0 : i32
    %534 = tpu.memref_slice %arg3[%301, %c0_i32_391] : memref<64x32xf32, #tpu.memory_space<any>> -> memref<1x32xf32, #tpu.memory_space<any>>
    %c14_i32_392 = arith.constant 14 : i32
    %c0_i32_393 = arith.constant 0 : i32
    %535 = tpu.memref_slice %arg5[%c14_i32_392, %c0_i32_393] : memref<48x32xf32, #tpu.memory_space<vmem>> -> memref<1x32xf32, #tpu.memory_space<vmem>>
    %536 = tpu.memref_slice %arg6[%c14_i32_390] : memref<48x!tpu.dma_semaphore, #tpu.memory_space<semaphore_mem>> -> memref<1x!tpu.dma_semaphore, #tpu.memory_space<semaphore_mem>>
    %537 = tpu.memref_squeeze %536 : memref<1x!tpu.dma_semaphore, #tpu.memory_space<semaphore_mem>> -> memref<!tpu.dma_semaphore, #tpu.memory_space<semaphore_mem>>
    tpu.wait_dma2 semaphore(%537 : memref<!tpu.dma_semaphore, #tpu.memory_space<semaphore_mem>>) src(%534 : memref<1x32xf32, #tpu.memory_space<any>>) dst(%535 : memref<1x32xf32, #tpu.memory_space<vmem>>)
    %c22_i32_394 = arith.constant 22 : i32
    %c0_i32_395 = arith.constant 0 : i32
    %538 = tpu.memref_slice %arg3[%309, %c0_i32_395] : memref<64x32xf32, #tpu.memory_space<any>> -> memref<1x32xf32, #tpu.memory_space<any>>
    %c22_i32_396 = arith.constant 22 : i32
    %c0_i32_397 = arith.constant 0 : i32
    %539 = tpu.memref_slice %arg5[%c22_i32_396, %c0_i32_397] : memref<48x32xf32, #tpu.memory_space<vmem>> -> memref<1x32xf32, #tpu.memory_space<vmem>>
    %540 = tpu.memref_slice %arg6[%c22_i32_394] : memref<48x!tpu.dma_semaphore, #tpu.memory_space<semaphore_mem>> -> memref<1x!tpu.dma_semaphore, #tpu.memory_space<semaphore_mem>>
    %541 = tpu.memref_squeeze %540 : memref<1x!tpu.dma_semaphore, #tpu.memory_space<semaphore_mem>> -> memref<!tpu.dma_semaphore, #tpu.memory_space<semaphore_mem>>
    tpu.wait_dma2 semaphore(%541 : memref<!tpu.dma_semaphore, #tpu.memory_space<semaphore_mem>>) src(%538 : memref<1x32xf32, #tpu.memory_space<any>>) dst(%539 : memref<1x32xf32, #tpu.memory_space<vmem>>)
    %c30_i32_398 = arith.constant 30 : i32
    %c0_i32_399 = arith.constant 0 : i32
    %542 = tpu.memref_slice %arg3[%317, %c0_i32_399] : memref<64x32xf32, #tpu.memory_space<any>> -> memref<1x32xf32, #tpu.memory_space<any>>
    %c30_i32_400 = arith.constant 30 : i32
    %c0_i32_401 = arith.constant 0 : i32
    %543 = tpu.memref_slice %arg5[%c30_i32_400, %c0_i32_401] : memref<48x32xf32, #tpu.memory_space<vmem>> -> memref<1x32xf32, #tpu.memory_space<vmem>>
    %544 = tpu.memref_slice %arg6[%c30_i32_398] : memref<48x!tpu.dma_semaphore, #tpu.memory_space<semaphore_mem>> -> memref<1x!tpu.dma_semaphore, #tpu.memory_space<semaphore_mem>>
    %545 = tpu.memref_squeeze %544 : memref<1x!tpu.dma_semaphore, #tpu.memory_space<semaphore_mem>> -> memref<!tpu.dma_semaphore, #tpu.memory_space<semaphore_mem>>
    tpu.wait_dma2 semaphore(%545 : memref<!tpu.dma_semaphore, #tpu.memory_space<semaphore_mem>>) src(%542 : memref<1x32xf32, #tpu.memory_space<any>>) dst(%543 : memref<1x32xf32, #tpu.memory_space<vmem>>)
    %c38_i32_402 = arith.constant 38 : i32
    %c0_i32_403 = arith.constant 0 : i32
    %546 = tpu.memref_slice %arg3[%325, %c0_i32_403] : memref<64x32xf32, #tpu.memory_space<any>> -> memref<1x32xf32, #tpu.memory_space<any>>
    %c38_i32_404 = arith.constant 38 : i32
    %c0_i32_405 = arith.constant 0 : i32
    %547 = tpu.memref_slice %arg5[%c38_i32_404, %c0_i32_405] : memref<48x32xf32, #tpu.memory_space<vmem>> -> memref<1x32xf32, #tpu.memory_space<vmem>>
    %548 = tpu.memref_slice %arg6[%c38_i32_402] : memref<48x!tpu.dma_semaphore, #tpu.memory_space<semaphore_mem>> -> memref<1x!tpu.dma_semaphore, #tpu.memory_space<semaphore_mem>>
    %549 = tpu.memref_squeeze %548 : memref<1x!tpu.dma_semaphore, #tpu.memory_space<semaphore_mem>> -> memref<!tpu.dma_semaphore, #tpu.memory_space<semaphore_mem>>
    tpu.wait_dma2 semaphore(%549 : memref<!tpu.dma_semaphore, #tpu.memory_space<semaphore_mem>>) src(%546 : memref<1x32xf32, #tpu.memory_space<any>>) dst(%547 : memref<1x32xf32, #tpu.memory_space<vmem>>)
    %c46_i32_406 = arith.constant 46 : i32
    %c0_i32_407 = arith.constant 0 : i32
    %550 = tpu.memref_slice %arg3[%333, %c0_i32_407] : memref<64x32xf32, #tpu.memory_space<any>> -> memref<1x32xf32, #tpu.memory_space<any>>
    %c46_i32_408 = arith.constant 46 : i32
    %c0_i32_409 = arith.constant 0 : i32
    %551 = tpu.memref_slice %arg5[%c46_i32_408, %c0_i32_409] : memref<48x32xf32, #tpu.memory_space<vmem>> -> memref<1x32xf32, #tpu.memory_space<vmem>>
    %552 = tpu.memref_slice %arg6[%c46_i32_406] : memref<48x!tpu.dma_semaphore, #tpu.memory_space<semaphore_mem>> -> memref<1x!tpu.dma_semaphore, #tpu.memory_space<semaphore_mem>>
    %553 = tpu.memref_squeeze %552 : memref<1x!tpu.dma_semaphore, #tpu.memory_space<semaphore_mem>> -> memref<!tpu.dma_semaphore, #tpu.memory_space<semaphore_mem>>
    tpu.wait_dma2 semaphore(%553 : memref<!tpu.dma_semaphore, #tpu.memory_space<semaphore_mem>>) src(%550 : memref<1x32xf32, #tpu.memory_space<any>>) dst(%551 : memref<1x32xf32, #tpu.memory_space<vmem>>)
    %c7_i32_410 = arith.constant 7 : i32
    %c0_i32_411 = arith.constant 0 : i32
    %554 = tpu.memref_slice %arg3[%341, %c0_i32_411] : memref<64x32xf32, #tpu.memory_space<any>> -> memref<1x32xf32, #tpu.memory_space<any>>
    %c7_i32_412 = arith.constant 7 : i32
    %c0_i32_413 = arith.constant 0 : i32
    %555 = tpu.memref_slice %arg5[%c7_i32_412, %c0_i32_413] : memref<48x32xf32, #tpu.memory_space<vmem>> -> memref<1x32xf32, #tpu.memory_space<vmem>>
    %556 = tpu.memref_slice %arg6[%c7_i32_410] : memref<48x!tpu.dma_semaphore, #tpu.memory_space<semaphore_mem>> -> memref<1x!tpu.dma_semaphore, #tpu.memory_space<semaphore_mem>>
    %557 = tpu.memref_squeeze %556 : memref<1x!tpu.dma_semaphore, #tpu.memory_space<semaphore_mem>> -> memref<!tpu.dma_semaphore, #tpu.memory_space<semaphore_mem>>
    tpu.wait_dma2 semaphore(%557 : memref<!tpu.dma_semaphore, #tpu.memory_space<semaphore_mem>>) src(%554 : memref<1x32xf32, #tpu.memory_space<any>>) dst(%555 : memref<1x32xf32, #tpu.memory_space<vmem>>)
    %c15_i32_414 = arith.constant 15 : i32
    %c0_i32_415 = arith.constant 0 : i32
    %558 = tpu.memref_slice %arg3[%349, %c0_i32_415] : memref<64x32xf32, #tpu.memory_space<any>> -> memref<1x32xf32, #tpu.memory_space<any>>
    %c15_i32_416 = arith.constant 15 : i32
    %c0_i32_417 = arith.constant 0 : i32
    %559 = tpu.memref_slice %arg5[%c15_i32_416, %c0_i32_417] : memref<48x32xf32, #tpu.memory_space<vmem>> -> memref<1x32xf32, #tpu.memory_space<vmem>>
    %560 = tpu.memref_slice %arg6[%c15_i32_414] : memref<48x!tpu.dma_semaphore, #tpu.memory_space<semaphore_mem>> -> memref<1x!tpu.dma_semaphore, #tpu.memory_space<semaphore_mem>>
    %561 = tpu.memref_squeeze %560 : memref<1x!tpu.dma_semaphore, #tpu.memory_space<semaphore_mem>> -> memref<!tpu.dma_semaphore, #tpu.memory_space<semaphore_mem>>
    tpu.wait_dma2 semaphore(%561 : memref<!tpu.dma_semaphore, #tpu.memory_space<semaphore_mem>>) src(%558 : memref<1x32xf32, #tpu.memory_space<any>>) dst(%559 : memref<1x32xf32, #tpu.memory_space<vmem>>)
    %c23_i32_418 = arith.constant 23 : i32
    %c0_i32_419 = arith.constant 0 : i32
    %562 = tpu.memref_slice %arg3[%357, %c0_i32_419] : memref<64x32xf32, #tpu.memory_space<any>> -> memref<1x32xf32, #tpu.memory_space<any>>
    %c23_i32_420 = arith.constant 23 : i32
    %c0_i32_421 = arith.constant 0 : i32
    %563 = tpu.memref_slice %arg5[%c23_i32_420, %c0_i32_421] : memref<48x32xf32, #tpu.memory_space<vmem>> -> memref<1x32xf32, #tpu.memory_space<vmem>>
    %564 = tpu.memref_slice %arg6[%c23_i32_418] : memref<48x!tpu.dma_semaphore, #tpu.memory_space<semaphore_mem>> -> memref<1x!tpu.dma_semaphore, #tpu.memory_space<semaphore_mem>>
    %565 = tpu.memref_squeeze %564 : memref<1x!tpu.dma_semaphore, #tpu.memory_space<semaphore_mem>> -> memref<!tpu.dma_semaphore, #tpu.memory_space<semaphore_mem>>
    tpu.wait_dma2 semaphore(%565 : memref<!tpu.dma_semaphore, #tpu.memory_space<semaphore_mem>>) src(%562 : memref<1x32xf32, #tpu.memory_space<any>>) dst(%563 : memref<1x32xf32, #tpu.memory_space<vmem>>)
    %c31_i32_422 = arith.constant 31 : i32
    %c0_i32_423 = arith.constant 0 : i32
    %566 = tpu.memref_slice %arg3[%365, %c0_i32_423] : memref<64x32xf32, #tpu.memory_space<any>> -> memref<1x32xf32, #tpu.memory_space<any>>
    %c31_i32_424 = arith.constant 31 : i32
    %c0_i32_425 = arith.constant 0 : i32
    %567 = tpu.memref_slice %arg5[%c31_i32_424, %c0_i32_425] : memref<48x32xf32, #tpu.memory_space<vmem>> -> memref<1x32xf32, #tpu.memory_space<vmem>>
    %568 = tpu.memref_slice %arg6[%c31_i32_422] : memref<48x!tpu.dma_semaphore, #tpu.memory_space<semaphore_mem>> -> memref<1x!tpu.dma_semaphore, #tpu.memory_space<semaphore_mem>>
    %569 = tpu.memref_squeeze %568 : memref<1x!tpu.dma_semaphore, #tpu.memory_space<semaphore_mem>> -> memref<!tpu.dma_semaphore, #tpu.memory_space<semaphore_mem>>
    tpu.wait_dma2 semaphore(%569 : memref<!tpu.dma_semaphore, #tpu.memory_space<semaphore_mem>>) src(%566 : memref<1x32xf32, #tpu.memory_space<any>>) dst(%567 : memref<1x32xf32, #tpu.memory_space<vmem>>)
    %c39_i32_426 = arith.constant 39 : i32
    %c0_i32_427 = arith.constant 0 : i32
    %570 = tpu.memref_slice %arg3[%373, %c0_i32_427] : memref<64x32xf32, #tpu.memory_space<any>> -> memref<1x32xf32, #tpu.memory_space<any>>
    %c39_i32_428 = arith.constant 39 : i32
    %c0_i32_429 = arith.constant 0 : i32
    %571 = tpu.memref_slice %arg5[%c39_i32_428, %c0_i32_429] : memref<48x32xf32, #tpu.memory_space<vmem>> -> memref<1x32xf32, #tpu.memory_space<vmem>>
    %572 = tpu.memref_slice %arg6[%c39_i32_426] : memref<48x!tpu.dma_semaphore, #tpu.memory_space<semaphore_mem>> -> memref<1x!tpu.dma_semaphore, #tpu.memory_space<semaphore_mem>>
    %573 = tpu.memref_squeeze %572 : memref<1x!tpu.dma_semaphore, #tpu.memory_space<semaphore_mem>> -> memref<!tpu.dma_semaphore, #tpu.memory_space<semaphore_mem>>
    tpu.wait_dma2 semaphore(%573 : memref<!tpu.dma_semaphore, #tpu.memory_space<semaphore_mem>>) src(%570 : memref<1x32xf32, #tpu.memory_space<any>>) dst(%571 : memref<1x32xf32, #tpu.memory_space<vmem>>)
    %c47_i32_430 = arith.constant 47 : i32
    %c0_i32_431 = arith.constant 0 : i32
    %574 = tpu.memref_slice %arg3[%381, %c0_i32_431] : memref<64x32xf32, #tpu.memory_space<any>> -> memref<1x32xf32, #tpu.memory_space<any>>
    %c47_i32_432 = arith.constant 47 : i32
    %c0_i32_433 = arith.constant 0 : i32
    %575 = tpu.memref_slice %arg5[%c47_i32_432, %c0_i32_433] : memref<48x32xf32, #tpu.memory_space<vmem>> -> memref<1x32xf32, #tpu.memory_space<vmem>>
    %576 = tpu.memref_slice %arg6[%c47_i32_430] : memref<48x!tpu.dma_semaphore, #tpu.memory_space<semaphore_mem>> -> memref<1x!tpu.dma_semaphore, #tpu.memory_space<semaphore_mem>>
    %577 = tpu.memref_squeeze %576 : memref<1x!tpu.dma_semaphore, #tpu.memory_space<semaphore_mem>> -> memref<!tpu.dma_semaphore, #tpu.memory_space<semaphore_mem>>
    tpu.wait_dma2 semaphore(%577 : memref<!tpu.dma_semaphore, #tpu.memory_space<semaphore_mem>>) src(%574 : memref<1x32xf32, #tpu.memory_space<any>>) dst(%575 : memref<1x32xf32, #tpu.memory_space<vmem>>)
    %c0 = arith.constant 0 : index
    %c0_434 = arith.constant 0 : index
    %578 = vector.load %arg2[%c0, %c0_434] : memref<8x32xf32, #tpu.memory_space<vmem>>, vector<8x32xf32>
    %c0_435 = arith.constant 0 : index
    %c0_436 = arith.constant 0 : index
    %579 = vector.load %arg5[%c0_435, %c0_436] : memref<48x32xf32, #tpu.memory_space<vmem>>, vector<8x32xf32>
    %580 = arith.mulf %578, %579 : vector<8x32xf32>
    %cst = arith.constant dense<0.000000e+00> : vector<8xf32>
    %581 = vector.multi_reduction <add>, %580, %cst [1] : vector<8x32xf32> to vector<8xf32>
    %582 = vector.shape_cast %581 : vector<8xf32> to vector<8x1xf32>
    %c8 = arith.constant 8 : index
    %c0_437 = arith.constant 0 : index
    %583 = vector.load %arg5[%c8, %c0_437] : memref<48x32xf32, #tpu.memory_space<vmem>>, vector<8x32xf32>
    %584 = arith.mulf %578, %583 : vector<8x32xf32>
    %cst_438 = arith.constant dense<0.000000e+00> : vector<8xf32>
    %585 = vector.multi_reduction <add>, %584, %cst_438 [1] : vector<8x32xf32> to vector<8xf32>
    %586 = vector.shape_cast %585 : vector<8xf32> to vector<8x1xf32>
    %c16 = arith.constant 16 : index
    %c0_439 = arith.constant 0 : index
    %587 = vector.load %arg5[%c16, %c0_439] : memref<48x32xf32, #tpu.memory_space<vmem>>, vector<8x32xf32>
    %588 = arith.mulf %578, %587 : vector<8x32xf32>
    %cst_440 = arith.constant dense<0.000000e+00> : vector<8xf32>
    %589 = vector.multi_reduction <add>, %588, %cst_440 [1] : vector<8x32xf32> to vector<8xf32>
    %590 = vector.shape_cast %589 : vector<8xf32> to vector<8x1xf32>
    %c24 = arith.constant 24 : index
    %c0_441 = arith.constant 0 : index
    %591 = vector.load %arg5[%c24, %c0_441] : memref<48x32xf32, #tpu.memory_space<vmem>>, vector<8x32xf32>
    %592 = arith.mulf %578, %591 : vector<8x32xf32>
    %cst_442 = arith.constant dense<0.000000e+00> : vector<8xf32>
    %593 = vector.multi_reduction <add>, %592, %cst_442 [1] : vector<8x32xf32> to vector<8xf32>
    %594 = vector.shape_cast %593 : vector<8xf32> to vector<8x1xf32>
    %c32 = arith.constant 32 : index
    %c0_443 = arith.constant 0 : index
    %595 = vector.load %arg5[%c32, %c0_443] : memref<48x32xf32, #tpu.memory_space<vmem>>, vector<8x32xf32>
    %596 = arith.mulf %578, %595 : vector<8x32xf32>
    %cst_444 = arith.constant dense<0.000000e+00> : vector<8xf32>
    %597 = vector.multi_reduction <add>, %596, %cst_444 [1] : vector<8x32xf32> to vector<8xf32>
    %598 = vector.shape_cast %597 : vector<8xf32> to vector<8x1xf32>
    %c40 = arith.constant 40 : index
    %c0_445 = arith.constant 0 : index
    %599 = vector.load %arg5[%c40, %c0_445] : memref<48x32xf32, #tpu.memory_space<vmem>>, vector<8x32xf32>
    %600 = arith.mulf %578, %599 : vector<8x32xf32>
    %cst_446 = arith.constant dense<0.000000e+00> : vector<8xf32>
    %601 = vector.multi_reduction <add>, %600, %cst_446 [1] : vector<8x32xf32> to vector<8xf32>
    %602 = vector.shape_cast %601 : vector<8xf32> to vector<8x1xf32>
    %603 = tpu.concatenate %582, %586, %590, %594, %598, %602 in 1 : vector<8x1xf32>, vector<8x1xf32>, vector<8x1xf32>, vector<8x1xf32>, vector<8x1xf32>, vector<8x1xf32> -> vector<8x6xf32>
    %604 = arith.negf %603 : vector<8x6xf32>
    %605 = math.exp %604 : vector<8x6xf32>
    %cst_447 = arith.constant 1.000000e+00 : f32
    %606 = vector.broadcast %cst_447 : f32 to vector<8x6xf32>
    %607 = arith.addf %606, %605 : vector<8x6xf32>
    %608 = arith.divf %606, %607 : vector<8x6xf32>
    %cst_448 = arith.constant 0.000000e+00 : f32
    %609 = vector.broadcast %cst_448 : f32 to vector<8x122xf32>
    %610 = tpu.concatenate %608, %609 in 1 : vector<8x6xf32>, vector<8x122xf32> -> vector<8x128xf32>
    %c0_449 = arith.constant 0 : index
    %c0_450 = arith.constant 0 : index
    %611 = vector.load %arg4[%c0_449, %c0_450] : memref<8x128xf32, #tpu.memory_space<vmem>>, vector<8x128xf32>
    tpu.vector_store %arg4[%c0_449, %c0_450], %610 {strides = array<i32>} : memref<8x128xf32, #tpu.memory_space<vmem>>, vector<8x128xf32>,
    return
  }
  func.func @transform_0(%arg0: i32, %arg1: memref<96xi32, #tpu.memory_space<smem>>) -> (i32, i32) {
    %c0_i32 = arith.constant 0 : i32
    %c0_i32_0 = arith.constant 0 : i32
    return %arg0, %c0_i32 : i32, i32
  }
  func.func @transform_2(%arg0: i32, %arg1: memref<96xi32, #tpu.memory_space<smem>>) -> (i32, i32) {
    %c0_i32 = arith.constant 0 : i32
    %c0_i32_0 = arith.constant 0 : i32
    return %arg0, %c0_i32 : i32, i32
  }
}

</mosaic_0001>

<llo_original>
// kernel: tpu_custom_call.1
$region0: #{tpu_custom_call.1}
  #allocation0 [shape = 'u32[]', space=smem, size = 0x4, offset = 0x4, fixed_abs, tag = 'smem constant byte address 0x4 - core index']
  #allocation1 [shape = 'u32[144,128]{1,0:T(1,128)}', space=vmem, size = 0x12000, scoped, tag = 'internal scratch']
  #allocation2 [shape = 'f32[48,32]{1,0:T(8,128)}', space=vmem, size = 0x6000, scoped, tag = 'scratch operand']
  #allocation3 [shape = 's32[48]{0}', space=sflag, size = 0xc0, scoped, tag = 'scratch operand']
  #allocation4 [shape = 's32[1]{0}', space=sflag, size = 0x4, scoped, tag = 'scoped memory for tpu_custom_call.1']
  #allocation5 [shape = 'u8[512]{0}', space=smem, size = 0x200, scoped, tag = 'prefetched SMEM operand 0']
  #allocation8 [shape = 's32[]', space=sflag, size = 0x4, offset = 0, fixed_abs, tag = 'sflag constant byte address 0x0 - dummy sync flag']
  #allocation9 [shape = 's32[]', space=sflag, size = 0x4, offset = 0, fixed_abs, tag = 'sflag constant byte address 0x0 - dummy sync flag']
  #allocation10 [shape = 's32[]', space=sflag, size = 0x4, offset = 0, fixed_abs, tag = 'sflag constant byte address 0x0 - dummy sync flag']
  #allocation11 [shape = 's32[]', space=sflag, size = 0x4, offset = 0, fixed_abs, tag = 'sflag constant byte address 0x0 - dummy sync flag']
  #allocation12 [shape = 's32[]', space=sflag, size = 0x4, offset = 0, fixed_abs, tag = 'sflag constant byte address 0x0 - dummy sync flag']
  #allocation13 [shape = 's32[]', space=sflag, size = 0x4, offset = 0, fixed_abs, tag = 'sflag constant byte address 0x0 - dummy sync flag']
  #allocation14 [shape = 's32[]', space=sflag, size = 0x4, offset = 0, fixed_abs, tag = 'sflag constant byte address 0x0 - dummy sync flag']
  #allocation15 [shape = 's32[]', space=sflag, size = 0x4, offset = 0, fixed_abs, tag = 'sflag constant byte address 0x0 - dummy sync flag']
  #allocation16 [shape = 's32[]', space=sflag, size = 0x4, offset = 0, fixed_abs, tag = 'sflag constant byte address 0x0 - dummy sync flag']
  #allocation17 [shape = 's32[]', space=sflag, size = 0x4, offset = 0, fixed_abs, tag = 'sflag constant byte address 0x0 - dummy sync flag']
  #allocation18 [shape = 's32[]', space=sflag, size = 0x4, offset = 0, fixed_abs, tag = 'sflag constant byte address 0x0 - dummy sync flag']
  #allocation19 [shape = 's32[]', space=sflag, size = 0x4, offset = 0, fixed_abs, tag = 'sflag constant byte address 0x0 - dummy sync flag']
  #allocation20 [shape = 's32[]', space=sflag, size = 0x4, offset = 0, fixed_abs, tag = 'sflag constant byte address 0x0 - dummy sync flag']
  #allocation21 [shape = 's32[]', space=sflag, size = 0x4, offset = 0, fixed_abs, tag = 'sflag constant byte address 0x0 - dummy sync flag']
  #allocation22 [shape = 's32[]', space=sflag, size = 0x4, offset = 0, fixed_abs, tag = 'sflag constant byte address 0x0 - dummy sync flag']
  #allocation23 [shape = 's32[]', space=sflag, size = 0x4, offset = 0, fixed_abs, tag = 'sflag constant byte address 0x0 - dummy sync flag']
  #allocation24 [shape = 's32[]', space=sflag, size = 0x4, offset = 0, fixed_abs, tag = 'sflag constant byte address 0x0 - dummy sync flag']
  #allocation25 [shape = 's32[]', space=sflag, size = 0x4, offset = 0, fixed_abs, tag = 'sflag constant byte address 0x0 - dummy sync flag']
  #allocation26 [shape = 's32[]', space=sflag, size = 0x4, offset = 0, fixed_abs, tag = 'sflag constant byte address 0x0 - dummy sync flag']
  #allocation27 [shape = 's32[]', space=sflag, size = 0x4, offset = 0, fixed_abs, tag = 'sflag constant byte address 0x0 - dummy sync flag']
  #allocation28 [shape = 's32[]', space=sflag, size = 0x4, offset = 0, fixed_abs, tag = 'sflag constant byte address 0x0 - dummy sync flag']
  #allocation29 [shape = 's32[]', space=sflag, size = 0x4, offset = 0, fixed_abs, tag = 'sflag constant byte address 0x0 - dummy sync flag']
  #allocation30 [shape = 's32[]', space=sflag, size = 0x4, offset = 0, fixed_abs, tag = 'sflag constant byte address 0x0 - dummy sync flag']
  #allocation31 [shape = 's32[]', space=sflag, size = 0x4, offset = 0, fixed_abs, tag = 'sflag constant byte address 0x0 - dummy sync flag']
  #allocation32 [shape = 's32[]', space=sflag, size = 0x4, offset = 0, fixed_abs, tag = 'sflag constant byte address 0x0 - dummy sync flag']
  #allocation33 [shape = 's32[]', space=sflag, size = 0x4, offset = 0, fixed_abs, tag = 'sflag constant byte address 0x0 - dummy sync flag']
  #allocation34 [shape = 's32[]', space=sflag, size = 0x4, offset = 0, fixed_abs, tag = 'sflag constant byte address 0x0 - dummy sync flag']
  #allocation35 [shape = 's32[]', space=sflag, size = 0x4, offset = 0, fixed_abs, tag = 'sflag constant byte address 0x0 - dummy sync flag']
  #allocation36 [shape = 's32[]', space=sflag, size = 0x4, offset = 0, fixed_abs, tag = 'sflag constant byte address 0x0 - dummy sync flag']
  #allocation37 [shape = 's32[]', space=sflag, size = 0x4, offset = 0, fixed_abs, tag = 'sflag constant byte address 0x0 - dummy sync flag']
  #allocation38 [shape = 's32[]', space=sflag, size = 0x4, offset = 0, fixed_abs, tag = 'sflag constant byte address 0x0 - dummy sync flag']
  #allocation39 [shape = 's32[]', space=sflag, size = 0x4, offset = 0, fixed_abs, tag = 'sflag constant byte address 0x0 - dummy sync flag']
  #allocation40 [shape = 's32[]', space=sflag, size = 0x4, offset = 0, fixed_abs, tag = 'sflag constant byte address 0x0 - dummy sync flag']
  #allocation41 [shape = 's32[]', space=sflag, size = 0x4, offset = 0, fixed_abs, tag = 'sflag constant byte address 0x0 - dummy sync flag']
  #allocation42 [shape = 's32[]', space=sflag, size = 0x4, offset = 0, fixed_abs, tag = 'sflag constant byte address 0x0 - dummy sync flag']
  #allocation43 [shape = 's32[]', space=sflag, size = 0x4, offset = 0, fixed_abs, tag = 'sflag constant byte address 0x0 - dummy sync flag']
  #allocation44 [shape = 's32[]', space=sflag, size = 0x4, offset = 0, fixed_abs, tag = 'sflag constant byte address 0x0 - dummy sync flag']
  #allocation45 [shape = 's32[]', space=sflag, size = 0x4, offset = 0, fixed_abs, tag = 'sflag constant byte address 0x0 - dummy sync flag']
  #allocation46 [shape = 's32[]', space=sflag, size = 0x4, offset = 0, fixed_abs, tag = 'sflag constant byte address 0x0 - dummy sync flag']
  #allocation47 [shape = 's32[]', space=sflag, size = 0x4, offset = 0, fixed_abs, tag = 'sflag constant byte address 0x0 - dummy sync flag']
  #allocation48 [shape = 's32[]', space=sflag, size = 0x4, offset = 0, fixed_abs, tag = 'sflag constant byte address 0x0 - dummy sync flag']
  #allocation49 [shape = 's32[]', space=sflag, size = 0x4, offset = 0, fixed_abs, tag = 'sflag constant byte address 0x0 - dummy sync flag']
  #allocation50 [shape = 's32[]', space=sflag, size = 0x4, offset = 0, fixed_abs, tag = 'sflag constant byte address 0x0 - dummy sync flag']
  #allocation51 [shape = 's32[]', space=sflag, size = 0x4, offset = 0, fixed_abs, tag = 'sflag constant byte address 0x0 - dummy sync flag']
  #allocation52 [shape = 's32[]', space=sflag, size = 0x4, offset = 0, fixed_abs, tag = 'sflag constant byte address 0x0 - dummy sync flag']
  #allocation53 [shape = 's32[]', space=sflag, size = 0x4, offset = 0, fixed_abs, tag = 'sflag constant byte address 0x0 - dummy sync flag']
  #allocation54 [shape = 's32[]', space=sflag, size = 0x4, offset = 0, fixed_abs, tag = 'sflag constant byte address 0x0 - dummy sync flag']
  #allocation55 [shape = 's32[]', space=sflag, size = 0x4, offset = 0, fixed_abs, tag = 'sflag constant byte address 0x0 - dummy sync flag']
  %s0 = inlined_call_operand.vmem [shape: s32[96], index: 0, kind: input, shape index: {}]
  %s1 = inlined_call_operand.vmem [shape: f32[16,32], index: 1, kind: input, shape index: {}]
  %s2 = inlined_call_operand.vmem [shape: f32[64,32], index: 2, kind: input, shape index: {}]
  %s3 = inlined_call_operand.hbm [shape: f32[16,128], index: 3, kind: output, shape index: {}]
  %s4 = sld [smem:[#allocation0]]
  $region1477: #{tpu_custom_call.1} parent=0
    _
  %s6 = ssub.s32 1, %s4
  %s7 = scalar_select 0, %s6, %s4
  %s8 = sshll.u32 %s0, 4
  %s9 = int_to_ptr.vmem [resolvable:$true] %s8
  %11 = dma.vmem_to_smem %s9, 16, [#allocation5], [#allocation4]
  %12 = dma.done [#allocation4], 16
  %13 = sfence
  $region1: #{tpu_custom_call.1} parent=0
    #allocation6 [shape = 'u8[8192]{0}', space=vmem, size = 0x2000, scoped, tag = 'output window, operand 0']
    #allocation7 [shape = 's32[2]{0}', space=sflag, size = 0x8, scoped, tag = 'scoped memory for tpu_custom_call.1']
    %14 = vsyncpa [#allocation7], 0
    %s15 = scalar_lea.sflag [#allocation7], 1
    %16 = vsyncpa %s15, 0
    loop: start=0, step=1, limit=4
    $region2: #{tpu_custom_call.1} parent=1 // loop_pre_header
      _
    $region3: #{tpu_custom_call.1} parent=1 // loop_header
      %s18 = sphi 0, %s22
      %p19 = scmp.ge.s32.totalorder %s18, 4
      %s28 = sphi 0, %s30
      %s31 = sphi 0, %s28
      %s32 = sphi 0, %s31
      %s48 = sphi 0, %s32
      %s54 = sphi 0, %s56
      %s57 = sphi 0, %s54
      %s58 = sphi 0, %s57
      %s74 = sphi 0, %s58
    $region4: #{tpu_custom_call.1} parent=1 // loop_header_branch
      %21 = sbr.rel (%p19) target = $region8
    $region5: #{tpu_custom_call.1} parent=1 // loop_body
      %s23 = ssub.s32 %s18, 1
      %s24 = ssub.s32 %s18, 2
      %s25 = sadd.s32 %s18, 1
      %s26 = ssub.s32 %s18, %s25
      %p27 = scmp.eq.s32.totalorder %s26, 0
      %s29 = sadd.s32 %s28, 1
      %s30 = scalar_select %p27, %s28, %s29
      %p33 = pneg %p27
      %p34 = scmp.eq.s32.totalorder %s18, 1
      %p35 = por %p33, %p34
      %p36 = scmp.ne.s32.totalorder %s28, %s31
      %p37 = scmp.eq.s32.totalorder %s18, 0
      %p38 = por %p36, %p37
      %p39 = scmp.ne.s32.totalorder %s28, %s31
      %p40 = scmp.eq.s32.totalorder %s23, 1
      %p41 = por %p39, %p40
      %p42 = scmp.ne.s32.totalorder %s31, %s32
      %p43 = scmp.eq.s32.totalorder %s23, 0
      %p44 = por %p42, %p43
      %p45 = scmp.ne.s32.totalorder %s31, %s32
      %p46 = scmp.eq.s32.totalorder %s24, 1
      %p47 = por %p45, %p46
      %p49 = scmp.ne.s32.totalorder %s32, %s48
      %p50 = scmp.eq.s32.totalorder %s24, 0
      %p51 = por %p49, %p50
      %s52 = ssub.s32 %s18, %s25
      %p53 = scmp.eq.s32.totalorder %s52, 0
      %s55 = sadd.s32 %s54, 1
      %s56 = scalar_select %p53, %s54, %s55
      %p59 = pneg %p53
      %p60 = scmp.eq.s32.totalorder %s18, 1
      %p61 = por %p59, %p60
      %p62 = scmp.ne.s32.totalorder %s54, %s57
      %p63 = scmp.eq.s32.totalorder %s18, 0
      %p64 = por %p62, %p63
      %p65 = scmp.ne.s32.totalorder %s54, %s57
      %p66 = scmp.eq.s32.totalorder %s23, 1
      %p67 = por %p65, %p66
      %p68 = scmp.ne.s32.totalorder %s57, %s58
      %p69 = scmp.eq.s32.totalorder %s23, 0
      %p70 = por %p68, %p69
      %p71 = scmp.ne.s32.totalorder %s57, %s58
      %p72 = scmp.eq.s32.totalorder %s24, 1
      %p73 = por %p71, %p72
      %p75 = scmp.ne.s32.totalorder %s58, %s74
      %p76 = scmp.eq.s32.totalorder %s24, 0
      %p77 = por %p75, %p76
      %p78 = scmp.le.s32.totalorder 1, %s18
      %p79 = scmp.lt.s32.totalorder %s18, 3
      %p80 = pnand %p78, %p79
      %p81 = pneg %p80
      // Predicated region
      $region9: #{tpu_custom_call.1} parent=5 // pred_check
        _
      $region10: #{tpu_custom_call.1} parent=5 // pred_check_branch
        %83 = sbr.rel (%p80) target = $region12
      $region11: #{tpu_custom_call.1} parent=5 // pred_region
        %s84 = ssub.s32 %s18, 1
      $region12: #{tpu_custom_call.1} parent=5 // pred_fallthru
        _
      %p85 = scmp.lt.s32.totalorder %s18, 2
      // Predicated region
      $region13: #{tpu_custom_call.1} parent=5 // pred_check
        %p86 = pneg %p85
      $region14: #{tpu_custom_call.1} parent=5 // pred_check_branch
        %88 = sbr.rel (%p86) target = $region16
      $region15: #{tpu_custom_call.1} parent=5 // pred_region
        // Predicated region
        $region17: #{tpu_custom_call.1} parent=15 // pred_check
          %p89 = pneg %p38
        $region18: #{tpu_custom_call.1} parent=15 // pred_check_branch
          %91 = sbr.rel (%p89) target = $region20
        $region19: #{tpu_custom_call.1} parent=15 // pred_region
          %p92 = scmp.lt.s32.totalorder %s18, 1
          %s93 = scalar_select %p92, %s18, 1
          %s94 = smul.addr %s93, 8
          %s95 = scalar_lea.vmem %s1, %s94
        $region20: #{tpu_custom_call.1} parent=15 // pred_fallthru
          _
      $region16: #{tpu_custom_call.1} parent=5 // pred_fallthru
        _
      %p96 = scmp.le.s32.totalorder 1, %s18
      %p97 = scmp.lt.s32.totalorder %s18, 3
      %p98 = pnand %p96, %p97
      %p99 = pneg %p98
      // Predicated region
      $region21: #{tpu_custom_call.1} parent=5 // pred_check
        _
      $region22: #{tpu_custom_call.1} parent=5 // pred_check_branch
        %101 = sbr.rel (%p98) target = $region24
      $region23: #{tpu_custom_call.1} parent=5 // pred_region
        %s102 = ssub.s32 %s18, 1
        %p103 = scmp.lt.s32.totalorder %s23, 1
        %s104 = scalar_select %p103, %s23, 1
        %s105 = smul.addr %s104, 8
        %s106 = scalar_lea.vmem %s1, %s105
        %p107 = pneg %p44
        %p108 = pneg %p41
        %p109 = pneg %p70
        %p110 = pneg %p67
        %s111 = sand.u32 %s57, 1
        %s112 = scalar_lea.sflag [#allocation7], %s111
        %s113 = sand.u32 %s57, 1
        %s114 = smul.addr %s113, 8
        %s115 = scalar_lea.vmem [#allocation6], %s114
        %p116 = scmp.lt.s32.totalorder %s23, 1
        %s117 = scalar_select %p116, %s23, 1
        %s118 = smul.addr %s117, 8
        %s119 = scalar_lea.vmem %s1, %s118
        %s120 = smul.u32 %s23, 48
        %s121 = sld [smem:[#allocation5 + %s120]]
        %s122 = scalar_lea.vmem %s2, %s121
        %p124 = scmp.lt.u32.totalorder 1, 8
        %p125 = pneg %p124
        // Predicated region
        $region25: #{tpu_custom_call.1} parent=23 // pred_check
          _
        $region26: #{tpu_custom_call.1} parent=23 // pred_check_branch
          %127 = sbr.rel (%p124) target = $region28
        $region27: #{tpu_custom_call.1} parent=23 // pred_region
          %s142 = sand.u32 1, 7
          %p143 = scmp.eq.s32.totalorder %s142, 0
          %p144 = pneg %p143
          // Predicated region
          $region40: #{tpu_custom_call.1} parent=27 // pred_check
            _
          $region41: #{tpu_custom_call.1} parent=27 // pred_check_branch
            %146 = sbr.rel (%p143) target = $region43
          $region42: #{tpu_custom_call.1} parent=27 // pred_region
            %s147 = sand.u32 1, 7
            %s148 = ssub.s32 1, %s147
            %s149 = scalar_lea.vmem %s122, %s148
            %s150 = ssub.s32 1, %s147
            %s151 = scalar_lea.vmem [#allocation2], %s150
            %s152 = sshllo.u32 0, %s147
            loop: start=0, step=1, limit=1
            $region44: #{tpu_custom_call.1} parent=42 // loop_pre_header
              _
            $region45: #{tpu_custom_call.1} parent=42 // loop_header
              %s154 = sphi 0, %s158
              %p155 = scmp.ge.s32.totalorder %s154, 1
              %s159 = sphi %s149, %s149
              %s160 = sphi %s151, %s151
            $region46: #{tpu_custom_call.1} parent=42 // loop_header_branch
              %157 = sbr.rel (%p155) target = $region50
            $region47: #{tpu_custom_call.1} parent=42 // loop_body
              %v161 = vld [vmem:[%s159] sm:%s152]
              %162 = vst [vmem:[%s160] sm:%s152] %v161
            $region48: #{tpu_custom_call.1} parent=42 // loop_footer
              %s158 = sadd.s32 1, %s154
            $region49: #{tpu_custom_call.1} parent=42 // loop_footer_branch
              %153 = sbr.rel target = $region45
            $region50: #{tpu_custom_call.1} parent=42 // loop_exit
              _
          $region43: #{tpu_custom_call.1} parent=27 // pred_fallthru
            _
        $region28: #{tpu_custom_call.1} parent=23 // pred_fallthru
          _
        // Predicated region
        $region29: #{tpu_custom_call.1} parent=23 // pred_check
          %p128 = pneg %p124
        $region30: #{tpu_custom_call.1} parent=23 // pred_check_branch
          %130 = sbr.rel (%p128) target = $region32
        $region31: #{tpu_custom_call.1} parent=23 // pred_region
          %s131 = sshllo.u32 0, 1
          loop: start=0, step=1, limit=1
          $region33: #{tpu_custom_call.1} parent=31 // loop_pre_header
            _
          $region34: #{tpu_custom_call.1} parent=31 // loop_header
            %s133 = sphi 0, %s137
            %p134 = scmp.ge.s32.totalorder %s133, 1
            %s138 = sphi %s122, %s122
            %s139 = sphi [#allocation2], [#allocation2]
          $region35: #{tpu_custom_call.1} parent=31 // loop_header_branch
            %136 = sbr.rel (%p134) target = $region39
          $region36: #{tpu_custom_call.1} parent=31 // loop_body
            %v140 = vld [vmem:[%s138] sm:%s131]
            %141 = vst [vmem:[%s139] sm:%s131] %v140
          $region37: #{tpu_custom_call.1} parent=31 // loop_footer
            %s137 = sadd.s32 1, %s133
          $region38: #{tpu_custom_call.1} parent=31 // loop_footer_branch
            %132 = sbr.rel target = $region34
          $region39: #{tpu_custom_call.1} parent=31 // loop_exit
            _
        $region32: #{tpu_custom_call.1} parent=23 // pred_fallthru
          _
        // Predicated region
        $region51: #{tpu_custom_call.1} parent=23 // pred_check
          _
        $region52: #{tpu_custom_call.1} parent=23 // pred_check_branch
          %165 = sbr.rel (0) target = $region54
        $region53: #{tpu_custom_call.1} parent=23 // pred_region
          %166 = vsyncadd [#allocation3], 16
        $region54: #{tpu_custom_call.1} parent=23 // pred_fallthru
          _
        %s167 = sadd.s32 %s120, 1
        %s168 = sld [smem:[#allocation5 + %s167]]
        %s169 = scalar_lea.vmem %s2, %s168
        %s170 = scalar_lea.vmem [#allocation2], 8
        %s171 = scalar_lea.sflag [#allocation3], 8
        %p173 = scmp.lt.u32.totalorder 1, 8
        %p174 = pneg %p173
        // Predicated region
        $region55: #{tpu_custom_call.1} parent=23 // pred_check
          _
        $region56: #{tpu_custom_call.1} parent=23 // pred_check_branch
          %176 = sbr.rel (%p173) target = $region58
        $region57: #{tpu_custom_call.1} parent=23 // pred_region
          %s191 = sand.u32 1, 7
          %p192 = scmp.eq.s32.totalorder %s191, 0
          %p193 = pneg %p192
          // Predicated region
          $region70: #{tpu_custom_call.1} parent=57 // pred_check
            _
          $region71: #{tpu_custom_call.1} parent=57 // pred_check_branch
            %195 = sbr.rel (%p192) target = $region73
          $region72: #{tpu_custom_call.1} parent=57 // pred_region
            %s196 = sand.u32 1, 7
            %s197 = ssub.s32 1, %s196
            %s198 = scalar_lea.vmem %s169, %s197
            %s199 = ssub.s32 1, %s196
            %s200 = scalar_lea.vmem %s170, %s199 [#allocation2]
            %s201 = sshllo.u32 0, %s196
            loop: start=0, step=1, limit=1
            $region74: #{tpu_custom_call.1} parent=72 // loop_pre_header
              _
            $region75: #{tpu_custom_call.1} parent=72 // loop_header
              %s203 = sphi 0, %s207
              %p204 = scmp.ge.s32.totalorder %s203, 1
              %s208 = sphi %s198, %s198
              %s209 = sphi %s200, %s200
            $region76: #{tpu_custom_call.1} parent=72 // loop_header_branch
              %206 = sbr.rel (%p204) target = $region80
            $region77: #{tpu_custom_call.1} parent=72 // loop_body
              %v210 = vld [vmem:[%s208] sm:%s201]
              %211 = vst [vmem:[%s209] sm:%s201] %v210
            $region78: #{tpu_custom_call.1} parent=72 // loop_footer
              %s207 = sadd.s32 1, %s203
            $region79: #{tpu_custom_call.1} parent=72 // loop_footer_branch
              %202 = sbr.rel target = $region75
            $region80: #{tpu_custom_call.1} parent=72 // loop_exit
              _
          $region73: #{tpu_custom_call.1} parent=57 // pred_fallthru
            _
        $region58: #{tpu_custom_call.1} parent=23 // pred_fallthru
          _
        // Predicated region
        $region59: #{tpu_custom_call.1} parent=23 // pred_check
          %p177 = pneg %p173
        $region60: #{tpu_custom_call.1} parent=23 // pred_check_branch
          %179 = sbr.rel (%p177) target = $region62
        $region61: #{tpu_custom_call.1} parent=23 // pred_region
          %s180 = sshllo.u32 0, 1
          loop: start=0, step=1, limit=1
          $region63: #{tpu_custom_call.1} parent=61 // loop_pre_header
            _
          $region64: #{tpu_custom_call.1} parent=61 // loop_header
            %s182 = sphi 0, %s186
            %p183 = scmp.ge.s32.totalorder %s182, 1
            %s187 = sphi %s169, %s169
            %s188 = sphi %s170, %s170
          $region65: #{tpu_custom_call.1} parent=61 // loop_header_branch
            %185 = sbr.rel (%p183) target = $region69
          $region66: #{tpu_custom_call.1} parent=61 // loop_body
            %v189 = vld [vmem:[%s187] sm:%s180]
            %190 = vst [vmem:[%s188] sm:%s180] %v189
          $region67: #{tpu_custom_call.1} parent=61 // loop_footer
            %s186 = sadd.s32 1, %s182
          $region68: #{tpu_custom_call.1} parent=61 // loop_footer_branch
            %181 = sbr.rel target = $region64
          $region69: #{tpu_custom_call.1} parent=61 // loop_exit
            _
        $region62: #{tpu_custom_call.1} parent=23 // pred_fallthru
          _
        // Predicated region
        $region81: #{tpu_custom_call.1} parent=23 // pred_check
          _
        $region82: #{tpu_custom_call.1} parent=23 // pred_check_branch
          %214 = sbr.rel (0) target = $region84
        $region83: #{tpu_custom_call.1} parent=23 // pred_region
          %215 = vsyncadd %s171, 16
        $region84: #{tpu_custom_call.1} parent=23 // pred_fallthru
          _
        %s216 = sadd.s32 %s120, 2
        %s217 = sld [smem:[#allocation5 + %s216]]
        %s218 = scalar_lea.vmem %s2, %s217
        %s219 = scalar_lea.vmem [#allocation2], 16
        %s220 = scalar_lea.sflag [#allocation3], 16
        %p222 = scmp.lt.u32.totalorder 1, 8
        %p223 = pneg %p222
        // Predicated region
        $region85: #{tpu_custom_call.1} parent=23 // pred_check
          _
        $region86: #{tpu_custom_call.1} parent=23 // pred_check_branch
          %225 = sbr.rel (%p222) target = $region88
        $region87: #{tpu_custom_call.1} parent=23 // pred_region
          %s240 = sand.u32 1, 7
          %p241 = scmp.eq.s32.totalorder %s240, 0
          %p242 = pneg %p241
          // Predicated region
          $region100: #{tpu_custom_call.1} parent=87 // pred_check
            _
          $region101: #{tpu_custom_call.1} parent=87 // pred_check_branch
            %244 = sbr.rel (%p241) target = $region103
          $region102: #{tpu_custom_call.1} parent=87 // pred_region
            %s245 = sand.u32 1, 7
            %s246 = ssub.s32 1, %s245
            %s247 = scalar_lea.vmem %s218, %s246
            %s248 = ssub.s32 1, %s245
            %s249 = scalar_lea.vmem %s219, %s248 [#allocation2]
            %s250 = sshllo.u32 0, %s245
            loop: start=0, step=1, limit=1
            $region104: #{tpu_custom_call.1} parent=102 // loop_pre_header
              _
            $region105: #{tpu_custom_call.1} parent=102 // loop_header
              %s252 = sphi 0, %s256
              %p253 = scmp.ge.s32.totalorder %s252, 1
              %s257 = sphi %s247, %s247
              %s258 = sphi %s249, %s249
            $region106: #{tpu_custom_call.1} parent=102 // loop_header_branch
              %255 = sbr.rel (%p253) target = $region110
            $region107: #{tpu_custom_call.1} parent=102 // loop_body
              %v259 = vld [vmem:[%s257] sm:%s250]
              %260 = vst [vmem:[%s258] sm:%s250] %v259
            $region108: #{tpu_custom_call.1} parent=102 // loop_footer
              %s256 = sadd.s32 1, %s252
            $region109: #{tpu_custom_call.1} parent=102 // loop_footer_branch
              %251 = sbr.rel target = $region105
            $region110: #{tpu_custom_call.1} parent=102 // loop_exit
              _
          $region103: #{tpu_custom_call.1} parent=87 // pred_fallthru
            _
        $region88: #{tpu_custom_call.1} parent=23 // pred_fallthru
          _
        // Predicated region
        $region89: #{tpu_custom_call.1} parent=23 // pred_check
          %p226 = pneg %p222
        $region90: #{tpu_custom_call.1} parent=23 // pred_check_branch
          %228 = sbr.rel (%p226) target = $region92
        $region91: #{tpu_custom_call.1} parent=23 // pred_region
          %s229 = sshllo.u32 0, 1
          loop: start=0, step=1, limit=1
          $region93: #{tpu_custom_call.1} parent=91 // loop_pre_header
            _
          $region94: #{tpu_custom_call.1} parent=91 // loop_header
            %s231 = sphi 0, %s235
            %p232 = scmp.ge.s32.totalorder %s231, 1
            %s236 = sphi %s218, %s218
            %s237 = sphi %s219, %s219
          $region95: #{tpu_custom_call.1} parent=91 // loop_header_branch
            %234 = sbr.rel (%p232) target = $region99
          $region96: #{tpu_custom_call.1} parent=91 // loop_body
            %v238 = vld [vmem:[%s236] sm:%s229]
            %239 = vst [vmem:[%s237] sm:%s229] %v238
          $region97: #{tpu_custom_call.1} parent=91 // loop_footer
            %s235 = sadd.s32 1, %s231
          $region98: #{tpu_custom_call.1} parent=91 // loop_footer_branch
            %230 = sbr.rel target = $region94
          $region99: #{tpu_custom_call.1} parent=91 // loop_exit
            _
        $region92: #{tpu_custom_call.1} parent=23 // pred_fallthru
          _
        // Predicated region
        $region111: #{tpu_custom_call.1} parent=23 // pred_check
          _
        $region112: #{tpu_custom_call.1} parent=23 // pred_check_branch
          %263 = sbr.rel (0) target = $region114
        $region113: #{tpu_custom_call.1} parent=23 // pred_region
          %264 = vsyncadd %s220, 16
        $region114: #{tpu_custom_call.1} parent=23 // pred_fallthru
          _
        %s265 = sadd.s32 %s120, 3
        %s266 = sld [smem:[#allocation5 + %s265]]
        %s267 = scalar_lea.vmem %s2, %s266
        %s268 = scalar_lea.vmem [#allocation2], 24
        %s269 = scalar_lea.sflag [#allocation3], 24
        %p271 = scmp.lt.u32.totalorder 1, 8
        %p272 = pneg %p271
        // Predicated region
        $region115: #{tpu_custom_call.1} parent=23 // pred_check
          _
        $region116: #{tpu_custom_call.1} parent=23 // pred_check_branch
          %274 = sbr.rel (%p271) target = $region118
        $region117: #{tpu_custom_call.1} parent=23 // pred_region
          %s289 = sand.u32 1, 7
          %p290 = scmp.eq.s32.totalorder %s289, 0
          %p291 = pneg %p290
          // Predicated region
          $region130: #{tpu_custom_call.1} parent=117 // pred_check
            _
          $region131: #{tpu_custom_call.1} parent=117 // pred_check_branch
            %293 = sbr.rel (%p290) target = $region133
          $region132: #{tpu_custom_call.1} parent=117 // pred_region
            %s294 = sand.u32 1, 7
            %s295 = ssub.s32 1, %s294
            %s296 = scalar_lea.vmem %s267, %s295
            %s297 = ssub.s32 1, %s294
            %s298 = scalar_lea.vmem %s268, %s297 [#allocation2]
            %s299 = sshllo.u32 0, %s294
            loop: start=0, step=1, limit=1
            $region134: #{tpu_custom_call.1} parent=132 // loop_pre_header
              _
            $region135: #{tpu_custom_call.1} parent=132 // loop_header
              %s301 = sphi 0, %s305
              %p302 = scmp.ge.s32.totalorder %s301, 1
              %s306 = sphi %s296, %s296
              %s307 = sphi %s298, %s298
            $region136: #{tpu_custom_call.1} parent=132 // loop_header_branch
              %304 = sbr.rel (%p302) target = $region140
            $region137: #{tpu_custom_call.1} parent=132 // loop_body
              %v308 = vld [vmem:[%s306] sm:%s299]
              %309 = vst [vmem:[%s307] sm:%s299] %v308
            $region138: #{tpu_custom_call.1} parent=132 // loop_footer
              %s305 = sadd.s32 1, %s301
            $region139: #{tpu_custom_call.1} parent=132 // loop_footer_branch
              %300 = sbr.rel target = $region135
            $region140: #{tpu_custom_call.1} parent=132 // loop_exit
              _
          $region133: #{tpu_custom_call.1} parent=117 // pred_fallthru
            _
        $region118: #{tpu_custom_call.1} parent=23 // pred_fallthru
          _
        // Predicated region
        $region119: #{tpu_custom_call.1} parent=23 // pred_check
          %p275 = pneg %p271
        $region120: #{tpu_custom_call.1} parent=23 // pred_check_branch
          %277 = sbr.rel (%p275) target = $region122
        $region121: #{tpu_custom_call.1} parent=23 // pred_region
          %s278 = sshllo.u32 0, 1
          loop: start=0, step=1, limit=1
          $region123: #{tpu_custom_call.1} parent=121 // loop_pre_header
            _
          $region124: #{tpu_custom_call.1} parent=121 // loop_header
            %s280 = sphi 0, %s284
            %p281 = scmp.ge.s32.totalorder %s280, 1
            %s285 = sphi %s267, %s267
            %s286 = sphi %s268, %s268
          $region125: #{tpu_custom_call.1} parent=121 // loop_header_branch
            %283 = sbr.rel (%p281) target = $region129
          $region126: #{tpu_custom_call.1} parent=121 // loop_body
            %v287 = vld [vmem:[%s285] sm:%s278]
            %288 = vst [vmem:[%s286] sm:%s278] %v287
          $region127: #{tpu_custom_call.1} parent=121 // loop_footer
            %s284 = sadd.s32 1, %s280
          $region128: #{tpu_custom_call.1} parent=121 // loop_footer_branch
            %279 = sbr.rel target = $region124
          $region129: #{tpu_custom_call.1} parent=121 // loop_exit
            _
        $region122: #{tpu_custom_call.1} parent=23 // pred_fallthru
          _
        // Predicated region
        $region141: #{tpu_custom_call.1} parent=23 // pred_check
          _
        $region142: #{tpu_custom_call.1} parent=23 // pred_check_branch
          %312 = sbr.rel (0) target = $region144
        $region143: #{tpu_custom_call.1} parent=23 // pred_region
          %313 = vsyncadd %s269, 16
        $region144: #{tpu_custom_call.1} parent=23 // pred_fallthru
          _
        %s314 = sadd.s32 %s120, 4
        %s315 = sld [smem:[#allocation5 + %s314]]
        %s316 = scalar_lea.vmem %s2, %s315
        %s317 = scalar_lea.vmem [#allocation2], 32
        %s318 = scalar_lea.sflag [#allocation3], 32
        %p320 = scmp.lt.u32.totalorder 1, 8
        %p321 = pneg %p320
        // Predicated region
        $region145: #{tpu_custom_call.1} parent=23 // pred_check
          _
        $region146: #{tpu_custom_call.1} parent=23 // pred_check_branch
          %323 = sbr.rel (%p320) target = $region148
        $region147: #{tpu_custom_call.1} parent=23 // pred_region
          %s338 = sand.u32 1, 7
          %p339 = scmp.eq.s32.totalorder %s338, 0
          %p340 = pneg %p339
          // Predicated region
          $region160: #{tpu_custom_call.1} parent=147 // pred_check
            _
          $region161: #{tpu_custom_call.1} parent=147 // pred_check_branch
            %342 = sbr.rel (%p339) target = $region163
          $region162: #{tpu_custom_call.1} parent=147 // pred_region
            %s343 = sand.u32 1, 7
            %s344 = ssub.s32 1, %s343
            %s345 = scalar_lea.vmem %s316, %s344
            %s346 = ssub.s32 1, %s343
            %s347 = scalar_lea.vmem %s317, %s346 [#allocation2]
            %s348 = sshllo.u32 0, %s343
            loop: start=0, step=1, limit=1
            $region164: #{tpu_custom_call.1} parent=162 // loop_pre_header
              _
            $region165: #{tpu_custom_call.1} parent=162 // loop_header
              %s350 = sphi 0, %s354
              %p351 = scmp.ge.s32.totalorder %s350, 1
              %s355 = sphi %s345, %s345
              %s356 = sphi %s347, %s347
            $region166: #{tpu_custom_call.1} parent=162 // loop_header_branch
              %353 = sbr.rel (%p351) target = $region170
            $region167: #{tpu_custom_call.1} parent=162 // loop_body
              %v357 = vld [vmem:[%s355] sm:%s348]
              %358 = vst [vmem:[%s356] sm:%s348] %v357
            $region168: #{tpu_custom_call.1} parent=162 // loop_footer
              %s354 = sadd.s32 1, %s350
            $region169: #{tpu_custom_call.1} parent=162 // loop_footer_branch
              %349 = sbr.rel target = $region165
            $region170: #{tpu_custom_call.1} parent=162 // loop_exit
              _
          $region163: #{tpu_custom_call.1} parent=147 // pred_fallthru
            _
        $region148: #{tpu_custom_call.1} parent=23 // pred_fallthru
          _
        // Predicated region
        $region149: #{tpu_custom_call.1} parent=23 // pred_check
          %p324 = pneg %p320
        $region150: #{tpu_custom_call.1} parent=23 // pred_check_branch
          %326 = sbr.rel (%p324) target = $region152
        $region151: #{tpu_custom_call.1} parent=23 // pred_region
          %s327 = sshllo.u32 0, 1
          loop: start=0, step=1, limit=1
          $region153: #{tpu_custom_call.1} parent=151 // loop_pre_header
            _
          $region154: #{tpu_custom_call.1} parent=151 // loop_header
            %s329 = sphi 0, %s333
            %p330 = scmp.ge.s32.totalorder %s329, 1
            %s334 = sphi %s316, %s316
            %s335 = sphi %s317, %s317
          $region155: #{tpu_custom_call.1} parent=151 // loop_header_branch
            %332 = sbr.rel (%p330) target = $region159
          $region156: #{tpu_custom_call.1} parent=151 // loop_body
            %v336 = vld [vmem:[%s334] sm:%s327]
            %337 = vst [vmem:[%s335] sm:%s327] %v336
          $region157: #{tpu_custom_call.1} parent=151 // loop_footer
            %s333 = sadd.s32 1, %s329
          $region158: #{tpu_custom_call.1} parent=151 // loop_footer_branch
            %328 = sbr.rel target = $region154
          $region159: #{tpu_custom_call.1} parent=151 // loop_exit
            _
        $region152: #{tpu_custom_call.1} parent=23 // pred_fallthru
          _
        // Predicated region
        $region171: #{tpu_custom_call.1} parent=23 // pred_check
          _
        $region172: #{tpu_custom_call.1} parent=23 // pred_check_branch
          %361 = sbr.rel (0) target = $region174
        $region173: #{tpu_custom_call.1} parent=23 // pred_region
          %362 = vsyncadd %s318, 16
        $region174: #{tpu_custom_call.1} parent=23 // pred_fallthru
          _
        %s363 = sadd.s32 %s120, 5
        %s364 = sld [smem:[#allocation5 + %s363]]
        %s365 = scalar_lea.vmem %s2, %s364
        %s366 = scalar_lea.vmem [#allocation2], 40
        %s367 = scalar_lea.sflag [#allocation3], 40
        %p369 = scmp.lt.u32.totalorder 1, 8
        %p370 = pneg %p369
        // Predicated region
        $region175: #{tpu_custom_call.1} parent=23 // pred_check
          _
        $region176: #{tpu_custom_call.1} parent=23 // pred_check_branch
          %372 = sbr.rel (%p369) target = $region178
        $region177: #{tpu_custom_call.1} parent=23 // pred_region
          %s387 = sand.u32 1, 7
          %p388 = scmp.eq.s32.totalorder %s387, 0
          %p389 = pneg %p388
          // Predicated region
          $region190: #{tpu_custom_call.1} parent=177 // pred_check
            _
          $region191: #{tpu_custom_call.1} parent=177 // pred_check_branch
            %391 = sbr.rel (%p388) target = $region193
          $region192: #{tpu_custom_call.1} parent=177 // pred_region
            %s392 = sand.u32 1, 7
            %s393 = ssub.s32 1, %s392
            %s394 = scalar_lea.vmem %s365, %s393
            %s395 = ssub.s32 1, %s392
            %s396 = scalar_lea.vmem %s366, %s395 [#allocation2]
            %s397 = sshllo.u32 0, %s392
            loop: start=0, step=1, limit=1
            $region194: #{tpu_custom_call.1} parent=192 // loop_pre_header
              _
            $region195: #{tpu_custom_call.1} parent=192 // loop_header
              %s399 = sphi 0, %s403
              %p400 = scmp.ge.s32.totalorder %s399, 1
              %s404 = sphi %s394, %s394
              %s405 = sphi %s396, %s396
            $region196: #{tpu_custom_call.1} parent=192 // loop_header_branch
              %402 = sbr.rel (%p400) target = $region200
            $region197: #{tpu_custom_call.1} parent=192 // loop_body
              %v406 = vld [vmem:[%s404] sm:%s397]
              %407 = vst [vmem:[%s405] sm:%s397] %v406
            $region198: #{tpu_custom_call.1} parent=192 // loop_footer
              %s403 = sadd.s32 1, %s399
            $region199: #{tpu_custom_call.1} parent=192 // loop_footer_branch
              %398 = sbr.rel target = $region195
            $region200: #{tpu_custom_call.1} parent=192 // loop_exit
              _
          $region193: #{tpu_custom_call.1} parent=177 // pred_fallthru
            _
        $region178: #{tpu_custom_call.1} parent=23 // pred_fallthru
          _
        // Predicated region
        $region179: #{tpu_custom_call.1} parent=23 // pred_check
          %p373 = pneg %p369
        $region180: #{tpu_custom_call.1} parent=23 // pred_check_branch
          %375 = sbr.rel (%p373) target = $region182
        $region181: #{tpu_custom_call.1} parent=23 // pred_region
          %s376 = sshllo.u32 0, 1
          loop: start=0, step=1, limit=1
          $region183: #{tpu_custom_call.1} parent=181 // loop_pre_header
            _
          $region184: #{tpu_custom_call.1} parent=181 // loop_header
            %s378 = sphi 0, %s382
            %p379 = scmp.ge.s32.totalorder %s378, 1
            %s383 = sphi %s365, %s365
            %s384 = sphi %s366, %s366
          $region185: #{tpu_custom_call.1} parent=181 // loop_header_branch
            %381 = sbr.rel (%p379) target = $region189
          $region186: #{tpu_custom_call.1} parent=181 // loop_body
            %v385 = vld [vmem:[%s383] sm:%s376]
            %386 = vst [vmem:[%s384] sm:%s376] %v385
          $region187: #{tpu_custom_call.1} parent=181 // loop_footer
            %s382 = sadd.s32 1, %s378
          $region188: #{tpu_custom_call.1} parent=181 // loop_footer_branch
            %377 = sbr.rel target = $region184
          $region189: #{tpu_custom_call.1} parent=181 // loop_exit
            _
        $region182: #{tpu_custom_call.1} parent=23 // pred_fallthru
          _
        // Predicated region
        $region201: #{tpu_custom_call.1} parent=23 // pred_check
          _
        $region202: #{tpu_custom_call.1} parent=23 // pred_check_branch
          %410 = sbr.rel (0) target = $region204
        $region203: #{tpu_custom_call.1} parent=23 // pred_region
          %411 = vsyncadd %s367, 16
        $region204: #{tpu_custom_call.1} parent=23 // pred_fallthru
          _
        %s412 = sadd.s32 %s120, 6
        %s413 = sld [smem:[#allocation5 + %s412]]
        %s414 = scalar_lea.vmem %s2, %s413
        %s415 = scalar_lea.vmem [#allocation2], 1
        %s416 = scalar_lea.sflag [#allocation3], 1
        %p418 = scmp.lt.u32.totalorder 1, 8
        %p419 = pneg %p418
        // Predicated region
        $region205: #{tpu_custom_call.1} parent=23 // pred_check
          _
        $region206: #{tpu_custom_call.1} parent=23 // pred_check_branch
          %421 = sbr.rel (%p418) target = $region208
        $region207: #{tpu_custom_call.1} parent=23 // pred_region
          %s436 = sand.u32 1, 7
          %p437 = scmp.eq.s32.totalorder %s436, 0
          %p438 = pneg %p437
          // Predicated region
          $region220: #{tpu_custom_call.1} parent=207 // pred_check
            _
          $region221: #{tpu_custom_call.1} parent=207 // pred_check_branch
            %440 = sbr.rel (%p437) target = $region223
          $region222: #{tpu_custom_call.1} parent=207 // pred_region
            %s441 = sand.u32 1, 7
            %s442 = ssub.s32 1, %s441
            %s443 = scalar_lea.vmem %s414, %s442
            %s444 = ssub.s32 1, %s441
            %s445 = scalar_lea.vmem %s415, %s444 [#allocation2]
            %s446 = sshllo.u32 0, %s441
            loop: start=0, step=1, limit=1
            $region224: #{tpu_custom_call.1} parent=222 // loop_pre_header
              _
            $region225: #{tpu_custom_call.1} parent=222 // loop_header
              %s448 = sphi 0, %s452
              %p449 = scmp.ge.s32.totalorder %s448, 1
              %s453 = sphi %s443, %s443
              %s454 = sphi %s445, %s445
            $region226: #{tpu_custom_call.1} parent=222 // loop_header_branch
              %451 = sbr.rel (%p449) target = $region230
            $region227: #{tpu_custom_call.1} parent=222 // loop_body
              %v455 = vld [vmem:[%s453] sm:%s446]
              %456 = vst [vmem:[%s454] sm:%s446] %v455
            $region228: #{tpu_custom_call.1} parent=222 // loop_footer
              %s452 = sadd.s32 1, %s448
            $region229: #{tpu_custom_call.1} parent=222 // loop_footer_branch
              %447 = sbr.rel target = $region225
            $region230: #{tpu_custom_call.1} parent=222 // loop_exit
              _
          $region223: #{tpu_custom_call.1} parent=207 // pred_fallthru
            _
        $region208: #{tpu_custom_call.1} parent=23 // pred_fallthru
          _
        // Predicated region
        $region209: #{tpu_custom_call.1} parent=23 // pred_check
          %p422 = pneg %p418
        $region210: #{tpu_custom_call.1} parent=23 // pred_check_branch
          %424 = sbr.rel (%p422) target = $region212
        $region211: #{tpu_custom_call.1} parent=23 // pred_region
          %s425 = sshllo.u32 0, 1
          loop: start=0, step=1, limit=1
          $region213: #{tpu_custom_call.1} parent=211 // loop_pre_header
            _
          $region214: #{tpu_custom_call.1} parent=211 // loop_header
            %s427 = sphi 0, %s431
            %p428 = scmp.ge.s32.totalorder %s427, 1
            %s432 = sphi %s414, %s414
            %s433 = sphi %s415, %s415
          $region215: #{tpu_custom_call.1} parent=211 // loop_header_branch
            %430 = sbr.rel (%p428) target = $region219
          $region216: #{tpu_custom_call.1} parent=211 // loop_body
            %v434 = vld [vmem:[%s432] sm:%s425]
            %435 = vst [vmem:[%s433] sm:%s425] %v434
          $region217: #{tpu_custom_call.1} parent=211 // loop_footer
            %s431 = sadd.s32 1, %s427
          $region218: #{tpu_custom_call.1} parent=211 // loop_footer_branch
            %426 = sbr.rel target = $region214
          $region219: #{tpu_custom_call.1} parent=211 // loop_exit
            _
        $region212: #{tpu_custom_call.1} parent=23 // pred_fallthru
          _
        // Predicated region
        $region231: #{tpu_custom_call.1} parent=23 // pred_check
          _
        $region232: #{tpu_custom_call.1} parent=23 // pred_check_branch
          %459 = sbr.rel (0) target = $region234
        $region233: #{tpu_custom_call.1} parent=23 // pred_region
          %460 = vsyncadd %s416, 16
        $region234: #{tpu_custom_call.1} parent=23 // pred_fallthru
          _
        %s461 = sadd.s32 %s120, 7
        %s462 = sld [smem:[#allocation5 + %s461]]
        %s463 = scalar_lea.vmem %s2, %s462
        %s464 = scalar_lea.vmem [#allocation2], 9
        %s465 = scalar_lea.sflag [#allocation3], 9
        %p467 = scmp.lt.u32.totalorder 1, 8
        %p468 = pneg %p467
        // Predicated region
        $region235: #{tpu_custom_call.1} parent=23 // pred_check
          _
        $region236: #{tpu_custom_call.1} parent=23 // pred_check_branch
          %470 = sbr.rel (%p467) target = $region238
        $region237: #{tpu_custom_call.1} parent=23 // pred_region
          %s485 = sand.u32 1, 7
          %p486 = scmp.eq.s32.totalorder %s485, 0
          %p487 = pneg %p486
          // Predicated region
          $region250: #{tpu_custom_call.1} parent=237 // pred_check
            _
          $region251: #{tpu_custom_call.1} parent=237 // pred_check_branch
            %489 = sbr.rel (%p486) target = $region253
          $region252: #{tpu_custom_call.1} parent=237 // pred_region
            %s490 = sand.u32 1, 7
            %s491 = ssub.s32 1, %s490
            %s492 = scalar_lea.vmem %s463, %s491
            %s493 = ssub.s32 1, %s490
            %s494 = scalar_lea.vmem %s464, %s493 [#allocation2]
            %s495 = sshllo.u32 0, %s490
            loop: start=0, step=1, limit=1
            $region254: #{tpu_custom_call.1} parent=252 // loop_pre_header
              _
            $region255: #{tpu_custom_call.1} parent=252 // loop_header
              %s497 = sphi 0, %s501
              %p498 = scmp.ge.s32.totalorder %s497, 1
              %s502 = sphi %s492, %s492
              %s503 = sphi %s494, %s494
            $region256: #{tpu_custom_call.1} parent=252 // loop_header_branch
              %500 = sbr.rel (%p498) target = $region260
            $region257: #{tpu_custom_call.1} parent=252 // loop_body
              %v504 = vld [vmem:[%s502] sm:%s495]
              %505 = vst [vmem:[%s503] sm:%s495] %v504
            $region258: #{tpu_custom_call.1} parent=252 // loop_footer
              %s501 = sadd.s32 1, %s497
            $region259: #{tpu_custom_call.1} parent=252 // loop_footer_branch
              %496 = sbr.rel target = $region255
            $region260: #{tpu_custom_call.1} parent=252 // loop_exit
              _
          $region253: #{tpu_custom_call.1} parent=237 // pred_fallthru
            _
        $region238: #{tpu_custom_call.1} parent=23 // pred_fallthru
          _
        // Predicated region
        $region239: #{tpu_custom_call.1} parent=23 // pred_check
          %p471 = pneg %p467
        $region240: #{tpu_custom_call.1} parent=23 // pred_check_branch
          %473 = sbr.rel (%p471) target = $region242
        $region241: #{tpu_custom_call.1} parent=23 // pred_region
          %s474 = sshllo.u32 0, 1
          loop: start=0, step=1, limit=1
          $region243: #{tpu_custom_call.1} parent=241 // loop_pre_header
            _
          $region244: #{tpu_custom_call.1} parent=241 // loop_header
            %s476 = sphi 0, %s480
            %p477 = scmp.ge.s32.totalorder %s476, 1
            %s481 = sphi %s463, %s463
            %s482 = sphi %s464, %s464
          $region245: #{tpu_custom_call.1} parent=241 // loop_header_branch
            %479 = sbr.rel (%p477) target = $region249
          $region246: #{tpu_custom_call.1} parent=241 // loop_body
            %v483 = vld [vmem:[%s481] sm:%s474]
            %484 = vst [vmem:[%s482] sm:%s474] %v483
          $region247: #{tpu_custom_call.1} parent=241 // loop_footer
            %s480 = sadd.s32 1, %s476
          $region248: #{tpu_custom_call.1} parent=241 // loop_footer_branch
            %475 = sbr.rel target = $region244
          $region249: #{tpu_custom_call.1} parent=241 // loop_exit
            _
        $region242: #{tpu_custom_call.1} parent=23 // pred_fallthru
          _
        // Predicated region
        $region261: #{tpu_custom_call.1} parent=23 // pred_check
          _
        $region262: #{tpu_custom_call.1} parent=23 // pred_check_branch
          %508 = sbr.rel (0) target = $region264
        $region263: #{tpu_custom_call.1} parent=23 // pred_region
          %509 = vsyncadd %s465, 16
        $region264: #{tpu_custom_call.1} parent=23 // pred_fallthru
          _
        %s510 = sadd.s32 %s120, 8
        %s511 = sld [smem:[#allocation5 + %s510]]
        %s512 = scalar_lea.vmem %s2, %s511
        %s513 = scalar_lea.vmem [#allocation2], 17
        %s514 = scalar_lea.sflag [#allocation3], 17
        %p516 = scmp.lt.u32.totalorder 1, 8
        %p517 = pneg %p516
        // Predicated region
        $region265: #{tpu_custom_call.1} parent=23 // pred_check
          _
        $region266: #{tpu_custom_call.1} parent=23 // pred_check_branch
          %519 = sbr.rel (%p516) target = $region268
        $region267: #{tpu_custom_call.1} parent=23 // pred_region
          %s534 = sand.u32 1, 7
          %p535 = scmp.eq.s32.totalorder %s534, 0
          %p536 = pneg %p535
          // Predicated region
          $region280: #{tpu_custom_call.1} parent=267 // pred_check
            _
          $region281: #{tpu_custom_call.1} parent=267 // pred_check_branch
            %538 = sbr.rel (%p535) target = $region283
          $region282: #{tpu_custom_call.1} parent=267 // pred_region
            %s539 = sand.u32 1, 7
            %s540 = ssub.s32 1, %s539
            %s541 = scalar_lea.vmem %s512, %s540
            %s542 = ssub.s32 1, %s539
            %s543 = scalar_lea.vmem %s513, %s542 [#allocation2]
            %s544 = sshllo.u32 0, %s539
            loop: start=0, step=1, limit=1
            $region284: #{tpu_custom_call.1} parent=282 // loop_pre_header
              _
            $region285: #{tpu_custom_call.1} parent=282 // loop_header
              %s546 = sphi 0, %s550
              %p547 = scmp.ge.s32.totalorder %s546, 1
              %s551 = sphi %s541, %s541
              %s552 = sphi %s543, %s543
            $region286: #{tpu_custom_call.1} parent=282 // loop_header_branch
              %549 = sbr.rel (%p547) target = $region290
            $region287: #{tpu_custom_call.1} parent=282 // loop_body
              %v553 = vld [vmem:[%s551] sm:%s544]
              %554 = vst [vmem:[%s552] sm:%s544] %v553
            $region288: #{tpu_custom_call.1} parent=282 // loop_footer
              %s550 = sadd.s32 1, %s546
            $region289: #{tpu_custom_call.1} parent=282 // loop_footer_branch
              %545 = sbr.rel target = $region285
            $region290: #{tpu_custom_call.1} parent=282 // loop_exit
              _
          $region283: #{tpu_custom_call.1} parent=267 // pred_fallthru
            _
        $region268: #{tpu_custom_call.1} parent=23 // pred_fallthru
          _
        // Predicated region
        $region269: #{tpu_custom_call.1} parent=23 // pred_check
          %p520 = pneg %p516
        $region270: #{tpu_custom_call.1} parent=23 // pred_check_branch
          %522 = sbr.rel (%p520) target = $region272
        $region271: #{tpu_custom_call.1} parent=23 // pred_region
          %s523 = sshllo.u32 0, 1
          loop: start=0, step=1, limit=1
          $region273: #{tpu_custom_call.1} parent=271 // loop_pre_header
            _
          $region274: #{tpu_custom_call.1} parent=271 // loop_header
            %s525 = sphi 0, %s529
            %p526 = scmp.ge.s32.totalorder %s525, 1
            %s530 = sphi %s512, %s512
            %s531 = sphi %s513, %s513
          $region275: #{tpu_custom_call.1} parent=271 // loop_header_branch
            %528 = sbr.rel (%p526) target = $region279
          $region276: #{tpu_custom_call.1} parent=271 // loop_body
            %v532 = vld [vmem:[%s530] sm:%s523]
            %533 = vst [vmem:[%s531] sm:%s523] %v532
          $region277: #{tpu_custom_call.1} parent=271 // loop_footer
            %s529 = sadd.s32 1, %s525
          $region278: #{tpu_custom_call.1} parent=271 // loop_footer_branch
            %524 = sbr.rel target = $region274
          $region279: #{tpu_custom_call.1} parent=271 // loop_exit
            _
        $region272: #{tpu_custom_call.1} parent=23 // pred_fallthru
          _
        // Predicated region
        $region291: #{tpu_custom_call.1} parent=23 // pred_check
          _
        $region292: #{tpu_custom_call.1} parent=23 // pred_check_branch
          %557 = sbr.rel (0) target = $region294
        $region293: #{tpu_custom_call.1} parent=23 // pred_region
          %558 = vsyncadd %s514, 16
        $region294: #{tpu_custom_call.1} parent=23 // pred_fallthru
          _
        %s559 = sadd.s32 %s120, 9
        %s560 = sld [smem:[#allocation5 + %s559]]
        %s561 = scalar_lea.vmem %s2, %s560
        %s562 = scalar_lea.vmem [#allocation2], 25
        %s563 = scalar_lea.sflag [#allocation3], 25
        %p565 = scmp.lt.u32.totalorder 1, 8
        %p566 = pneg %p565
        // Predicated region
        $region295: #{tpu_custom_call.1} parent=23 // pred_check
          _
        $region296: #{tpu_custom_call.1} parent=23 // pred_check_branch
          %568 = sbr.rel (%p565) target = $region298
        $region297: #{tpu_custom_call.1} parent=23 // pred_region
          %s583 = sand.u32 1, 7
          %p584 = scmp.eq.s32.totalorder %s583, 0
          %p585 = pneg %p584
          // Predicated region
          $region310: #{tpu_custom_call.1} parent=297 // pred_check
            _
          $region311: #{tpu_custom_call.1} parent=297 // pred_check_branch
            %587 = sbr.rel (%p584) target = $region313
          $region312: #{tpu_custom_call.1} parent=297 // pred_region
            %s588 = sand.u32 1, 7
            %s589 = ssub.s32 1, %s588
            %s590 = scalar_lea.vmem %s561, %s589
            %s591 = ssub.s32 1, %s588
            %s592 = scalar_lea.vmem %s562, %s591 [#allocation2]
            %s593 = sshllo.u32 0, %s588
            loop: start=0, step=1, limit=1
            $region314: #{tpu_custom_call.1} parent=312 // loop_pre_header
              _
            $region315: #{tpu_custom_call.1} parent=312 // loop_header
              %s595 = sphi 0, %s599
              %p596 = scmp.ge.s32.totalorder %s595, 1
              %s600 = sphi %s590, %s590
              %s601 = sphi %s592, %s592
            $region316: #{tpu_custom_call.1} parent=312 // loop_header_branch
              %598 = sbr.rel (%p596) target = $region320
            $region317: #{tpu_custom_call.1} parent=312 // loop_body
              %v602 = vld [vmem:[%s600] sm:%s593]
              %603 = vst [vmem:[%s601] sm:%s593] %v602
            $region318: #{tpu_custom_call.1} parent=312 // loop_footer
              %s599 = sadd.s32 1, %s595
            $region319: #{tpu_custom_call.1} parent=312 // loop_footer_branch
              %594 = sbr.rel target = $region315
            $region320: #{tpu_custom_call.1} parent=312 // loop_exit
              _
          $region313: #{tpu_custom_call.1} parent=297 // pred_fallthru
            _
        $region298: #{tpu_custom_call.1} parent=23 // pred_fallthru
          _
        // Predicated region
        $region299: #{tpu_custom_call.1} parent=23 // pred_check
          %p569 = pneg %p565
        $region300: #{tpu_custom_call.1} parent=23 // pred_check_branch
          %571 = sbr.rel (%p569) target = $region302
        $region301: #{tpu_custom_call.1} parent=23 // pred_region
          %s572 = sshllo.u32 0, 1
          loop: start=0, step=1, limit=1
          $region303: #{tpu_custom_call.1} parent=301 // loop_pre_header
            _
          $region304: #{tpu_custom_call.1} parent=301 // loop_header
            %s574 = sphi 0, %s578
            %p575 = scmp.ge.s32.totalorder %s574, 1
            %s579 = sphi %s561, %s561
            %s580 = sphi %s562, %s562
          $region305: #{tpu_custom_call.1} parent=301 // loop_header_branch
            %577 = sbr.rel (%p575) target = $region309
          $region306: #{tpu_custom_call.1} parent=301 // loop_body
            %v581 = vld [vmem:[%s579] sm:%s572]
            %582 = vst [vmem:[%s580] sm:%s572] %v581
          $region307: #{tpu_custom_call.1} parent=301 // loop_footer
            %s578 = sadd.s32 1, %s574
          $region308: #{tpu_custom_call.1} parent=301 // loop_footer_branch
            %573 = sbr.rel target = $region304
          $region309: #{tpu_custom_call.1} parent=301 // loop_exit
            _
        $region302: #{tpu_custom_call.1} parent=23 // pred_fallthru
          _
        // Predicated region
        $region321: #{tpu_custom_call.1} parent=23 // pred_check
          _
        $region322: #{tpu_custom_call.1} parent=23 // pred_check_branch
          %606 = sbr.rel (0) target = $region324
        $region323: #{tpu_custom_call.1} parent=23 // pred_region
          %607 = vsyncadd %s563, 16
        $region324: #{tpu_custom_call.1} parent=23 // pred_fallthru
          _
        %s608 = sadd.s32 %s120, 10
        %s609 = sld [smem:[#allocation5 + %s608]]
        %s610 = scalar_lea.vmem %s2, %s609
        %s611 = scalar_lea.vmem [#allocation2], 33
        %s612 = scalar_lea.sflag [#allocation3], 33
        %p614 = scmp.lt.u32.totalorder 1, 8
        %p615 = pneg %p614
        // Predicated region
        $region325: #{tpu_custom_call.1} parent=23 // pred_check
          _
        $region326: #{tpu_custom_call.1} parent=23 // pred_check_branch
          %617 = sbr.rel (%p614) target = $region328
        $region327: #{tpu_custom_call.1} parent=23 // pred_region
          %s632 = sand.u32 1, 7
          %p633 = scmp.eq.s32.totalorder %s632, 0
          %p634 = pneg %p633
          // Predicated region
          $region340: #{tpu_custom_call.1} parent=327 // pred_check
            _
          $region341: #{tpu_custom_call.1} parent=327 // pred_check_branch
            %636 = sbr.rel (%p633) target = $region343
          $region342: #{tpu_custom_call.1} parent=327 // pred_region
            %s637 = sand.u32 1, 7
            %s638 = ssub.s32 1, %s637
            %s639 = scalar_lea.vmem %s610, %s638
            %s640 = ssub.s32 1, %s637
            %s641 = scalar_lea.vmem %s611, %s640 [#allocation2]
            %s642 = sshllo.u32 0, %s637
            loop: start=0, step=1, limit=1
            $region344: #{tpu_custom_call.1} parent=342 // loop_pre_header
              _
            $region345: #{tpu_custom_call.1} parent=342 // loop_header
              %s644 = sphi 0, %s648
              %p645 = scmp.ge.s32.totalorder %s644, 1
              %s649 = sphi %s639, %s639
              %s650 = sphi %s641, %s641
            $region346: #{tpu_custom_call.1} parent=342 // loop_header_branch
              %647 = sbr.rel (%p645) target = $region350
            $region347: #{tpu_custom_call.1} parent=342 // loop_body
              %v651 = vld [vmem:[%s649] sm:%s642]
              %652 = vst [vmem:[%s650] sm:%s642] %v651
            $region348: #{tpu_custom_call.1} parent=342 // loop_footer
              %s648 = sadd.s32 1, %s644
            $region349: #{tpu_custom_call.1} parent=342 // loop_footer_branch
              %643 = sbr.rel target = $region345
            $region350: #{tpu_custom_call.1} parent=342 // loop_exit
              _
          $region343: #{tpu_custom_call.1} parent=327 // pred_fallthru
            _
        $region328: #{tpu_custom_call.1} parent=23 // pred_fallthru
          _
        // Predicated region
        $region329: #{tpu_custom_call.1} parent=23 // pred_check
          %p618 = pneg %p614
        $region330: #{tpu_custom_call.1} parent=23 // pred_check_branch
          %620 = sbr.rel (%p618) target = $region332
        $region331: #{tpu_custom_call.1} parent=23 // pred_region
          %s621 = sshllo.u32 0, 1
          loop: start=0, step=1, limit=1
          $region333: #{tpu_custom_call.1} parent=331 // loop_pre_header
            _
          $region334: #{tpu_custom_call.1} parent=331 // loop_header
            %s623 = sphi 0, %s627
            %p624 = scmp.ge.s32.totalorder %s623, 1
            %s628 = sphi %s610, %s610
            %s629 = sphi %s611, %s611
          $region335: #{tpu_custom_call.1} parent=331 // loop_header_branch
            %626 = sbr.rel (%p624) target = $region339
          $region336: #{tpu_custom_call.1} parent=331 // loop_body
            %v630 = vld [vmem:[%s628] sm:%s621]
            %631 = vst [vmem:[%s629] sm:%s621] %v630
          $region337: #{tpu_custom_call.1} parent=331 // loop_footer
            %s627 = sadd.s32 1, %s623
          $region338: #{tpu_custom_call.1} parent=331 // loop_footer_branch
            %622 = sbr.rel target = $region334
          $region339: #{tpu_custom_call.1} parent=331 // loop_exit
            _
        $region332: #{tpu_custom_call.1} parent=23 // pred_fallthru
          _
        // Predicated region
        $region351: #{tpu_custom_call.1} parent=23 // pred_check
          _
        $region352: #{tpu_custom_call.1} parent=23 // pred_check_branch
          %655 = sbr.rel (0) target = $region354
        $region353: #{tpu_custom_call.1} parent=23 // pred_region
          %656 = vsyncadd %s612, 16
        $region354: #{tpu_custom_call.1} parent=23 // pred_fallthru
          _
        %s657 = sadd.s32 %s120, 11
        %s658 = sld [smem:[#allocation5 + %s657]]
        %s659 = scalar_lea.vmem %s2, %s658
        %s660 = scalar_lea.vmem [#allocation2], 41
        %s661 = scalar_lea.sflag [#allocation3], 41
        %p663 = scmp.lt.u32.totalorder 1, 8
        %p664 = pneg %p663
        // Predicated region
        $region355: #{tpu_custom_call.1} parent=23 // pred_check
          _
        $region356: #{tpu_custom_call.1} parent=23 // pred_check_branch
          %666 = sbr.rel (%p663) target = $region358
        $region357: #{tpu_custom_call.1} parent=23 // pred_region
          %s681 = sand.u32 1, 7
          %p682 = scmp.eq.s32.totalorder %s681, 0
          %p683 = pneg %p682
          // Predicated region
          $region370: #{tpu_custom_call.1} parent=357 // pred_check
            _
          $region371: #{tpu_custom_call.1} parent=357 // pred_check_branch
            %685 = sbr.rel (%p682) target = $region373
          $region372: #{tpu_custom_call.1} parent=357 // pred_region
            %s686 = sand.u32 1, 7
            %s687 = ssub.s32 1, %s686
            %s688 = scalar_lea.vmem %s659, %s687
            %s689 = ssub.s32 1, %s686
            %s690 = scalar_lea.vmem %s660, %s689 [#allocation2]
            %s691 = sshllo.u32 0, %s686
            loop: start=0, step=1, limit=1
            $region374: #{tpu_custom_call.1} parent=372 // loop_pre_header
              _
            $region375: #{tpu_custom_call.1} parent=372 // loop_header
              %s693 = sphi 0, %s697
              %p694 = scmp.ge.s32.totalorder %s693, 1
              %s698 = sphi %s688, %s688
              %s699 = sphi %s690, %s690
            $region376: #{tpu_custom_call.1} parent=372 // loop_header_branch
              %696 = sbr.rel (%p694) target = $region380
            $region377: #{tpu_custom_call.1} parent=372 // loop_body
              %v700 = vld [vmem:[%s698] sm:%s691]
              %701 = vst [vmem:[%s699] sm:%s691] %v700
            $region378: #{tpu_custom_call.1} parent=372 // loop_footer
              %s697 = sadd.s32 1, %s693
            $region379: #{tpu_custom_call.1} parent=372 // loop_footer_branch
              %692 = sbr.rel target = $region375
            $region380: #{tpu_custom_call.1} parent=372 // loop_exit
              _
          $region373: #{tpu_custom_call.1} parent=357 // pred_fallthru
            _
        $region358: #{tpu_custom_call.1} parent=23 // pred_fallthru
          _
        // Predicated region
        $region359: #{tpu_custom_call.1} parent=23 // pred_check
          %p667 = pneg %p663
        $region360: #{tpu_custom_call.1} parent=23 // pred_check_branch
          %669 = sbr.rel (%p667) target = $region362
        $region361: #{tpu_custom_call.1} parent=23 // pred_region
          %s670 = sshllo.u32 0, 1
          loop: start=0, step=1, limit=1
          $region363: #{tpu_custom_call.1} parent=361 // loop_pre_header
            _
          $region364: #{tpu_custom_call.1} parent=361 // loop_header
            %s672 = sphi 0, %s676
            %p673 = scmp.ge.s32.totalorder %s672, 1
            %s677 = sphi %s659, %s659
            %s678 = sphi %s660, %s660
          $region365: #{tpu_custom_call.1} parent=361 // loop_header_branch
            %675 = sbr.rel (%p673) target = $region369
          $region366: #{tpu_custom_call.1} parent=361 // loop_body
            %v679 = vld [vmem:[%s677] sm:%s670]
            %680 = vst [vmem:[%s678] sm:%s670] %v679
          $region367: #{tpu_custom_call.1} parent=361 // loop_footer
            %s676 = sadd.s32 1, %s672
          $region368: #{tpu_custom_call.1} parent=361 // loop_footer_branch
            %671 = sbr.rel target = $region364
          $region369: #{tpu_custom_call.1} parent=361 // loop_exit
            _
        $region362: #{tpu_custom_call.1} parent=23 // pred_fallthru
          _
        // Predicated region
        $region381: #{tpu_custom_call.1} parent=23 // pred_check
          _
        $region382: #{tpu_custom_call.1} parent=23 // pred_check_branch
          %704 = sbr.rel (0) target = $region384
        $region383: #{tpu_custom_call.1} parent=23 // pred_region
          %705 = vsyncadd %s661, 16
        $region384: #{tpu_custom_call.1} parent=23 // pred_fallthru
          _
        %s706 = sadd.s32 %s120, 12
        %s707 = sld [smem:[#allocation5 + %s706]]
        %s708 = scalar_lea.vmem %s2, %s707
        %s709 = scalar_lea.vmem [#allocation2], 2
        %s710 = scalar_lea.sflag [#allocation3], 2
        %p712 = scmp.lt.u32.totalorder 1, 8
        %p713 = pneg %p712
        // Predicated region
        $region385: #{tpu_custom_call.1} parent=23 // pred_check
          _
        $region386: #{tpu_custom_call.1} parent=23 // pred_check_branch
          %715 = sbr.rel (%p712) target = $region388
        $region387: #{tpu_custom_call.1} parent=23 // pred_region
          %s730 = sand.u32 1, 7
          %p731 = scmp.eq.s32.totalorder %s730, 0
          %p732 = pneg %p731
          // Predicated region
          $region400: #{tpu_custom_call.1} parent=387 // pred_check
            _
          $region401: #{tpu_custom_call.1} parent=387 // pred_check_branch
            %734 = sbr.rel (%p731) target = $region403
          $region402: #{tpu_custom_call.1} parent=387 // pred_region
            %s735 = sand.u32 1, 7
            %s736 = ssub.s32 1, %s735
            %s737 = scalar_lea.vmem %s708, %s736
            %s738 = ssub.s32 1, %s735
            %s739 = scalar_lea.vmem %s709, %s738 [#allocation2]
            %s740 = sshllo.u32 0, %s735
            loop: start=0, step=1, limit=1
            $region404: #{tpu_custom_call.1} parent=402 // loop_pre_header
              _
            $region405: #{tpu_custom_call.1} parent=402 // loop_header
              %s742 = sphi 0, %s746
              %p743 = scmp.ge.s32.totalorder %s742, 1
              %s747 = sphi %s737, %s737
              %s748 = sphi %s739, %s739
            $region406: #{tpu_custom_call.1} parent=402 // loop_header_branch
              %745 = sbr.rel (%p743) target = $region410
            $region407: #{tpu_custom_call.1} parent=402 // loop_body
              %v749 = vld [vmem:[%s747] sm:%s740]
              %750 = vst [vmem:[%s748] sm:%s740] %v749
            $region408: #{tpu_custom_call.1} parent=402 // loop_footer
              %s746 = sadd.s32 1, %s742
            $region409: #{tpu_custom_call.1} parent=402 // loop_footer_branch
              %741 = sbr.rel target = $region405
            $region410: #{tpu_custom_call.1} parent=402 // loop_exit
              _
          $region403: #{tpu_custom_call.1} parent=387 // pred_fallthru
            _
        $region388: #{tpu_custom_call.1} parent=23 // pred_fallthru
          _
        // Predicated region
        $region389: #{tpu_custom_call.1} parent=23 // pred_check
          %p716 = pneg %p712
        $region390: #{tpu_custom_call.1} parent=23 // pred_check_branch
          %718 = sbr.rel (%p716) target = $region392
        $region391: #{tpu_custom_call.1} parent=23 // pred_region
          %s719 = sshllo.u32 0, 1
          loop: start=0, step=1, limit=1
          $region393: #{tpu_custom_call.1} parent=391 // loop_pre_header
            _
          $region394: #{tpu_custom_call.1} parent=391 // loop_header
            %s721 = sphi 0, %s725
            %p722 = scmp.ge.s32.totalorder %s721, 1
            %s726 = sphi %s708, %s708
            %s727 = sphi %s709, %s709
          $region395: #{tpu_custom_call.1} parent=391 // loop_header_branch
            %724 = sbr.rel (%p722) target = $region399
          $region396: #{tpu_custom_call.1} parent=391 // loop_body
            %v728 = vld [vmem:[%s726] sm:%s719]
            %729 = vst [vmem:[%s727] sm:%s719] %v728
          $region397: #{tpu_custom_call.1} parent=391 // loop_footer
            %s725 = sadd.s32 1, %s721
          $region398: #{tpu_custom_call.1} parent=391 // loop_footer_branch
            %720 = sbr.rel target = $region394
          $region399: #{tpu_custom_call.1} parent=391 // loop_exit
            _
        $region392: #{tpu_custom_call.1} parent=23 // pred_fallthru
          _
        // Predicated region
        $region411: #{tpu_custom_call.1} parent=23 // pred_check
          _
        $region412: #{tpu_custom_call.1} parent=23 // pred_check_branch
          %753 = sbr.rel (0) target = $region414
        $region413: #{tpu_custom_call.1} parent=23 // pred_region
          %754 = vsyncadd %s710, 16
        $region414: #{tpu_custom_call.1} parent=23 // pred_fallthru
          _
        %s755 = sadd.s32 %s120, 13
        %s756 = sld [smem:[#allocation5 + %s755]]
        %s757 = scalar_lea.vmem %s2, %s756
        %s758 = scalar_lea.vmem [#allocation2], 10
        %s759 = scalar_lea.sflag [#allocation3], 10
        %p761 = scmp.lt.u32.totalorder 1, 8
        %p762 = pneg %p761
        // Predicated region
        $region415: #{tpu_custom_call.1} parent=23 // pred_check
          _
        $region416: #{tpu_custom_call.1} parent=23 // pred_check_branch
          %764 = sbr.rel (%p761) target = $region418
        $region417: #{tpu_custom_call.1} parent=23 // pred_region
          %s779 = sand.u32 1, 7
          %p780 = scmp.eq.s32.totalorder %s779, 0
          %p781 = pneg %p780
          // Predicated region
          $region430: #{tpu_custom_call.1} parent=417 // pred_check
            _
          $region431: #{tpu_custom_call.1} parent=417 // pred_check_branch
            %783 = sbr.rel (%p780) target = $region433
          $region432: #{tpu_custom_call.1} parent=417 // pred_region
            %s784 = sand.u32 1, 7
            %s785 = ssub.s32 1, %s784
            %s786 = scalar_lea.vmem %s757, %s785
            %s787 = ssub.s32 1, %s784
            %s788 = scalar_lea.vmem %s758, %s787 [#allocation2]
            %s789 = sshllo.u32 0, %s784
            loop: start=0, step=1, limit=1
            $region434: #{tpu_custom_call.1} parent=432 // loop_pre_header
              _
            $region435: #{tpu_custom_call.1} parent=432 // loop_header
              %s791 = sphi 0, %s795
              %p792 = scmp.ge.s32.totalorder %s791, 1
              %s796 = sphi %s786, %s786
              %s797 = sphi %s788, %s788
            $region436: #{tpu_custom_call.1} parent=432 // loop_header_branch
              %794 = sbr.rel (%p792) target = $region440
            $region437: #{tpu_custom_call.1} parent=432 // loop_body
              %v798 = vld [vmem:[%s796] sm:%s789]
              %799 = vst [vmem:[%s797] sm:%s789] %v798
            $region438: #{tpu_custom_call.1} parent=432 // loop_footer
              %s795 = sadd.s32 1, %s791
            $region439: #{tpu_custom_call.1} parent=432 // loop_footer_branch
              %790 = sbr.rel target = $region435
            $region440: #{tpu_custom_call.1} parent=432 // loop_exit
              _
          $region433: #{tpu_custom_call.1} parent=417 // pred_fallthru
            _
        $region418: #{tpu_custom_call.1} parent=23 // pred_fallthru
          _
        // Predicated region
        $region419: #{tpu_custom_call.1} parent=23 // pred_check
          %p765 = pneg %p761
        $region420: #{tpu_custom_call.1} parent=23 // pred_check_branch
          %767 = sbr.rel (%p765) target = $region422
        $region421: #{tpu_custom_call.1} parent=23 // pred_region
          %s768 = sshllo.u32 0, 1
          loop: start=0, step=1, limit=1
          $region423: #{tpu_custom_call.1} parent=421 // loop_pre_header
            _
          $region424: #{tpu_custom_call.1} parent=421 // loop_header
            %s770 = sphi 0, %s774
            %p771 = scmp.ge.s32.totalorder %s770, 1
            %s775 = sphi %s757, %s757
            %s776 = sphi %s758, %s758
          $region425: #{tpu_custom_call.1} parent=421 // loop_header_branch
            %773 = sbr.rel (%p771) target = $region429
          $region426: #{tpu_custom_call.1} parent=421 // loop_body
            %v777 = vld [vmem:[%s775] sm:%s768]
            %778 = vst [vmem:[%s776] sm:%s768] %v777
          $region427: #{tpu_custom_call.1} parent=421 // loop_footer
            %s774 = sadd.s32 1, %s770
          $region428: #{tpu_custom_call.1} parent=421 // loop_footer_branch
            %769 = sbr.rel target = $region424
          $region429: #{tpu_custom_call.1} parent=421 // loop_exit
            _
        $region422: #{tpu_custom_call.1} parent=23 // pred_fallthru
          _
        // Predicated region
        $region441: #{tpu_custom_call.1} parent=23 // pred_check
          _
        $region442: #{tpu_custom_call.1} parent=23 // pred_check_branch
          %802 = sbr.rel (0) target = $region444
        $region443: #{tpu_custom_call.1} parent=23 // pred_region
          %803 = vsyncadd %s759, 16
        $region444: #{tpu_custom_call.1} parent=23 // pred_fallthru
          _
        %s804 = sadd.s32 %s120, 14
        %s805 = sld [smem:[#allocation5 + %s804]]
        %s806 = scalar_lea.vmem %s2, %s805
        %s807 = scalar_lea.vmem [#allocation2], 18
        %s808 = scalar_lea.sflag [#allocation3], 18
        %p810 = scmp.lt.u32.totalorder 1, 8
        %p811 = pneg %p810
        // Predicated region
        $region445: #{tpu_custom_call.1} parent=23 // pred_check
          _
        $region446: #{tpu_custom_call.1} parent=23 // pred_check_branch
          %813 = sbr.rel (%p810) target = $region448
        $region447: #{tpu_custom_call.1} parent=23 // pred_region
          %s828 = sand.u32 1, 7
          %p829 = scmp.eq.s32.totalorder %s828, 0
          %p830 = pneg %p829
          // Predicated region
          $region460: #{tpu_custom_call.1} parent=447 // pred_check
            _
          $region461: #{tpu_custom_call.1} parent=447 // pred_check_branch
            %832 = sbr.rel (%p829) target = $region463
          $region462: #{tpu_custom_call.1} parent=447 // pred_region
            %s833 = sand.u32 1, 7
            %s834 = ssub.s32 1, %s833
            %s835 = scalar_lea.vmem %s806, %s834
            %s836 = ssub.s32 1, %s833
            %s837 = scalar_lea.vmem %s807, %s836 [#allocation2]
            %s838 = sshllo.u32 0, %s833
            loop: start=0, step=1, limit=1
            $region464: #{tpu_custom_call.1} parent=462 // loop_pre_header
              _
            $region465: #{tpu_custom_call.1} parent=462 // loop_header
              %s840 = sphi 0, %s844
              %p841 = scmp.ge.s32.totalorder %s840, 1
              %s845 = sphi %s835, %s835
              %s846 = sphi %s837, %s837
            $region466: #{tpu_custom_call.1} parent=462 // loop_header_branch
              %843 = sbr.rel (%p841) target = $region470
            $region467: #{tpu_custom_call.1} parent=462 // loop_body
              %v847 = vld [vmem:[%s845] sm:%s838]
              %848 = vst [vmem:[%s846] sm:%s838] %v847
            $region468: #{tpu_custom_call.1} parent=462 // loop_footer
              %s844 = sadd.s32 1, %s840
            $region469: #{tpu_custom_call.1} parent=462 // loop_footer_branch
              %839 = sbr.rel target = $region465
            $region470: #{tpu_custom_call.1} parent=462 // loop_exit
              _
          $region463: #{tpu_custom_call.1} parent=447 // pred_fallthru
            _
        $region448: #{tpu_custom_call.1} parent=23 // pred_fallthru
          _
        // Predicated region
        $region449: #{tpu_custom_call.1} parent=23 // pred_check
          %p814 = pneg %p810
        $region450: #{tpu_custom_call.1} parent=23 // pred_check_branch
          %816 = sbr.rel (%p814) target = $region452
        $region451: #{tpu_custom_call.1} parent=23 // pred_region
          %s817 = sshllo.u32 0, 1
          loop: start=0, step=1, limit=1
          $region453: #{tpu_custom_call.1} parent=451 // loop_pre_header
            _
          $region454: #{tpu_custom_call.1} parent=451 // loop_header
            %s819 = sphi 0, %s823
            %p820 = scmp.ge.s32.totalorder %s819, 1
            %s824 = sphi %s806, %s806
            %s825 = sphi %s807, %s807
          $region455: #{tpu_custom_call.1} parent=451 // loop_header_branch
            %822 = sbr.rel (%p820) target = $region459
          $region456: #{tpu_custom_call.1} parent=451 // loop_body
            %v826 = vld [vmem:[%s824] sm:%s817]
            %827 = vst [vmem:[%s825] sm:%s817] %v826
          $region457: #{tpu_custom_call.1} parent=451 // loop_footer
            %s823 = sadd.s32 1, %s819
          $region458: #{tpu_custom_call.1} parent=451 // loop_footer_branch
            %818 = sbr.rel target = $region454
          $region459: #{tpu_custom_call.1} parent=451 // loop_exit
            _
        $region452: #{tpu_custom_call.1} parent=23 // pred_fallthru
          _
        // Predicated region
        $region471: #{tpu_custom_call.1} parent=23 // pred_check
          _
        $region472: #{tpu_custom_call.1} parent=23 // pred_check_branch
          %851 = sbr.rel (0) target = $region474
        $region473: #{tpu_custom_call.1} parent=23 // pred_region
          %852 = vsyncadd %s808, 16
        $region474: #{tpu_custom_call.1} parent=23 // pred_fallthru
          _
        %s853 = sadd.s32 %s120, 15
        %s854 = sld [smem:[#allocation5 + %s853]]
        %s855 = scalar_lea.vmem %s2, %s854
        %s856 = scalar_lea.vmem [#allocation2], 26
        %s857 = scalar_lea.sflag [#allocation3], 26
        %p859 = scmp.lt.u32.totalorder 1, 8
        %p860 = pneg %p859
        // Predicated region
        $region475: #{tpu_custom_call.1} parent=23 // pred_check
          _
        $region476: #{tpu_custom_call.1} parent=23 // pred_check_branch
          %862 = sbr.rel (%p859) target = $region478
        $region477: #{tpu_custom_call.1} parent=23 // pred_region
          %s877 = sand.u32 1, 7
          %p878 = scmp.eq.s32.totalorder %s877, 0
          %p879 = pneg %p878
          // Predicated region
          $region490: #{tpu_custom_call.1} parent=477 // pred_check
            _
          $region491: #{tpu_custom_call.1} parent=477 // pred_check_branch
            %881 = sbr.rel (%p878) target = $region493
          $region492: #{tpu_custom_call.1} parent=477 // pred_region
            %s882 = sand.u32 1, 7
            %s883 = ssub.s32 1, %s882
            %s884 = scalar_lea.vmem %s855, %s883
            %s885 = ssub.s32 1, %s882
            %s886 = scalar_lea.vmem %s856, %s885 [#allocation2]
            %s887 = sshllo.u32 0, %s882
            loop: start=0, step=1, limit=1
            $region494: #{tpu_custom_call.1} parent=492 // loop_pre_header
              _
            $region495: #{tpu_custom_call.1} parent=492 // loop_header
              %s889 = sphi 0, %s893
              %p890 = scmp.ge.s32.totalorder %s889, 1
              %s894 = sphi %s884, %s884
              %s895 = sphi %s886, %s886
            $region496: #{tpu_custom_call.1} parent=492 // loop_header_branch
              %892 = sbr.rel (%p890) target = $region500
            $region497: #{tpu_custom_call.1} parent=492 // loop_body
              %v896 = vld [vmem:[%s894] sm:%s887]
              %897 = vst [vmem:[%s895] sm:%s887] %v896
            $region498: #{tpu_custom_call.1} parent=492 // loop_footer
              %s893 = sadd.s32 1, %s889
            $region499: #{tpu_custom_call.1} parent=492 // loop_footer_branch
              %888 = sbr.rel target = $region495
            $region500: #{tpu_custom_call.1} parent=492 // loop_exit
              _
          $region493: #{tpu_custom_call.1} parent=477 // pred_fallthru
            _
        $region478: #{tpu_custom_call.1} parent=23 // pred_fallthru
          _
        // Predicated region
        $region479: #{tpu_custom_call.1} parent=23 // pred_check
          %p863 = pneg %p859
        $region480: #{tpu_custom_call.1} parent=23 // pred_check_branch
          %865 = sbr.rel (%p863) target = $region482
        $region481: #{tpu_custom_call.1} parent=23 // pred_region
          %s866 = sshllo.u32 0, 1
          loop: start=0, step=1, limit=1
          $region483: #{tpu_custom_call.1} parent=481 // loop_pre_header
            _
          $region484: #{tpu_custom_call.1} parent=481 // loop_header
            %s868 = sphi 0, %s872
            %p869 = scmp.ge.s32.totalorder %s868, 1
            %s873 = sphi %s855, %s855
            %s874 = sphi %s856, %s856
          $region485: #{tpu_custom_call.1} parent=481 // loop_header_branch
            %871 = sbr.rel (%p869) target = $region489
          $region486: #{tpu_custom_call.1} parent=481 // loop_body
            %v875 = vld [vmem:[%s873] sm:%s866]
            %876 = vst [vmem:[%s874] sm:%s866] %v875
          $region487: #{tpu_custom_call.1} parent=481 // loop_footer
            %s872 = sadd.s32 1, %s868
          $region488: #{tpu_custom_call.1} parent=481 // loop_footer_branch
            %867 = sbr.rel target = $region484
          $region489: #{tpu_custom_call.1} parent=481 // loop_exit
            _
        $region482: #{tpu_custom_call.1} parent=23 // pred_fallthru
          _
        // Predicated region
        $region501: #{tpu_custom_call.1} parent=23 // pred_check
          _
        $region502: #{tpu_custom_call.1} parent=23 // pred_check_branch
          %900 = sbr.rel (0) target = $region504
        $region503: #{tpu_custom_call.1} parent=23 // pred_region
          %901 = vsyncadd %s857, 16
        $region504: #{tpu_custom_call.1} parent=23 // pred_fallthru
          _
        %s902 = sadd.s32 %s120, 16
        %s903 = sld [smem:[#allocation5 + %s902]]
        %s904 = scalar_lea.vmem %s2, %s903
        %s905 = scalar_lea.vmem [#allocation2], 34
        %s906 = scalar_lea.sflag [#allocation3], 34
        %p908 = scmp.lt.u32.totalorder 1, 8
        %p909 = pneg %p908
        // Predicated region
        $region505: #{tpu_custom_call.1} parent=23 // pred_check
          _
        $region506: #{tpu_custom_call.1} parent=23 // pred_check_branch
          %911 = sbr.rel (%p908) target = $region508
        $region507: #{tpu_custom_call.1} parent=23 // pred_region
          %s926 = sand.u32 1, 7
          %p927 = scmp.eq.s32.totalorder %s926, 0
          %p928 = pneg %p927
          // Predicated region
          $region520: #{tpu_custom_call.1} parent=507 // pred_check
            _
          $region521: #{tpu_custom_call.1} parent=507 // pred_check_branch
            %930 = sbr.rel (%p927) target = $region523
          $region522: #{tpu_custom_call.1} parent=507 // pred_region
            %s931 = sand.u32 1, 7
            %s932 = ssub.s32 1, %s931
            %s933 = scalar_lea.vmem %s904, %s932
            %s934 = ssub.s32 1, %s931
            %s935 = scalar_lea.vmem %s905, %s934 [#allocation2]
            %s936 = sshllo.u32 0, %s931
            loop: start=0, step=1, limit=1
            $region524: #{tpu_custom_call.1} parent=522 // loop_pre_header
              _
            $region525: #{tpu_custom_call.1} parent=522 // loop_header
              %s938 = sphi 0, %s942
              %p939 = scmp.ge.s32.totalorder %s938, 1
              %s943 = sphi %s933, %s933
              %s944 = sphi %s935, %s935
            $region526: #{tpu_custom_call.1} parent=522 // loop_header_branch
              %941 = sbr.rel (%p939) target = $region530
            $region527: #{tpu_custom_call.1} parent=522 // loop_body
              %v945 = vld [vmem:[%s943] sm:%s936]
              %946 = vst [vmem:[%s944] sm:%s936] %v945
            $region528: #{tpu_custom_call.1} parent=522 // loop_footer
              %s942 = sadd.s32 1, %s938
            $region529: #{tpu_custom_call.1} parent=522 // loop_footer_branch
              %937 = sbr.rel target = $region525
            $region530: #{tpu_custom_call.1} parent=522 // loop_exit
              _
          $region523: #{tpu_custom_call.1} parent=507 // pred_fallthru
            _
        $region508: #{tpu_custom_call.1} parent=23 // pred_fallthru
          _
        // Predicated region
        $region509: #{tpu_custom_call.1} parent=23 // pred_check
          %p912 = pneg %p908
        $region510: #{tpu_custom_call.1} parent=23 // pred_check_branch
          %914 = sbr.rel (%p912) target = $region512
        $region511: #{tpu_custom_call.1} parent=23 // pred_region
          %s915 = sshllo.u32 0, 1
          loop: start=0, step=1, limit=1
          $region513: #{tpu_custom_call.1} parent=511 // loop_pre_header
            _
          $region514: #{tpu_custom_call.1} parent=511 // loop_header
            %s917 = sphi 0, %s921
            %p918 = scmp.ge.s32.totalorder %s917, 1
            %s922 = sphi %s904, %s904
            %s923 = sphi %s905, %s905
          $region515: #{tpu_custom_call.1} parent=511 // loop_header_branch
            %920 = sbr.rel (%p918) target = $region519
          $region516: #{tpu_custom_call.1} parent=511 // loop_body
            %v924 = vld [vmem:[%s922] sm:%s915]
            %925 = vst [vmem:[%s923] sm:%s915] %v924
          $region517: #{tpu_custom_call.1} parent=511 // loop_footer
            %s921 = sadd.s32 1, %s917
          $region518: #{tpu_custom_call.1} parent=511 // loop_footer_branch
            %916 = sbr.rel target = $region514
          $region519: #{tpu_custom_call.1} parent=511 // loop_exit
            _
        $region512: #{tpu_custom_call.1} parent=23 // pred_fallthru
          _
        // Predicated region
        $region531: #{tpu_custom_call.1} parent=23 // pred_check
          _
        $region532: #{tpu_custom_call.1} parent=23 // pred_check_branch
          %949 = sbr.rel (0) target = $region534
        $region533: #{tpu_custom_call.1} parent=23 // pred_region
          %950 = vsyncadd %s906, 16
        $region534: #{tpu_custom_call.1} parent=23 // pred_fallthru
          _
        %s951 = sadd.s32 %s120, 17
        %s952 = sld [smem:[#allocation5 + %s951]]
        %s953 = scalar_lea.vmem %s2, %s952
        %s954 = scalar_lea.vmem [#allocation2], 42
        %s955 = scalar_lea.sflag [#allocation3], 42
        %p957 = scmp.lt.u32.totalorder 1, 8
        %p958 = pneg %p957
        // Predicated region
        $region535: #{tpu_custom_call.1} parent=23 // pred_check
          _
        $region536: #{tpu_custom_call.1} parent=23 // pred_check_branch
          %960 = sbr.rel (%p957) target = $region538
        $region537: #{tpu_custom_call.1} parent=23 // pred_region
          %s975 = sand.u32 1, 7
          %p976 = scmp.eq.s32.totalorder %s975, 0
          %p977 = pneg %p976
          // Predicated region
          $region550: #{tpu_custom_call.1} parent=537 // pred_check
            _
          $region551: #{tpu_custom_call.1} parent=537 // pred_check_branch
            %979 = sbr.rel (%p976) target = $region553
          $region552: #{tpu_custom_call.1} parent=537 // pred_region
            %s980 = sand.u32 1, 7
            %s981 = ssub.s32 1, %s980
            %s982 = scalar_lea.vmem %s953, %s981
            %s983 = ssub.s32 1, %s980
            %s984 = scalar_lea.vmem %s954, %s983 [#allocation2]
            %s985 = sshllo.u32 0, %s980
            loop: start=0, step=1, limit=1
            $region554: #{tpu_custom_call.1} parent=552 // loop_pre_header
              _
            $region555: #{tpu_custom_call.1} parent=552 // loop_header
              %s987 = sphi 0, %s991
              %p988 = scmp.ge.s32.totalorder %s987, 1
              %s992 = sphi %s982, %s982
              %s993 = sphi %s984, %s984
            $region556: #{tpu_custom_call.1} parent=552 // loop_header_branch
              %990 = sbr.rel (%p988) target = $region560
            $region557: #{tpu_custom_call.1} parent=552 // loop_body
              %v994 = vld [vmem:[%s992] sm:%s985]
              %995 = vst [vmem:[%s993] sm:%s985] %v994
            $region558: #{tpu_custom_call.1} parent=552 // loop_footer
              %s991 = sadd.s32 1, %s987
            $region559: #{tpu_custom_call.1} parent=552 // loop_footer_branch
              %986 = sbr.rel target = $region555
            $region560: #{tpu_custom_call.1} parent=552 // loop_exit
              _
          $region553: #{tpu_custom_call.1} parent=537 // pred_fallthru
            _
        $region538: #{tpu_custom_call.1} parent=23 // pred_fallthru
          _
        // Predicated region
        $region539: #{tpu_custom_call.1} parent=23 // pred_check
          %p961 = pneg %p957
        $region540: #{tpu_custom_call.1} parent=23 // pred_check_branch
          %963 = sbr.rel (%p961) target = $region542
        $region541: #{tpu_custom_call.1} parent=23 // pred_region
          %s964 = sshllo.u32 0, 1
          loop: start=0, step=1, limit=1
          $region543: #{tpu_custom_call.1} parent=541 // loop_pre_header
            _
          $region544: #{tpu_custom_call.1} parent=541 // loop_header
            %s966 = sphi 0, %s970
            %p967 = scmp.ge.s32.totalorder %s966, 1
            %s971 = sphi %s953, %s953
            %s972 = sphi %s954, %s954
          $region545: #{tpu_custom_call.1} parent=541 // loop_header_branch
            %969 = sbr.rel (%p967) target = $region549
          $region546: #{tpu_custom_call.1} parent=541 // loop_body
            %v973 = vld [vmem:[%s971] sm:%s964]
            %974 = vst [vmem:[%s972] sm:%s964] %v973
          $region547: #{tpu_custom_call.1} parent=541 // loop_footer
            %s970 = sadd.s32 1, %s966
          $region548: #{tpu_custom_call.1} parent=541 // loop_footer_branch
            %965 = sbr.rel target = $region544
          $region549: #{tpu_custom_call.1} parent=541 // loop_exit
            _
        $region542: #{tpu_custom_call.1} parent=23 // pred_fallthru
          _
        // Predicated region
        $region561: #{tpu_custom_call.1} parent=23 // pred_check
          _
        $region562: #{tpu_custom_call.1} parent=23 // pred_check_branch
          %998 = sbr.rel (0) target = $region564
        $region563: #{tpu_custom_call.1} parent=23 // pred_region
          %999 = vsyncadd %s955, 16
        $region564: #{tpu_custom_call.1} parent=23 // pred_fallthru
          _
        %s1000 = sadd.s32 %s120, 18
        %s1001 = sld [smem:[#allocation5 + %s1000]]
        %s1002 = scalar_lea.vmem %s2, %s1001
        %s1003 = scalar_lea.vmem [#allocation2], 3
        %s1004 = scalar_lea.sflag [#allocation3], 3
        %p1006 = scmp.lt.u32.totalorder 1, 8
        %p1007 = pneg %p1006
        // Predicated region
        $region565: #{tpu_custom_call.1} parent=23 // pred_check
          _
        $region566: #{tpu_custom_call.1} parent=23 // pred_check_branch
          %1009 = sbr.rel (%p1006) target = $region568
        $region567: #{tpu_custom_call.1} parent=23 // pred_region
          %s1024 = sand.u32 1, 7
          %p1025 = scmp.eq.s32.totalorder %s1024, 0
          %p1026 = pneg %p1025
          // Predicated region
          $region580: #{tpu_custom_call.1} parent=567 // pred_check
            _
          $region581: #{tpu_custom_call.1} parent=567 // pred_check_branch
            %1028 = sbr.rel (%p1025) target = $region583
          $region582: #{tpu_custom_call.1} parent=567 // pred_region
            %s1029 = sand.u32 1, 7
            %s1030 = ssub.s32 1, %s1029
            %s1031 = scalar_lea.vmem %s1002, %s1030
            %s1032 = ssub.s32 1, %s1029
            %s1033 = scalar_lea.vmem %s1003, %s1032 [#allocation2]
            %s1034 = sshllo.u32 0, %s1029
            loop: start=0, step=1, limit=1
            $region584: #{tpu_custom_call.1} parent=582 // loop_pre_header
              _
            $region585: #{tpu_custom_call.1} parent=582 // loop_header
              %s1036 = sphi 0, %s1040
              %p1037 = scmp.ge.s32.totalorder %s1036, 1
              %s1041 = sphi %s1031, %s1031
              %s1042 = sphi %s1033, %s1033
            $region586: #{tpu_custom_call.1} parent=582 // loop_header_branch
              %1039 = sbr.rel (%p1037) target = $region590
            $region587: #{tpu_custom_call.1} parent=582 // loop_body
              %v1043 = vld [vmem:[%s1041] sm:%s1034]
              %1044 = vst [vmem:[%s1042] sm:%s1034] %v1043
            $region588: #{tpu_custom_call.1} parent=582 // loop_footer
              %s1040 = sadd.s32 1, %s1036
            $region589: #{tpu_custom_call.1} parent=582 // loop_footer_branch
              %1035 = sbr.rel target = $region585
            $region590: #{tpu_custom_call.1} parent=582 // loop_exit
              _
          $region583: #{tpu_custom_call.1} parent=567 // pred_fallthru
            _
        $region568: #{tpu_custom_call.1} parent=23 // pred_fallthru
          _
        // Predicated region
        $region569: #{tpu_custom_call.1} parent=23 // pred_check
          %p1010 = pneg %p1006
        $region570: #{tpu_custom_call.1} parent=23 // pred_check_branch
          %1012 = sbr.rel (%p1010) target = $region572
        $region571: #{tpu_custom_call.1} parent=23 // pred_region
          %s1013 = sshllo.u32 0, 1
          loop: start=0, step=1, limit=1
          $region573: #{tpu_custom_call.1} parent=571 // loop_pre_header
            _
          $region574: #{tpu_custom_call.1} parent=571 // loop_header
            %s1015 = sphi 0, %s1019
            %p1016 = scmp.ge.s32.totalorder %s1015, 1
            %s1020 = sphi %s1002, %s1002
            %s1021 = sphi %s1003, %s1003
          $region575: #{tpu_custom_call.1} parent=571 // loop_header_branch
            %1018 = sbr.rel (%p1016) target = $region579
          $region576: #{tpu_custom_call.1} parent=571 // loop_body
            %v1022 = vld [vmem:[%s1020] sm:%s1013]
            %1023 = vst [vmem:[%s1021] sm:%s1013] %v1022
          $region577: #{tpu_custom_call.1} parent=571 // loop_footer
            %s1019 = sadd.s32 1, %s1015
          $region578: #{tpu_custom_call.1} parent=571 // loop_footer_branch
            %1014 = sbr.rel target = $region574
          $region579: #{tpu_custom_call.1} parent=571 // loop_exit
            _
        $region572: #{tpu_custom_call.1} parent=23 // pred_fallthru
          _
        // Predicated region
        $region591: #{tpu_custom_call.1} parent=23 // pred_check
          _
        $region592: #{tpu_custom_call.1} parent=23 // pred_check_branch
          %1047 = sbr.rel (0) target = $region594
        $region593: #{tpu_custom_call.1} parent=23 // pred_region
          %1048 = vsyncadd %s1004, 16
        $region594: #{tpu_custom_call.1} parent=23 // pred_fallthru
          _
        %s1049 = sadd.s32 %s120, 19
        %s1050 = sld [smem:[#allocation5 + %s1049]]
        %s1051 = scalar_lea.vmem %s2, %s1050
        %s1052 = scalar_lea.vmem [#allocation2], 11
        %s1053 = scalar_lea.sflag [#allocation3], 11
        %p1055 = scmp.lt.u32.totalorder 1, 8
        %p1056 = pneg %p1055
        // Predicated region
        $region595: #{tpu_custom_call.1} parent=23 // pred_check
          _
        $region596: #{tpu_custom_call.1} parent=23 // pred_check_branch
          %1058 = sbr.rel (%p1055) target = $region598
        $region597: #{tpu_custom_call.1} parent=23 // pred_region
          %s1073 = sand.u32 1, 7
          %p1074 = scmp.eq.s32.totalorder %s1073, 0
          %p1075 = pneg %p1074
          // Predicated region
          $region610: #{tpu_custom_call.1} parent=597 // pred_check
            _
          $region611: #{tpu_custom_call.1} parent=597 // pred_check_branch
            %1077 = sbr.rel (%p1074) target = $region613
          $region612: #{tpu_custom_call.1} parent=597 // pred_region
            %s1078 = sand.u32 1, 7
            %s1079 = ssub.s32 1, %s1078
            %s1080 = scalar_lea.vmem %s1051, %s1079
            %s1081 = ssub.s32 1, %s1078
            %s1082 = scalar_lea.vmem %s1052, %s1081 [#allocation2]
            %s1083 = sshllo.u32 0, %s1078
            loop: start=0, step=1, limit=1
            $region614: #{tpu_custom_call.1} parent=612 // loop_pre_header
              _
            $region615: #{tpu_custom_call.1} parent=612 // loop_header
              %s1085 = sphi 0, %s1089
              %p1086 = scmp.ge.s32.totalorder %s1085, 1
              %s1090 = sphi %s1080, %s1080
              %s1091 = sphi %s1082, %s1082
            $region616: #{tpu_custom_call.1} parent=612 // loop_header_branch
              %1088 = sbr.rel (%p1086) target = $region620
            $region617: #{tpu_custom_call.1} parent=612 // loop_body
              %v1092 = vld [vmem:[%s1090] sm:%s1083]
              %1093 = vst [vmem:[%s1091] sm:%s1083] %v1092
            $region618: #{tpu_custom_call.1} parent=612 // loop_footer
              %s1089 = sadd.s32 1, %s1085
            $region619: #{tpu_custom_call.1} parent=612 // loop_footer_branch
              %1084 = sbr.rel target = $region615
            $region620: #{tpu_custom_call.1} parent=612 // loop_exit
              _
          $region613: #{tpu_custom_call.1} parent=597 // pred_fallthru
            _
        $region598: #{tpu_custom_call.1} parent=23 // pred_fallthru
          _
        // Predicated region
        $region599: #{tpu_custom_call.1} parent=23 // pred_check
          %p1059 = pneg %p1055
        $region600: #{tpu_custom_call.1} parent=23 // pred_check_branch
          %1061 = sbr.rel (%p1059) target = $region602
        $region601: #{tpu_custom_call.1} parent=23 // pred_region
          %s1062 = sshllo.u32 0, 1
          loop: start=0, step=1, limit=1
          $region603: #{tpu_custom_call.1} parent=601 // loop_pre_header
            _
          $region604: #{tpu_custom_call.1} parent=601 // loop_header
            %s1064 = sphi 0, %s1068
            %p1065 = scmp.ge.s32.totalorder %s1064, 1
            %s1069 = sphi %s1051, %s1051
            %s1070 = sphi %s1052, %s1052
          $region605: #{tpu_custom_call.1} parent=601 // loop_header_branch
            %1067 = sbr.rel (%p1065) target = $region609
          $region606: #{tpu_custom_call.1} parent=601 // loop_body
            %v1071 = vld [vmem:[%s1069] sm:%s1062]
            %1072 = vst [vmem:[%s1070] sm:%s1062] %v1071
          $region607: #{tpu_custom_call.1} parent=601 // loop_footer
            %s1068 = sadd.s32 1, %s1064
          $region608: #{tpu_custom_call.1} parent=601 // loop_footer_branch
            %1063 = sbr.rel target = $region604
          $region609: #{tpu_custom_call.1} parent=601 // loop_exit
            _
        $region602: #{tpu_custom_call.1} parent=23 // pred_fallthru
          _
        // Predicated region
        $region621: #{tpu_custom_call.1} parent=23 // pred_check
          _
        $region622: #{tpu_custom_call.1} parent=23 // pred_check_branch
          %1096 = sbr.rel (0) target = $region624
        $region623: #{tpu_custom_call.1} parent=23 // pred_region
          %1097 = vsyncadd %s1053, 16
        $region624: #{tpu_custom_call.1} parent=23 // pred_fallthru
          _
        %s1098 = sadd.s32 %s120, 20
        %s1099 = sld [smem:[#allocation5 + %s1098]]
        %s1100 = scalar_lea.vmem %s2, %s1099
        %s1101 = scalar_lea.vmem [#allocation2], 19
        %s1102 = scalar_lea.sflag [#allocation3], 19
        %p1104 = scmp.lt.u32.totalorder 1, 8
        %p1105 = pneg %p1104
        // Predicated region
        $region625: #{tpu_custom_call.1} parent=23 // pred_check
          _
        $region626: #{tpu_custom_call.1} parent=23 // pred_check_branch
          %1107 = sbr.rel (%p1104) target = $region628
        $region627: #{tpu_custom_call.1} parent=23 // pred_region
          %s1122 = sand.u32 1, 7
          %p1123 = scmp.eq.s32.totalorder %s1122, 0
          %p1124 = pneg %p1123
          // Predicated region
          $region640: #{tpu_custom_call.1} parent=627 // pred_check
            _
          $region641: #{tpu_custom_call.1} parent=627 // pred_check_branch
            %1126 = sbr.rel (%p1123) target = $region643
          $region642: #{tpu_custom_call.1} parent=627 // pred_region
            %s1127 = sand.u32 1, 7
            %s1128 = ssub.s32 1, %s1127
            %s1129 = scalar_lea.vmem %s1100, %s1128
            %s1130 = ssub.s32 1, %s1127
            %s1131 = scalar_lea.vmem %s1101, %s1130 [#allocation2]
            %s1132 = sshllo.u32 0, %s1127
            loop: start=0, step=1, limit=1
            $region644: #{tpu_custom_call.1} parent=642 // loop_pre_header
              _
            $region645: #{tpu_custom_call.1} parent=642 // loop_header
              %s1134 = sphi 0, %s1138
              %p1135 = scmp.ge.s32.totalorder %s1134, 1
              %s1139 = sphi %s1129, %s1129
              %s1140 = sphi %s1131, %s1131
            $region646: #{tpu_custom_call.1} parent=642 // loop_header_branch
              %1137 = sbr.rel (%p1135) target = $region650
            $region647: #{tpu_custom_call.1} parent=642 // loop_body
              %v1141 = vld [vmem:[%s1139] sm:%s1132]
              %1142 = vst [vmem:[%s1140] sm:%s1132] %v1141
            $region648: #{tpu_custom_call.1} parent=642 // loop_footer
              %s1138 = sadd.s32 1, %s1134
            $region649: #{tpu_custom_call.1} parent=642 // loop_footer_branch
              %1133 = sbr.rel target = $region645
            $region650: #{tpu_custom_call.1} parent=642 // loop_exit
              _
          $region643: #{tpu_custom_call.1} parent=627 // pred_fallthru
            _
        $region628: #{tpu_custom_call.1} parent=23 // pred_fallthru
          _
        // Predicated region
        $region629: #{tpu_custom_call.1} parent=23 // pred_check
          %p1108 = pneg %p1104
        $region630: #{tpu_custom_call.1} parent=23 // pred_check_branch
          %1110 = sbr.rel (%p1108) target = $region632
        $region631: #{tpu_custom_call.1} parent=23 // pred_region
          %s1111 = sshllo.u32 0, 1
          loop: start=0, step=1, limit=1
          $region633: #{tpu_custom_call.1} parent=631 // loop_pre_header
            _
          $region634: #{tpu_custom_call.1} parent=631 // loop_header
            %s1113 = sphi 0, %s1117
            %p1114 = scmp.ge.s32.totalorder %s1113, 1
            %s1118 = sphi %s1100, %s1100
            %s1119 = sphi %s1101, %s1101
          $region635: #{tpu_custom_call.1} parent=631 // loop_header_branch
            %1116 = sbr.rel (%p1114) target = $region639
          $region636: #{tpu_custom_call.1} parent=631 // loop_body
            %v1120 = vld [vmem:[%s1118] sm:%s1111]
            %1121 = vst [vmem:[%s1119] sm:%s1111] %v1120
          $region637: #{tpu_custom_call.1} parent=631 // loop_footer
            %s1117 = sadd.s32 1, %s1113
          $region638: #{tpu_custom_call.1} parent=631 // loop_footer_branch
            %1112 = sbr.rel target = $region634
          $region639: #{tpu_custom_call.1} parent=631 // loop_exit
            _
        $region632: #{tpu_custom_call.1} parent=23 // pred_fallthru
          _
        // Predicated region
        $region651: #{tpu_custom_call.1} parent=23 // pred_check
          _
        $region652: #{tpu_custom_call.1} parent=23 // pred_check_branch
          %1145 = sbr.rel (0) target = $region654
        $region653: #{tpu_custom_call.1} parent=23 // pred_region
          %1146 = vsyncadd %s1102, 16
        $region654: #{tpu_custom_call.1} parent=23 // pred_fallthru
          _
        %s1147 = sadd.s32 %s120, 21
        %s1148 = sld [smem:[#allocation5 + %s1147]]
        %s1149 = scalar_lea.vmem %s2, %s1148
        %s1150 = scalar_lea.vmem [#allocation2], 27
        %s1151 = scalar_lea.sflag [#allocation3], 27
        %p1153 = scmp.lt.u32.totalorder 1, 8
        %p1154 = pneg %p1153
        // Predicated region
        $region655: #{tpu_custom_call.1} parent=23 // pred_check
          _
        $region656: #{tpu_custom_call.1} parent=23 // pred_check_branch
          %1156 = sbr.rel (%p1153) target = $region658
        $region657: #{tpu_custom_call.1} parent=23 // pred_region
          %s1171 = sand.u32 1, 7
          %p1172 = scmp.eq.s32.totalorder %s1171, 0
          %p1173 = pneg %p1172
          // Predicated region
          $region670: #{tpu_custom_call.1} parent=657 // pred_check
            _
          $region671: #{tpu_custom_call.1} parent=657 // pred_check_branch
            %1175 = sbr.rel (%p1172) target = $region673
          $region672: #{tpu_custom_call.1} parent=657 // pred_region
            %s1176 = sand.u32 1, 7
            %s1177 = ssub.s32 1, %s1176
            %s1178 = scalar_lea.vmem %s1149, %s1177
            %s1179 = ssub.s32 1, %s1176
            %s1180 = scalar_lea.vmem %s1150, %s1179 [#allocation2]
            %s1181 = sshllo.u32 0, %s1176
            loop: start=0, step=1, limit=1
            $region674: #{tpu_custom_call.1} parent=672 // loop_pre_header
              _
            $region675: #{tpu_custom_call.1} parent=672 // loop_header
              %s1183 = sphi 0, %s1187
              %p1184 = scmp.ge.s32.totalorder %s1183, 1
              %s1188 = sphi %s1178, %s1178
              %s1189 = sphi %s1180, %s1180
            $region676: #{tpu_custom_call.1} parent=672 // loop_header_branch
              %1186 = sbr.rel (%p1184) target = $region680
            $region677: #{tpu_custom_call.1} parent=672 // loop_body
              %v1190 = vld [vmem:[%s1188] sm:%s1181]
              %1191 = vst [vmem:[%s1189] sm:%s1181] %v1190
            $region678: #{tpu_custom_call.1} parent=672 // loop_footer
              %s1187 = sadd.s32 1, %s1183
            $region679: #{tpu_custom_call.1} parent=672 // loop_footer_branch
              %1182 = sbr.rel target = $region675
            $region680: #{tpu_custom_call.1} parent=672 // loop_exit
              _
          $region673: #{tpu_custom_call.1} parent=657 // pred_fallthru
            _
        $region658: #{tpu_custom_call.1} parent=23 // pred_fallthru
          _
        // Predicated region
        $region659: #{tpu_custom_call.1} parent=23 // pred_check
          %p1157 = pneg %p1153
        $region660: #{tpu_custom_call.1} parent=23 // pred_check_branch
          %1159 = sbr.rel (%p1157) target = $region662
        $region661: #{tpu_custom_call.1} parent=23 // pred_region
          %s1160 = sshllo.u32 0, 1
          loop: start=0, step=1, limit=1
          $region663: #{tpu_custom_call.1} parent=661 // loop_pre_header
            _
          $region664: #{tpu_custom_call.1} parent=661 // loop_header
            %s1162 = sphi 0, %s1166
            %p1163 = scmp.ge.s32.totalorder %s1162, 1
            %s1167 = sphi %s1149, %s1149
            %s1168 = sphi %s1150, %s1150
          $region665: #{tpu_custom_call.1} parent=661 // loop_header_branch
            %1165 = sbr.rel (%p1163) target = $region669
          $region666: #{tpu_custom_call.1} parent=661 // loop_body
            %v1169 = vld [vmem:[%s1167] sm:%s1160]
            %1170 = vst [vmem:[%s1168] sm:%s1160] %v1169
          $region667: #{tpu_custom_call.1} parent=661 // loop_footer
            %s1166 = sadd.s32 1, %s1162
          $region668: #{tpu_custom_call.1} parent=661 // loop_footer_branch
            %1161 = sbr.rel target = $region664
          $region669: #{tpu_custom_call.1} parent=661 // loop_exit
            _
        $region662: #{tpu_custom_call.1} parent=23 // pred_fallthru
          _
        // Predicated region
        $region681: #{tpu_custom_call.1} parent=23 // pred_check
          _
        $region682: #{tpu_custom_call.1} parent=23 // pred_check_branch
          %1194 = sbr.rel (0) target = $region684
        $region683: #{tpu_custom_call.1} parent=23 // pred_region
          %1195 = vsyncadd %s1151, 16
        $region684: #{tpu_custom_call.1} parent=23 // pred_fallthru
          _
        %s1196 = sadd.s32 %s120, 22
        %s1197 = sld [smem:[#allocation5 + %s1196]]
        %s1198 = scalar_lea.vmem %s2, %s1197
        %s1199 = scalar_lea.vmem [#allocation2], 35
        %s1200 = scalar_lea.sflag [#allocation3], 35
        %p1202 = scmp.lt.u32.totalorder 1, 8
        %p1203 = pneg %p1202
        // Predicated region
        $region685: #{tpu_custom_call.1} parent=23 // pred_check
          _
        $region686: #{tpu_custom_call.1} parent=23 // pred_check_branch
          %1205 = sbr.rel (%p1202) target = $region688
        $region687: #{tpu_custom_call.1} parent=23 // pred_region
          %s1220 = sand.u32 1, 7
          %p1221 = scmp.eq.s32.totalorder %s1220, 0
          %p1222 = pneg %p1221
          // Predicated region
          $region700: #{tpu_custom_call.1} parent=687 // pred_check
            _
          $region701: #{tpu_custom_call.1} parent=687 // pred_check_branch
            %1224 = sbr.rel (%p1221) target = $region703
          $region702: #{tpu_custom_call.1} parent=687 // pred_region
            %s1225 = sand.u32 1, 7
            %s1226 = ssub.s32 1, %s1225
            %s1227 = scalar_lea.vmem %s1198, %s1226
            %s1228 = ssub.s32 1, %s1225
            %s1229 = scalar_lea.vmem %s1199, %s1228 [#allocation2]
            %s1230 = sshllo.u32 0, %s1225
            loop: start=0, step=1, limit=1
            $region704: #{tpu_custom_call.1} parent=702 // loop_pre_header
              _
            $region705: #{tpu_custom_call.1} parent=702 // loop_header
              %s1232 = sphi 0, %s1236
              %p1233 = scmp.ge.s32.totalorder %s1232, 1
              %s1237 = sphi %s1227, %s1227
              %s1238 = sphi %s1229, %s1229
            $region706: #{tpu_custom_call.1} parent=702 // loop_header_branch
              %1235 = sbr.rel (%p1233) target = $region710
            $region707: #{tpu_custom_call.1} parent=702 // loop_body
              %v1239 = vld [vmem:[%s1237] sm:%s1230]
              %1240 = vst [vmem:[%s1238] sm:%s1230] %v1239
            $region708: #{tpu_custom_call.1} parent=702 // loop_footer
              %s1236 = sadd.s32 1, %s1232
            $region709: #{tpu_custom_call.1} parent=702 // loop_footer_branch
              %1231 = sbr.rel target = $region705
            $region710: #{tpu_custom_call.1} parent=702 // loop_exit
              _
          $region703: #{tpu_custom_call.1} parent=687 // pred_fallthru
            _
        $region688: #{tpu_custom_call.1} parent=23 // pred_fallthru
          _
        // Predicated region
        $region689: #{tpu_custom_call.1} parent=23 // pred_check
          %p1206 = pneg %p1202
        $region690: #{tpu_custom_call.1} parent=23 // pred_check_branch
          %1208 = sbr.rel (%p1206) target = $region692
        $region691: #{tpu_custom_call.1} parent=23 // pred_region
          %s1209 = sshllo.u32 0, 1
          loop: start=0, step=1, limit=1
          $region693: #{tpu_custom_call.1} parent=691 // loop_pre_header
            _
          $region694: #{tpu_custom_call.1} parent=691 // loop_header
            %s1211 = sphi 0, %s1215
            %p1212 = scmp.ge.s32.totalorder %s1211, 1
            %s1216 = sphi %s1198, %s1198
            %s1217 = sphi %s1199, %s1199
          $region695: #{tpu_custom_call.1} parent=691 // loop_header_branch
            %1214 = sbr.rel (%p1212) target = $region699
          $region696: #{tpu_custom_call.1} parent=691 // loop_body
            %v1218 = vld [vmem:[%s1216] sm:%s1209]
            %1219 = vst [vmem:[%s1217] sm:%s1209] %v1218
          $region697: #{tpu_custom_call.1} parent=691 // loop_footer
            %s1215 = sadd.s32 1, %s1211
          $region698: #{tpu_custom_call.1} parent=691 // loop_footer_branch
            %1210 = sbr.rel target = $region694
          $region699: #{tpu_custom_call.1} parent=691 // loop_exit
            _
        $region692: #{tpu_custom_call.1} parent=23 // pred_fallthru
          _
        // Predicated region
        $region711: #{tpu_custom_call.1} parent=23 // pred_check
          _
        $region712: #{tpu_custom_call.1} parent=23 // pred_check_branch
          %1243 = sbr.rel (0) target = $region714
        $region713: #{tpu_custom_call.1} parent=23 // pred_region
          %1244 = vsyncadd %s1200, 16
        $region714: #{tpu_custom_call.1} parent=23 // pred_fallthru
          _
        %s1245 = sadd.s32 %s120, 23
        %s1246 = sld [smem:[#allocation5 + %s1245]]
        %s1247 = scalar_lea.vmem %s2, %s1246
        %s1248 = scalar_lea.vmem [#allocation2], 43
        %s1249 = scalar_lea.sflag [#allocation3], 43
        %p1251 = scmp.lt.u32.totalorder 1, 8
        %p1252 = pneg %p1251
        // Predicated region
        $region715: #{tpu_custom_call.1} parent=23 // pred_check
          _
        $region716: #{tpu_custom_call.1} parent=23 // pred_check_branch
          %1254 = sbr.rel (%p1251) target = $region718
        $region717: #{tpu_custom_call.1} parent=23 // pred_region
          %s1269 = sand.u32 1, 7
          %p1270 = scmp.eq.s32.totalorder %s1269, 0
          %p1271 = pneg %p1270
          // Predicated region
          $region730: #{tpu_custom_call.1} parent=717 // pred_check
            _
          $region731: #{tpu_custom_call.1} parent=717 // pred_check_branch
            %1273 = sbr.rel (%p1270) target = $region733
          $region732: #{tpu_custom_call.1} parent=717 // pred_region
            %s1274 = sand.u32 1, 7
            %s1275 = ssub.s32 1, %s1274
            %s1276 = scalar_lea.vmem %s1247, %s1275
            %s1277 = ssub.s32 1, %s1274
            %s1278 = scalar_lea.vmem %s1248, %s1277 [#allocation2]
            %s1279 = sshllo.u32 0, %s1274
            loop: start=0, step=1, limit=1
            $region734: #{tpu_custom_call.1} parent=732 // loop_pre_header
              _
            $region735: #{tpu_custom_call.1} parent=732 // loop_header
              %s1281 = sphi 0, %s1285
              %p1282 = scmp.ge.s32.totalorder %s1281, 1
              %s1286 = sphi %s1276, %s1276
              %s1287 = sphi %s1278, %s1278
            $region736: #{tpu_custom_call.1} parent=732 // loop_header_branch
              %1284 = sbr.rel (%p1282) target = $region740
            $region737: #{tpu_custom_call.1} parent=732 // loop_body
              %v1288 = vld [vmem:[%s1286] sm:%s1279]
              %1289 = vst [vmem:[%s1287] sm:%s1279] %v1288
            $region738: #{tpu_custom_call.1} parent=732 // loop_footer
              %s1285 = sadd.s32 1, %s1281
            $region739: #{tpu_custom_call.1} parent=732 // loop_footer_branch
              %1280 = sbr.rel target = $region735
            $region740: #{tpu_custom_call.1} parent=732 // loop_exit
              _
          $region733: #{tpu_custom_call.1} parent=717 // pred_fallthru
            _
        $region718: #{tpu_custom_call.1} parent=23 // pred_fallthru
          _
        // Predicated region
        $region719: #{tpu_custom_call.1} parent=23 // pred_check
          %p1255 = pneg %p1251
        $region720: #{tpu_custom_call.1} parent=23 // pred_check_branch
          %1257 = sbr.rel (%p1255) target = $region722
        $region721: #{tpu_custom_call.1} parent=23 // pred_region
          %s1258 = sshllo.u32 0, 1
          loop: start=0, step=1, limit=1
          $region723: #{tpu_custom_call.1} parent=721 // loop_pre_header
            _
          $region724: #{tpu_custom_call.1} parent=721 // loop_header
            %s1260 = sphi 0, %s1264
            %p1261 = scmp.ge.s32.totalorder %s1260, 1
            %s1265 = sphi %s1247, %s1247
            %s1266 = sphi %s1248, %s1248
          $region725: #{tpu_custom_call.1} parent=721 // loop_header_branch
            %1263 = sbr.rel (%p1261) target = $region729
          $region726: #{tpu_custom_call.1} parent=721 // loop_body
            %v1267 = vld [vmem:[%s1265] sm:%s1258]
            %1268 = vst [vmem:[%s1266] sm:%s1258] %v1267
          $region727: #{tpu_custom_call.1} parent=721 // loop_footer
            %s1264 = sadd.s32 1, %s1260
          $region728: #{tpu_custom_call.1} parent=721 // loop_footer_branch
            %1259 = sbr.rel target = $region724
          $region729: #{tpu_custom_call.1} parent=721 // loop_exit
            _
        $region722: #{tpu_custom_call.1} parent=23 // pred_fallthru
          _
        // Predicated region
        $region741: #{tpu_custom_call.1} parent=23 // pred_check
          _
        $region742: #{tpu_custom_call.1} parent=23 // pred_check_branch
          %1292 = sbr.rel (0) target = $region744
        $region743: #{tpu_custom_call.1} parent=23 // pred_region
          %1293 = vsyncadd %s1249, 16
        $region744: #{tpu_custom_call.1} parent=23 // pred_fallthru
          _
        %s1294 = sadd.s32 %s120, 24
        %s1295 = sld [smem:[#allocation5 + %s1294]]
        %s1296 = scalar_lea.vmem %s2, %s1295
        %s1297 = scalar_lea.vmem [#allocation2], 4
        %s1298 = scalar_lea.sflag [#allocation3], 4
        %p1300 = scmp.lt.u32.totalorder 1, 8
        %p1301 = pneg %p1300
        // Predicated region
        $region745: #{tpu_custom_call.1} parent=23 // pred_check
          _
        $region746: #{tpu_custom_call.1} parent=23 // pred_check_branch
          %1303 = sbr.rel (%p1300) target = $region748
        $region747: #{tpu_custom_call.1} parent=23 // pred_region
          %s1318 = sand.u32 1, 7
          %p1319 = scmp.eq.s32.totalorder %s1318, 0
          %p1320 = pneg %p1319
          // Predicated region
          $region760: #{tpu_custom_call.1} parent=747 // pred_check
            _
          $region761: #{tpu_custom_call.1} parent=747 // pred_check_branch
            %1322 = sbr.rel (%p1319) target = $region763
          $region762: #{tpu_custom_call.1} parent=747 // pred_region
            %s1323 = sand.u32 1, 7
            %s1324 = ssub.s32 1, %s1323
            %s1325 = scalar_lea.vmem %s1296, %s1324
            %s1326 = ssub.s32 1, %s1323
            %s1327 = scalar_lea.vmem %s1297, %s1326 [#allocation2]
            %s1328 = sshllo.u32 0, %s1323
            loop: start=0, step=1, limit=1
            $region764: #{tpu_custom_call.1} parent=762 // loop_pre_header
              _
            $region765: #{tpu_custom_call.1} parent=762 // loop_header
              %s1330 = sphi 0, %s1334
              %p1331 = scmp.ge.s32.totalorder %s1330, 1
              %s1335 = sphi %s1325, %s1325
              %s1336 = sphi %s1327, %s1327
            $region766: #{tpu_custom_call.1} parent=762 // loop_header_branch
              %1333 = sbr.rel (%p1331) target = $region770
            $region767: #{tpu_custom_call.1} parent=762 // loop_body
              %v1337 = vld [vmem:[%s1335] sm:%s1328]
              %1338 = vst [vmem:[%s1336] sm:%s1328] %v1337
            $region768: #{tpu_custom_call.1} parent=762 // loop_footer
              %s1334 = sadd.s32 1, %s1330
            $region769: #{tpu_custom_call.1} parent=762 // loop_footer_branch
              %1329 = sbr.rel target = $region765
            $region770: #{tpu_custom_call.1} parent=762 // loop_exit
              _
          $region763: #{tpu_custom_call.1} parent=747 // pred_fallthru
            _
        $region748: #{tpu_custom_call.1} parent=23 // pred_fallthru
          _
        // Predicated region
        $region749: #{tpu_custom_call.1} parent=23 // pred_check
          %p1304 = pneg %p1300
        $region750: #{tpu_custom_call.1} parent=23 // pred_check_branch
          %1306 = sbr.rel (%p1304) target = $region752
        $region751: #{tpu_custom_call.1} parent=23 // pred_region
          %s1307 = sshllo.u32 0, 1
          loop: start=0, step=1, limit=1
          $region753: #{tpu_custom_call.1} parent=751 // loop_pre_header
            _
          $region754: #{tpu_custom_call.1} parent=751 // loop_header
            %s1309 = sphi 0, %s1313
            %p1310 = scmp.ge.s32.totalorder %s1309, 1
            %s1314 = sphi %s1296, %s1296
            %s1315 = sphi %s1297, %s1297
          $region755: #{tpu_custom_call.1} parent=751 // loop_header_branch
            %1312 = sbr.rel (%p1310) target = $region759
          $region756: #{tpu_custom_call.1} parent=751 // loop_body
            %v1316 = vld [vmem:[%s1314] sm:%s1307]
            %1317 = vst [vmem:[%s1315] sm:%s1307] %v1316
          $region757: #{tpu_custom_call.1} parent=751 // loop_footer
            %s1313 = sadd.s32 1, %s1309
          $region758: #{tpu_custom_call.1} parent=751 // loop_footer_branch
            %1308 = sbr.rel target = $region754
          $region759: #{tpu_custom_call.1} parent=751 // loop_exit
            _
        $region752: #{tpu_custom_call.1} parent=23 // pred_fallthru
          _
        // Predicated region
        $region771: #{tpu_custom_call.1} parent=23 // pred_check
          _
        $region772: #{tpu_custom_call.1} parent=23 // pred_check_branch
          %1341 = sbr.rel (0) target = $region774
        $region773: #{tpu_custom_call.1} parent=23 // pred_region
          %1342 = vsyncadd %s1298, 16
        $region774: #{tpu_custom_call.1} parent=23 // pred_fallthru
          _
        %s1343 = sadd.s32 %s120, 25
        %s1344 = sld [smem:[#allocation5 + %s1343]]
        %s1345 = scalar_lea.vmem %s2, %s1344
        %s1346 = scalar_lea.vmem [#allocation2], 12
        %s1347 = scalar_lea.sflag [#allocation3], 12
        %p1349 = scmp.lt.u32.totalorder 1, 8
        %p1350 = pneg %p1349
        // Predicated region
        $region775: #{tpu_custom_call.1} parent=23 // pred_check
          _
        $region776: #{tpu_custom_call.1} parent=23 // pred_check_branch
          %1352 = sbr.rel (%p1349) target = $region778
        $region777: #{tpu_custom_call.1} parent=23 // pred_region
          %s1367 = sand.u32 1, 7
          %p1368 = scmp.eq.s32.totalorder %s1367, 0
          %p1369 = pneg %p1368
          // Predicated region
          $region790: #{tpu_custom_call.1} parent=777 // pred_check
            _
          $region791: #{tpu_custom_call.1} parent=777 // pred_check_branch
            %1371 = sbr.rel (%p1368) target = $region793
          $region792: #{tpu_custom_call.1} parent=777 // pred_region
            %s1372 = sand.u32 1, 7
            %s1373 = ssub.s32 1, %s1372
            %s1374 = scalar_lea.vmem %s1345, %s1373
            %s1375 = ssub.s32 1, %s1372
            %s1376 = scalar_lea.vmem %s1346, %s1375 [#allocation2]
            %s1377 = sshllo.u32 0, %s1372
            loop: start=0, step=1, limit=1
            $region794: #{tpu_custom_call.1} parent=792 // loop_pre_header
              _
            $region795: #{tpu_custom_call.1} parent=792 // loop_header
              %s1379 = sphi 0, %s1383
              %p1380 = scmp.ge.s32.totalorder %s1379, 1
              %s1384 = sphi %s1374, %s1374
              %s1385 = sphi %s1376, %s1376
            $region796: #{tpu_custom_call.1} parent=792 // loop_header_branch
              %1382 = sbr.rel (%p1380) target = $region800
            $region797: #{tpu_custom_call.1} parent=792 // loop_body
              %v1386 = vld [vmem:[%s1384] sm:%s1377]
              %1387 = vst [vmem:[%s1385] sm:%s1377] %v1386
            $region798: #{tpu_custom_call.1} parent=792 // loop_footer
              %s1383 = sadd.s32 1, %s1379
            $region799: #{tpu_custom_call.1} parent=792 // loop_footer_branch
              %1378 = sbr.rel target = $region795
            $region800: #{tpu_custom_call.1} parent=792 // loop_exit
              _
          $region793: #{tpu_custom_call.1} parent=777 // pred_fallthru
            _
        $region778: #{tpu_custom_call.1} parent=23 // pred_fallthru
          _
        // Predicated region
        $region779: #{tpu_custom_call.1} parent=23 // pred_check
          %p1353 = pneg %p1349
        $region780: #{tpu_custom_call.1} parent=23 // pred_check_branch
          %1355 = sbr.rel (%p1353) target = $region782
        $region781: #{tpu_custom_call.1} parent=23 // pred_region
          %s1356 = sshllo.u32 0, 1
          loop: start=0, step=1, limit=1
          $region783: #{tpu_custom_call.1} parent=781 // loop_pre_header
            _
          $region784: #{tpu_custom_call.1} parent=781 // loop_header
            %s1358 = sphi 0, %s1362
            %p1359 = scmp.ge.s32.totalorder %s1358, 1
            %s1363 = sphi %s1345, %s1345
            %s1364 = sphi %s1346, %s1346
          $region785: #{tpu_custom_call.1} parent=781 // loop_header_branch
            %1361 = sbr.rel (%p1359) target = $region789
          $region786: #{tpu_custom_call.1} parent=781 // loop_body
            %v1365 = vld [vmem:[%s1363] sm:%s1356]
            %1366 = vst [vmem:[%s1364] sm:%s1356] %v1365
          $region787: #{tpu_custom_call.1} parent=781 // loop_footer
            %s1362 = sadd.s32 1, %s1358
          $region788: #{tpu_custom_call.1} parent=781 // loop_footer_branch
            %1357 = sbr.rel target = $region784
          $region789: #{tpu_custom_call.1} parent=781 // loop_exit
            _
        $region782: #{tpu_custom_call.1} parent=23 // pred_fallthru
          _
        // Predicated region
        $region801: #{tpu_custom_call.1} parent=23 // pred_check
          _
        $region802: #{tpu_custom_call.1} parent=23 // pred_check_branch
          %1390 = sbr.rel (0) target = $region804
        $region803: #{tpu_custom_call.1} parent=23 // pred_region
          %1391 = vsyncadd %s1347, 16
        $region804: #{tpu_custom_call.1} parent=23 // pred_fallthru
          _
        %s1392 = sadd.s32 %s120, 26
        %s1393 = sld [smem:[#allocation5 + %s1392]]
        %s1394 = scalar_lea.vmem %s2, %s1393
        %s1395 = scalar_lea.vmem [#allocation2], 20
        %s1396 = scalar_lea.sflag [#allocation3], 20
        %p1398 = scmp.lt.u32.totalorder 1, 8
        %p1399 = pneg %p1398
        // Predicated region
        $region805: #{tpu_custom_call.1} parent=23 // pred_check
          _
        $region806: #{tpu_custom_call.1} parent=23 // pred_check_branch
          %1401 = sbr.rel (%p1398) target = $region808
        $region807: #{tpu_custom_call.1} parent=23 // pred_region
          %s1416 = sand.u32 1, 7
          %p1417 = scmp.eq.s32.totalorder %s1416, 0
          %p1418 = pneg %p1417
          // Predicated region
          $region820: #{tpu_custom_call.1} parent=807 // pred_check
            _
          $region821: #{tpu_custom_call.1} parent=807 // pred_check_branch
            %1420 = sbr.rel (%p1417) target = $region823
          $region822: #{tpu_custom_call.1} parent=807 // pred_region
            %s1421 = sand.u32 1, 7
            %s1422 = ssub.s32 1, %s1421
            %s1423 = scalar_lea.vmem %s1394, %s1422
            %s1424 = ssub.s32 1, %s1421
            %s1425 = scalar_lea.vmem %s1395, %s1424 [#allocation2]
            %s1426 = sshllo.u32 0, %s1421
            loop: start=0, step=1, limit=1
            $region824: #{tpu_custom_call.1} parent=822 // loop_pre_header
              _
            $region825: #{tpu_custom_call.1} parent=822 // loop_header
              %s1428 = sphi 0, %s1432
              %p1429 = scmp.ge.s32.totalorder %s1428, 1
              %s1433 = sphi %s1423, %s1423
              %s1434 = sphi %s1425, %s1425
            $region826: #{tpu_custom_call.1} parent=822 // loop_header_branch
              %1431 = sbr.rel (%p1429) target = $region830
            $region827: #{tpu_custom_call.1} parent=822 // loop_body
              %v1435 = vld [vmem:[%s1433] sm:%s1426]
              %1436 = vst [vmem:[%s1434] sm:%s1426] %v1435
            $region828: #{tpu_custom_call.1} parent=822 // loop_footer
              %s1432 = sadd.s32 1, %s1428
            $region829: #{tpu_custom_call.1} parent=822 // loop_footer_branch
              %1427 = sbr.rel target = $region825
            $region830: #{tpu_custom_call.1} parent=822 // loop_exit
              _
          $region823: #{tpu_custom_call.1} parent=807 // pred_fallthru
            _
        $region808: #{tpu_custom_call.1} parent=23 // pred_fallthru
          _
        // Predicated region
        $region809: #{tpu_custom_call.1} parent=23 // pred_check
          %p1402 = pneg %p1398
        $region810: #{tpu_custom_call.1} parent=23 // pred_check_branch
          %1404 = sbr.rel (%p1402) target = $region812
        $region811: #{tpu_custom_call.1} parent=23 // pred_region
          %s1405 = sshllo.u32 0, 1
          loop: start=0, step=1, limit=1
          $region813: #{tpu_custom_call.1} parent=811 // loop_pre_header
            _
          $region814: #{tpu_custom_call.1} parent=811 // loop_header
            %s1407 = sphi 0, %s1411
            %p1408 = scmp.ge.s32.totalorder %s1407, 1
            %s1412 = sphi %s1394, %s1394
            %s1413 = sphi %s1395, %s1395
          $region815: #{tpu_custom_call.1} parent=811 // loop_header_branch
            %1410 = sbr.rel (%p1408) target = $region819
          $region816: #{tpu_custom_call.1} parent=811 // loop_body
            %v1414 = vld [vmem:[%s1412] sm:%s1405]
            %1415 = vst [vmem:[%s1413] sm:%s1405] %v1414
          $region817: #{tpu_custom_call.1} parent=811 // loop_footer
            %s1411 = sadd.s32 1, %s1407
          $region818: #{tpu_custom_call.1} parent=811 // loop_footer_branch
            %1406 = sbr.rel target = $region814
          $region819: #{tpu_custom_call.1} parent=811 // loop_exit
            _
        $region812: #{tpu_custom_call.1} parent=23 // pred_fallthru
          _
        // Predicated region
        $region831: #{tpu_custom_call.1} parent=23 // pred_check
          _
        $region832: #{tpu_custom_call.1} parent=23 // pred_check_branch
          %1439 = sbr.rel (0) target = $region834
        $region833: #{tpu_custom_call.1} parent=23 // pred_region
          %1440 = vsyncadd %s1396, 16
        $region834: #{tpu_custom_call.1} parent=23 // pred_fallthru
          _
        %s1441 = sadd.s32 %s120, 27
        %s1442 = sld [smem:[#allocation5 + %s1441]]
        %s1443 = scalar_lea.vmem %s2, %s1442
        %s1444 = scalar_lea.vmem [#allocation2], 28
        %s1445 = scalar_lea.sflag [#allocation3], 28
        %p1447 = scmp.lt.u32.totalorder 1, 8
        %p1448 = pneg %p1447
        // Predicated region
        $region835: #{tpu_custom_call.1} parent=23 // pred_check
          _
        $region836: #{tpu_custom_call.1} parent=23 // pred_check_branch
          %1450 = sbr.rel (%p1447) target = $region838
        $region837: #{tpu_custom_call.1} parent=23 // pred_region
          %s1465 = sand.u32 1, 7
          %p1466 = scmp.eq.s32.totalorder %s1465, 0
          %p1467 = pneg %p1466
          // Predicated region
          $region850: #{tpu_custom_call.1} parent=837 // pred_check
            _
          $region851: #{tpu_custom_call.1} parent=837 // pred_check_branch
            %1469 = sbr.rel (%p1466) target = $region853
          $region852: #{tpu_custom_call.1} parent=837 // pred_region
            %s1470 = sand.u32 1, 7
            %s1471 = ssub.s32 1, %s1470
            %s1472 = scalar_lea.vmem %s1443, %s1471
            %s1473 = ssub.s32 1, %s1470
            %s1474 = scalar_lea.vmem %s1444, %s1473 [#allocation2]
            %s1475 = sshllo.u32 0, %s1470
            loop: start=0, step=1, limit=1
            $region854: #{tpu_custom_call.1} parent=852 // loop_pre_header
              _
            $region855: #{tpu_custom_call.1} parent=852 // loop_header
              %s1477 = sphi 0, %s1481
              %p1478 = scmp.ge.s32.totalorder %s1477, 1
              %s1482 = sphi %s1472, %s1472
              %s1483 = sphi %s1474, %s1474
            $region856: #{tpu_custom_call.1} parent=852 // loop_header_branch
              %1480 = sbr.rel (%p1478) target = $region860
            $region857: #{tpu_custom_call.1} parent=852 // loop_body
              %v1484 = vld [vmem:[%s1482] sm:%s1475]
              %1485 = vst [vmem:[%s1483] sm:%s1475] %v1484
            $region858: #{tpu_custom_call.1} parent=852 // loop_footer
              %s1481 = sadd.s32 1, %s1477
            $region859: #{tpu_custom_call.1} parent=852 // loop_footer_branch
              %1476 = sbr.rel target = $region855
            $region860: #{tpu_custom_call.1} parent=852 // loop_exit
              _
          $region853: #{tpu_custom_call.1} parent=837 // pred_fallthru
            _
        $region838: #{tpu_custom_call.1} parent=23 // pred_fallthru
          _
        // Predicated region
        $region839: #{tpu_custom_call.1} parent=23 // pred_check
          %p1451 = pneg %p1447
        $region840: #{tpu_custom_call.1} parent=23 // pred_check_branch
          %1453 = sbr.rel (%p1451) target = $region842
        $region841: #{tpu_custom_call.1} parent=23 // pred_region
          %s1454 = sshllo.u32 0, 1
          loop: start=0, step=1, limit=1
          $region843: #{tpu_custom_call.1} parent=841 // loop_pre_header
            _
          $region844: #{tpu_custom_call.1} parent=841 // loop_header
            %s1456 = sphi 0, %s1460
            %p1457 = scmp.ge.s32.totalorder %s1456, 1
            %s1461 = sphi %s1443, %s1443
            %s1462 = sphi %s1444, %s1444
          $region845: #{tpu_custom_call.1} parent=841 // loop_header_branch
            %1459 = sbr.rel (%p1457) target = $region849
          $region846: #{tpu_custom_call.1} parent=841 // loop_body
            %v1463 = vld [vmem:[%s1461] sm:%s1454]
            %1464 = vst [vmem:[%s1462] sm:%s1454] %v1463
          $region847: #{tpu_custom_call.1} parent=841 // loop_footer
            %s1460 = sadd.s32 1, %s1456
          $region848: #{tpu_custom_call.1} parent=841 // loop_footer_branch
            %1455 = sbr.rel target = $region844
          $region849: #{tpu_custom_call.1} parent=841 // loop_exit
            _
        $region842: #{tpu_custom_call.1} parent=23 // pred_fallthru
          _
        // Predicated region
        $region861: #{tpu_custom_call.1} parent=23 // pred_check
          _
        $region862: #{tpu_custom_call.1} parent=23 // pred_check_branch
          %1488 = sbr.rel (0) target = $region864
        $region863: #{tpu_custom_call.1} parent=23 // pred_region
          %1489 = vsyncadd %s1445, 16
        $region864: #{tpu_custom_call.1} parent=23 // pred_fallthru
          _
        %s1490 = sadd.s32 %s120, 28
        %s1491 = sld [smem:[#allocation5 + %s1490]]
        %s1492 = scalar_lea.vmem %s2, %s1491
        %s1493 = scalar_lea.vmem [#allocation2], 36
        %s1494 = scalar_lea.sflag [#allocation3], 36
        %p1496 = scmp.lt.u32.totalorder 1, 8
        %p1497 = pneg %p1496
        // Predicated region
        $region865: #{tpu_custom_call.1} parent=23 // pred_check
          _
        $region866: #{tpu_custom_call.1} parent=23 // pred_check_branch
          %1499 = sbr.rel (%p1496) target = $region868
        $region867: #{tpu_custom_call.1} parent=23 // pred_region
          %s1514 = sand.u32 1, 7
          %p1515 = scmp.eq.s32.totalorder %s1514, 0
          %p1516 = pneg %p1515
          // Predicated region
          $region880: #{tpu_custom_call.1} parent=867 // pred_check
            _
          $region881: #{tpu_custom_call.1} parent=867 // pred_check_branch
            %1518 = sbr.rel (%p1515) target = $region883
          $region882: #{tpu_custom_call.1} parent=867 // pred_region
            %s1519 = sand.u32 1, 7
            %s1520 = ssub.s32 1, %s1519
            %s1521 = scalar_lea.vmem %s1492, %s1520
            %s1522 = ssub.s32 1, %s1519
            %s1523 = scalar_lea.vmem %s1493, %s1522 [#allocation2]
            %s1524 = sshllo.u32 0, %s1519
            loop: start=0, step=1, limit=1
            $region884: #{tpu_custom_call.1} parent=882 // loop_pre_header
              _
            $region885: #{tpu_custom_call.1} parent=882 // loop_header
              %s1526 = sphi 0, %s1530
              %p1527 = scmp.ge.s32.totalorder %s1526, 1
              %s1531 = sphi %s1521, %s1521
              %s1532 = sphi %s1523, %s1523
            $region886: #{tpu_custom_call.1} parent=882 // loop_header_branch
              %1529 = sbr.rel (%p1527) target = $region890
            $region887: #{tpu_custom_call.1} parent=882 // loop_body
              %v1533 = vld [vmem:[%s1531] sm:%s1524]
              %1534 = vst [vmem:[%s1532] sm:%s1524] %v1533
            $region888: #{tpu_custom_call.1} parent=882 // loop_footer
              %s1530 = sadd.s32 1, %s1526
            $region889: #{tpu_custom_call.1} parent=882 // loop_footer_branch
              %1525 = sbr.rel target = $region885
            $region890: #{tpu_custom_call.1} parent=882 // loop_exit
              _
          $region883: #{tpu_custom_call.1} parent=867 // pred_fallthru
            _
        $region868: #{tpu_custom_call.1} parent=23 // pred_fallthru
          _
        // Predicated region
        $region869: #{tpu_custom_call.1} parent=23 // pred_check
          %p1500 = pneg %p1496
        $region870: #{tpu_custom_call.1} parent=23 // pred_check_branch
          %1502 = sbr.rel (%p1500) target = $region872
        $region871: #{tpu_custom_call.1} parent=23 // pred_region
          %s1503 = sshllo.u32 0, 1
          loop: start=0, step=1, limit=1
          $region873: #{tpu_custom_call.1} parent=871 // loop_pre_header
            _
          $region874: #{tpu_custom_call.1} parent=871 // loop_header
            %s1505 = sphi 0, %s1509
            %p1506 = scmp.ge.s32.totalorder %s1505, 1
            %s1510 = sphi %s1492, %s1492
            %s1511 = sphi %s1493, %s1493
          $region875: #{tpu_custom_call.1} parent=871 // loop_header_branch
            %1508 = sbr.rel (%p1506) target = $region879
          $region876: #{tpu_custom_call.1} parent=871 // loop_body
            %v1512 = vld [vmem:[%s1510] sm:%s1503]
            %1513 = vst [vmem:[%s1511] sm:%s1503] %v1512
          $region877: #{tpu_custom_call.1} parent=871 // loop_footer
            %s1509 = sadd.s32 1, %s1505
          $region878: #{tpu_custom_call.1} parent=871 // loop_footer_branch
            %1504 = sbr.rel target = $region874
          $region879: #{tpu_custom_call.1} parent=871 // loop_exit
            _
        $region872: #{tpu_custom_call.1} parent=23 // pred_fallthru
          _
        // Predicated region
        $region891: #{tpu_custom_call.1} parent=23 // pred_check
          _
        $region892: #{tpu_custom_call.1} parent=23 // pred_check_branch
          %1537 = sbr.rel (0) target = $region894
        $region893: #{tpu_custom_call.1} parent=23 // pred_region
          %1538 = vsyncadd %s1494, 16
        $region894: #{tpu_custom_call.1} parent=23 // pred_fallthru
          _
        %s1539 = sadd.s32 %s120, 29
        %s1540 = sld [smem:[#allocation5 + %s1539]]
        %s1541 = scalar_lea.vmem %s2, %s1540
        %s1542 = scalar_lea.vmem [#allocation2], 44
        %s1543 = scalar_lea.sflag [#allocation3], 44
        %p1545 = scmp.lt.u32.totalorder 1, 8
        %p1546 = pneg %p1545
        // Predicated region
        $region895: #{tpu_custom_call.1} parent=23 // pred_check
          _
        $region896: #{tpu_custom_call.1} parent=23 // pred_check_branch
          %1548 = sbr.rel (%p1545) target = $region898
        $region897: #{tpu_custom_call.1} parent=23 // pred_region
          %s1563 = sand.u32 1, 7
          %p1564 = scmp.eq.s32.totalorder %s1563, 0
          %p1565 = pneg %p1564
          // Predicated region
          $region910: #{tpu_custom_call.1} parent=897 // pred_check
            _
          $region911: #{tpu_custom_call.1} parent=897 // pred_check_branch
            %1567 = sbr.rel (%p1564) target = $region913
          $region912: #{tpu_custom_call.1} parent=897 // pred_region
            %s1568 = sand.u32 1, 7
            %s1569 = ssub.s32 1, %s1568
            %s1570 = scalar_lea.vmem %s1541, %s1569
            %s1571 = ssub.s32 1, %s1568
            %s1572 = scalar_lea.vmem %s1542, %s1571 [#allocation2]
            %s1573 = sshllo.u32 0, %s1568
            loop: start=0, step=1, limit=1
            $region914: #{tpu_custom_call.1} parent=912 // loop_pre_header
              _
            $region915: #{tpu_custom_call.1} parent=912 // loop_header
              %s1575 = sphi 0, %s1579
              %p1576 = scmp.ge.s32.totalorder %s1575, 1
              %s1580 = sphi %s1570, %s1570
              %s1581 = sphi %s1572, %s1572
            $region916: #{tpu_custom_call.1} parent=912 // loop_header_branch
              %1578 = sbr.rel (%p1576) target = $region920
            $region917: #{tpu_custom_call.1} parent=912 // loop_body
              %v1582 = vld [vmem:[%s1580] sm:%s1573]
              %1583 = vst [vmem:[%s1581] sm:%s1573] %v1582
            $region918: #{tpu_custom_call.1} parent=912 // loop_footer
              %s1579 = sadd.s32 1, %s1575
            $region919: #{tpu_custom_call.1} parent=912 // loop_footer_branch
              %1574 = sbr.rel target = $region915
            $region920: #{tpu_custom_call.1} parent=912 // loop_exit
              _
          $region913: #{tpu_custom_call.1} parent=897 // pred_fallthru
            _
        $region898: #{tpu_custom_call.1} parent=23 // pred_fallthru
          _
        // Predicated region
        $region899: #{tpu_custom_call.1} parent=23 // pred_check
          %p1549 = pneg %p1545
        $region900: #{tpu_custom_call.1} parent=23 // pred_check_branch
          %1551 = sbr.rel (%p1549) target = $region902
        $region901: #{tpu_custom_call.1} parent=23 // pred_region
          %s1552 = sshllo.u32 0, 1
          loop: start=0, step=1, limit=1
          $region903: #{tpu_custom_call.1} parent=901 // loop_pre_header
            _
          $region904: #{tpu_custom_call.1} parent=901 // loop_header
            %s1554 = sphi 0, %s1558
            %p1555 = scmp.ge.s32.totalorder %s1554, 1
            %s1559 = sphi %s1541, %s1541
            %s1560 = sphi %s1542, %s1542
          $region905: #{tpu_custom_call.1} parent=901 // loop_header_branch
            %1557 = sbr.rel (%p1555) target = $region909
          $region906: #{tpu_custom_call.1} parent=901 // loop_body
            %v1561 = vld [vmem:[%s1559] sm:%s1552]
            %1562 = vst [vmem:[%s1560] sm:%s1552] %v1561
          $region907: #{tpu_custom_call.1} parent=901 // loop_footer
            %s1558 = sadd.s32 1, %s1554
          $region908: #{tpu_custom_call.1} parent=901 // loop_footer_branch
            %1553 = sbr.rel target = $region904
          $region909: #{tpu_custom_call.1} parent=901 // loop_exit
            _
        $region902: #{tpu_custom_call.1} parent=23 // pred_fallthru
          _
        // Predicated region
        $region921: #{tpu_custom_call.1} parent=23 // pred_check
          _
        $region922: #{tpu_custom_call.1} parent=23 // pred_check_branch
          %1586 = sbr.rel (0) target = $region924
        $region923: #{tpu_custom_call.1} parent=23 // pred_region
          %1587 = vsyncadd %s1543, 16
        $region924: #{tpu_custom_call.1} parent=23 // pred_fallthru
          _
        %s1588 = sadd.s32 %s120, 30
        %s1589 = sld [smem:[#allocation5 + %s1588]]
        %s1590 = scalar_lea.vmem %s2, %s1589
        %s1591 = scalar_lea.vmem [#allocation2], 5
        %s1592 = scalar_lea.sflag [#allocation3], 5
        %p1594 = scmp.lt.u32.totalorder 1, 8
        %p1595 = pneg %p1594
        // Predicated region
        $region925: #{tpu_custom_call.1} parent=23 // pred_check
          _
        $region926: #{tpu_custom_call.1} parent=23 // pred_check_branch
          %1597 = sbr.rel (%p1594) target = $region928
        $region927: #{tpu_custom_call.1} parent=23 // pred_region
          %s1612 = sand.u32 1, 7
          %p1613 = scmp.eq.s32.totalorder %s1612, 0
          %p1614 = pneg %p1613
          // Predicated region
          $region940: #{tpu_custom_call.1} parent=927 // pred_check
            _
          $region941: #{tpu_custom_call.1} parent=927 // pred_check_branch
            %1616 = sbr.rel (%p1613) target = $region943
          $region942: #{tpu_custom_call.1} parent=927 // pred_region
            %s1617 = sand.u32 1, 7
            %s1618 = ssub.s32 1, %s1617
            %s1619 = scalar_lea.vmem %s1590, %s1618
            %s1620 = ssub.s32 1, %s1617
            %s1621 = scalar_lea.vmem %s1591, %s1620 [#allocation2]
            %s1622 = sshllo.u32 0, %s1617
            loop: start=0, step=1, limit=1
            $region944: #{tpu_custom_call.1} parent=942 // loop_pre_header
              _
            $region945: #{tpu_custom_call.1} parent=942 // loop_header
              %s1624 = sphi 0, %s1628
              %p1625 = scmp.ge.s32.totalorder %s1624, 1
              %s1629 = sphi %s1619, %s1619
              %s1630 = sphi %s1621, %s1621
            $region946: #{tpu_custom_call.1} parent=942 // loop_header_branch
              %1627 = sbr.rel (%p1625) target = $region950
            $region947: #{tpu_custom_call.1} parent=942 // loop_body
              %v1631 = vld [vmem:[%s1629] sm:%s1622]
              %1632 = vst [vmem:[%s1630] sm:%s1622] %v1631
            $region948: #{tpu_custom_call.1} parent=942 // loop_footer
              %s1628 = sadd.s32 1, %s1624
            $region949: #{tpu_custom_call.1} parent=942 // loop_footer_branch
              %1623 = sbr.rel target = $region945
            $region950: #{tpu_custom_call.1} parent=942 // loop_exit
              _
          $region943: #{tpu_custom_call.1} parent=927 // pred_fallthru
            _
        $region928: #{tpu_custom_call.1} parent=23 // pred_fallthru
          _
        // Predicated region
        $region929: #{tpu_custom_call.1} parent=23 // pred_check
          %p1598 = pneg %p1594
        $region930: #{tpu_custom_call.1} parent=23 // pred_check_branch
          %1600 = sbr.rel (%p1598) target = $region932
        $region931: #{tpu_custom_call.1} parent=23 // pred_region
          %s1601 = sshllo.u32 0, 1
          loop: start=0, step=1, limit=1
          $region933: #{tpu_custom_call.1} parent=931 // loop_pre_header
            _
          $region934: #{tpu_custom_call.1} parent=931 // loop_header
            %s1603 = sphi 0, %s1607
            %p1604 = scmp.ge.s32.totalorder %s1603, 1
            %s1608 = sphi %s1590, %s1590
            %s1609 = sphi %s1591, %s1591
          $region935: #{tpu_custom_call.1} parent=931 // loop_header_branch
            %1606 = sbr.rel (%p1604) target = $region939
          $region936: #{tpu_custom_call.1} parent=931 // loop_body
            %v1610 = vld [vmem:[%s1608] sm:%s1601]
            %1611 = vst [vmem:[%s1609] sm:%s1601] %v1610
          $region937: #{tpu_custom_call.1} parent=931 // loop_footer
            %s1607 = sadd.s32 1, %s1603
          $region938: #{tpu_custom_call.1} parent=931 // loop_footer_branch
            %1602 = sbr.rel target = $region934
          $region939: #{tpu_custom_call.1} parent=931 // loop_exit
            _
        $region932: #{tpu_custom_call.1} parent=23 // pred_fallthru
          _
        // Predicated region
        $region951: #{tpu_custom_call.1} parent=23 // pred_check
          _
        $region952: #{tpu_custom_call.1} parent=23 // pred_check_branch
          %1635 = sbr.rel (0) target = $region954
        $region953: #{tpu_custom_call.1} parent=23 // pred_region
          %1636 = vsyncadd %s1592, 16
        $region954: #{tpu_custom_call.1} parent=23 // pred_fallthru
          _
        %s1637 = sadd.s32 %s120, 31
        %s1638 = sld [smem:[#allocation5 + %s1637]]
        %s1639 = scalar_lea.vmem %s2, %s1638
        %s1640 = scalar_lea.vmem [#allocation2], 13
        %s1641 = scalar_lea.sflag [#allocation3], 13
        %p1643 = scmp.lt.u32.totalorder 1, 8
        %p1644 = pneg %p1643
        // Predicated region
        $region955: #{tpu_custom_call.1} parent=23 // pred_check
          _
        $region956: #{tpu_custom_call.1} parent=23 // pred_check_branch
          %1646 = sbr.rel (%p1643) target = $region958
        $region957: #{tpu_custom_call.1} parent=23 // pred_region
          %s1661 = sand.u32 1, 7
          %p1662 = scmp.eq.s32.totalorder %s1661, 0
          %p1663 = pneg %p1662
          // Predicated region
          $region970: #{tpu_custom_call.1} parent=957 // pred_check
            _
          $region971: #{tpu_custom_call.1} parent=957 // pred_check_branch
            %1665 = sbr.rel (%p1662) target = $region973
          $region972: #{tpu_custom_call.1} parent=957 // pred_region
            %s1666 = sand.u32 1, 7
            %s1667 = ssub.s32 1, %s1666
            %s1668 = scalar_lea.vmem %s1639, %s1667
            %s1669 = ssub.s32 1, %s1666
            %s1670 = scalar_lea.vmem %s1640, %s1669 [#allocation2]
            %s1671 = sshllo.u32 0, %s1666
            loop: start=0, step=1, limit=1
            $region974: #{tpu_custom_call.1} parent=972 // loop_pre_header
              _
            $region975: #{tpu_custom_call.1} parent=972 // loop_header
              %s1673 = sphi 0, %s1677
              %p1674 = scmp.ge.s32.totalorder %s1673, 1
              %s1678 = sphi %s1668, %s1668
              %s1679 = sphi %s1670, %s1670
            $region976: #{tpu_custom_call.1} parent=972 // loop_header_branch
              %1676 = sbr.rel (%p1674) target = $region980
            $region977: #{tpu_custom_call.1} parent=972 // loop_body
              %v1680 = vld [vmem:[%s1678] sm:%s1671]
              %1681 = vst [vmem:[%s1679] sm:%s1671] %v1680
            $region978: #{tpu_custom_call.1} parent=972 // loop_footer
              %s1677 = sadd.s32 1, %s1673
            $region979: #{tpu_custom_call.1} parent=972 // loop_footer_branch
              %1672 = sbr.rel target = $region975
            $region980: #{tpu_custom_call.1} parent=972 // loop_exit
              _
          $region973: #{tpu_custom_call.1} parent=957 // pred_fallthru
            _
        $region958: #{tpu_custom_call.1} parent=23 // pred_fallthru
          _
        // Predicated region
        $region959: #{tpu_custom_call.1} parent=23 // pred_check
          %p1647 = pneg %p1643
        $region960: #{tpu_custom_call.1} parent=23 // pred_check_branch
          %1649 = sbr.rel (%p1647) target = $region962
        $region961: #{tpu_custom_call.1} parent=23 // pred_region
          %s1650 = sshllo.u32 0, 1
          loop: start=0, step=1, limit=1
          $region963: #{tpu_custom_call.1} parent=961 // loop_pre_header
            _
          $region964: #{tpu_custom_call.1} parent=961 // loop_header
            %s1652 = sphi 0, %s1656
            %p1653 = scmp.ge.s32.totalorder %s1652, 1
            %s1657 = sphi %s1639, %s1639
            %s1658 = sphi %s1640, %s1640
          $region965: #{tpu_custom_call.1} parent=961 // loop_header_branch
            %1655 = sbr.rel (%p1653) target = $region969
          $region966: #{tpu_custom_call.1} parent=961 // loop_body
            %v1659 = vld [vmem:[%s1657] sm:%s1650]
            %1660 = vst [vmem:[%s1658] sm:%s1650] %v1659
          $region967: #{tpu_custom_call.1} parent=961 // loop_footer
            %s1656 = sadd.s32 1, %s1652
          $region968: #{tpu_custom_call.1} parent=961 // loop_footer_branch
            %1651 = sbr.rel target = $region964
          $region969: #{tpu_custom_call.1} parent=961 // loop_exit
            _
        $region962: #{tpu_custom_call.1} parent=23 // pred_fallthru
          _
        // Predicated region
        $region981: #{tpu_custom_call.1} parent=23 // pred_check
          _
        $region982: #{tpu_custom_call.1} parent=23 // pred_check_branch
          %1684 = sbr.rel (0) target = $region984
        $region983: #{tpu_custom_call.1} parent=23 // pred_region
          %1685 = vsyncadd %s1641, 16
        $region984: #{tpu_custom_call.1} parent=23 // pred_fallthru
          _
        %s1686 = sadd.s32 %s120, 32
        %s1687 = sld [smem:[#allocation5 + %s1686]]
        %s1688 = scalar_lea.vmem %s2, %s1687
        %s1689 = scalar_lea.vmem [#allocation2], 21
        %s1690 = scalar_lea.sflag [#allocation3], 21
        %p1692 = scmp.lt.u32.totalorder 1, 8
        %p1693 = pneg %p1692
        // Predicated region
        $region985: #{tpu_custom_call.1} parent=23 // pred_check
          _
        $region986: #{tpu_custom_call.1} parent=23 // pred_check_branch
          %1695 = sbr.rel (%p1692) target = $region988
        $region987: #{tpu_custom_call.1} parent=23 // pred_region
          %s1710 = sand.u32 1, 7
          %p1711 = scmp.eq.s32.totalorder %s1710, 0
          %p1712 = pneg %p1711
          // Predicated region
          $region1000: #{tpu_custom_call.1} parent=987 // pred_check
            _
          $region1001: #{tpu_custom_call.1} parent=987 // pred_check_branch
            %1714 = sbr.rel (%p1711) target = $region1003
          $region1002: #{tpu_custom_call.1} parent=987 // pred_region
            %s1715 = sand.u32 1, 7
            %s1716 = ssub.s32 1, %s1715
            %s1717 = scalar_lea.vmem %s1688, %s1716
            %s1718 = ssub.s32 1, %s1715
            %s1719 = scalar_lea.vmem %s1689, %s1718 [#allocation2]
            %s1720 = sshllo.u32 0, %s1715
            loop: start=0, step=1, limit=1
            $region1004: #{tpu_custom_call.1} parent=1002 // loop_pre_header
              _
            $region1005: #{tpu_custom_call.1} parent=1002 // loop_header
              %s1722 = sphi 0, %s1726
              %p1723 = scmp.ge.s32.totalorder %s1722, 1
              %s1727 = sphi %s1717, %s1717
              %s1728 = sphi %s1719, %s1719
            $region1006: #{tpu_custom_call.1} parent=1002 // loop_header_branch
              %1725 = sbr.rel (%p1723) target = $region1010
            $region1007: #{tpu_custom_call.1} parent=1002 // loop_body
              %v1729 = vld [vmem:[%s1727] sm:%s1720]
              %1730 = vst [vmem:[%s1728] sm:%s1720] %v1729
            $region1008: #{tpu_custom_call.1} parent=1002 // loop_footer
              %s1726 = sadd.s32 1, %s1722
            $region1009: #{tpu_custom_call.1} parent=1002 // loop_footer_branch
              %1721 = sbr.rel target = $region1005
            $region1010: #{tpu_custom_call.1} parent=1002 // loop_exit
              _
          $region1003: #{tpu_custom_call.1} parent=987 // pred_fallthru
            _
        $region988: #{tpu_custom_call.1} parent=23 // pred_fallthru
          _
        // Predicated region
        $region989: #{tpu_custom_call.1} parent=23 // pred_check
          %p1696 = pneg %p1692
        $region990: #{tpu_custom_call.1} parent=23 // pred_check_branch
          %1698 = sbr.rel (%p1696) target = $region992
        $region991: #{tpu_custom_call.1} parent=23 // pred_region
          %s1699 = sshllo.u32 0, 1
          loop: start=0, step=1, limit=1
          $region993: #{tpu_custom_call.1} parent=991 // loop_pre_header
            _
          $region994: #{tpu_custom_call.1} parent=991 // loop_header
            %s1701 = sphi 0, %s1705
            %p1702 = scmp.ge.s32.totalorder %s1701, 1
            %s1706 = sphi %s1688, %s1688
            %s1707 = sphi %s1689, %s1689
          $region995: #{tpu_custom_call.1} parent=991 // loop_header_branch
            %1704 = sbr.rel (%p1702) target = $region999
          $region996: #{tpu_custom_call.1} parent=991 // loop_body
            %v1708 = vld [vmem:[%s1706] sm:%s1699]
            %1709 = vst [vmem:[%s1707] sm:%s1699] %v1708
          $region997: #{tpu_custom_call.1} parent=991 // loop_footer
            %s1705 = sadd.s32 1, %s1701
          $region998: #{tpu_custom_call.1} parent=991 // loop_footer_branch
            %1700 = sbr.rel target = $region994
          $region999: #{tpu_custom_call.1} parent=991 // loop_exit
            _
        $region992: #{tpu_custom_call.1} parent=23 // pred_fallthru
          _
        // Predicated region
        $region1011: #{tpu_custom_call.1} parent=23 // pred_check
          _
        $region1012: #{tpu_custom_call.1} parent=23 // pred_check_branch
          %1733 = sbr.rel (0) target = $region1014
        $region1013: #{tpu_custom_call.1} parent=23 // pred_region
          %1734 = vsyncadd %s1690, 16
        $region1014: #{tpu_custom_call.1} parent=23 // pred_fallthru
          _
        %s1735 = sadd.s32 %s120, 33
        %s1736 = sld [smem:[#allocation5 + %s1735]]
        %s1737 = scalar_lea.vmem %s2, %s1736
        %s1738 = scalar_lea.vmem [#allocation2], 29
        %s1739 = scalar_lea.sflag [#allocation3], 29
        %p1741 = scmp.lt.u32.totalorder 1, 8
        %p1742 = pneg %p1741
        // Predicated region
        $region1015: #{tpu_custom_call.1} parent=23 // pred_check
          _
        $region1016: #{tpu_custom_call.1} parent=23 // pred_check_branch
          %1744 = sbr.rel (%p1741) target = $region1018
        $region1017: #{tpu_custom_call.1} parent=23 // pred_region
          %s1759 = sand.u32 1, 7
          %p1760 = scmp.eq.s32.totalorder %s1759, 0
          %p1761 = pneg %p1760
          // Predicated region
          $region1030: #{tpu_custom_call.1} parent=1017 // pred_check
            _
          $region1031: #{tpu_custom_call.1} parent=1017 // pred_check_branch
            %1763 = sbr.rel (%p1760) target = $region1033
          $region1032: #{tpu_custom_call.1} parent=1017 // pred_region
            %s1764 = sand.u32 1, 7
            %s1765 = ssub.s32 1, %s1764
            %s1766 = scalar_lea.vmem %s1737, %s1765
            %s1767 = ssub.s32 1, %s1764
            %s1768 = scalar_lea.vmem %s1738, %s1767 [#allocation2]
            %s1769 = sshllo.u32 0, %s1764
            loop: start=0, step=1, limit=1
            $region1034: #{tpu_custom_call.1} parent=1032 // loop_pre_header
              _
            $region1035: #{tpu_custom_call.1} parent=1032 // loop_header
              %s1771 = sphi 0, %s1775
              %p1772 = scmp.ge.s32.totalorder %s1771, 1
              %s1776 = sphi %s1766, %s1766
              %s1777 = sphi %s1768, %s1768
            $region1036: #{tpu_custom_call.1} parent=1032 // loop_header_branch
              %1774 = sbr.rel (%p1772) target = $region1040
            $region1037: #{tpu_custom_call.1} parent=1032 // loop_body
              %v1778 = vld [vmem:[%s1776] sm:%s1769]
              %1779 = vst [vmem:[%s1777] sm:%s1769] %v1778
            $region1038: #{tpu_custom_call.1} parent=1032 // loop_footer
              %s1775 = sadd.s32 1, %s1771
            $region1039: #{tpu_custom_call.1} parent=1032 // loop_footer_branch
              %1770 = sbr.rel target = $region1035
            $region1040: #{tpu_custom_call.1} parent=1032 // loop_exit
              _
          $region1033: #{tpu_custom_call.1} parent=1017 // pred_fallthru
            _
        $region1018: #{tpu_custom_call.1} parent=23 // pred_fallthru
          _
        // Predicated region
        $region1019: #{tpu_custom_call.1} parent=23 // pred_check
          %p1745 = pneg %p1741
        $region1020: #{tpu_custom_call.1} parent=23 // pred_check_branch
          %1747 = sbr.rel (%p1745) target = $region1022
        $region1021: #{tpu_custom_call.1} parent=23 // pred_region
          %s1748 = sshllo.u32 0, 1
          loop: start=0, step=1, limit=1
          $region1023: #{tpu_custom_call.1} parent=1021 // loop_pre_header
            _
          $region1024: #{tpu_custom_call.1} parent=1021 // loop_header
            %s1750 = sphi 0, %s1754
            %p1751 = scmp.ge.s32.totalorder %s1750, 1
            %s1755 = sphi %s1737, %s1737
            %s1756 = sphi %s1738, %s1738
          $region1025: #{tpu_custom_call.1} parent=1021 // loop_header_branch
            %1753 = sbr.rel (%p1751) target = $region1029
          $region1026: #{tpu_custom_call.1} parent=1021 // loop_body
            %v1757 = vld [vmem:[%s1755] sm:%s1748]
            %1758 = vst [vmem:[%s1756] sm:%s1748] %v1757
          $region1027: #{tpu_custom_call.1} parent=1021 // loop_footer
            %s1754 = sadd.s32 1, %s1750
          $region1028: #{tpu_custom_call.1} parent=1021 // loop_footer_branch
            %1749 = sbr.rel target = $region1024
          $region1029: #{tpu_custom_call.1} parent=1021 // loop_exit
            _
        $region1022: #{tpu_custom_call.1} parent=23 // pred_fallthru
          _
        // Predicated region
        $region1041: #{tpu_custom_call.1} parent=23 // pred_check
          _
        $region1042: #{tpu_custom_call.1} parent=23 // pred_check_branch
          %1782 = sbr.rel (0) target = $region1044
        $region1043: #{tpu_custom_call.1} parent=23 // pred_region
          %1783 = vsyncadd %s1739, 16
        $region1044: #{tpu_custom_call.1} parent=23 // pred_fallthru
          _
        %s1784 = sadd.s32 %s120, 34
        %s1785 = sld [smem:[#allocation5 + %s1784]]
        %s1786 = scalar_lea.vmem %s2, %s1785
        %s1787 = scalar_lea.vmem [#allocation2], 37
        %s1788 = scalar_lea.sflag [#allocation3], 37
        %p1790 = scmp.lt.u32.totalorder 1, 8
        %p1791 = pneg %p1790
        // Predicated region
        $region1045: #{tpu_custom_call.1} parent=23 // pred_check
          _
        $region1046: #{tpu_custom_call.1} parent=23 // pred_check_branch
          %1793 = sbr.rel (%p1790) target = $region1048
        $region1047: #{tpu_custom_call.1} parent=23 // pred_region
          %s1808 = sand.u32 1, 7
          %p1809 = scmp.eq.s32.totalorder %s1808, 0
          %p1810 = pneg %p1809
          // Predicated region
          $region1060: #{tpu_custom_call.1} parent=1047 // pred_check
            _
          $region1061: #{tpu_custom_call.1} parent=1047 // pred_check_branch
            %1812 = sbr.rel (%p1809) target = $region1063
          $region1062: #{tpu_custom_call.1} parent=1047 // pred_region
            %s1813 = sand.u32 1, 7
            %s1814 = ssub.s32 1, %s1813
            %s1815 = scalar_lea.vmem %s1786, %s1814
            %s1816 = ssub.s32 1, %s1813
            %s1817 = scalar_lea.vmem %s1787, %s1816 [#allocation2]
            %s1818 = sshllo.u32 0, %s1813
            loop: start=0, step=1, limit=1
            $region1064: #{tpu_custom_call.1} parent=1062 // loop_pre_header
              _
            $region1065: #{tpu_custom_call.1} parent=1062 // loop_header
              %s1820 = sphi 0, %s1824
              %p1821 = scmp.ge.s32.totalorder %s1820, 1
              %s1825 = sphi %s1815, %s1815
              %s1826 = sphi %s1817, %s1817
            $region1066: #{tpu_custom_call.1} parent=1062 // loop_header_branch
              %1823 = sbr.rel (%p1821) target = $region1070
            $region1067: #{tpu_custom_call.1} parent=1062 // loop_body
              %v1827 = vld [vmem:[%s1825] sm:%s1818]
              %1828 = vst [vmem:[%s1826] sm:%s1818] %v1827
            $region1068: #{tpu_custom_call.1} parent=1062 // loop_footer
              %s1824 = sadd.s32 1, %s1820
            $region1069: #{tpu_custom_call.1} parent=1062 // loop_footer_branch
              %1819 = sbr.rel target = $region1065
            $region1070: #{tpu_custom_call.1} parent=1062 // loop_exit
              _
          $region1063: #{tpu_custom_call.1} parent=1047 // pred_fallthru
            _
        $region1048: #{tpu_custom_call.1} parent=23 // pred_fallthru
          _
        // Predicated region
        $region1049: #{tpu_custom_call.1} parent=23 // pred_check
          %p1794 = pneg %p1790
        $region1050: #{tpu_custom_call.1} parent=23 // pred_check_branch
          %1796 = sbr.rel (%p1794) target = $region1052
        $region1051: #{tpu_custom_call.1} parent=23 // pred_region
          %s1797 = sshllo.u32 0, 1
          loop: start=0, step=1, limit=1
          $region1053: #{tpu_custom_call.1} parent=1051 // loop_pre_header
            _
          $region1054: #{tpu_custom_call.1} parent=1051 // loop_header
            %s1799 = sphi 0, %s1803
            %p1800 = scmp.ge.s32.totalorder %s1799, 1
            %s1804 = sphi %s1786, %s1786
            %s1805 = sphi %s1787, %s1787
          $region1055: #{tpu_custom_call.1} parent=1051 // loop_header_branch
            %1802 = sbr.rel (%p1800) target = $region1059
          $region1056: #{tpu_custom_call.1} parent=1051 // loop_body
            %v1806 = vld [vmem:[%s1804] sm:%s1797]
            %1807 = vst [vmem:[%s1805] sm:%s1797] %v1806
          $region1057: #{tpu_custom_call.1} parent=1051 // loop_footer
            %s1803 = sadd.s32 1, %s1799
          $region1058: #{tpu_custom_call.1} parent=1051 // loop_footer_branch
            %1798 = sbr.rel target = $region1054
          $region1059: #{tpu_custom_call.1} parent=1051 // loop_exit
            _
        $region1052: #{tpu_custom_call.1} parent=23 // pred_fallthru
          _
        // Predicated region
        $region1071: #{tpu_custom_call.1} parent=23 // pred_check
          _
        $region1072: #{tpu_custom_call.1} parent=23 // pred_check_branch
          %1831 = sbr.rel (0) target = $region1074
        $region1073: #{tpu_custom_call.1} parent=23 // pred_region
          %1832 = vsyncadd %s1788, 16
        $region1074: #{tpu_custom_call.1} parent=23 // pred_fallthru
          _
        %s1833 = sadd.s32 %s120, 35
        %s1834 = sld [smem:[#allocation5 + %s1833]]
        %s1835 = scalar_lea.vmem %s2, %s1834
        %s1836 = scalar_lea.vmem [#allocation2], 45
        %s1837 = scalar_lea.sflag [#allocation3], 45
        %p1839 = scmp.lt.u32.totalorder 1, 8
        %p1840 = pneg %p1839
        // Predicated region
        $region1075: #{tpu_custom_call.1} parent=23 // pred_check
          _
        $region1076: #{tpu_custom_call.1} parent=23 // pred_check_branch
          %1842 = sbr.rel (%p1839) target = $region1078
        $region1077: #{tpu_custom_call.1} parent=23 // pred_region
          %s1857 = sand.u32 1, 7
          %p1858 = scmp.eq.s32.totalorder %s1857, 0
          %p1859 = pneg %p1858
          // Predicated region
          $region1090: #{tpu_custom_call.1} parent=1077 // pred_check
            _
          $region1091: #{tpu_custom_call.1} parent=1077 // pred_check_branch
            %1861 = sbr.rel (%p1858) target = $region1093
          $region1092: #{tpu_custom_call.1} parent=1077 // pred_region
            %s1862 = sand.u32 1, 7
            %s1863 = ssub.s32 1, %s1862
            %s1864 = scalar_lea.vmem %s1835, %s1863
            %s1865 = ssub.s32 1, %s1862
            %s1866 = scalar_lea.vmem %s1836, %s1865 [#allocation2]
            %s1867 = sshllo.u32 0, %s1862
            loop: start=0, step=1, limit=1
            $region1094: #{tpu_custom_call.1} parent=1092 // loop_pre_header
              _
            $region1095: #{tpu_custom_call.1} parent=1092 // loop_header
              %s1869 = sphi 0, %s1873
              %p1870 = scmp.ge.s32.totalorder %s1869, 1
              %s1874 = sphi %s1864, %s1864
              %s1875 = sphi %s1866, %s1866
            $region1096: #{tpu_custom_call.1} parent=1092 // loop_header_branch
              %1872 = sbr.rel (%p1870) target = $region1100
            $region1097: #{tpu_custom_call.1} parent=1092 // loop_body
              %v1876 = vld [vmem:[%s1874] sm:%s1867]
              %1877 = vst [vmem:[%s1875] sm:%s1867] %v1876
            $region1098: #{tpu_custom_call.1} parent=1092 // loop_footer
              %s1873 = sadd.s32 1, %s1869
            $region1099: #{tpu_custom_call.1} parent=1092 // loop_footer_branch
              %1868 = sbr.rel target = $region1095
            $region1100: #{tpu_custom_call.1} parent=1092 // loop_exit
              _
          $region1093: #{tpu_custom_call.1} parent=1077 // pred_fallthru
            _
        $region1078: #{tpu_custom_call.1} parent=23 // pred_fallthru
          _
        // Predicated region
        $region1079: #{tpu_custom_call.1} parent=23 // pred_check
          %p1843 = pneg %p1839
        $region1080: #{tpu_custom_call.1} parent=23 // pred_check_branch
          %1845 = sbr.rel (%p1843) target = $region1082
        $region1081: #{tpu_custom_call.1} parent=23 // pred_region
          %s1846 = sshllo.u32 0, 1
          loop: start=0, step=1, limit=1
          $region1083: #{tpu_custom_call.1} parent=1081 // loop_pre_header
            _
          $region1084: #{tpu_custom_call.1} parent=1081 // loop_header
            %s1848 = sphi 0, %s1852
            %p1849 = scmp.ge.s32.totalorder %s1848, 1
            %s1853 = sphi %s1835, %s1835
            %s1854 = sphi %s1836, %s1836
          $region1085: #{tpu_custom_call.1} parent=1081 // loop_header_branch
            %1851 = sbr.rel (%p1849) target = $region1089
          $region1086: #{tpu_custom_call.1} parent=1081 // loop_body
            %v1855 = vld [vmem:[%s1853] sm:%s1846]
            %1856 = vst [vmem:[%s1854] sm:%s1846] %v1855
          $region1087: #{tpu_custom_call.1} parent=1081 // loop_footer
            %s1852 = sadd.s32 1, %s1848
          $region1088: #{tpu_custom_call.1} parent=1081 // loop_footer_branch
            %1847 = sbr.rel target = $region1084
          $region1089: #{tpu_custom_call.1} parent=1081 // loop_exit
            _
        $region1082: #{tpu_custom_call.1} parent=23 // pred_fallthru
          _
        // Predicated region
        $region1101: #{tpu_custom_call.1} parent=23 // pred_check
          _
        $region1102: #{tpu_custom_call.1} parent=23 // pred_check_branch
          %1880 = sbr.rel (0) target = $region1104
        $region1103: #{tpu_custom_call.1} parent=23 // pred_region
          %1881 = vsyncadd %s1837, 16
        $region1104: #{tpu_custom_call.1} parent=23 // pred_fallthru
          _
        %s1882 = sadd.s32 %s120, 36
        %s1883 = sld [smem:[#allocation5 + %s1882]]
        %s1884 = scalar_lea.vmem %s2, %s1883
        %s1885 = scalar_lea.vmem [#allocation2], 6
        %s1886 = scalar_lea.sflag [#allocation3], 6
        %p1888 = scmp.lt.u32.totalorder 1, 8
        %p1889 = pneg %p1888
        // Predicated region
        $region1105: #{tpu_custom_call.1} parent=23 // pred_check
          _
        $region1106: #{tpu_custom_call.1} parent=23 // pred_check_branch
          %1891 = sbr.rel (%p1888) target = $region1108
        $region1107: #{tpu_custom_call.1} parent=23 // pred_region
          %s1906 = sand.u32 1, 7
          %p1907 = scmp.eq.s32.totalorder %s1906, 0
          %p1908 = pneg %p1907
          // Predicated region
          $region1120: #{tpu_custom_call.1} parent=1107 // pred_check
            _
          $region1121: #{tpu_custom_call.1} parent=1107 // pred_check_branch
            %1910 = sbr.rel (%p1907) target = $region1123
          $region1122: #{tpu_custom_call.1} parent=1107 // pred_region
            %s1911 = sand.u32 1, 7
            %s1912 = ssub.s32 1, %s1911
            %s1913 = scalar_lea.vmem %s1884, %s1912
            %s1914 = ssub.s32 1, %s1911
            %s1915 = scalar_lea.vmem %s1885, %s1914 [#allocation2]
            %s1916 = sshllo.u32 0, %s1911
            loop: start=0, step=1, limit=1
            $region1124: #{tpu_custom_call.1} parent=1122 // loop_pre_header
              _
            $region1125: #{tpu_custom_call.1} parent=1122 // loop_header
              %s1918 = sphi 0, %s1922
              %p1919 = scmp.ge.s32.totalorder %s1918, 1
              %s1923 = sphi %s1913, %s1913
              %s1924 = sphi %s1915, %s1915
            $region1126: #{tpu_custom_call.1} parent=1122 // loop_header_branch
              %1921 = sbr.rel (%p1919) target = $region1130
            $region1127: #{tpu_custom_call.1} parent=1122 // loop_body
              %v1925 = vld [vmem:[%s1923] sm:%s1916]
              %1926 = vst [vmem:[%s1924] sm:%s1916] %v1925
            $region1128: #{tpu_custom_call.1} parent=1122 // loop_footer
              %s1922 = sadd.s32 1, %s1918
            $region1129: #{tpu_custom_call.1} parent=1122 // loop_footer_branch
              %1917 = sbr.rel target = $region1125
            $region1130: #{tpu_custom_call.1} parent=1122 // loop_exit
              _
          $region1123: #{tpu_custom_call.1} parent=1107 // pred_fallthru
            _
        $region1108: #{tpu_custom_call.1} parent=23 // pred_fallthru
          _
        // Predicated region
        $region1109: #{tpu_custom_call.1} parent=23 // pred_check
          %p1892 = pneg %p1888
        $region1110: #{tpu_custom_call.1} parent=23 // pred_check_branch
          %1894 = sbr.rel (%p1892) target = $region1112
        $region1111: #{tpu_custom_call.1} parent=23 // pred_region
          %s1895 = sshllo.u32 0, 1
          loop: start=0, step=1, limit=1
          $region1113: #{tpu_custom_call.1} parent=1111 // loop_pre_header
            _
          $region1114: #{tpu_custom_call.1} parent=1111 // loop_header
            %s1897 = sphi 0, %s1901
            %p1898 = scmp.ge.s32.totalorder %s1897, 1
            %s1902 = sphi %s1884, %s1884
            %s1903 = sphi %s1885, %s1885
          $region1115: #{tpu_custom_call.1} parent=1111 // loop_header_branch
            %1900 = sbr.rel (%p1898) target = $region1119
          $region1116: #{tpu_custom_call.1} parent=1111 // loop_body
            %v1904 = vld [vmem:[%s1902] sm:%s1895]
            %1905 = vst [vmem:[%s1903] sm:%s1895] %v1904
          $region1117: #{tpu_custom_call.1} parent=1111 // loop_footer
            %s1901 = sadd.s32 1, %s1897
          $region1118: #{tpu_custom_call.1} parent=1111 // loop_footer_branch
            %1896 = sbr.rel target = $region1114
          $region1119: #{tpu_custom_call.1} parent=1111 // loop_exit
            _
        $region1112: #{tpu_custom_call.1} parent=23 // pred_fallthru
          _
        // Predicated region
        $region1131: #{tpu_custom_call.1} parent=23 // pred_check
          _
        $region1132: #{tpu_custom_call.1} parent=23 // pred_check_branch
          %1929 = sbr.rel (0) target = $region1134
        $region1133: #{tpu_custom_call.1} parent=23 // pred_region
          %1930 = vsyncadd %s1886, 16
        $region1134: #{tpu_custom_call.1} parent=23 // pred_fallthru
          _
        %s1931 = sadd.s32 %s120, 37
        %s1932 = sld [smem:[#allocation5 + %s1931]]
        %s1933 = scalar_lea.vmem %s2, %s1932
        %s1934 = scalar_lea.vmem [#allocation2], 14
        %s1935 = scalar_lea.sflag [#allocation3], 14
        %p1937 = scmp.lt.u32.totalorder 1, 8
        %p1938 = pneg %p1937
        // Predicated region
        $region1135: #{tpu_custom_call.1} parent=23 // pred_check
          _
        $region1136: #{tpu_custom_call.1} parent=23 // pred_check_branch
          %1940 = sbr.rel (%p1937) target = $region1138
        $region1137: #{tpu_custom_call.1} parent=23 // pred_region
          %s1955 = sand.u32 1, 7
          %p1956 = scmp.eq.s32.totalorder %s1955, 0
          %p1957 = pneg %p1956
          // Predicated region
          $region1150: #{tpu_custom_call.1} parent=1137 // pred_check
            _
          $region1151: #{tpu_custom_call.1} parent=1137 // pred_check_branch
            %1959 = sbr.rel (%p1956) target = $region1153
          $region1152: #{tpu_custom_call.1} parent=1137 // pred_region
            %s1960 = sand.u32 1, 7
            %s1961 = ssub.s32 1, %s1960
            %s1962 = scalar_lea.vmem %s1933, %s1961
            %s1963 = ssub.s32 1, %s1960
            %s1964 = scalar_lea.vmem %s1934, %s1963 [#allocation2]
            %s1965 = sshllo.u32 0, %s1960
            loop: start=0, step=1, limit=1
            $region1154: #{tpu_custom_call.1} parent=1152 // loop_pre_header
              _
            $region1155: #{tpu_custom_call.1} parent=1152 // loop_header
              %s1967 = sphi 0, %s1971
              %p1968 = scmp.ge.s32.totalorder %s1967, 1
              %s1972 = sphi %s1962, %s1962
              %s1973 = sphi %s1964, %s1964
            $region1156: #{tpu_custom_call.1} parent=1152 // loop_header_branch
              %1970 = sbr.rel (%p1968) target = $region1160
            $region1157: #{tpu_custom_call.1} parent=1152 // loop_body
              %v1974 = vld [vmem:[%s1972] sm:%s1965]
              %1975 = vst [vmem:[%s1973] sm:%s1965] %v1974
            $region1158: #{tpu_custom_call.1} parent=1152 // loop_footer
              %s1971 = sadd.s32 1, %s1967
            $region1159: #{tpu_custom_call.1} parent=1152 // loop_footer_branch
              %1966 = sbr.rel target = $region1155
            $region1160: #{tpu_custom_call.1} parent=1152 // loop_exit
              _
          $region1153: #{tpu_custom_call.1} parent=1137 // pred_fallthru
            _
        $region1138: #{tpu_custom_call.1} parent=23 // pred_fallthru
          _
        // Predicated region
        $region1139: #{tpu_custom_call.1} parent=23 // pred_check
          %p1941 = pneg %p1937
        $region1140: #{tpu_custom_call.1} parent=23 // pred_check_branch
          %1943 = sbr.rel (%p1941) target = $region1142
        $region1141: #{tpu_custom_call.1} parent=23 // pred_region
          %s1944 = sshllo.u32 0, 1
          loop: start=0, step=1, limit=1
          $region1143: #{tpu_custom_call.1} parent=1141 // loop_pre_header
            _
          $region1144: #{tpu_custom_call.1} parent=1141 // loop_header
            %s1946 = sphi 0, %s1950
            %p1947 = scmp.ge.s32.totalorder %s1946, 1
            %s1951 = sphi %s1933, %s1933
            %s1952 = sphi %s1934, %s1934
          $region1145: #{tpu_custom_call.1} parent=1141 // loop_header_branch
            %1949 = sbr.rel (%p1947) target = $region1149
          $region1146: #{tpu_custom_call.1} parent=1141 // loop_body
            %v1953 = vld [vmem:[%s1951] sm:%s1944]
            %1954 = vst [vmem:[%s1952] sm:%s1944] %v1953
          $region1147: #{tpu_custom_call.1} parent=1141 // loop_footer
            %s1950 = sadd.s32 1, %s1946
          $region1148: #{tpu_custom_call.1} parent=1141 // loop_footer_branch
            %1945 = sbr.rel target = $region1144
          $region1149: #{tpu_custom_call.1} parent=1141 // loop_exit
            _
        $region1142: #{tpu_custom_call.1} parent=23 // pred_fallthru
          _
        // Predicated region
        $region1161: #{tpu_custom_call.1} parent=23 // pred_check
          _
        $region1162: #{tpu_custom_call.1} parent=23 // pred_check_branch
          %1978 = sbr.rel (0) target = $region1164
        $region1163: #{tpu_custom_call.1} parent=23 // pred_region
          %1979 = vsyncadd %s1935, 16
        $region1164: #{tpu_custom_call.1} parent=23 // pred_fallthru
          _
        %s1980 = sadd.s32 %s120, 38
        %s1981 = sld [smem:[#allocation5 + %s1980]]
        %s1982 = scalar_lea.vmem %s2, %s1981
        %s1983 = scalar_lea.vmem [#allocation2], 22
        %s1984 = scalar_lea.sflag [#allocation3], 22
        %p1986 = scmp.lt.u32.totalorder 1, 8
        %p1987 = pneg %p1986
        // Predicated region
        $region1165: #{tpu_custom_call.1} parent=23 // pred_check
          _
        $region1166: #{tpu_custom_call.1} parent=23 // pred_check_branch
          %1989 = sbr.rel (%p1986) target = $region1168
        $region1167: #{tpu_custom_call.1} parent=23 // pred_region
          %s2004 = sand.u32 1, 7
          %p2005 = scmp.eq.s32.totalorder %s2004, 0
          %p2006 = pneg %p2005
          // Predicated region
          $region1180: #{tpu_custom_call.1} parent=1167 // pred_check
            _
          $region1181: #{tpu_custom_call.1} parent=1167 // pred_check_branch
            %2008 = sbr.rel (%p2005) target = $region1183
          $region1182: #{tpu_custom_call.1} parent=1167 // pred_region
            %s2009 = sand.u32 1, 7
            %s2010 = ssub.s32 1, %s2009
            %s2011 = scalar_lea.vmem %s1982, %s2010
            %s2012 = ssub.s32 1, %s2009
            %s2013 = scalar_lea.vmem %s1983, %s2012 [#allocation2]
            %s2014 = sshllo.u32 0, %s2009
            loop: start=0, step=1, limit=1
            $region1184: #{tpu_custom_call.1} parent=1182 // loop_pre_header
              _
            $region1185: #{tpu_custom_call.1} parent=1182 // loop_header
              %s2016 = sphi 0, %s2020
              %p2017 = scmp.ge.s32.totalorder %s2016, 1
              %s2021 = sphi %s2011, %s2011
              %s2022 = sphi %s2013, %s2013
            $region1186: #{tpu_custom_call.1} parent=1182 // loop_header_branch
              %2019 = sbr.rel (%p2017) target = $region1190
            $region1187: #{tpu_custom_call.1} parent=1182 // loop_body
              %v2023 = vld [vmem:[%s2021] sm:%s2014]
              %2024 = vst [vmem:[%s2022] sm:%s2014] %v2023
            $region1188: #{tpu_custom_call.1} parent=1182 // loop_footer
              %s2020 = sadd.s32 1, %s2016
            $region1189: #{tpu_custom_call.1} parent=1182 // loop_footer_branch
              %2015 = sbr.rel target = $region1185
            $region1190: #{tpu_custom_call.1} parent=1182 // loop_exit
              _
          $region1183: #{tpu_custom_call.1} parent=1167 // pred_fallthru
            _
        $region1168: #{tpu_custom_call.1} parent=23 // pred_fallthru
          _
        // Predicated region
        $region1169: #{tpu_custom_call.1} parent=23 // pred_check
          %p1990 = pneg %p1986
        $region1170: #{tpu_custom_call.1} parent=23 // pred_check_branch
          %1992 = sbr.rel (%p1990) target = $region1172
        $region1171: #{tpu_custom_call.1} parent=23 // pred_region
          %s1993 = sshllo.u32 0, 1
          loop: start=0, step=1, limit=1
          $region1173: #{tpu_custom_call.1} parent=1171 // loop_pre_header
            _
          $region1174: #{tpu_custom_call.1} parent=1171 // loop_header
            %s1995 = sphi 0, %s1999
            %p1996 = scmp.ge.s32.totalorder %s1995, 1
            %s2000 = sphi %s1982, %s1982
            %s2001 = sphi %s1983, %s1983
          $region1175: #{tpu_custom_call.1} parent=1171 // loop_header_branch
            %1998 = sbr.rel (%p1996) target = $region1179
          $region1176: #{tpu_custom_call.1} parent=1171 // loop_body
            %v2002 = vld [vmem:[%s2000] sm:%s1993]
            %2003 = vst [vmem:[%s2001] sm:%s1993] %v2002
          $region1177: #{tpu_custom_call.1} parent=1171 // loop_footer
            %s1999 = sadd.s32 1, %s1995
          $region1178: #{tpu_custom_call.1} parent=1171 // loop_footer_branch
            %1994 = sbr.rel target = $region1174
          $region1179: #{tpu_custom_call.1} parent=1171 // loop_exit
            _
        $region1172: #{tpu_custom_call.1} parent=23 // pred_fallthru
          _
        // Predicated region
        $region1191: #{tpu_custom_call.1} parent=23 // pred_check
          _
        $region1192: #{tpu_custom_call.1} parent=23 // pred_check_branch
          %2027 = sbr.rel (0) target = $region1194
        $region1193: #{tpu_custom_call.1} parent=23 // pred_region
          %2028 = vsyncadd %s1984, 16
        $region1194: #{tpu_custom_call.1} parent=23 // pred_fallthru
          _
        %s2029 = sadd.s32 %s120, 39
        %s2030 = sld [smem:[#allocation5 + %s2029]]
        %s2031 = scalar_lea.vmem %s2, %s2030
        %s2032 = scalar_lea.vmem [#allocation2], 30
        %s2033 = scalar_lea.sflag [#allocation3], 30
        %p2035 = scmp.lt.u32.totalorder 1, 8
        %p2036 = pneg %p2035
        // Predicated region
        $region1195: #{tpu_custom_call.1} parent=23 // pred_check
          _
        $region1196: #{tpu_custom_call.1} parent=23 // pred_check_branch
          %2038 = sbr.rel (%p2035) target = $region1198
        $region1197: #{tpu_custom_call.1} parent=23 // pred_region
          %s2053 = sand.u32 1, 7
          %p2054 = scmp.eq.s32.totalorder %s2053, 0
          %p2055 = pneg %p2054
          // Predicated region
          $region1210: #{tpu_custom_call.1} parent=1197 // pred_check
            _
          $region1211: #{tpu_custom_call.1} parent=1197 // pred_check_branch
            %2057 = sbr.rel (%p2054) target = $region1213
          $region1212: #{tpu_custom_call.1} parent=1197 // pred_region
            %s2058 = sand.u32 1, 7
            %s2059 = ssub.s32 1, %s2058
            %s2060 = scalar_lea.vmem %s2031, %s2059
            %s2061 = ssub.s32 1, %s2058
            %s2062 = scalar_lea.vmem %s2032, %s2061 [#allocation2]
            %s2063 = sshllo.u32 0, %s2058
            loop: start=0, step=1, limit=1
            $region1214: #{tpu_custom_call.1} parent=1212 // loop_pre_header
              _
            $region1215: #{tpu_custom_call.1} parent=1212 // loop_header
              %s2065 = sphi 0, %s2069
              %p2066 = scmp.ge.s32.totalorder %s2065, 1
              %s2070 = sphi %s2060, %s2060
              %s2071 = sphi %s2062, %s2062
            $region1216: #{tpu_custom_call.1} parent=1212 // loop_header_branch
              %2068 = sbr.rel (%p2066) target = $region1220
            $region1217: #{tpu_custom_call.1} parent=1212 // loop_body
              %v2072 = vld [vmem:[%s2070] sm:%s2063]
              %2073 = vst [vmem:[%s2071] sm:%s2063] %v2072
            $region1218: #{tpu_custom_call.1} parent=1212 // loop_footer
              %s2069 = sadd.s32 1, %s2065
            $region1219: #{tpu_custom_call.1} parent=1212 // loop_footer_branch
              %2064 = sbr.rel target = $region1215
            $region1220: #{tpu_custom_call.1} parent=1212 // loop_exit
              _
          $region1213: #{tpu_custom_call.1} parent=1197 // pred_fallthru
            _
        $region1198: #{tpu_custom_call.1} parent=23 // pred_fallthru
          _
        // Predicated region
        $region1199: #{tpu_custom_call.1} parent=23 // pred_check
          %p2039 = pneg %p2035
        $region1200: #{tpu_custom_call.1} parent=23 // pred_check_branch
          %2041 = sbr.rel (%p2039) target = $region1202
        $region1201: #{tpu_custom_call.1} parent=23 // pred_region
          %s2042 = sshllo.u32 0, 1
          loop: start=0, step=1, limit=1
          $region1203: #{tpu_custom_call.1} parent=1201 // loop_pre_header
            _
          $region1204: #{tpu_custom_call.1} parent=1201 // loop_header
            %s2044 = sphi 0, %s2048
            %p2045 = scmp.ge.s32.totalorder %s2044, 1
            %s2049 = sphi %s2031, %s2031
            %s2050 = sphi %s2032, %s2032
          $region1205: #{tpu_custom_call.1} parent=1201 // loop_header_branch
            %2047 = sbr.rel (%p2045) target = $region1209
          $region1206: #{tpu_custom_call.1} parent=1201 // loop_body
            %v2051 = vld [vmem:[%s2049] sm:%s2042]
            %2052 = vst [vmem:[%s2050] sm:%s2042] %v2051
          $region1207: #{tpu_custom_call.1} parent=1201 // loop_footer
            %s2048 = sadd.s32 1, %s2044
          $region1208: #{tpu_custom_call.1} parent=1201 // loop_footer_branch
            %2043 = sbr.rel target = $region1204
          $region1209: #{tpu_custom_call.1} parent=1201 // loop_exit
            _
        $region1202: #{tpu_custom_call.1} parent=23 // pred_fallthru
          _
        // Predicated region
        $region1221: #{tpu_custom_call.1} parent=23 // pred_check
          _
        $region1222: #{tpu_custom_call.1} parent=23 // pred_check_branch
          %2076 = sbr.rel (0) target = $region1224
        $region1223: #{tpu_custom_call.1} parent=23 // pred_region
          %2077 = vsyncadd %s2033, 16
        $region1224: #{tpu_custom_call.1} parent=23 // pred_fallthru
          _
        %s2078 = sadd.s32 %s120, 40
        %s2079 = sld [smem:[#allocation5 + %s2078]]
        %s2080 = scalar_lea.vmem %s2, %s2079
        %s2081 = scalar_lea.vmem [#allocation2], 38
        %s2082 = scalar_lea.sflag [#allocation3], 38
        %p2084 = scmp.lt.u32.totalorder 1, 8
        %p2085 = pneg %p2084
        // Predicated region
        $region1225: #{tpu_custom_call.1} parent=23 // pred_check
          _
        $region1226: #{tpu_custom_call.1} parent=23 // pred_check_branch
          %2087 = sbr.rel (%p2084) target = $region1228
        $region1227: #{tpu_custom_call.1} parent=23 // pred_region
          %s2102 = sand.u32 1, 7
          %p2103 = scmp.eq.s32.totalorder %s2102, 0
          %p2104 = pneg %p2103
          // Predicated region
          $region1240: #{tpu_custom_call.1} parent=1227 // pred_check
            _
          $region1241: #{tpu_custom_call.1} parent=1227 // pred_check_branch
            %2106 = sbr.rel (%p2103) target = $region1243
          $region1242: #{tpu_custom_call.1} parent=1227 // pred_region
            %s2107 = sand.u32 1, 7
            %s2108 = ssub.s32 1, %s2107
            %s2109 = scalar_lea.vmem %s2080, %s2108
            %s2110 = ssub.s32 1, %s2107
            %s2111 = scalar_lea.vmem %s2081, %s2110 [#allocation2]
            %s2112 = sshllo.u32 0, %s2107
            loop: start=0, step=1, limit=1
            $region1244: #{tpu_custom_call.1} parent=1242 // loop_pre_header
              _
            $region1245: #{tpu_custom_call.1} parent=1242 // loop_header
              %s2114 = sphi 0, %s2118
              %p2115 = scmp.ge.s32.totalorder %s2114, 1
              %s2119 = sphi %s2109, %s2109
              %s2120 = sphi %s2111, %s2111
            $region1246: #{tpu_custom_call.1} parent=1242 // loop_header_branch
              %2117 = sbr.rel (%p2115) target = $region1250
            $region1247: #{tpu_custom_call.1} parent=1242 // loop_body
              %v2121 = vld [vmem:[%s2119] sm:%s2112]
              %2122 = vst [vmem:[%s2120] sm:%s2112] %v2121
            $region1248: #{tpu_custom_call.1} parent=1242 // loop_footer
              %s2118 = sadd.s32 1, %s2114
            $region1249: #{tpu_custom_call.1} parent=1242 // loop_footer_branch
              %2113 = sbr.rel target = $region1245
            $region1250: #{tpu_custom_call.1} parent=1242 // loop_exit
              _
          $region1243: #{tpu_custom_call.1} parent=1227 // pred_fallthru
            _
        $region1228: #{tpu_custom_call.1} parent=23 // pred_fallthru
          _
        // Predicated region
        $region1229: #{tpu_custom_call.1} parent=23 // pred_check
          %p2088 = pneg %p2084
        $region1230: #{tpu_custom_call.1} parent=23 // pred_check_branch
          %2090 = sbr.rel (%p2088) target = $region1232
        $region1231: #{tpu_custom_call.1} parent=23 // pred_region
          %s2091 = sshllo.u32 0, 1
          loop: start=0, step=1, limit=1
          $region1233: #{tpu_custom_call.1} parent=1231 // loop_pre_header
            _
          $region1234: #{tpu_custom_call.1} parent=1231 // loop_header
            %s2093 = sphi 0, %s2097
            %p2094 = scmp.ge.s32.totalorder %s2093, 1
            %s2098 = sphi %s2080, %s2080
            %s2099 = sphi %s2081, %s2081
          $region1235: #{tpu_custom_call.1} parent=1231 // loop_header_branch
            %2096 = sbr.rel (%p2094) target = $region1239
          $region1236: #{tpu_custom_call.1} parent=1231 // loop_body
            %v2100 = vld [vmem:[%s2098] sm:%s2091]
            %2101 = vst [vmem:[%s2099] sm:%s2091] %v2100
          $region1237: #{tpu_custom_call.1} parent=1231 // loop_footer
            %s2097 = sadd.s32 1, %s2093
          $region1238: #{tpu_custom_call.1} parent=1231 // loop_footer_branch
            %2092 = sbr.rel target = $region1234
          $region1239: #{tpu_custom_call.1} parent=1231 // loop_exit
            _
        $region1232: #{tpu_custom_call.1} parent=23 // pred_fallthru
          _
        // Predicated region
        $region1251: #{tpu_custom_call.1} parent=23 // pred_check
          _
        $region1252: #{tpu_custom_call.1} parent=23 // pred_check_branch
          %2125 = sbr.rel (0) target = $region1254
        $region1253: #{tpu_custom_call.1} parent=23 // pred_region
          %2126 = vsyncadd %s2082, 16
        $region1254: #{tpu_custom_call.1} parent=23 // pred_fallthru
          _
        %s2127 = sadd.s32 %s120, 41
        %s2128 = sld [smem:[#allocation5 + %s2127]]
        %s2129 = scalar_lea.vmem %s2, %s2128
        %s2130 = scalar_lea.vmem [#allocation2], 46
        %s2131 = scalar_lea.sflag [#allocation3], 46
        %p2133 = scmp.lt.u32.totalorder 1, 8
        %p2134 = pneg %p2133
        // Predicated region
        $region1255: #{tpu_custom_call.1} parent=23 // pred_check
          _
        $region1256: #{tpu_custom_call.1} parent=23 // pred_check_branch
          %2136 = sbr.rel (%p2133) target = $region1258
        $region1257: #{tpu_custom_call.1} parent=23 // pred_region
          %s2151 = sand.u32 1, 7
          %p2152 = scmp.eq.s32.totalorder %s2151, 0
          %p2153 = pneg %p2152
          // Predicated region
          $region1270: #{tpu_custom_call.1} parent=1257 // pred_check
            _
          $region1271: #{tpu_custom_call.1} parent=1257 // pred_check_branch
            %2155 = sbr.rel (%p2152) target = $region1273
          $region1272: #{tpu_custom_call.1} parent=1257 // pred_region
            %s2156 = sand.u32 1, 7
            %s2157 = ssub.s32 1, %s2156
            %s2158 = scalar_lea.vmem %s2129, %s2157
            %s2159 = ssub.s32 1, %s2156
            %s2160 = scalar_lea.vmem %s2130, %s2159 [#allocation2]
            %s2161 = sshllo.u32 0, %s2156
            loop: start=0, step=1, limit=1
            $region1274: #{tpu_custom_call.1} parent=1272 // loop_pre_header
              _
            $region1275: #{tpu_custom_call.1} parent=1272 // loop_header
              %s2163 = sphi 0, %s2167
              %p2164 = scmp.ge.s32.totalorder %s2163, 1
              %s2168 = sphi %s2158, %s2158
              %s2169 = sphi %s2160, %s2160
            $region1276: #{tpu_custom_call.1} parent=1272 // loop_header_branch
              %2166 = sbr.rel (%p2164) target = $region1280
            $region1277: #{tpu_custom_call.1} parent=1272 // loop_body
              %v2170 = vld [vmem:[%s2168] sm:%s2161]
              %2171 = vst [vmem:[%s2169] sm:%s2161] %v2170
            $region1278: #{tpu_custom_call.1} parent=1272 // loop_footer
              %s2167 = sadd.s32 1, %s2163
            $region1279: #{tpu_custom_call.1} parent=1272 // loop_footer_branch
              %2162 = sbr.rel target = $region1275
            $region1280: #{tpu_custom_call.1} parent=1272 // loop_exit
              _
          $region1273: #{tpu_custom_call.1} parent=1257 // pred_fallthru
            _
        $region1258: #{tpu_custom_call.1} parent=23 // pred_fallthru
          _
        // Predicated region
        $region1259: #{tpu_custom_call.1} parent=23 // pred_check
          %p2137 = pneg %p2133
        $region1260: #{tpu_custom_call.1} parent=23 // pred_check_branch
          %2139 = sbr.rel (%p2137) target = $region1262
        $region1261: #{tpu_custom_call.1} parent=23 // pred_region
          %s2140 = sshllo.u32 0, 1
          loop: start=0, step=1, limit=1
          $region1263: #{tpu_custom_call.1} parent=1261 // loop_pre_header
            _
          $region1264: #{tpu_custom_call.1} parent=1261 // loop_header
            %s2142 = sphi 0, %s2146
            %p2143 = scmp.ge.s32.totalorder %s2142, 1
            %s2147 = sphi %s2129, %s2129
            %s2148 = sphi %s2130, %s2130
          $region1265: #{tpu_custom_call.1} parent=1261 // loop_header_branch
            %2145 = sbr.rel (%p2143) target = $region1269
          $region1266: #{tpu_custom_call.1} parent=1261 // loop_body
            %v2149 = vld [vmem:[%s2147] sm:%s2140]
            %2150 = vst [vmem:[%s2148] sm:%s2140] %v2149
          $region1267: #{tpu_custom_call.1} parent=1261 // loop_footer
            %s2146 = sadd.s32 1, %s2142
          $region1268: #{tpu_custom_call.1} parent=1261 // loop_footer_branch
            %2141 = sbr.rel target = $region1264
          $region1269: #{tpu_custom_call.1} parent=1261 // loop_exit
            _
        $region1262: #{tpu_custom_call.1} parent=23 // pred_fallthru
          _
        // Predicated region
        $region1281: #{tpu_custom_call.1} parent=23 // pred_check
          _
        $region1282: #{tpu_custom_call.1} parent=23 // pred_check_branch
          %2174 = sbr.rel (0) target = $region1284
        $region1283: #{tpu_custom_call.1} parent=23 // pred_region
          %2175 = vsyncadd %s2131, 16
        $region1284: #{tpu_custom_call.1} parent=23 // pred_fallthru
          _
        %s2176 = sadd.s32 %s120, 42
        %s2177 = sld [smem:[#allocation5 + %s2176]]
        %s2178 = scalar_lea.vmem %s2, %s2177
        %s2179 = scalar_lea.vmem [#allocation2], 7
        %s2180 = scalar_lea.sflag [#allocation3], 7
        %p2182 = scmp.lt.u32.totalorder 1, 8
        %p2183 = pneg %p2182
        // Predicated region
        $region1285: #{tpu_custom_call.1} parent=23 // pred_check
          _
        $region1286: #{tpu_custom_call.1} parent=23 // pred_check_branch
          %2185 = sbr.rel (%p2182) target = $region1288
        $region1287: #{tpu_custom_call.1} parent=23 // pred_region
          %s2200 = sand.u32 1, 7
          %p2201 = scmp.eq.s32.totalorder %s2200, 0
          %p2202 = pneg %p2201
          // Predicated region
          $region1300: #{tpu_custom_call.1} parent=1287 // pred_check
            _
          $region1301: #{tpu_custom_call.1} parent=1287 // pred_check_branch
            %2204 = sbr.rel (%p2201) target = $region1303
          $region1302: #{tpu_custom_call.1} parent=1287 // pred_region
            %s2205 = sand.u32 1, 7
            %s2206 = ssub.s32 1, %s2205
            %s2207 = scalar_lea.vmem %s2178, %s2206
            %s2208 = ssub.s32 1, %s2205
            %s2209 = scalar_lea.vmem %s2179, %s2208 [#allocation2]
            %s2210 = sshllo.u32 0, %s2205
            loop: start=0, step=1, limit=1
            $region1304: #{tpu_custom_call.1} parent=1302 // loop_pre_header
              _
            $region1305: #{tpu_custom_call.1} parent=1302 // loop_header
              %s2212 = sphi 0, %s2216
              %p2213 = scmp.ge.s32.totalorder %s2212, 1
              %s2217 = sphi %s2207, %s2207
              %s2218 = sphi %s2209, %s2209
            $region1306: #{tpu_custom_call.1} parent=1302 // loop_header_branch
              %2215 = sbr.rel (%p2213) target = $region1310
            $region1307: #{tpu_custom_call.1} parent=1302 // loop_body
              %v2219 = vld [vmem:[%s2217] sm:%s2210]
              %2220 = vst [vmem:[%s2218] sm:%s2210] %v2219
            $region1308: #{tpu_custom_call.1} parent=1302 // loop_footer
              %s2216 = sadd.s32 1, %s2212
            $region1309: #{tpu_custom_call.1} parent=1302 // loop_footer_branch
              %2211 = sbr.rel target = $region1305
            $region1310: #{tpu_custom_call.1} parent=1302 // loop_exit
              _
          $region1303: #{tpu_custom_call.1} parent=1287 // pred_fallthru
            _
        $region1288: #{tpu_custom_call.1} parent=23 // pred_fallthru
          _
        // Predicated region
        $region1289: #{tpu_custom_call.1} parent=23 // pred_check
          %p2186 = pneg %p2182
        $region1290: #{tpu_custom_call.1} parent=23 // pred_check_branch
          %2188 = sbr.rel (%p2186) target = $region1292
        $region1291: #{tpu_custom_call.1} parent=23 // pred_region
          %s2189 = sshllo.u32 0, 1
          loop: start=0, step=1, limit=1
          $region1293: #{tpu_custom_call.1} parent=1291 // loop_pre_header
            _
          $region1294: #{tpu_custom_call.1} parent=1291 // loop_header
            %s2191 = sphi 0, %s2195
            %p2192 = scmp.ge.s32.totalorder %s2191, 1
            %s2196 = sphi %s2178, %s2178
            %s2197 = sphi %s2179, %s2179
          $region1295: #{tpu_custom_call.1} parent=1291 // loop_header_branch
            %2194 = sbr.rel (%p2192) target = $region1299
          $region1296: #{tpu_custom_call.1} parent=1291 // loop_body
            %v2198 = vld [vmem:[%s2196] sm:%s2189]
            %2199 = vst [vmem:[%s2197] sm:%s2189] %v2198
          $region1297: #{tpu_custom_call.1} parent=1291 // loop_footer
            %s2195 = sadd.s32 1, %s2191
          $region1298: #{tpu_custom_call.1} parent=1291 // loop_footer_branch
            %2190 = sbr.rel target = $region1294
          $region1299: #{tpu_custom_call.1} parent=1291 // loop_exit
            _
        $region1292: #{tpu_custom_call.1} parent=23 // pred_fallthru
          _
        // Predicated region
        $region1311: #{tpu_custom_call.1} parent=23 // pred_check
          _
        $region1312: #{tpu_custom_call.1} parent=23 // pred_check_branch
          %2223 = sbr.rel (0) target = $region1314
        $region1313: #{tpu_custom_call.1} parent=23 // pred_region
          %2224 = vsyncadd %s2180, 16
        $region1314: #{tpu_custom_call.1} parent=23 // pred_fallthru
          _
        %s2225 = sadd.s32 %s120, 43
        %s2226 = sld [smem:[#allocation5 + %s2225]]
        %s2227 = scalar_lea.vmem %s2, %s2226
        %s2228 = scalar_lea.vmem [#allocation2], 15
        %s2229 = scalar_lea.sflag [#allocation3], 15
        %p2231 = scmp.lt.u32.totalorder 1, 8
        %p2232 = pneg %p2231
        // Predicated region
        $region1315: #{tpu_custom_call.1} parent=23 // pred_check
          _
        $region1316: #{tpu_custom_call.1} parent=23 // pred_check_branch
          %2234 = sbr.rel (%p2231) target = $region1318
        $region1317: #{tpu_custom_call.1} parent=23 // pred_region
          %s2249 = sand.u32 1, 7
          %p2250 = scmp.eq.s32.totalorder %s2249, 0
          %p2251 = pneg %p2250
          // Predicated region
          $region1330: #{tpu_custom_call.1} parent=1317 // pred_check
            _
          $region1331: #{tpu_custom_call.1} parent=1317 // pred_check_branch
            %2253 = sbr.rel (%p2250) target = $region1333
          $region1332: #{tpu_custom_call.1} parent=1317 // pred_region
            %s2254 = sand.u32 1, 7
            %s2255 = ssub.s32 1, %s2254
            %s2256 = scalar_lea.vmem %s2227, %s2255
            %s2257 = ssub.s32 1, %s2254
            %s2258 = scalar_lea.vmem %s2228, %s2257 [#allocation2]
            %s2259 = sshllo.u32 0, %s2254
            loop: start=0, step=1, limit=1
            $region1334: #{tpu_custom_call.1} parent=1332 // loop_pre_header
              _
            $region1335: #{tpu_custom_call.1} parent=1332 // loop_header
              %s2261 = sphi 0, %s2265
              %p2262 = scmp.ge.s32.totalorder %s2261, 1
              %s2266 = sphi %s2256, %s2256
              %s2267 = sphi %s2258, %s2258
            $region1336: #{tpu_custom_call.1} parent=1332 // loop_header_branch
              %2264 = sbr.rel (%p2262) target = $region1340
            $region1337: #{tpu_custom_call.1} parent=1332 // loop_body
              %v2268 = vld [vmem:[%s2266] sm:%s2259]
              %2269 = vst [vmem:[%s2267] sm:%s2259] %v2268
            $region1338: #{tpu_custom_call.1} parent=1332 // loop_footer
              %s2265 = sadd.s32 1, %s2261
            $region1339: #{tpu_custom_call.1} parent=1332 // loop_footer_branch
              %2260 = sbr.rel target = $region1335
            $region1340: #{tpu_custom_call.1} parent=1332 // loop_exit
              _
          $region1333: #{tpu_custom_call.1} parent=1317 // pred_fallthru
            _
        $region1318: #{tpu_custom_call.1} parent=23 // pred_fallthru
          _
        // Predicated region
        $region1319: #{tpu_custom_call.1} parent=23 // pred_check
          %p2235 = pneg %p2231
        $region1320: #{tpu_custom_call.1} parent=23 // pred_check_branch
          %2237 = sbr.rel (%p2235) target = $region1322
        $region1321: #{tpu_custom_call.1} parent=23 // pred_region
          %s2238 = sshllo.u32 0, 1
          loop: start=0, step=1, limit=1
          $region1323: #{tpu_custom_call.1} parent=1321 // loop_pre_header
            _
          $region1324: #{tpu_custom_call.1} parent=1321 // loop_header
            %s2240 = sphi 0, %s2244
            %p2241 = scmp.ge.s32.totalorder %s2240, 1
            %s2245 = sphi %s2227, %s2227
            %s2246 = sphi %s2228, %s2228
          $region1325: #{tpu_custom_call.1} parent=1321 // loop_header_branch
            %2243 = sbr.rel (%p2241) target = $region1329
          $region1326: #{tpu_custom_call.1} parent=1321 // loop_body
            %v2247 = vld [vmem:[%s2245] sm:%s2238]
            %2248 = vst [vmem:[%s2246] sm:%s2238] %v2247
          $region1327: #{tpu_custom_call.1} parent=1321 // loop_footer
            %s2244 = sadd.s32 1, %s2240
          $region1328: #{tpu_custom_call.1} parent=1321 // loop_footer_branch
            %2239 = sbr.rel target = $region1324
          $region1329: #{tpu_custom_call.1} parent=1321 // loop_exit
            _
        $region1322: #{tpu_custom_call.1} parent=23 // pred_fallthru
          _
        // Predicated region
        $region1341: #{tpu_custom_call.1} parent=23 // pred_check
          _
        $region1342: #{tpu_custom_call.1} parent=23 // pred_check_branch
          %2272 = sbr.rel (0) target = $region1344
        $region1343: #{tpu_custom_call.1} parent=23 // pred_region
          %2273 = vsyncadd %s2229, 16
        $region1344: #{tpu_custom_call.1} parent=23 // pred_fallthru
          _
        %s2274 = sadd.s32 %s120, 44
        %s2275 = sld [smem:[#allocation5 + %s2274]]
        %s2276 = scalar_lea.vmem %s2, %s2275
        %s2277 = scalar_lea.vmem [#allocation2], 23
        %s2278 = scalar_lea.sflag [#allocation3], 23
        %p2280 = scmp.lt.u32.totalorder 1, 8
        %p2281 = pneg %p2280
        // Predicated region
        $region1345: #{tpu_custom_call.1} parent=23 // pred_check
          _
        $region1346: #{tpu_custom_call.1} parent=23 // pred_check_branch
          %2283 = sbr.rel (%p2280) target = $region1348
        $region1347: #{tpu_custom_call.1} parent=23 // pred_region
          %s2298 = sand.u32 1, 7
          %p2299 = scmp.eq.s32.totalorder %s2298, 0
          %p2300 = pneg %p2299
          // Predicated region
          $region1360: #{tpu_custom_call.1} parent=1347 // pred_check
            _
          $region1361: #{tpu_custom_call.1} parent=1347 // pred_check_branch
            %2302 = sbr.rel (%p2299) target = $region1363
          $region1362: #{tpu_custom_call.1} parent=1347 // pred_region
            %s2303 = sand.u32 1, 7
            %s2304 = ssub.s32 1, %s2303
            %s2305 = scalar_lea.vmem %s2276, %s2304
            %s2306 = ssub.s32 1, %s2303
            %s2307 = scalar_lea.vmem %s2277, %s2306 [#allocation2]
            %s2308 = sshllo.u32 0, %s2303
            loop: start=0, step=1, limit=1
            $region1364: #{tpu_custom_call.1} parent=1362 // loop_pre_header
              _
            $region1365: #{tpu_custom_call.1} parent=1362 // loop_header
              %s2310 = sphi 0, %s2314
              %p2311 = scmp.ge.s32.totalorder %s2310, 1
              %s2315 = sphi %s2305, %s2305
              %s2316 = sphi %s2307, %s2307
            $region1366: #{tpu_custom_call.1} parent=1362 // loop_header_branch
              %2313 = sbr.rel (%p2311) target = $region1370
            $region1367: #{tpu_custom_call.1} parent=1362 // loop_body
              %v2317 = vld [vmem:[%s2315] sm:%s2308]
              %2318 = vst [vmem:[%s2316] sm:%s2308] %v2317
            $region1368: #{tpu_custom_call.1} parent=1362 // loop_footer
              %s2314 = sadd.s32 1, %s2310
            $region1369: #{tpu_custom_call.1} parent=1362 // loop_footer_branch
              %2309 = sbr.rel target = $region1365
            $region1370: #{tpu_custom_call.1} parent=1362 // loop_exit
              _
          $region1363: #{tpu_custom_call.1} parent=1347 // pred_fallthru
            _
        $region1348: #{tpu_custom_call.1} parent=23 // pred_fallthru
          _
        // Predicated region
        $region1349: #{tpu_custom_call.1} parent=23 // pred_check
          %p2284 = pneg %p2280
        $region1350: #{tpu_custom_call.1} parent=23 // pred_check_branch
          %2286 = sbr.rel (%p2284) target = $region1352
        $region1351: #{tpu_custom_call.1} parent=23 // pred_region
          %s2287 = sshllo.u32 0, 1
          loop: start=0, step=1, limit=1
          $region1353: #{tpu_custom_call.1} parent=1351 // loop_pre_header
            _
          $region1354: #{tpu_custom_call.1} parent=1351 // loop_header
            %s2289 = sphi 0, %s2293
            %p2290 = scmp.ge.s32.totalorder %s2289, 1
            %s2294 = sphi %s2276, %s2276
            %s2295 = sphi %s2277, %s2277
          $region1355: #{tpu_custom_call.1} parent=1351 // loop_header_branch
            %2292 = sbr.rel (%p2290) target = $region1359
          $region1356: #{tpu_custom_call.1} parent=1351 // loop_body
            %v2296 = vld [vmem:[%s2294] sm:%s2287]
            %2297 = vst [vmem:[%s2295] sm:%s2287] %v2296
          $region1357: #{tpu_custom_call.1} parent=1351 // loop_footer
            %s2293 = sadd.s32 1, %s2289
          $region1358: #{tpu_custom_call.1} parent=1351 // loop_footer_branch
            %2288 = sbr.rel target = $region1354
          $region1359: #{tpu_custom_call.1} parent=1351 // loop_exit
            _
        $region1352: #{tpu_custom_call.1} parent=23 // pred_fallthru
          _
        // Predicated region
        $region1371: #{tpu_custom_call.1} parent=23 // pred_check
          _
        $region1372: #{tpu_custom_call.1} parent=23 // pred_check_branch
          %2321 = sbr.rel (0) target = $region1374
        $region1373: #{tpu_custom_call.1} parent=23 // pred_region
          %2322 = vsyncadd %s2278, 16
        $region1374: #{tpu_custom_call.1} parent=23 // pred_fallthru
          _
        %s2323 = sadd.s32 %s120, 45
        %s2324 = sld [smem:[#allocation5 + %s2323]]
        %s2325 = scalar_lea.vmem %s2, %s2324
        %s2326 = scalar_lea.vmem [#allocation2], 31
        %s2327 = scalar_lea.sflag [#allocation3], 31
        %p2329 = scmp.lt.u32.totalorder 1, 8
        %p2330 = pneg %p2329
        // Predicated region
        $region1375: #{tpu_custom_call.1} parent=23 // pred_check
          _
        $region1376: #{tpu_custom_call.1} parent=23 // pred_check_branch
          %2332 = sbr.rel (%p2329) target = $region1378
        $region1377: #{tpu_custom_call.1} parent=23 // pred_region
          %s2347 = sand.u32 1, 7
          %p2348 = scmp.eq.s32.totalorder %s2347, 0
          %p2349 = pneg %p2348
          // Predicated region
          $region1390: #{tpu_custom_call.1} parent=1377 // pred_check
            _
          $region1391: #{tpu_custom_call.1} parent=1377 // pred_check_branch
            %2351 = sbr.rel (%p2348) target = $region1393
          $region1392: #{tpu_custom_call.1} parent=1377 // pred_region
            %s2352 = sand.u32 1, 7
            %s2353 = ssub.s32 1, %s2352
            %s2354 = scalar_lea.vmem %s2325, %s2353
            %s2355 = ssub.s32 1, %s2352
            %s2356 = scalar_lea.vmem %s2326, %s2355 [#allocation2]
            %s2357 = sshllo.u32 0, %s2352
            loop: start=0, step=1, limit=1
            $region1394: #{tpu_custom_call.1} parent=1392 // loop_pre_header
              _
            $region1395: #{tpu_custom_call.1} parent=1392 // loop_header
              %s2359 = sphi 0, %s2363
              %p2360 = scmp.ge.s32.totalorder %s2359, 1
              %s2364 = sphi %s2354, %s2354
              %s2365 = sphi %s2356, %s2356
            $region1396: #{tpu_custom_call.1} parent=1392 // loop_header_branch
              %2362 = sbr.rel (%p2360) target = $region1400
            $region1397: #{tpu_custom_call.1} parent=1392 // loop_body
              %v2366 = vld [vmem:[%s2364] sm:%s2357]
              %2367 = vst [vmem:[%s2365] sm:%s2357] %v2366
            $region1398: #{tpu_custom_call.1} parent=1392 // loop_footer
              %s2363 = sadd.s32 1, %s2359
            $region1399: #{tpu_custom_call.1} parent=1392 // loop_footer_branch
              %2358 = sbr.rel target = $region1395
            $region1400: #{tpu_custom_call.1} parent=1392 // loop_exit
              _
          $region1393: #{tpu_custom_call.1} parent=1377 // pred_fallthru
            _
        $region1378: #{tpu_custom_call.1} parent=23 // pred_fallthru
          _
        // Predicated region
        $region1379: #{tpu_custom_call.1} parent=23 // pred_check
          %p2333 = pneg %p2329
        $region1380: #{tpu_custom_call.1} parent=23 // pred_check_branch
          %2335 = sbr.rel (%p2333) target = $region1382
        $region1381: #{tpu_custom_call.1} parent=23 // pred_region
          %s2336 = sshllo.u32 0, 1
          loop: start=0, step=1, limit=1
          $region1383: #{tpu_custom_call.1} parent=1381 // loop_pre_header
            _
          $region1384: #{tpu_custom_call.1} parent=1381 // loop_header
            %s2338 = sphi 0, %s2342
            %p2339 = scmp.ge.s32.totalorder %s2338, 1
            %s2343 = sphi %s2325, %s2325
            %s2344 = sphi %s2326, %s2326
          $region1385: #{tpu_custom_call.1} parent=1381 // loop_header_branch
            %2341 = sbr.rel (%p2339) target = $region1389
          $region1386: #{tpu_custom_call.1} parent=1381 // loop_body
            %v2345 = vld [vmem:[%s2343] sm:%s2336]
            %2346 = vst [vmem:[%s2344] sm:%s2336] %v2345
          $region1387: #{tpu_custom_call.1} parent=1381 // loop_footer
            %s2342 = sadd.s32 1, %s2338
          $region1388: #{tpu_custom_call.1} parent=1381 // loop_footer_branch
            %2337 = sbr.rel target = $region1384
          $region1389: #{tpu_custom_call.1} parent=1381 // loop_exit
            _
        $region1382: #{tpu_custom_call.1} parent=23 // pred_fallthru
          _
        // Predicated region
        $region1401: #{tpu_custom_call.1} parent=23 // pred_check
          _
        $region1402: #{tpu_custom_call.1} parent=23 // pred_check_branch
          %2370 = sbr.rel (0) target = $region1404
        $region1403: #{tpu_custom_call.1} parent=23 // pred_region
          %2371 = vsyncadd %s2327, 16
        $region1404: #{tpu_custom_call.1} parent=23 // pred_fallthru
          _
        %s2372 = sadd.s32 %s120, 46
        %s2373 = sld [smem:[#allocation5 + %s2372]]
        %s2374 = scalar_lea.vmem %s2, %s2373
        %s2375 = scalar_lea.vmem [#allocation2], 39
        %s2376 = scalar_lea.sflag [#allocation3], 39
        %p2378 = scmp.lt.u32.totalorder 1, 8
        %p2379 = pneg %p2378
        // Predicated region
        $region1405: #{tpu_custom_call.1} parent=23 // pred_check
          _
        $region1406: #{tpu_custom_call.1} parent=23 // pred_check_branch
          %2381 = sbr.rel (%p2378) target = $region1408
        $region1407: #{tpu_custom_call.1} parent=23 // pred_region
          %s2396 = sand.u32 1, 7
          %p2397 = scmp.eq.s32.totalorder %s2396, 0
          %p2398 = pneg %p2397
          // Predicated region
          $region1420: #{tpu_custom_call.1} parent=1407 // pred_check
            _
          $region1421: #{tpu_custom_call.1} parent=1407 // pred_check_branch
            %2400 = sbr.rel (%p2397) target = $region1423
          $region1422: #{tpu_custom_call.1} parent=1407 // pred_region
            %s2401 = sand.u32 1, 7
            %s2402 = ssub.s32 1, %s2401
            %s2403 = scalar_lea.vmem %s2374, %s2402
            %s2404 = ssub.s32 1, %s2401
            %s2405 = scalar_lea.vmem %s2375, %s2404 [#allocation2]
            %s2406 = sshllo.u32 0, %s2401
            loop: start=0, step=1, limit=1
            $region1424: #{tpu_custom_call.1} parent=1422 // loop_pre_header
              _
            $region1425: #{tpu_custom_call.1} parent=1422 // loop_header
              %s2408 = sphi 0, %s2412
              %p2409 = scmp.ge.s32.totalorder %s2408, 1
              %s2413 = sphi %s2403, %s2403
              %s2414 = sphi %s2405, %s2405
            $region1426: #{tpu_custom_call.1} parent=1422 // loop_header_branch
              %2411 = sbr.rel (%p2409) target = $region1430
            $region1427: #{tpu_custom_call.1} parent=1422 // loop_body
              %v2415 = vld [vmem:[%s2413] sm:%s2406]
              %2416 = vst [vmem:[%s2414] sm:%s2406] %v2415
            $region1428: #{tpu_custom_call.1} parent=1422 // loop_footer
              %s2412 = sadd.s32 1, %s2408
            $region1429: #{tpu_custom_call.1} parent=1422 // loop_footer_branch
              %2407 = sbr.rel target = $region1425
            $region1430: #{tpu_custom_call.1} parent=1422 // loop_exit
              _
          $region1423: #{tpu_custom_call.1} parent=1407 // pred_fallthru
            _
        $region1408: #{tpu_custom_call.1} parent=23 // pred_fallthru
          _
        // Predicated region
        $region1409: #{tpu_custom_call.1} parent=23 // pred_check
          %p2382 = pneg %p2378
        $region1410: #{tpu_custom_call.1} parent=23 // pred_check_branch
          %2384 = sbr.rel (%p2382) target = $region1412
        $region1411: #{tpu_custom_call.1} parent=23 // pred_region
          %s2385 = sshllo.u32 0, 1
          loop: start=0, step=1, limit=1
          $region1413: #{tpu_custom_call.1} parent=1411 // loop_pre_header
            _
          $region1414: #{tpu_custom_call.1} parent=1411 // loop_header
            %s2387 = sphi 0, %s2391
            %p2388 = scmp.ge.s32.totalorder %s2387, 1
            %s2392 = sphi %s2374, %s2374
            %s2393 = sphi %s2375, %s2375
          $region1415: #{tpu_custom_call.1} parent=1411 // loop_header_branch
            %2390 = sbr.rel (%p2388) target = $region1419
          $region1416: #{tpu_custom_call.1} parent=1411 // loop_body
            %v2394 = vld [vmem:[%s2392] sm:%s2385]
            %2395 = vst [vmem:[%s2393] sm:%s2385] %v2394
          $region1417: #{tpu_custom_call.1} parent=1411 // loop_footer
            %s2391 = sadd.s32 1, %s2387
          $region1418: #{tpu_custom_call.1} parent=1411 // loop_footer_branch
            %2386 = sbr.rel target = $region1414
          $region1419: #{tpu_custom_call.1} parent=1411 // loop_exit
            _
        $region1412: #{tpu_custom_call.1} parent=23 // pred_fallthru
          _
        // Predicated region
        $region1431: #{tpu_custom_call.1} parent=23 // pred_check
          _
        $region1432: #{tpu_custom_call.1} parent=23 // pred_check_branch
          %2419 = sbr.rel (0) target = $region1434
        $region1433: #{tpu_custom_call.1} parent=23 // pred_region
          %2420 = vsyncadd %s2376, 16
        $region1434: #{tpu_custom_call.1} parent=23 // pred_fallthru
          _
        %s2421 = sadd.s32 %s120, 47
        %s2422 = sld [smem:[#allocation5 + %s2421]]
        %s2423 = scalar_lea.vmem %s2, %s2422
        %s2424 = scalar_lea.vmem [#allocation2], 47
        %s2425 = scalar_lea.sflag [#allocation3], 47
        %p2427 = scmp.lt.u32.totalorder 1, 8
        %p2428 = pneg %p2427
        // Predicated region
        $region1435: #{tpu_custom_call.1} parent=23 // pred_check
          _
        $region1436: #{tpu_custom_call.1} parent=23 // pred_check_branch
          %2430 = sbr.rel (%p2427) target = $region1438
        $region1437: #{tpu_custom_call.1} parent=23 // pred_region
          %s2445 = sand.u32 1, 7
          %p2446 = scmp.eq.s32.totalorder %s2445, 0
          %p2447 = pneg %p2446
          // Predicated region
          $region1450: #{tpu_custom_call.1} parent=1437 // pred_check
            _
          $region1451: #{tpu_custom_call.1} parent=1437 // pred_check_branch
            %2449 = sbr.rel (%p2446) target = $region1453
          $region1452: #{tpu_custom_call.1} parent=1437 // pred_region
            %s2450 = sand.u32 1, 7
            %s2451 = ssub.s32 1, %s2450
            %s2452 = scalar_lea.vmem %s2423, %s2451
            %s2453 = ssub.s32 1, %s2450
            %s2454 = scalar_lea.vmem %s2424, %s2453 [#allocation2]
            %s2455 = sshllo.u32 0, %s2450
            loop: start=0, step=1, limit=1
            $region1454: #{tpu_custom_call.1} parent=1452 // loop_pre_header
              _
            $region1455: #{tpu_custom_call.1} parent=1452 // loop_header
              %s2457 = sphi 0, %s2461
              %p2458 = scmp.ge.s32.totalorder %s2457, 1
              %s2462 = sphi %s2452, %s2452
              %s2463 = sphi %s2454, %s2454
            $region1456: #{tpu_custom_call.1} parent=1452 // loop_header_branch
              %2460 = sbr.rel (%p2458) target = $region1460
            $region1457: #{tpu_custom_call.1} parent=1452 // loop_body
              %v2464 = vld [vmem:[%s2462] sm:%s2455]
              %2465 = vst [vmem:[%s2463] sm:%s2455] %v2464
            $region1458: #{tpu_custom_call.1} parent=1452 // loop_footer
              %s2461 = sadd.s32 1, %s2457
            $region1459: #{tpu_custom_call.1} parent=1452 // loop_footer_branch
              %2456 = sbr.rel target = $region1455
            $region1460: #{tpu_custom_call.1} parent=1452 // loop_exit
              _
          $region1453: #{tpu_custom_call.1} parent=1437 // pred_fallthru
            _
        $region1438: #{tpu_custom_call.1} parent=23 // pred_fallthru
          _
        // Predicated region
        $region1439: #{tpu_custom_call.1} parent=23 // pred_check
          %p2431 = pneg %p2427
        $region1440: #{tpu_custom_call.1} parent=23 // pred_check_branch
          %2433 = sbr.rel (%p2431) target = $region1442
        $region1441: #{tpu_custom_call.1} parent=23 // pred_region
          %s2434 = sshllo.u32 0, 1
          loop: start=0, step=1, limit=1
          $region1443: #{tpu_custom_call.1} parent=1441 // loop_pre_header
            _
          $region1444: #{tpu_custom_call.1} parent=1441 // loop_header
            %s2436 = sphi 0, %s2440
            %p2437 = scmp.ge.s32.totalorder %s2436, 1
            %s2441 = sphi %s2423, %s2423
            %s2442 = sphi %s2424, %s2424
          $region1445: #{tpu_custom_call.1} parent=1441 // loop_header_branch
            %2439 = sbr.rel (%p2437) target = $region1449
          $region1446: #{tpu_custom_call.1} parent=1441 // loop_body
            %v2443 = vld [vmem:[%s2441] sm:%s2434]
            %2444 = vst [vmem:[%s2442] sm:%s2434] %v2443
          $region1447: #{tpu_custom_call.1} parent=1441 // loop_footer
            %s2440 = sadd.s32 1, %s2436
          $region1448: #{tpu_custom_call.1} parent=1441 // loop_footer_branch
            %2435 = sbr.rel target = $region1444
          $region1449: #{tpu_custom_call.1} parent=1441 // loop_exit
            _
        $region1442: #{tpu_custom_call.1} parent=23 // pred_fallthru
          _
        // Predicated region
        $region1461: #{tpu_custom_call.1} parent=23 // pred_check
          _
        $region1462: #{tpu_custom_call.1} parent=23 // pred_check_branch
          %2468 = sbr.rel (0) target = $region1464
        $region1463: #{tpu_custom_call.1} parent=23 // pred_region
          %2469 = vsyncadd %s2425, 16
        $region1464: #{tpu_custom_call.1} parent=23 // pred_fallthru
          _
        %s2470 = smul.u32 1, 1
        %s2471 = sshll.u32 %s2470, 4
        %2472 = dma.done [#allocation3], %s2471
        %s2473 = sshll.u32 %s2470, 4
        %2474 = dma.done %s171, %s2473
        %s2475 = sshll.u32 %s2470, 4
        %2476 = dma.done %s220, %s2475
        %s2477 = sshll.u32 %s2470, 4
        %2478 = dma.done %s269, %s2477
        %s2479 = sshll.u32 %s2470, 4
        %2480 = dma.done %s318, %s2479
        %s2481 = sshll.u32 %s2470, 4
        %2482 = dma.done %s367, %s2481
        %s2483 = sshll.u32 %s2470, 4
        %2484 = dma.done %s416, %s2483
        %s2485 = sshll.u32 %s2470, 4
        %2486 = dma.done %s465, %s2485
        %s2487 = sshll.u32 %s2470, 4
        %2488 = dma.done %s514, %s2487
        %s2489 = sshll.u32 %s2470, 4
        %2490 = dma.done %s563, %s2489
        %s2491 = sshll.u32 %s2470, 4
        %2492 = dma.done %s612, %s2491
        %s2493 = sshll.u32 %s2470, 4
        %2494 = dma.done %s661, %s2493
        %s2495 = sshll.u32 %s2470, 4
        %2496 = dma.done %s710, %s2495
        %s2497 = sshll.u32 %s2470, 4
        %2498 = dma.done %s759, %s2497
        %s2499 = sshll.u32 %s2470, 4
        %2500 = dma.done %s808, %s2499
        %s2501 = sshll.u32 %s2470, 4
        %2502 = dma.done %s857, %s2501
        %s2503 = sshll.u32 %s2470, 4
        %2504 = dma.done %s906, %s2503
        %s2505 = sshll.u32 %s2470, 4
        %2506 = dma.done %s955, %s2505
        %s2507 = sshll.u32 %s2470, 4
        %2508 = dma.done %s1004, %s2507
        %s2509 = sshll.u32 %s2470, 4
        %2510 = dma.done %s1053, %s2509
        %s2511 = sshll.u32 %s2470, 4
        %2512 = dma.done %s1102, %s2511
        %s2513 = sshll.u32 %s2470, 4
        %2514 = dma.done %s1151, %s2513
        %s2515 = sshll.u32 %s2470, 4
        %2516 = dma.done %s1200, %s2515
        %s2517 = sshll.u32 %s2470, 4
        %2518 = dma.done %s1249, %s2517
        %s2519 = sshll.u32 %s2470, 4
        %2520 = dma.done %s1298, %s2519
        %s2521 = sshll.u32 %s2470, 4
        %2522 = dma.done %s1347, %s2521
        %s2523 = sshll.u32 %s2470, 4
        %2524 = dma.done %s1396, %s2523
        %s2525 = sshll.u32 %s2470, 4
        %2526 = dma.done %s1445, %s2525
        %s2527 = sshll.u32 %s2470, 4
        %2528 = dma.done %s1494, %s2527
        %s2529 = sshll.u32 %s2470, 4
        %2530 = dma.done %s1543, %s2529
        %s2531 = sshll.u32 %s2470, 4
        %2532 = dma.done %s1592, %s2531
        %s2533 = sshll.u32 %s2470, 4
        %2534 = dma.done %s1641, %s2533
        %s2535 = sshll.u32 %s2470, 4
        %2536 = dma.done %s1690, %s2535
        %s2537 = sshll.u32 %s2470, 4
        %2538 = dma.done %s1739, %s2537
        %s2539 = sshll.u32 %s2470, 4
        %2540 = dma.done %s1788, %s2539
        %s2541 = sshll.u32 %s2470, 4
        %2542 = dma.done %s1837, %s2541
        %s2543 = sshll.u32 %s2470, 4
        %2544 = dma.done %s1886, %s2543
        %s2545 = sshll.u32 %s2470, 4
        %2546 = dma.done %s1935, %s2545
        %s2547 = sshll.u32 %s2470, 4
        %2548 = dma.done %s1984, %s2547
        %s2549 = sshll.u32 %s2470, 4
        %2550 = dma.done %s2033, %s2549
        %s2551 = sshll.u32 %s2470, 4
        %2552 = dma.done %s2082, %s2551
        %s2553 = sshll.u32 %s2470, 4
        %2554 = dma.done %s2131, %s2553
        %s2555 = sshll.u32 %s2470, 4
        %2556 = dma.done %s2180, %s2555
        %s2557 = sshll.u32 %s2470, 4
        %2558 = dma.done %s2229, %s2557
        %s2559 = sshll.u32 %s2470, 4
        %2560 = dma.done %s2278, %s2559
        %s2561 = sshll.u32 %s2470, 4
        %2562 = dma.done %s2327, %s2561
        %s2563 = sshll.u32 %s2470, 4
        %2564 = dma.done %s2376, %s2563
        %s2565 = sshll.u32 %s2470, 4
        %2566 = dma.done %s2425, %s2565
        %v2567 = vld [vmem:[%s119] sm:$0xff]
        %v2568 = vld [vmem:[#allocation2] sm:$0xff]
        %v2569 = vmul.f32 %v2567, %v2568
        %vm2570 = vcmask 261120
        %v2571 = vsel %vm2570, %v2569, 0.0
        %2572 = vadd.xlane.f32.xlu0 %v2571
        %v2573 = vpop.xlane.xlu0 %2572
        %v2574 = vld [vmem:[#allocation2 + $0x8] sm:$0xff]
        %v2575 = vmul.f32 %v2567, %v2574
        %v2576 = vsel %vm2570, %v2575, 0.0
        %2577 = vadd.xlane.f32.xlu0 %v2576
        %v2578 = vpop.xlane.xlu0 %2577
        %v2579 = vld [vmem:[#allocation2 + $0x10] sm:$0xff]
        %v2580 = vmul.f32 %v2567, %v2579
        %v2581 = vsel %vm2570, %v2580, 0.0
        %2582 = vadd.xlane.f32.xlu0 %v2581
        %v2583 = vpop.xlane.xlu0 %2582
        %v2584 = vld [vmem:[#allocation2 + $0x18] sm:$0xff]
        %v2585 = vmul.f32 %v2567, %v2584
        %v2586 = vsel %vm2570, %v2585, 0.0
        %2587 = vadd.xlane.f32.xlu0 %v2586
        %v2588 = vpop.xlane.xlu0 %2587
        %v2589 = vld [vmem:[#allocation2 + $0x20] sm:$0xff]
        %v2590 = vmul.f32 %v2567, %v2589
        %v2591 = vsel %vm2570, %v2590, 0.0
        %2592 = vadd.xlane.f32.xlu0 %v2591
        %v2593 = vpop.xlane.xlu0 %2592
        %v2594 = vld [vmem:[#allocation2 + $0x28] sm:$0xff]
        %v2595 = vmul.f32 %v2567, %v2594
        %v2596 = vsel %vm2570, %v2595, 0.0
        %2597 = vadd.xlane.f32.xlu0 %v2596
        %v2598 = vpop.xlane.xlu0 %2597
        %vm2599 = vcmask 7168
        %v2600 = vsel %vm2599, %v2573, %v2578
        %vm2601 = vcmask 15360
        %v2602 = vsel %vm2601, %v2600, %v2583
        %vm2603 = vcmask 23552
        %v2604 = vsel %vm2603, %v2602, %v2588
        %vm2605 = vcmask 31744
        %v2606 = vsel %vm2605, %v2604, %v2593
        %vm2607 = vcmask 39936
        %v2608 = vsel %vm2607, %v2606, %v2598
        %v2609 = vxor.u32 %v2608, 2147483648
        %v2610 = vmul.f32 %v2609, 1.442695
        %v2611 = vpow.pop %v2610
        %v2612 = vadd.f32 %v2611, 1.0
        %v2613 = vrcp.pop %v2612
        %v2614 = vmul.f32 1.0, %v2613
        %vm2615 = vcmask 48128
        %v2616 = vsel %vm2615, %v2614, 0.0
        %2617 = vst [vmem:[%s115] sm:$0xff] %v2616
        %s2618 = sand.u32 %s57, 1
        %s2619 = scalar_lea.sflag [#allocation7], %s2618
        %s2620 = sand.u32 %s57, 1
        %s2621 = smul.addr %s2620, 8
        %s2622 = scalar_lea.vmem [#allocation6], %s2621
        // Predicated region
        $region1465: #{tpu_custom_call.1} parent=23 // pred_check
          %p2623 = pneg %p67
        $region1466: #{tpu_custom_call.1} parent=23 // pred_check_branch
          %2625 = sbr.rel (%p2623) target = $region1468
        $region1467: #{tpu_custom_call.1} parent=23 // pred_region
          %s2627 = ssub.s32 128, 128
          %2628 = vsyncadd %s2619, %s2627
          %s2629 = smul.addr %s23, 128
          %s2630 = scalar_lea.hbm %s3, %s2629
          %s2632 = sshll.u32 %s2622, 4
          %s2633 = int_to_ptr.vmem [resolvable:$true] %s2632
          %2635 = dma.vmem_to_hbm [thread:$0]  %s2633, 128, %s2630, %s2619
        $region1468: #{tpu_custom_call.1} parent=23 // pred_fallthru
          _
      $region24: #{tpu_custom_call.1} parent=5 // pred_fallthru
        _
      %p2636 = scmp.le.s32.totalorder 2, %s18
      // Predicated region
      $region1469: #{tpu_custom_call.1} parent=5 // pred_check
        %p2637 = pneg %p2636
      $region1470: #{tpu_custom_call.1} parent=5 // pred_check_branch
        %2639 = sbr.rel (%p2637) target = $region1472
      $region1471: #{tpu_custom_call.1} parent=5 // pred_region
        %s2640 = ssub.s32 %s18, 2
        // Predicated region
        $region1473: #{tpu_custom_call.1} parent=1471 // pred_check
          %p2641 = pneg %p73
        $region1474: #{tpu_custom_call.1} parent=1471 // pred_check_branch
          %2643 = sbr.rel (%p2641) target = $region1476
        $region1475: #{tpu_custom_call.1} parent=1471 // pred_region
          %s2644 = sand.u32 %s58, 1
          %s2645 = scalar_lea.sflag [#allocation7], %s2644
          %s2646 = sand.u32 %s58, 1
          %s2647 = smul.addr %s2646, 8
          %s2648 = scalar_lea.vmem [#allocation6], %s2647
          %2649 = dma.done %s2645, 128
        $region1476: #{tpu_custom_call.1} parent=1471 // pred_fallthru
          _
      $region1472: #{tpu_custom_call.1} parent=5 // pred_fallthru
        _
    $region6: #{tpu_custom_call.1} parent=1 // loop_footer
      %s22 = sadd.s32 1, %s18
    $region7: #{tpu_custom_call.1} parent=1 // loop_footer_branch
      %17 = sbr.rel target = $region3
    $region8: #{tpu_custom_call.1} parent=1 // loop_exit
      _
    %2650 = vsyncpa [#allocation7], 1
    %s2651 = scalar_lea.sflag [#allocation7], 1
    %2652 = vsyncpa %s2651, 1
  %2653 = vsyncmov [#allocation3]
  %s2654 = vpop.sfrf %2653
  %p2655 = scmp.eq.s32.totalorder %s2654, 0
  %p2656 = pneg %p2655
  %2658 = shalt.err (%p2656)
  %s2659 = scalar_lea.sflag [#allocation3], 1
  %2660 = vsyncmov %s2659
  %s2661 = vpop.sfrf %2660
  %p2662 = scmp.eq.s32.totalorder %s2661, 0
  %p2663 = pneg %p2662
  %2665 = shalt.err (%p2663)
  %s2666 = scalar_lea.sflag [#allocation3], 2
  %2667 = vsyncmov %s2666
  %s2668 = vpop.sfrf %2667
  %p2669 = scmp.eq.s32.totalorder %s2668, 0
  %p2670 = pneg %p2669
  %2672 = shalt.err (%p2670)
  %s2673 = scalar_lea.sflag [#allocation3], 3
  %2674 = vsyncmov %s2673
  %s2675 = vpop.sfrf %2674
  %p2676 = scmp.eq.s32.totalorder %s2675, 0
  %p2677 = pneg %p2676
  %2679 = shalt.err (%p2677)
  %s2680 = scalar_lea.sflag [#allocation3], 4
  %2681 = vsyncmov %s2680
  %s2682 = vpop.sfrf %2681
  %p2683 = scmp.eq.s32.totalorder %s2682, 0
  %p2684 = pneg %p2683
  %2686 = shalt.err (%p2684)
  %s2687 = scalar_lea.sflag [#allocation3], 5
  %2688 = vsyncmov %s2687
  %s2689 = vpop.sfrf %2688
  %p2690 = scmp.eq.s32.totalorder %s2689, 0
  %p2691 = pneg %p2690
  %2693 = shalt.err (%p2691)
  %s2694 = scalar_lea.sflag [#allocation3], 6
  %2695 = vsyncmov %s2694
  %s2696 = vpop.sfrf %2695
  %p2697 = scmp.eq.s32.totalorder %s2696, 0
  %p2698 = pneg %p2697
  %2700 = shalt.err (%p2698)
  %s2701 = scalar_lea.sflag [#allocation3], 7
  %2702 = vsyncmov %s2701
  %s2703 = vpop.sfrf %2702
  %p2704 = scmp.eq.s32.totalorder %s2703, 0
  %p2705 = pneg %p2704
  %2707 = shalt.err (%p2705)
  %s2708 = scalar_lea.sflag [#allocation3], 8
  %2709 = vsyncmov %s2708
  %s2710 = vpop.sfrf %2709
  %p2711 = scmp.eq.s32.totalorder %s2710, 0
  %p2712 = pneg %p2711
  %2714 = shalt.err (%p2712)
  %s2715 = scalar_lea.sflag [#allocation3], 9
  %2716 = vsyncmov %s2715
  %s2717 = vpop.sfrf %2716
  %p2718 = scmp.eq.s32.totalorder %s2717, 0
  %p2719 = pneg %p2718
  %2721 = shalt.err (%p2719)
  %s2722 = scalar_lea.sflag [#allocation3], 10
  %2723 = vsyncmov %s2722
  %s2724 = vpop.sfrf %2723
  %p2725 = scmp.eq.s32.totalorder %s2724, 0
  %p2726 = pneg %p2725
  %2728 = shalt.err (%p2726)
  %s2729 = scalar_lea.sflag [#allocation3], 11
  %2730 = vsyncmov %s2729
  %s2731 = vpop.sfrf %2730
  %p2732 = scmp.eq.s32.totalorder %s2731, 0
  %p2733 = pneg %p2732
  %2735 = shalt.err (%p2733)
  %s2736 = scalar_lea.sflag [#allocation3], 12
  %2737 = vsyncmov %s2736
  %s2738 = vpop.sfrf %2737
  %p2739 = scmp.eq.s32.totalorder %s2738, 0
  %p2740 = pneg %p2739
  %2742 = shalt.err (%p2740)
  %s2743 = scalar_lea.sflag [#allocation3], 13
  %2744 = vsyncmov %s2743
  %s2745 = vpop.sfrf %2744
  %p2746 = scmp.eq.s32.totalorder %s2745, 0
  %p2747 = pneg %p2746
  %2749 = shalt.err (%p2747)
  %s2750 = scalar_lea.sflag [#allocation3], 14
  %2751 = vsyncmov %s2750
  %s2752 = vpop.sfrf %2751
  %p2753 = scmp.eq.s32.totalorder %s2752, 0
  %p2754 = pneg %p2753
  %2756 = shalt.err (%p2754)
  %s2757 = scalar_lea.sflag [#allocation3], 15
  %2758 = vsyncmov %s2757
  %s2759 = vpop.sfrf %2758
  %p2760 = scmp.eq.s32.totalorder %s2759, 0
  %p2761 = pneg %p2760
  %2763 = shalt.err (%p2761)
  %s2764 = scalar_lea.sflag [#allocation3], 16
  %2765 = vsyncmov %s2764
  %s2766 = vpop.sfrf %2765
  %p2767 = scmp.eq.s32.totalorder %s2766, 0
  %p2768 = pneg %p2767
  %2770 = shalt.err (%p2768)
  %s2771 = scalar_lea.sflag [#allocation3], 17
  %2772 = vsyncmov %s2771
  %s2773 = vpop.sfrf %2772
  %p2774 = scmp.eq.s32.totalorder %s2773, 0
  %p2775 = pneg %p2774
  %2777 = shalt.err (%p2775)
  %s2778 = scalar_lea.sflag [#allocation3], 18
  %2779 = vsyncmov %s2778
  %s2780 = vpop.sfrf %2779
  %p2781 = scmp.eq.s32.totalorder %s2780, 0
  %p2782 = pneg %p2781
  %2784 = shalt.err (%p2782)
  %s2785 = scalar_lea.sflag [#allocation3], 19
  %2786 = vsyncmov %s2785
  %s2787 = vpop.sfrf %2786
  %p2788 = scmp.eq.s32.totalorder %s2787, 0
  %p2789 = pneg %p2788
  %2791 = shalt.err (%p2789)
  %s2792 = scalar_lea.sflag [#allocation3], 20
  %2793 = vsyncmov %s2792
  %s2794 = vpop.sfrf %2793
  %p2795 = scmp.eq.s32.totalorder %s2794, 0
  %p2796 = pneg %p2795
  %2798 = shalt.err (%p2796)
  %s2799 = scalar_lea.sflag [#allocation3], 21
  %2800 = vsyncmov %s2799
  %s2801 = vpop.sfrf %2800
  %p2802 = scmp.eq.s32.totalorder %s2801, 0
  %p2803 = pneg %p2802
  %2805 = shalt.err (%p2803)
  %s2806 = scalar_lea.sflag [#allocation3], 22
  %2807 = vsyncmov %s2806
  %s2808 = vpop.sfrf %2807
  %p2809 = scmp.eq.s32.totalorder %s2808, 0
  %p2810 = pneg %p2809
  %2812 = shalt.err (%p2810)
  %s2813 = scalar_lea.sflag [#allocation3], 23
  %2814 = vsyncmov %s2813
  %s2815 = vpop.sfrf %2814
  %p2816 = scmp.eq.s32.totalorder %s2815, 0
  %p2817 = pneg %p2816
  %2819 = shalt.err (%p2817)
  %s2820 = scalar_lea.sflag [#allocation3], 24
  %2821 = vsyncmov %s2820
  %s2822 = vpop.sfrf %2821
  %p2823 = scmp.eq.s32.totalorder %s2822, 0
  %p2824 = pneg %p2823
  %2826 = shalt.err (%p2824)
  %s2827 = scalar_lea.sflag [#allocation3], 25
  %2828 = vsyncmov %s2827
  %s2829 = vpop.sfrf %2828
  %p2830 = scmp.eq.s32.totalorder %s2829, 0
  %p2831 = pneg %p2830
  %2833 = shalt.err (%p2831)
  %s2834 = scalar_lea.sflag [#allocation3], 26
  %2835 = vsyncmov %s2834
  %s2836 = vpop.sfrf %2835
  %p2837 = scmp.eq.s32.totalorder %s2836, 0
  %p2838 = pneg %p2837
  %2840 = shalt.err (%p2838)
  %s2841 = scalar_lea.sflag [#allocation3], 27
  %2842 = vsyncmov %s2841
  %s2843 = vpop.sfrf %2842
  %p2844 = scmp.eq.s32.totalorder %s2843, 0
  %p2845 = pneg %p2844
  %2847 = shalt.err (%p2845)
  %s2848 = scalar_lea.sflag [#allocation3], 28
  %2849 = vsyncmov %s2848
  %s2850 = vpop.sfrf %2849
  %p2851 = scmp.eq.s32.totalorder %s2850, 0
  %p2852 = pneg %p2851
  %2854 = shalt.err (%p2852)
  %s2855 = scalar_lea.sflag [#allocation3], 29
  %2856 = vsyncmov %s2855
  %s2857 = vpop.sfrf %2856
  %p2858 = scmp.eq.s32.totalorder %s2857, 0
  %p2859 = pneg %p2858
  %2861 = shalt.err (%p2859)
  %s2862 = scalar_lea.sflag [#allocation3], 30
  %2863 = vsyncmov %s2862
  %s2864 = vpop.sfrf %2863
  %p2865 = scmp.eq.s32.totalorder %s2864, 0
  %p2866 = pneg %p2865
  %2868 = shalt.err (%p2866)
  %s2869 = scalar_lea.sflag [#allocation3], 31
  %2870 = vsyncmov %s2869
  %s2871 = vpop.sfrf %2870
  %p2872 = scmp.eq.s32.totalorder %s2871, 0
  %p2873 = pneg %p2872
  %2875 = shalt.err (%p2873)
  %s2876 = scalar_lea.sflag [#allocation3], 32
  %2877 = vsyncmov %s2876
  %s2878 = vpop.sfrf %2877
  %p2879 = scmp.eq.s32.totalorder %s2878, 0
  %p2880 = pneg %p2879
  %2882 = shalt.err (%p2880)
  %s2883 = scalar_lea.sflag [#allocation3], 33
  %2884 = vsyncmov %s2883
  %s2885 = vpop.sfrf %2884
  %p2886 = scmp.eq.s32.totalorder %s2885, 0
  %p2887 = pneg %p2886
  %2889 = shalt.err (%p2887)
  %s2890 = scalar_lea.sflag [#allocation3], 34
  %2891 = vsyncmov %s2890
  %s2892 = vpop.sfrf %2891
  %p2893 = scmp.eq.s32.totalorder %s2892, 0
  %p2894 = pneg %p2893
  %2896 = shalt.err (%p2894)
  %s2897 = scalar_lea.sflag [#allocation3], 35
  %2898 = vsyncmov %s2897
  %s2899 = vpop.sfrf %2898
  %p2900 = scmp.eq.s32.totalorder %s2899, 0
  %p2901 = pneg %p2900
  %2903 = shalt.err (%p2901)
  %s2904 = scalar_lea.sflag [#allocation3], 36
  %2905 = vsyncmov %s2904
  %s2906 = vpop.sfrf %2905
  %p2907 = scmp.eq.s32.totalorder %s2906, 0
  %p2908 = pneg %p2907
  %2910 = shalt.err (%p2908)
  %s2911 = scalar_lea.sflag [#allocation3], 37
  %2912 = vsyncmov %s2911
  %s2913 = vpop.sfrf %2912
  %p2914 = scmp.eq.s32.totalorder %s2913, 0
  %p2915 = pneg %p2914
  %2917 = shalt.err (%p2915)
  %s2918 = scalar_lea.sflag [#allocation3], 38
  %2919 = vsyncmov %s2918
  %s2920 = vpop.sfrf %2919
  %p2921 = scmp.eq.s32.totalorder %s2920, 0
  %p2922 = pneg %p2921
  %2924 = shalt.err (%p2922)
  %s2925 = scalar_lea.sflag [#allocation3], 39
  %2926 = vsyncmov %s2925
  %s2927 = vpop.sfrf %2926
  %p2928 = scmp.eq.s32.totalorder %s2927, 0
  %p2929 = pneg %p2928
  %2931 = shalt.err (%p2929)
  %s2932 = scalar_lea.sflag [#allocation3], 40
  %2933 = vsyncmov %s2932
  %s2934 = vpop.sfrf %2933
  %p2935 = scmp.eq.s32.totalorder %s2934, 0
  %p2936 = pneg %p2935
  %2938 = shalt.err (%p2936)
  %s2939 = scalar_lea.sflag [#allocation3], 41
  %2940 = vsyncmov %s2939
  %s2941 = vpop.sfrf %2940
  %p2942 = scmp.eq.s32.totalorder %s2941, 0
  %p2943 = pneg %p2942
  %2945 = shalt.err (%p2943)
  %s2946 = scalar_lea.sflag [#allocation3], 42
  %2947 = vsyncmov %s2946
  %s2948 = vpop.sfrf %2947
  %p2949 = scmp.eq.s32.totalorder %s2948, 0
  %p2950 = pneg %p2949
  %2952 = shalt.err (%p2950)
  %s2953 = scalar_lea.sflag [#allocation3], 43
  %2954 = vsyncmov %s2953
  %s2955 = vpop.sfrf %2954
  %p2956 = scmp.eq.s32.totalorder %s2955, 0
  %p2957 = pneg %p2956
  %2959 = shalt.err (%p2957)
  %s2960 = scalar_lea.sflag [#allocation3], 44
  %2961 = vsyncmov %s2960
  %s2962 = vpop.sfrf %2961
  %p2963 = scmp.eq.s32.totalorder %s2962, 0
  %p2964 = pneg %p2963
  %2966 = shalt.err (%p2964)
  %s2967 = scalar_lea.sflag [#allocation3], 45
  %2968 = vsyncmov %s2967
  %s2969 = vpop.sfrf %2968
  %p2970 = scmp.eq.s32.totalorder %s2969, 0
  %p2971 = pneg %p2970
  %2973 = shalt.err (%p2971)
  %s2974 = scalar_lea.sflag [#allocation3], 46
  %2975 = vsyncmov %s2974
  %s2976 = vpop.sfrf %2975
  %p2977 = scmp.eq.s32.totalorder %s2976, 0
  %p2978 = pneg %p2977
  %2980 = shalt.err (%p2978)
  %s2981 = scalar_lea.sflag [#allocation3], 47
  %2982 = vsyncmov %s2981
  %s2983 = vpop.sfrf %2982
  %p2984 = scmp.eq.s32.totalorder %s2983, 0
  %p2985 = pneg %p2984
  %2987 = shalt.err (%p2985)

</llo_original>
